<compile_context>
chip_gen: v6e
topology: v6e:2x2x1
jax: 0.10.0
libtpu: 0.0.40
codegen_flags: <defaults>
</compile_context>

<pallas_src>
import functools
import math

import numpy as np
import jax
import jax.numpy as jnp
from jax.experimental import pallas as pl
from jax.experimental.pallas import tpu as pltpu


# ----------------------------------------------------------------------------
# sin/cos positional embeddings (same numpy math as the PyTorch reference)
# ----------------------------------------------------------------------------
def get_1d_sincos_pos_embed_from_grid(embed_dim, pos):
    assert embed_dim % 2 == 0
    omega = np.arange(embed_dim // 2, dtype=np.float64)
    omega /= embed_dim / 2.0
    omega = 1.0 / 10000 ** omega
    pos = pos.reshape(-1)
    out = np.einsum("m,d->md", pos, omega)
    return np.concatenate([np.sin(out), np.cos(out)], axis=1)


def get_2d_sincos_pos_embed(embed_dim, grid_size):
    grid_h = np.arange(grid_size, dtype=np.float32)
    grid_w = np.arange(grid_size, dtype=np.float32)
    grid = np.meshgrid(grid_w, grid_h)
    grid = np.stack(grid, axis=0).reshape([2, 1, grid_size, grid_size])
    emb_h = get_1d_sincos_pos_embed_from_grid(embed_dim // 2, grid[0])
    emb_w = get_1d_sincos_pos_embed_from_grid(embed_dim // 2, grid[1])
    return np.concatenate([emb_h, emb_w], axis=1)


# ----------------------------------------------------------------------------
# Fused Pallas kernel: whole DiT forward for one batch element per grid step.
# ----------------------------------------------------------------------------
def dit_fused_kernel(
    # per-batch activations
    noised_ref, prev_ref, cond_bias_ref, tfreq_ref,
    # shared weights (resident in VMEM across the whole grid)
    patch_w_ref, patch_b_ref, noised_pos_ref,
    t_w0_ref, t_b0_ref, t_w2_ref, t_b2_ref,
    ada_w_ref, ada_b_ref,
    cq_w_ref, cq_b_ref, ckv_w_ref, ckv_b_ref, co_w_ref, co_b_ref,
    qkv_w_ref, qkv_b_ref, proj_w_ref, proj_b_ref,
    mlp1_w_ref, mlp1_b_ref, mlp2_w_ref, mlp2_b_ref,
    fin_ada_w_ref, fin_ada_b_ref, fin_w_ref, fin_b_ref,
    # output
    out_ref,
    *, depth, num_heads, hidden, eps):
    D = hidden
    Dh = D // num_heads
    attn_scale = Dh ** -0.5
    gelu_c = math.sqrt(2.0 / math.pi)

    def layernorm(v):
        mu = jnp.mean(v, axis=-1, keepdims=True)
        vc = v - mu
        var = jnp.mean(vc * vc, axis=-1, keepdims=True)
        return vc * jax.lax.rsqrt(var + eps)

    def mha_proj(q, k, v, w_o):
        # concat_h(softmax(q_h k_h^T * s) v_h) @ W_o  ==  sum_h (... @ W_o[h])
        acc = None
        for h in range(num_heads):
            sl = slice(h * Dh, (h + 1) * Dh)
            s = jax.lax.dot_general(
                q[:, sl], k[:, sl], (((1,), (1,)), ((), ())),
                preferred_element_type=jnp.float32) * attn_scale
            s = s - jnp.max(s, axis=-1, keepdims=True)
            p = jnp.exp(s)
            p = p * pl.reciprocal(jnp.sum(p, axis=-1, keepdims=True), approx=True)
            oh = jnp.dot(p, v[:, sl], preferred_element_type=jnp.float32)
            contrib = jnp.dot(oh, w_o[sl, :], preferred_element_type=jnp.float32)
            acc = contrib if acc is None else acc + contrib
        return acc

    patch_w = patch_w_ref[...]        # (C*P*P, D)
    patch_b = patch_b_ref[...]        # (1, D)

    # --- patch embedding (+ pos embeds) for noised obs and conditioning ---
    x = (jnp.dot(noised_ref[0], patch_w, preferred_element_type=jnp.float32)
         + patch_b + noised_pos_ref[...])                       # (T, D)
    cond = (jnp.dot(prev_ref[0], patch_w, preferred_element_type=jnp.float32)
            + patch_b + cond_bias_ref[0])                       # (steps*T, D)

    # --- timestep embedding MLP: Linear -> SiLU -> Linear, then SiLU(adaLN) ---
    h0 = jnp.dot(tfreq_ref[0], t_w0_ref[...],
                 preferred_element_type=jnp.float32) + t_b0_ref[...]
    h0 = h0 * jax.nn.sigmoid(h0)
    t_emb = jnp.dot(h0, t_w2_ref[...],
                    preferred_element_type=jnp.float32) + t_b2_ref[...]
    st = t_emb * jax.nn.sigmoid(t_emb)                          # (1, D)

    for d in range(depth):
        mod = jnp.dot(st, ada_w_ref[d],
                      preferred_element_type=jnp.float32) + ada_b_ref[d]  # (1, 6D)
        shift_msa = mod[:, 0 * D:1 * D]
        scale_msa = mod[:, 1 * D:2 * D]
        gate_msa = mod[:, 2 * D:3 * D]
        shift_mlp = mod[:, 3 * D:4 * D]
        scale_mlp = mod[:, 4 * D:5 * D]
        gate_mlp = mod[:, 5 * D:6 * D]

        # --- cross-attention on the conditioning sequence (plain LN query) ---
        xn = layernorm(x)
        q = jnp.dot(xn, cq_w_ref[d],
                    preferred_element_type=jnp.float32) + cq_b_ref[d]
        kv = jnp.dot(cond, ckv_w_ref[d],
                     preferred_element_type=jnp.float32) + ckv_b_ref[d]   # (Lc, 2D)
        x = x + mha_proj(q, kv[:, :D], kv[:, D:], co_w_ref[d]) + co_b_ref[d]

        # --- adaLN-modulated self-attention ---
        h = layernorm(x) * (1.0 + scale_msa) + shift_msa
        qkv = jnp.dot(h, qkv_w_ref[d],
                      preferred_element_type=jnp.float32) + qkv_b_ref[d]  # (T, 3D)
        o = mha_proj(qkv[:, :D], qkv[:, D:2 * D], qkv[:, 2 * D:],
                     proj_w_ref[d]) + proj_b_ref[d]
        x = x + gate_msa * o

        # --- adaLN-modulated MLP (gelu tanh) ---
        h = layernorm(x) * (1.0 + scale_mlp) + shift_mlp
        h1 = jnp.dot(h, mlp1_w_ref[d],
                     preferred_element_type=jnp.float32) + mlp1_b_ref[d]
        h1 = 0.5 * h1 * (1.0 + jnp.tanh(gelu_c * (h1 + 0.044715 * h1 * h1 * h1)))
        h2 = jnp.dot(h1, mlp2_w_ref[d],
                     preferred_element_type=jnp.float32) + mlp2_b_ref[d]
        x = x + gate_mlp * h2

    # --- final layer: adaLN modulate + linear to patch pixels ---
    fmod = jnp.dot(st, fin_ada_w_ref[...],
                   preferred_element_type=jnp.float32) + fin_ada_b_ref[...]  # (1, 2D)
    x = layernorm(x) * (1.0 + fmod[:, D:]) + fmod[:, :D]
    out_ref[0] = (jnp.dot(x, fin_w_ref[...],
                          preferred_element_type=jnp.float32) + fin_b_ref[...])


# ----------------------------------------------------------------------------
# Glue (layout only): patchify/unpatchify, action gather, timestep frequencies
# ----------------------------------------------------------------------------
def patchify(x, p):
    """NCHW -> (N, T, C*p*p), T row-major over the patch grid (= Conv2d stride=p)."""
    N, C, H, W = x.shape
    gh, gw = H // p, W // p
    x = x.reshape(N, C, gh, p, gw, p)
    x = x.transpose(0, 2, 4, 1, 3, 5)
    return x.reshape(N, gh * gw, C * p * p)


def unpatchify(x, out_c, p):
    N, T, _ = x.shape
    h = w = int(T ** 0.5)
    x = x.reshape(N, h, w, p, p, out_c)
    x = jnp.einsum("nhwpqc->nchpwq", x)
    return x.reshape(N, out_c, h * p, w * p)


def timestep_embedding(t, dim):
    half = dim // 2
    freqs = jnp.exp(-math.log(10000.0) * jnp.arange(half, dtype=jnp.float32) / half)
    args = t[:, None].astype(jnp.float32) * freqs[None]
    return jnp.concatenate([jnp.cos(args), jnp.sin(args)], axis=-1)


_WEIGHT_ORDER = [
    "patch_w", "patch_b", "noised_pos",
    "t_w0", "t_b0", "t_w2", "t_b2",
    "ada_w", "ada_b", "cq_w", "cq_b", "ckv_w", "ckv_b", "co_w", "co_b",
    "qkv_w", "qkv_b", "proj_w", "proj_b",
    "mlp1_w", "mlp1_b", "mlp2_w", "mlp2_b",
    "fin_ada_w", "fin_ada_b", "fin_w", "fin_b",
]


def dit_forward(params, noised_obs, t, prev_obs, prev_act, *, cfg):
    N = noised_obs.shape[0]
    P, D, H = cfg["patch"], cfg["hidden"], cfg["heads"]
    T, steps, depth = cfg["num_patches"], cfg["steps"], cfg["depth"]
    Lc = steps * T
    out_dim = P * P * cfg["out_c"]

    # layout glue (XLA): im2col, action gather, sinusoidal frequencies
    noised_patches = patchify(noised_obs, P).astype(jnp.float32)           # (N, T, CPP)
    prev_patches = patchify(
        prev_obs.reshape((N * steps,) + prev_obs.shape[2:]), P
    ).reshape(N, Lc, -1).astype(jnp.float32)                               # (N, Lc, CPP)

    pa = params["act_table"][prev_act]                                     # (N, steps, D)
    cond_bias = (params["prev_pos"][None, None, :, :]
                 + pa[:, :, None, :]
                 + params["temporal"][None, :, None, :]).reshape(N, Lc, D)

    tfreq = timestep_embedding(t, cfg["time_freq"]).reshape(N, 1, cfg["time_freq"])

    batch_ops = [noised_patches, prev_patches, cond_bias.astype(jnp.float32), tfreq]
    weights = [params[n].astype(jnp.float32) for n in _WEIGHT_ORDER]

    def batch_spec(shape):
        zeros = (0,) * (len(shape) - 1)
        return pl.BlockSpec((1,) + shape[1:], lambda i, z=zeros: (i,) + z)

    def weight_spec(shape):
        zeros = (0,) * len(shape)
        return pl.BlockSpec(shape, lambda i, z=zeros: z)

    kernel = functools.partial(dit_fused_kernel, depth=depth, num_heads=H,
                               hidden=D, eps=1e-6)
    out = pl.pallas_call(
        kernel,
        out_shape=jax.ShapeDtypeStruct((N, T, out_dim), jnp.float32),
        grid=(N,),
        in_specs=[batch_spec(a.shape) for a in batch_ops]
                 + [weight_spec(w.shape) for w in weights],
        out_specs=pl.BlockSpec((1, T, out_dim), lambda i: (i, 0, 0)),
        compiler_params=pltpu.CompilerParams(dimension_semantics=("parallel",)),
    )(*batch_ops, *weights)

    return unpatchify(out, cfg["out_c"], P)


# ----------------------------------------------------------------------------
# Deterministic parameter initialization (synthetic — no checkpoint load).
# Per-block weights are stacked along a leading `depth` axis so the fused
# kernel can static-index them inside the unrolled block loop.
# ----------------------------------------------------------------------------
def init_params(key, cfg):
    D = cfg["hidden"]
    P, C = cfg["patch"], cfg["in_c"]
    depth = cfg["depth"]
    T = cfg["num_patches"]
    mlp_hidden = int(D * cfg["mlp_ratio"])
    keys = iter(jax.random.split(key, 64))

    def rnd(shape, s=0.02):
        return jax.random.normal(next(keys), shape, jnp.float32) * s

    params = {
        "patch_w": rnd((C * P * P, D)), "patch_b": rnd((1, D)),
        "t_w0": rnd((cfg["time_freq"], D)), "t_b0": rnd((1, D)),
        "t_w2": rnd((D, D)), "t_b2": rnd((1, D)),
        "act_table": rnd((cfg["num_actions"], D)),
        "fin_ada_w": rnd((D, 2 * D)), "fin_ada_b": rnd((1, 2 * D)),
        "fin_w": rnd((D, P * P * cfg["out_c"])), "fin_b": rnd((1, P * P * cfg["out_c"])),
        # fixed sincos buffers
        "noised_pos": jnp.asarray(get_2d_sincos_pos_embed(D, int(T ** 0.5)), jnp.float32),
        "prev_pos": jnp.asarray(
            get_1d_sincos_pos_embed_from_grid(D, np.arange(T, dtype=np.float32)), jnp.float32),
        "temporal": jnp.asarray(
            get_1d_sincos_pos_embed_from_grid(D, np.arange(cfg["steps"], dtype=np.float32)),
            jnp.float32),
        # stacked per-block weights
        "ada_w": rnd((depth, D, 6 * D)), "ada_b": rnd((depth, 1, 6 * D)),
        "cq_w": rnd((depth, D, D)), "cq_b": rnd((depth, 1, D)),
        "ckv_w": rnd((depth, D, 2 * D)), "ckv_b": rnd((depth, 1, 2 * D)),   # K|V fused
        "co_w": rnd((depth, D, D)), "co_b": rnd((depth, 1, D)),
        "qkv_w": rnd((depth, D, 3 * D)), "qkv_b": rnd((depth, 1, 3 * D)),
        "proj_w": rnd((depth, D, D)), "proj_b": rnd((depth, 1, D)),
        "mlp1_w": rnd((depth, D, mlp_hidden)), "mlp1_b": rnd((depth, 1, mlp_hidden)),
        "mlp2_w": rnd((depth, mlp_hidden, D)), "mlp2_b": rnd((depth, 1, D)),
    }
    return params


# ----------------------------------------------------------------------------
if __name__ == "__main__":
    cfg = dict(
        num_actions=8, steps=2, input_size=16, patch=4, in_c=4,
        hidden=32, depth=2, heads=4, mlp_ratio=4.0, time_freq=32,
    )
    cfg["num_patches"] = (cfg["input_size"] // cfg["patch"]) ** 2      # 16
    cfg["out_c"] = cfg["in_c"] * 2                                     # learn_sigma=True

    key = jax.random.PRNGKey(0)
    k1, k2, k3, k4, kp = jax.random.split(key, 5)
    noised_obs = jax.random.normal(
        k1, (2, cfg["in_c"], cfg["input_size"], cfg["input_size"]), jnp.float32)
    t = jax.random.randint(k2, (2,), 0, 1000).astype(jnp.float32)
    prev_obs = jax.random.normal(
        k3, (2, cfg["steps"], cfg["in_c"], cfg["input_size"], cfg["input_size"]), jnp.float32)
    prev_act = jax.random.randint(k4, (2, cfg["steps"]), 0, cfg["num_actions"])

    params = init_params(kp, cfg)

    fwd = jax.jit(functools.partial(dit_forward, cfg=cfg))
    out = fwd(params, noised_obs, t, prev_obs, prev_act)
    out = jax.block_until_ready(out)

    assert out.shape == (2, cfg["out_c"], cfg["input_size"], cfg["input_size"]), out.shape
    assert jnp.all(jnp.isfinite(out))
    print("KERNEL_OK")
</pallas_src>

<mosaic_0001>
module attributes {stable_mosaic.version = 11 : i64} {
  func.func @dit_fused_kernel(%arg0: i32, %arg1: memref<1x16x64xf32, #tpu.memory_space<vmem>>, %arg2: memref<1x32x64xf32, #tpu.memory_space<vmem>>, %arg3: memref<1x32x32xf32, #tpu.memory_space<vmem>>, %arg4: memref<1x1x32xf32, #tpu.memory_space<vmem>>, %arg5: memref<64x32xf32, #tpu.memory_space<vmem>>, %arg6: memref<1x32xf32, #tpu.memory_space<vmem>>, %arg7: memref<16x32xf32, #tpu.memory_space<vmem>>, %arg8: memref<32x32xf32, #tpu.memory_space<vmem>>, %arg9: memref<1x32xf32, #tpu.memory_space<vmem>>, %arg10: memref<32x32xf32, #tpu.memory_space<vmem>>, %arg11: memref<1x32xf32, #tpu.memory_space<vmem>>, %arg12: memref<2x32x192xf32, #tpu.memory_space<vmem>>, %arg13: memref<2x1x192xf32, #tpu.memory_space<vmem>>, %arg14: memref<2x32x32xf32, #tpu.memory_space<vmem>>, %arg15: memref<2x1x32xf32, #tpu.memory_space<vmem>>, %arg16: memref<2x32x64xf32, #tpu.memory_space<vmem>>, %arg17: memref<2x1x64xf32, #tpu.memory_space<vmem>>, %arg18: memref<2x32x32xf32, #tpu.memory_space<vmem>>, %arg19: memref<2x1x32xf32, #tpu.memory_space<vmem>>, %arg20: memref<2x32x96xf32, #tpu.memory_space<vmem>>, %arg21: memref<2x1x96xf32, #tpu.memory_space<vmem>>, %arg22: memref<2x32x32xf32, #tpu.memory_space<vmem>>, %arg23: memref<2x1x32xf32, #tpu.memory_space<vmem>>, %arg24: memref<2x32x128xf32, #tpu.memory_space<vmem>>, %arg25: memref<2x1x128xf32, #tpu.memory_space<vmem>>, %arg26: memref<2x128x32xf32, #tpu.memory_space<vmem>>, %arg27: memref<2x1x32xf32, #tpu.memory_space<vmem>>, %arg28: memref<32x64xf32, #tpu.memory_space<vmem>>, %arg29: memref<1x64xf32, #tpu.memory_space<vmem>>, %arg30: memref<32x128xf32, #tpu.memory_space<vmem>>, %arg31: memref<1x128xf32, #tpu.memory_space<vmem>>, %arg32: memref<1x16x128xf32, #tpu.memory_space<vmem>>) attributes {dimension_semantics = [#tpu.dimension_semantics<parallel>], iteration_bounds = array<i64: 2>, scalar_prefetch = 0 : i64, scratch_operands = 0 : i64, tpu.core_type = #tpu.core_type<tc>, window_params = [{transform_indices = @transform_0, window_bounds = array<i64: 1, 16, 64>}, {transform_indices = @transform_1, window_bounds = array<i64: 1, 32, 64>}, {transform_indices = @transform_2, window_bounds = array<i64: 1, 32, 32>}, {transform_indices = @transform_3, window_bounds = array<i64: 1, 1, 32>}, {pipeline_mode = #tpu.pipeline_mode<synchronous>, transform_indices = @transform_4, window_bounds = array<i64: 64, 32>}, {pipeline_mode = #tpu.pipeline_mode<synchronous>, transform_indices = @transform_5, window_bounds = array<i64: 1, 32>}, {pipeline_mode = #tpu.pipeline_mode<synchronous>, transform_indices = @transform_6, window_bounds = array<i64: 16, 32>}, {pipeline_mode = #tpu.pipeline_mode<synchronous>, transform_indices = @transform_7, window_bounds = array<i64: 32, 32>}, {pipeline_mode = #tpu.pipeline_mode<synchronous>, transform_indices = @transform_8, window_bounds = array<i64: 1, 32>}, {pipeline_mode = #tpu.pipeline_mode<synchronous>, transform_indices = @transform_9, window_bounds = array<i64: 32, 32>}, {pipeline_mode = #tpu.pipeline_mode<synchronous>, transform_indices = @transform_10, window_bounds = array<i64: 1, 32>}, {pipeline_mode = #tpu.pipeline_mode<synchronous>, transform_indices = @transform_11, window_bounds = array<i64: 2, 32, 192>}, {pipeline_mode = #tpu.pipeline_mode<synchronous>, transform_indices = @transform_12, window_bounds = array<i64: 2, 1, 192>}, {pipeline_mode = #tpu.pipeline_mode<synchronous>, transform_indices = @transform_13, window_bounds = array<i64: 2, 32, 32>}, {pipeline_mode = #tpu.pipeline_mode<synchronous>, transform_indices = @transform_14, window_bounds = array<i64: 2, 1, 32>}, {pipeline_mode = #tpu.pipeline_mode<synchronous>, transform_indices = @transform_15, window_bounds = array<i64: 2, 32, 64>}, {pipeline_mode = #tpu.pipeline_mode<synchronous>, transform_indices = @transform_16, window_bounds = array<i64: 2, 1, 64>}, {pipeline_mode = #tpu.pipeline_mode<synchronous>, transform_indices = @transform_17, window_bounds = array<i64: 2, 32, 32>}, {pipeline_mode = #tpu.pipeline_mode<synchronous>, transform_indices = @transform_18, window_bounds = array<i64: 2, 1, 32>}, {pipeline_mode = #tpu.pipeline_mode<synchronous>, transform_indices = @transform_19, window_bounds = array<i64: 2, 32, 96>}, {pipeline_mode = #tpu.pipeline_mode<synchronous>, transform_indices = @transform_20, window_bounds = array<i64: 2, 1, 96>}, {pipeline_mode = #tpu.pipeline_mode<synchronous>, transform_indices = @transform_21, window_bounds = array<i64: 2, 32, 32>}, {pipeline_mode = #tpu.pipeline_mode<synchronous>, transform_indices = @transform_22, window_bounds = array<i64: 2, 1, 32>}, {pipeline_mode = #tpu.pipeline_mode<synchronous>, transform_indices = @transform_23, window_bounds = array<i64: 2, 32, 128>}, {pipeline_mode = #tpu.pipeline_mode<synchronous>, transform_indices = @transform_24, window_bounds = array<i64: 2, 1, 128>}, {pipeline_mode = #tpu.pipeline_mode<synchronous>, transform_indices = @transform_25, window_bounds = array<i64: 2, 128, 32>}, {pipeline_mode = #tpu.pipeline_mode<synchronous>, transform_indices = @transform_26, window_bounds = array<i64: 2, 1, 32>}, {pipeline_mode = #tpu.pipeline_mode<synchronous>, transform_indices = @transform_27, window_bounds = array<i64: 32, 64>}, {pipeline_mode = #tpu.pipeline_mode<synchronous>, transform_indices = @transform_28, window_bounds = array<i64: 1, 64>}, {pipeline_mode = #tpu.pipeline_mode<synchronous>, transform_indices = @transform_29, window_bounds = array<i64: 32, 128>}, {pipeline_mode = #tpu.pipeline_mode<synchronous>, transform_indices = @transform_30, window_bounds = array<i64: 1, 128>}, {transform_indices = @transform_31, window_bounds = array<i64: 1, 16, 128>}]} {
    %c0 = arith.constant 0 : index
    %c0_0 = arith.constant 0 : index
    %0 = vector.load %arg5[%c0, %c0_0] : memref<64x32xf32, #tpu.memory_space<vmem>>, vector<64x32xf32>
    %c0_1 = arith.constant 0 : index
    %c0_2 = arith.constant 0 : index
    %1 = vector.load %arg6[%c0_1, %c0_2] : memref<1x32xf32, #tpu.memory_space<vmem>>, vector<1x32xf32>
    %c0_3 = arith.constant 0 : index
    %c0_4 = arith.constant 0 : index
    %c0_5 = arith.constant 0 : index
    %2 = vector.load %arg1[%c0_3, %c0_4, %c0_5] : memref<1x16x64xf32, #tpu.memory_space<vmem>>, vector<1x16x64xf32>
    %3 = vector.shape_cast %2 : vector<1x16x64xf32> to vector<16x64xf32>
    %cst = arith.constant dense<0.000000e+00> : vector<16x32xf32>
    %4 = tpu.matmul %3, %0, %cst {dimension_numbers = #tpu.dot_dimension_numbers<[1], [0], [0], [1], [0, 0, 1, 1], [], []>} : vector<16x64xf32>, vector<64x32xf32>, vector<16x32xf32> -> vector<16x32xf32>
    %5 = vector.broadcast %1 : vector<1x32xf32> to vector<16x32xf32>
    %6 = arith.addf %4, %5 : vector<16x32xf32>
    %c0_6 = arith.constant 0 : index
    %c0_7 = arith.constant 0 : index
    %7 = vector.load %arg7[%c0_6, %c0_7] : memref<16x32xf32, #tpu.memory_space<vmem>>, vector<16x32xf32>
    %8 = arith.addf %6, %7 : vector<16x32xf32>
    %c0_8 = arith.constant 0 : index
    %c0_9 = arith.constant 0 : index
    %c0_10 = arith.constant 0 : index
    %9 = vector.load %arg2[%c0_8, %c0_9, %c0_10] : memref<1x32x64xf32, #tpu.memory_space<vmem>>, vector<1x32x64xf32>
    %10 = vector.shape_cast %9 : vector<1x32x64xf32> to vector<32x64xf32>
    %cst_11 = arith.constant dense<0.000000e+00> : vector<32x32xf32>
    %11 = tpu.matmul %10, %0, %cst_11 {dimension_numbers = #tpu.dot_dimension_numbers<[1], [0], [0], [1], [0, 0, 1, 1], [], []>} : vector<32x64xf32>, vector<64x32xf32>, vector<32x32xf32> -> vector<32x32xf32>
    %12 = vector.broadcast %1 : vector<1x32xf32> to vector<32x32xf32>
    %13 = arith.addf %11, %12 : vector<32x32xf32>
    %c0_12 = arith.constant 0 : index
    %c0_13 = arith.constant 0 : index
    %c0_14 = arith.constant 0 : index
    %14 = vector.load %arg3[%c0_12, %c0_13, %c0_14] : memref<1x32x32xf32, #tpu.memory_space<vmem>>, vector<1x32x32xf32>
    %15 = vector.shape_cast %14 : vector<1x32x32xf32> to vector<32x32xf32>
    %16 = arith.addf %13, %15 : vector<32x32xf32>
    %c0_15 = arith.constant 0 : index
    %c0_16 = arith.constant 0 : index
    %c0_17 = arith.constant 0 : index
    %17 = vector.load %arg4[%c0_15, %c0_16, %c0_17] : memref<1x1x32xf32, #tpu.memory_space<vmem>>, vector<1x1x32xf32>
    %18 = vector.shape_cast %17 : vector<1x1x32xf32> to vector<1x32xf32>
    %c0_18 = arith.constant 0 : index
    %c0_19 = arith.constant 0 : index
    %19 = vector.load %arg8[%c0_18, %c0_19] : memref<32x32xf32, #tpu.memory_space<vmem>>, vector<32x32xf32>
    %cst_20 = arith.constant dense<0.000000e+00> : vector<1x32xf32>
    %20 = tpu.matmul %18, %19, %cst_20 {dimension_numbers = #tpu.dot_dimension_numbers<[1], [0], [0], [1], [0, 0, 1, 1], [], []>} : vector<1x32xf32>, vector<32x32xf32>, vector<1x32xf32> -> vector<1x32xf32>
    %c0_21 = arith.constant 0 : index
    %c0_22 = arith.constant 0 : index
    %21 = vector.load %arg9[%c0_21, %c0_22] : memref<1x32xf32, #tpu.memory_space<vmem>>, vector<1x32xf32>
    %22 = arith.addf %20, %21 : vector<1x32xf32>
    %23 = arith.negf %22 : vector<1x32xf32>
    %24 = math.exp %23 : vector<1x32xf32>
    %cst_23 = arith.constant 1.000000e+00 : f32
    %25 = vector.broadcast %cst_23 : f32 to vector<1x32xf32>
    %26 = arith.addf %25, %24 : vector<1x32xf32>
    %27 = arith.divf %25, %26 : vector<1x32xf32>
    %28 = arith.mulf %22, %27 : vector<1x32xf32>
    %c0_24 = arith.constant 0 : index
    %c0_25 = arith.constant 0 : index
    %29 = vector.load %arg10[%c0_24, %c0_25] : memref<32x32xf32, #tpu.memory_space<vmem>>, vector<32x32xf32>
    %cst_26 = arith.constant dense<0.000000e+00> : vector<1x32xf32>
    %30 = tpu.matmul %28, %29, %cst_26 {dimension_numbers = #tpu.dot_dimension_numbers<[1], [0], [0], [1], [0, 0, 1, 1], [], []>} : vector<1x32xf32>, vector<32x32xf32>, vector<1x32xf32> -> vector<1x32xf32>
    %c0_27 = arith.constant 0 : index
    %c0_28 = arith.constant 0 : index
    %31 = vector.load %arg11[%c0_27, %c0_28] : memref<1x32xf32, #tpu.memory_space<vmem>>, vector<1x32xf32>
    %32 = arith.addf %30, %31 : vector<1x32xf32>
    %33 = arith.negf %32 : vector<1x32xf32>
    %34 = math.exp %33 : vector<1x32xf32>
    %cst_29 = arith.constant 1.000000e+00 : f32
    %35 = vector.broadcast %cst_29 : f32 to vector<1x32xf32>
    %36 = arith.addf %35, %34 : vector<1x32xf32>
    %37 = arith.divf %35, %36 : vector<1x32xf32>
    %38 = arith.mulf %32, %37 : vector<1x32xf32>
    %c0_30 = arith.constant 0 : index
    %c0_31 = arith.constant 0 : index
    %c0_32 = arith.constant 0 : index
    %39 = vector.load %arg12[%c0_30, %c0_31, %c0_32] : memref<2x32x192xf32, #tpu.memory_space<vmem>>, vector<1x32x192xf32>
    %40 = vector.shape_cast %39 : vector<1x32x192xf32> to vector<32x192xf32>
    %cst_33 = arith.constant dense<0.000000e+00> : vector<1x192xf32>
    %41 = tpu.matmul %38, %40, %cst_33 {dimension_numbers = #tpu.dot_dimension_numbers<[1], [0], [0], [1], [0, 0, 1, 1], [], []>} : vector<1x32xf32>, vector<32x192xf32>, vector<1x192xf32> -> vector<1x192xf32>
    %c0_34 = arith.constant 0 : index
    %c0_35 = arith.constant 0 : index
    %c0_36 = arith.constant 0 : index
    %42 = vector.load %arg13[%c0_34, %c0_35, %c0_36] : memref<2x1x192xf32, #tpu.memory_space<vmem>>, vector<1x1x192xf32>
    %43 = vector.shape_cast %42 : vector<1x1x192xf32> to vector<1x192xf32>
    %44 = arith.addf %41, %43 : vector<1x192xf32>
    %45 = vector.extract_strided_slice %44 {offsets = [0, 0], sizes = [1, 32], strides = [1, 1]} : vector<1x192xf32> to vector<1x32xf32>
    %46 = vector.extract_strided_slice %44 {offsets = [0, 32], sizes = [1, 32], strides = [1, 1]} : vector<1x192xf32> to vector<1x32xf32>
    %47 = vector.extract_strided_slice %44 {offsets = [0, 64], sizes = [1, 32], strides = [1, 1]} : vector<1x192xf32> to vector<1x32xf32>
    %48 = vector.extract_strided_slice %44 {offsets = [0, 96], sizes = [1, 32], strides = [1, 1]} : vector<1x192xf32> to vector<1x32xf32>
    %49 = vector.extract_strided_slice %44 {offsets = [0, 128], sizes = [1, 32], strides = [1, 1]} : vector<1x192xf32> to vector<1x32xf32>
    %50 = vector.extract_strided_slice %44 {offsets = [0, 160], sizes = [1, 32], strides = [1, 1]} : vector<1x192xf32> to vector<1x32xf32>
    %cst_37 = arith.constant dense<0.000000e+00> : vector<16xf32>
    %51 = vector.multi_reduction <add>, %8, %cst_37 [1] : vector<16x32xf32> to vector<16xf32>
    %52 = vector.shape_cast %51 : vector<16xf32> to vector<16x1xf32>
    %cst_38 = arith.constant 3.200000e+01 : f32
    %53 = vector.broadcast %cst_38 : f32 to vector<16x1xf32>
    %54 = arith.divf %52, %53 : vector<16x1xf32>
    %55 = vector.broadcast %54 : vector<16x1xf32> to vector<16x32xf32>
    %56 = arith.subf %8, %55 : vector<16x32xf32>
    %57 = arith.mulf %56, %56 : vector<16x32xf32>
    %cst_39 = arith.constant dense<0.000000e+00> : vector<16xf32>
    %58 = vector.multi_reduction <add>, %57, %cst_39 [1] : vector<16x32xf32> to vector<16xf32>
    %59 = vector.shape_cast %58 : vector<16xf32> to vector<16x1xf32>
    %cst_40 = arith.constant 3.200000e+01 : f32
    %60 = vector.broadcast %cst_40 : f32 to vector<16x1xf32>
    %61 = arith.divf %59, %60 : vector<16x1xf32>
    %cst_41 = arith.constant 9.99999997E-7 : f32
    %62 = vector.broadcast %cst_41 : f32 to vector<16x1xf32>
    %63 = arith.addf %61, %62 : vector<16x1xf32>
    %64 = math.rsqrt %63 : vector<16x1xf32>
    %65 = vector.broadcast %64 : vector<16x1xf32> to vector<16x32xf32>
    %66 = arith.mulf %56, %65 : vector<16x32xf32>
    %c0_42 = arith.constant 0 : index
    %c0_43 = arith.constant 0 : index
    %c0_44 = arith.constant 0 : index
    %67 = vector.load %arg14[%c0_42, %c0_43, %c0_44] : memref<2x32x32xf32, #tpu.memory_space<vmem>>, vector<1x32x32xf32>
    %68 = vector.shape_cast %67 : vector<1x32x32xf32> to vector<32x32xf32>
    %cst_45 = arith.constant dense<0.000000e+00> : vector<16x32xf32>
    %69 = tpu.matmul %66, %68, %cst_45 {dimension_numbers = #tpu.dot_dimension_numbers<[1], [0], [0], [1], [0, 0, 1, 1], [], []>} : vector<16x32xf32>, vector<32x32xf32>, vector<16x32xf32> -> vector<16x32xf32>
    %c0_46 = arith.constant 0 : index
    %c0_47 = arith.constant 0 : index
    %c0_48 = arith.constant 0 : index
    %70 = vector.load %arg15[%c0_46, %c0_47, %c0_48] : memref<2x1x32xf32, #tpu.memory_space<vmem>>, vector<1x1x32xf32>
    %71 = vector.shape_cast %70 : vector<1x1x32xf32> to vector<1x32xf32>
    %72 = vector.broadcast %71 : vector<1x32xf32> to vector<16x32xf32>
    %73 = arith.addf %69, %72 : vector<16x32xf32>
    %c0_49 = arith.constant 0 : index
    %c0_50 = arith.constant 0 : index
    %c0_51 = arith.constant 0 : index
    %74 = vector.load %arg16[%c0_49, %c0_50, %c0_51] : memref<2x32x64xf32, #tpu.memory_space<vmem>>, vector<1x32x64xf32>
    %75 = vector.shape_cast %74 : vector<1x32x64xf32> to vector<32x64xf32>
    %cst_52 = arith.constant dense<0.000000e+00> : vector<32x64xf32>
    %76 = tpu.matmul %16, %75, %cst_52 {dimension_numbers = #tpu.dot_dimension_numbers<[1], [0], [0], [1], [0, 0, 1, 1], [], []>} : vector<32x32xf32>, vector<32x64xf32>, vector<32x64xf32> -> vector<32x64xf32>
    %c0_53 = arith.constant 0 : index
    %c0_54 = arith.constant 0 : index
    %c0_55 = arith.constant 0 : index
    %77 = vector.load %arg17[%c0_53, %c0_54, %c0_55] : memref<2x1x64xf32, #tpu.memory_space<vmem>>, vector<1x1x64xf32>
    %78 = vector.shape_cast %77 : vector<1x1x64xf32> to vector<1x64xf32>
    %79 = vector.broadcast %78 : vector<1x64xf32> to vector<32x64xf32>
    %80 = arith.addf %76, %79 : vector<32x64xf32>
    %81 = vector.extract_strided_slice %80 {offsets = [0, 0], sizes = [32, 32], strides = [1, 1]} : vector<32x64xf32> to vector<32x32xf32>
    %82 = vector.extract_strided_slice %80 {offsets = [0, 32], sizes = [32, 32], strides = [1, 1]} : vector<32x64xf32> to vector<32x32xf32>
    %c0_56 = arith.constant 0 : index
    %c0_57 = arith.constant 0 : index
    %c0_58 = arith.constant 0 : index
    %83 = vector.load %arg18[%c0_56, %c0_57, %c0_58] : memref<2x32x32xf32, #tpu.memory_space<vmem>>, vector<1x32x32xf32>
    %84 = vector.shape_cast %83 : vector<1x32x32xf32> to vector<32x32xf32>
    %85 = vector.extract_strided_slice %73 {offsets = [0, 0], sizes = [16, 8], strides = [1, 1]} : vector<16x32xf32> to vector<16x8xf32>
    %86 = vector.extract_strided_slice %81 {offsets = [0, 0], sizes = [32, 8], strides = [1, 1]} : vector<32x32xf32> to vector<32x8xf32>
    %cst_59 = arith.constant dense<0.000000e+00> : vector<16x32xf32>
    %87 = tpu.matmul %85, %86, %cst_59 {dimension_numbers = #tpu.dot_dimension_numbers<[1], [1], [0], [0], [0, 0, 1, 0], [], []>} : vector<16x8xf32>, vector<32x8xf32>, vector<16x32xf32> -> vector<16x32xf32>
    %cst_60 = arith.constant 0.353553385 : f32
    %88 = vector.broadcast %cst_60 : f32 to vector<16x32xf32>
    %89 = arith.mulf %87, %88 : vector<16x32xf32>
    %cst_61 = arith.constant dense<0xFF800000> : vector<16xf32>
    %90 = vector.multi_reduction <maximumf>, %89, %cst_61 [1] : vector<16x32xf32> to vector<16xf32>
    %91 = vector.shape_cast %90 : vector<16xf32> to vector<16x1xf32>
    %92 = vector.broadcast %91 : vector<16x1xf32> to vector<16x32xf32>
    %93 = arith.subf %89, %92 : vector<16x32xf32>
    %94 = math.exp %93 : vector<16x32xf32>
    %cst_62 = arith.constant dense<0.000000e+00> : vector<16xf32>
    %95 = vector.multi_reduction <add>, %94, %cst_62 [1] : vector<16x32xf32> to vector<16xf32>
    %96 = vector.shape_cast %95 : vector<16xf32> to vector<16x1xf32>
    %97 = tpu.reciprocal %96 {approx = true} : vector<16x1xf32> -> vector<16x1xf32>
    %98 = vector.broadcast %97 : vector<16x1xf32> to vector<16x32xf32>
    %99 = arith.mulf %94, %98 : vector<16x32xf32>
    %100 = vector.extract_strided_slice %82 {offsets = [0, 0], sizes = [32, 8], strides = [1, 1]} : vector<32x32xf32> to vector<32x8xf32>
    %cst_63 = arith.constant dense<0.000000e+00> : vector<16x8xf32>
    %101 = tpu.matmul %99, %100, %cst_63 {dimension_numbers = #tpu.dot_dimension_numbers<[1], [0], [0], [1], [0, 0, 1, 1], [], []>} : vector<16x32xf32>, vector<32x8xf32>, vector<16x8xf32> -> vector<16x8xf32>
    %102 = vector.extract_strided_slice %84 {offsets = [0, 0], sizes = [8, 32], strides = [1, 1]} : vector<32x32xf32> to vector<8x32xf32>
    %cst_64 = arith.constant dense<0.000000e+00> : vector<16x32xf32>
    %103 = tpu.matmul %101, %102, %cst_64 {dimension_numbers = #tpu.dot_dimension_numbers<[1], [0], [0], [1], [0, 0, 1, 1], [], []>} : vector<16x8xf32>, vector<8x32xf32>, vector<16x32xf32> -> vector<16x32xf32>
    %104 = vector.extract_strided_slice %73 {offsets = [0, 8], sizes = [16, 8], strides = [1, 1]} : vector<16x32xf32> to vector<16x8xf32>
    %105 = vector.extract_strided_slice %81 {offsets = [0, 8], sizes = [32, 8], strides = [1, 1]} : vector<32x32xf32> to vector<32x8xf32>
    %cst_65 = arith.constant dense<0.000000e+00> : vector<16x32xf32>
    %106 = tpu.matmul %104, %105, %cst_65 {dimension_numbers = #tpu.dot_dimension_numbers<[1], [1], [0], [0], [0, 0, 1, 0], [], []>} : vector<16x8xf32>, vector<32x8xf32>, vector<16x32xf32> -> vector<16x32xf32>
    %cst_66 = arith.constant 0.353553385 : f32
    %107 = vector.broadcast %cst_66 : f32 to vector<16x32xf32>
    %108 = arith.mulf %106, %107 : vector<16x32xf32>
    %cst_67 = arith.constant dense<0xFF800000> : vector<16xf32>
    %109 = vector.multi_reduction <maximumf>, %108, %cst_67 [1] : vector<16x32xf32> to vector<16xf32>
    %110 = vector.shape_cast %109 : vector<16xf32> to vector<16x1xf32>
    %111 = vector.broadcast %110 : vector<16x1xf32> to vector<16x32xf32>
    %112 = arith.subf %108, %111 : vector<16x32xf32>
    %113 = math.exp %112 : vector<16x32xf32>
    %cst_68 = arith.constant dense<0.000000e+00> : vector<16xf32>
    %114 = vector.multi_reduction <add>, %113, %cst_68 [1] : vector<16x32xf32> to vector<16xf32>
    %115 = vector.shape_cast %114 : vector<16xf32> to vector<16x1xf32>
    %116 = tpu.reciprocal %115 {approx = true} : vector<16x1xf32> -> vector<16x1xf32>
    %117 = vector.broadcast %116 : vector<16x1xf32> to vector<16x32xf32>
    %118 = arith.mulf %113, %117 : vector<16x32xf32>
    %119 = vector.extract_strided_slice %82 {offsets = [0, 8], sizes = [32, 8], strides = [1, 1]} : vector<32x32xf32> to vector<32x8xf32>
    %cst_69 = arith.constant dense<0.000000e+00> : vector<16x8xf32>
    %120 = tpu.matmul %118, %119, %cst_69 {dimension_numbers = #tpu.dot_dimension_numbers<[1], [0], [0], [1], [0, 0, 1, 1], [], []>} : vector<16x32xf32>, vector<32x8xf32>, vector<16x8xf32> -> vector<16x8xf32>
    %121 = vector.extract_strided_slice %84 {offsets = [8, 0], sizes = [8, 32], strides = [1, 1]} : vector<32x32xf32> to vector<8x32xf32>
    %cst_70 = arith.constant dense<0.000000e+00> : vector<16x32xf32>
    %122 = tpu.matmul %120, %121, %cst_70 {dimension_numbers = #tpu.dot_dimension_numbers<[1], [0], [0], [1], [0, 0, 1, 1], [], []>} : vector<16x8xf32>, vector<8x32xf32>, vector<16x32xf32> -> vector<16x32xf32>
    %123 = arith.addf %103, %122 : vector<16x32xf32>
    %124 = vector.extract_strided_slice %73 {offsets = [0, 16], sizes = [16, 8], strides = [1, 1]} : vector<16x32xf32> to vector<16x8xf32>
    %125 = vector.extract_strided_slice %81 {offsets = [0, 16], sizes = [32, 8], strides = [1, 1]} : vector<32x32xf32> to vector<32x8xf32>
    %cst_71 = arith.constant dense<0.000000e+00> : vector<16x32xf32>
    %126 = tpu.matmul %124, %125, %cst_71 {dimension_numbers = #tpu.dot_dimension_numbers<[1], [1], [0], [0], [0, 0, 1, 0], [], []>} : vector<16x8xf32>, vector<32x8xf32>, vector<16x32xf32> -> vector<16x32xf32>
    %cst_72 = arith.constant 0.353553385 : f32
    %127 = vector.broadcast %cst_72 : f32 to vector<16x32xf32>
    %128 = arith.mulf %126, %127 : vector<16x32xf32>
    %cst_73 = arith.constant dense<0xFF800000> : vector<16xf32>
    %129 = vector.multi_reduction <maximumf>, %128, %cst_73 [1] : vector<16x32xf32> to vector<16xf32>
    %130 = vector.shape_cast %129 : vector<16xf32> to vector<16x1xf32>
    %131 = vector.broadcast %130 : vector<16x1xf32> to vector<16x32xf32>
    %132 = arith.subf %128, %131 : vector<16x32xf32>
    %133 = math.exp %132 : vector<16x32xf32>
    %cst_74 = arith.constant dense<0.000000e+00> : vector<16xf32>
    %134 = vector.multi_reduction <add>, %133, %cst_74 [1] : vector<16x32xf32> to vector<16xf32>
    %135 = vector.shape_cast %134 : vector<16xf32> to vector<16x1xf32>
    %136 = tpu.reciprocal %135 {approx = true} : vector<16x1xf32> -> vector<16x1xf32>
    %137 = vector.broadcast %136 : vector<16x1xf32> to vector<16x32xf32>
    %138 = arith.mulf %133, %137 : vector<16x32xf32>
    %139 = vector.extract_strided_slice %82 {offsets = [0, 16], sizes = [32, 8], strides = [1, 1]} : vector<32x32xf32> to vector<32x8xf32>
    %cst_75 = arith.constant dense<0.000000e+00> : vector<16x8xf32>
    %140 = tpu.matmul %138, %139, %cst_75 {dimension_numbers = #tpu.dot_dimension_numbers<[1], [0], [0], [1], [0, 0, 1, 1], [], []>} : vector<16x32xf32>, vector<32x8xf32>, vector<16x8xf32> -> vector<16x8xf32>
    %141 = vector.extract_strided_slice %84 {offsets = [16, 0], sizes = [8, 32], strides = [1, 1]} : vector<32x32xf32> to vector<8x32xf32>
    %cst_76 = arith.constant dense<0.000000e+00> : vector<16x32xf32>
    %142 = tpu.matmul %140, %141, %cst_76 {dimension_numbers = #tpu.dot_dimension_numbers<[1], [0], [0], [1], [0, 0, 1, 1], [], []>} : vector<16x8xf32>, vector<8x32xf32>, vector<16x32xf32> -> vector<16x32xf32>
    %143 = arith.addf %123, %142 : vector<16x32xf32>
    %144 = vector.extract_strided_slice %73 {offsets = [0, 24], sizes = [16, 8], strides = [1, 1]} : vector<16x32xf32> to vector<16x8xf32>
    %145 = vector.extract_strided_slice %81 {offsets = [0, 24], sizes = [32, 8], strides = [1, 1]} : vector<32x32xf32> to vector<32x8xf32>
    %cst_77 = arith.constant dense<0.000000e+00> : vector<16x32xf32>
    %146 = tpu.matmul %144, %145, %cst_77 {dimension_numbers = #tpu.dot_dimension_numbers<[1], [1], [0], [0], [0, 0, 1, 0], [], []>} : vector<16x8xf32>, vector<32x8xf32>, vector<16x32xf32> -> vector<16x32xf32>
    %cst_78 = arith.constant 0.353553385 : f32
    %147 = vector.broadcast %cst_78 : f32 to vector<16x32xf32>
    %148 = arith.mulf %146, %147 : vector<16x32xf32>
    %cst_79 = arith.constant dense<0xFF800000> : vector<16xf32>
    %149 = vector.multi_reduction <maximumf>, %148, %cst_79 [1] : vector<16x32xf32> to vector<16xf32>
    %150 = vector.shape_cast %149 : vector<16xf32> to vector<16x1xf32>
    %151 = vector.broadcast %150 : vector<16x1xf32> to vector<16x32xf32>
    %152 = arith.subf %148, %151 : vector<16x32xf32>
    %153 = math.exp %152 : vector<16x32xf32>
    %cst_80 = arith.constant dense<0.000000e+00> : vector<16xf32>
    %154 = vector.multi_reduction <add>, %153, %cst_80 [1] : vector<16x32xf32> to vector<16xf32>
    %155 = vector.shape_cast %154 : vector<16xf32> to vector<16x1xf32>
    %156 = tpu.reciprocal %155 {approx = true} : vector<16x1xf32> -> vector<16x1xf32>
    %157 = vector.broadcast %156 : vector<16x1xf32> to vector<16x32xf32>
    %158 = arith.mulf %153, %157 : vector<16x32xf32>
    %159 = vector.extract_strided_slice %82 {offsets = [0, 24], sizes = [32, 8], strides = [1, 1]} : vector<32x32xf32> to vector<32x8xf32>
    %cst_81 = arith.constant dense<0.000000e+00> : vector<16x8xf32>
    %160 = tpu.matmul %158, %159, %cst_81 {dimension_numbers = #tpu.dot_dimension_numbers<[1], [0], [0], [1], [0, 0, 1, 1], [], []>} : vector<16x32xf32>, vector<32x8xf32>, vector<16x8xf32> -> vector<16x8xf32>
    %161 = vector.extract_strided_slice %84 {offsets = [24, 0], sizes = [8, 32], strides = [1, 1]} : vector<32x32xf32> to vector<8x32xf32>
    %cst_82 = arith.constant dense<0.000000e+00> : vector<16x32xf32>
    %162 = tpu.matmul %160, %161, %cst_82 {dimension_numbers = #tpu.dot_dimension_numbers<[1], [0], [0], [1], [0, 0, 1, 1], [], []>} : vector<16x8xf32>, vector<8x32xf32>, vector<16x32xf32> -> vector<16x32xf32>
    %163 = arith.addf %143, %162 : vector<16x32xf32>
    %164 = arith.addf %8, %163 : vector<16x32xf32>
    %c0_83 = arith.constant 0 : index
    %c0_84 = arith.constant 0 : index
    %c0_85 = arith.constant 0 : index
    %165 = vector.load %arg19[%c0_83, %c0_84, %c0_85] : memref<2x1x32xf32, #tpu.memory_space<vmem>>, vector<1x1x32xf32>
    %166 = vector.shape_cast %165 : vector<1x1x32xf32> to vector<1x32xf32>
    %167 = vector.broadcast %166 : vector<1x32xf32> to vector<16x32xf32>
    %168 = arith.addf %164, %167 : vector<16x32xf32>
    %cst_86 = arith.constant dense<0.000000e+00> : vector<16xf32>
    %169 = vector.multi_reduction <add>, %168, %cst_86 [1] : vector<16x32xf32> to vector<16xf32>
    %170 = vector.shape_cast %169 : vector<16xf32> to vector<16x1xf32>
    %cst_87 = arith.constant 3.200000e+01 : f32
    %171 = vector.broadcast %cst_87 : f32 to vector<16x1xf32>
    %172 = arith.divf %170, %171 : vector<16x1xf32>
    %173 = vector.broadcast %172 : vector<16x1xf32> to vector<16x32xf32>
    %174 = arith.subf %168, %173 : vector<16x32xf32>
    %175 = arith.mulf %174, %174 : vector<16x32xf32>
    %cst_88 = arith.constant dense<0.000000e+00> : vector<16xf32>
    %176 = vector.multi_reduction <add>, %175, %cst_88 [1] : vector<16x32xf32> to vector<16xf32>
    %177 = vector.shape_cast %176 : vector<16xf32> to vector<16x1xf32>
    %cst_89 = arith.constant 3.200000e+01 : f32
    %178 = vector.broadcast %cst_89 : f32 to vector<16x1xf32>
    %179 = arith.divf %177, %178 : vector<16x1xf32>
    %cst_90 = arith.constant 9.99999997E-7 : f32
    %180 = vector.broadcast %cst_90 : f32 to vector<16x1xf32>
    %181 = arith.addf %179, %180 : vector<16x1xf32>
    %182 = math.rsqrt %181 : vector<16x1xf32>
    %183 = vector.broadcast %182 : vector<16x1xf32> to vector<16x32xf32>
    %184 = arith.mulf %174, %183 : vector<16x32xf32>
    %cst_91 = arith.constant 1.000000e+00 : f32
    %185 = vector.broadcast %cst_91 : f32 to vector<1x32xf32>
    %186 = arith.addf %185, %46 : vector<1x32xf32>
    %187 = vector.broadcast %186 : vector<1x32xf32> to vector<16x32xf32>
    %188 = arith.mulf %184, %187 : vector<16x32xf32>
    %189 = vector.broadcast %45 : vector<1x32xf32> to vector<16x32xf32>
    %190 = arith.addf %188, %189 : vector<16x32xf32>
    %c0_92 = arith.constant 0 : index
    %c0_93 = arith.constant 0 : index
    %c0_94 = arith.constant 0 : index
    %191 = vector.load %arg20[%c0_92, %c0_93, %c0_94] : memref<2x32x96xf32, #tpu.memory_space<vmem>>, vector<1x32x96xf32>
    %192 = vector.shape_cast %191 : vector<1x32x96xf32> to vector<32x96xf32>
    %cst_95 = arith.constant dense<0.000000e+00> : vector<16x96xf32>
    %193 = tpu.matmul %190, %192, %cst_95 {dimension_numbers = #tpu.dot_dimension_numbers<[1], [0], [0], [1], [0, 0, 1, 1], [], []>} : vector<16x32xf32>, vector<32x96xf32>, vector<16x96xf32> -> vector<16x96xf32>
    %c0_96 = arith.constant 0 : index
    %c0_97 = arith.constant 0 : index
    %c0_98 = arith.constant 0 : index
    %194 = vector.load %arg21[%c0_96, %c0_97, %c0_98] : memref<2x1x96xf32, #tpu.memory_space<vmem>>, vector<1x1x96xf32>
    %195 = vector.shape_cast %194 : vector<1x1x96xf32> to vector<1x96xf32>
    %196 = vector.broadcast %195 : vector<1x96xf32> to vector<16x96xf32>
    %197 = arith.addf %193, %196 : vector<16x96xf32>
    %198 = vector.extract_strided_slice %197 {offsets = [0, 0], sizes = [16, 32], strides = [1, 1]} : vector<16x96xf32> to vector<16x32xf32>
    %199 = vector.extract_strided_slice %197 {offsets = [0, 32], sizes = [16, 32], strides = [1, 1]} : vector<16x96xf32> to vector<16x32xf32>
    %200 = vector.extract_strided_slice %197 {offsets = [0, 64], sizes = [16, 32], strides = [1, 1]} : vector<16x96xf32> to vector<16x32xf32>
    %c0_99 = arith.constant 0 : index
    %c0_100 = arith.constant 0 : index
    %c0_101 = arith.constant 0 : index
    %201 = vector.load %arg22[%c0_99, %c0_100, %c0_101] : memref<2x32x32xf32, #tpu.memory_space<vmem>>, vector<1x32x32xf32>
    %202 = vector.shape_cast %201 : vector<1x32x32xf32> to vector<32x32xf32>
    %203 = vector.extract_strided_slice %198 {offsets = [0, 0], sizes = [16, 8], strides = [1, 1]} : vector<16x32xf32> to vector<16x8xf32>
    %204 = vector.extract_strided_slice %199 {offsets = [0, 0], sizes = [16, 8], strides = [1, 1]} : vector<16x32xf32> to vector<16x8xf32>
    %cst_102 = arith.constant dense<0.000000e+00> : vector<16x16xf32>
    %205 = tpu.matmul %203, %204, %cst_102 {dimension_numbers = #tpu.dot_dimension_numbers<[1], [1], [0], [0], [0, 0, 1, 0], [], []>} : vector<16x8xf32>, vector<16x8xf32>, vector<16x16xf32> -> vector<16x16xf32>
    %cst_103 = arith.constant 0.353553385 : f32
    %206 = vector.broadcast %cst_103 : f32 to vector<16x16xf32>
    %207 = arith.mulf %205, %206 : vector<16x16xf32>
    %cst_104 = arith.constant dense<0xFF800000> : vector<16xf32>
    %208 = vector.multi_reduction <maximumf>, %207, %cst_104 [1] : vector<16x16xf32> to vector<16xf32>
    %209 = vector.shape_cast %208 : vector<16xf32> to vector<16x1xf32>
    %210 = vector.broadcast %209 : vector<16x1xf32> to vector<16x16xf32>
    %211 = arith.subf %207, %210 : vector<16x16xf32>
    %212 = math.exp %211 : vector<16x16xf32>
    %cst_105 = arith.constant dense<0.000000e+00> : vector<16xf32>
    %213 = vector.multi_reduction <add>, %212, %cst_105 [1] : vector<16x16xf32> to vector<16xf32>
    %214 = vector.shape_cast %213 : vector<16xf32> to vector<16x1xf32>
    %215 = tpu.reciprocal %214 {approx = true} : vector<16x1xf32> -> vector<16x1xf32>
    %216 = vector.broadcast %215 : vector<16x1xf32> to vector<16x16xf32>
    %217 = arith.mulf %212, %216 : vector<16x16xf32>
    %218 = vector.extract_strided_slice %200 {offsets = [0, 0], sizes = [16, 8], strides = [1, 1]} : vector<16x32xf32> to vector<16x8xf32>
    %cst_106 = arith.constant dense<0.000000e+00> : vector<16x8xf32>
    %219 = tpu.matmul %217, %218, %cst_106 {dimension_numbers = #tpu.dot_dimension_numbers<[1], [0], [0], [1], [0, 0, 1, 1], [], []>} : vector<16x16xf32>, vector<16x8xf32>, vector<16x8xf32> -> vector<16x8xf32>
    %220 = vector.extract_strided_slice %202 {offsets = [0, 0], sizes = [8, 32], strides = [1, 1]} : vector<32x32xf32> to vector<8x32xf32>
    %cst_107 = arith.constant dense<0.000000e+00> : vector<16x32xf32>
    %221 = tpu.matmul %219, %220, %cst_107 {dimension_numbers = #tpu.dot_dimension_numbers<[1], [0], [0], [1], [0, 0, 1, 1], [], []>} : vector<16x8xf32>, vector<8x32xf32>, vector<16x32xf32> -> vector<16x32xf32>
    %222 = vector.extract_strided_slice %198 {offsets = [0, 8], sizes = [16, 8], strides = [1, 1]} : vector<16x32xf32> to vector<16x8xf32>
    %223 = vector.extract_strided_slice %199 {offsets = [0, 8], sizes = [16, 8], strides = [1, 1]} : vector<16x32xf32> to vector<16x8xf32>
    %cst_108 = arith.constant dense<0.000000e+00> : vector<16x16xf32>
    %224 = tpu.matmul %222, %223, %cst_108 {dimension_numbers = #tpu.dot_dimension_numbers<[1], [1], [0], [0], [0, 0, 1, 0], [], []>} : vector<16x8xf32>, vector<16x8xf32>, vector<16x16xf32> -> vector<16x16xf32>
    %cst_109 = arith.constant 0.353553385 : f32
    %225 = vector.broadcast %cst_109 : f32 to vector<16x16xf32>
    %226 = arith.mulf %224, %225 : vector<16x16xf32>
    %cst_110 = arith.constant dense<0xFF800000> : vector<16xf32>
    %227 = vector.multi_reduction <maximumf>, %226, %cst_110 [1] : vector<16x16xf32> to vector<16xf32>
    %228 = vector.shape_cast %227 : vector<16xf32> to vector<16x1xf32>
    %229 = vector.broadcast %228 : vector<16x1xf32> to vector<16x16xf32>
    %230 = arith.subf %226, %229 : vector<16x16xf32>
    %231 = math.exp %230 : vector<16x16xf32>
    %cst_111 = arith.constant dense<0.000000e+00> : vector<16xf32>
    %232 = vector.multi_reduction <add>, %231, %cst_111 [1] : vector<16x16xf32> to vector<16xf32>
    %233 = vector.shape_cast %232 : vector<16xf32> to vector<16x1xf32>
    %234 = tpu.reciprocal %233 {approx = true} : vector<16x1xf32> -> vector<16x1xf32>
    %235 = vector.broadcast %234 : vector<16x1xf32> to vector<16x16xf32>
    %236 = arith.mulf %231, %235 : vector<16x16xf32>
    %237 = vector.extract_strided_slice %200 {offsets = [0, 8], sizes = [16, 8], strides = [1, 1]} : vector<16x32xf32> to vector<16x8xf32>
    %cst_112 = arith.constant dense<0.000000e+00> : vector<16x8xf32>
    %238 = tpu.matmul %236, %237, %cst_112 {dimension_numbers = #tpu.dot_dimension_numbers<[1], [0], [0], [1], [0, 0, 1, 1], [], []>} : vector<16x16xf32>, vector<16x8xf32>, vector<16x8xf32> -> vector<16x8xf32>
    %239 = vector.extract_strided_slice %202 {offsets = [8, 0], sizes = [8, 32], strides = [1, 1]} : vector<32x32xf32> to vector<8x32xf32>
    %cst_113 = arith.constant dense<0.000000e+00> : vector<16x32xf32>
    %240 = tpu.matmul %238, %239, %cst_113 {dimension_numbers = #tpu.dot_dimension_numbers<[1], [0], [0], [1], [0, 0, 1, 1], [], []>} : vector<16x8xf32>, vector<8x32xf32>, vector<16x32xf32> -> vector<16x32xf32>
    %241 = arith.addf %221, %240 : vector<16x32xf32>
    %242 = vector.extract_strided_slice %198 {offsets = [0, 16], sizes = [16, 8], strides = [1, 1]} : vector<16x32xf32> to vector<16x8xf32>
    %243 = vector.extract_strided_slice %199 {offsets = [0, 16], sizes = [16, 8], strides = [1, 1]} : vector<16x32xf32> to vector<16x8xf32>
    %cst_114 = arith.constant dense<0.000000e+00> : vector<16x16xf32>
    %244 = tpu.matmul %242, %243, %cst_114 {dimension_numbers = #tpu.dot_dimension_numbers<[1], [1], [0], [0], [0, 0, 1, 0], [], []>} : vector<16x8xf32>, vector<16x8xf32>, vector<16x16xf32> -> vector<16x16xf32>
    %cst_115 = arith.constant 0.353553385 : f32
    %245 = vector.broadcast %cst_115 : f32 to vector<16x16xf32>
    %246 = arith.mulf %244, %245 : vector<16x16xf32>
    %cst_116 = arith.constant dense<0xFF800000> : vector<16xf32>
    %247 = vector.multi_reduction <maximumf>, %246, %cst_116 [1] : vector<16x16xf32> to vector<16xf32>
    %248 = vector.shape_cast %247 : vector<16xf32> to vector<16x1xf32>
    %249 = vector.broadcast %248 : vector<16x1xf32> to vector<16x16xf32>
    %250 = arith.subf %246, %249 : vector<16x16xf32>
    %251 = math.exp %250 : vector<16x16xf32>
    %cst_117 = arith.constant dense<0.000000e+00> : vector<16xf32>
    %252 = vector.multi_reduction <add>, %251, %cst_117 [1] : vector<16x16xf32> to vector<16xf32>
    %253 = vector.shape_cast %252 : vector<16xf32> to vector<16x1xf32>
    %254 = tpu.reciprocal %253 {approx = true} : vector<16x1xf32> -> vector<16x1xf32>
    %255 = vector.broadcast %254 : vector<16x1xf32> to vector<16x16xf32>
    %256 = arith.mulf %251, %255 : vector<16x16xf32>
    %257 = vector.extract_strided_slice %200 {offsets = [0, 16], sizes = [16, 8], strides = [1, 1]} : vector<16x32xf32> to vector<16x8xf32>
    %cst_118 = arith.constant dense<0.000000e+00> : vector<16x8xf32>
    %258 = tpu.matmul %256, %257, %cst_118 {dimension_numbers = #tpu.dot_dimension_numbers<[1], [0], [0], [1], [0, 0, 1, 1], [], []>} : vector<16x16xf32>, vector<16x8xf32>, vector<16x8xf32> -> vector<16x8xf32>
    %259 = vector.extract_strided_slice %202 {offsets = [16, 0], sizes = [8, 32], strides = [1, 1]} : vector<32x32xf32> to vector<8x32xf32>
    %cst_119 = arith.constant dense<0.000000e+00> : vector<16x32xf32>
    %260 = tpu.matmul %258, %259, %cst_119 {dimension_numbers = #tpu.dot_dimension_numbers<[1], [0], [0], [1], [0, 0, 1, 1], [], []>} : vector<16x8xf32>, vector<8x32xf32>, vector<16x32xf32> -> vector<16x32xf32>
    %261 = arith.addf %241, %260 : vector<16x32xf32>
    %262 = vector.extract_strided_slice %198 {offsets = [0, 24], sizes = [16, 8], strides = [1, 1]} : vector<16x32xf32> to vector<16x8xf32>
    %263 = vector.extract_strided_slice %199 {offsets = [0, 24], sizes = [16, 8], strides = [1, 1]} : vector<16x32xf32> to vector<16x8xf32>
    %cst_120 = arith.constant dense<0.000000e+00> : vector<16x16xf32>
    %264 = tpu.matmul %262, %263, %cst_120 {dimension_numbers = #tpu.dot_dimension_numbers<[1], [1], [0], [0], [0, 0, 1, 0], [], []>} : vector<16x8xf32>, vector<16x8xf32>, vector<16x16xf32> -> vector<16x16xf32>
    %cst_121 = arith.constant 0.353553385 : f32
    %265 = vector.broadcast %cst_121 : f32 to vector<16x16xf32>
    %266 = arith.mulf %264, %265 : vector<16x16xf32>
    %cst_122 = arith.constant dense<0xFF800000> : vector<16xf32>
    %267 = vector.multi_reduction <maximumf>, %266, %cst_122 [1] : vector<16x16xf32> to vector<16xf32>
    %268 = vector.shape_cast %267 : vector<16xf32> to vector<16x1xf32>
    %269 = vector.broadcast %268 : vector<16x1xf32> to vector<16x16xf32>
    %270 = arith.subf %266, %269 : vector<16x16xf32>
    %271 = math.exp %270 : vector<16x16xf32>
    %cst_123 = arith.constant dense<0.000000e+00> : vector<16xf32>
    %272 = vector.multi_reduction <add>, %271, %cst_123 [1] : vector<16x16xf32> to vector<16xf32>
    %273 = vector.shape_cast %272 : vector<16xf32> to vector<16x1xf32>
    %274 = tpu.reciprocal %273 {approx = true} : vector<16x1xf32> -> vector<16x1xf32>
    %275 = vector.broadcast %274 : vector<16x1xf32> to vector<16x16xf32>
    %276 = arith.mulf %271, %275 : vector<16x16xf32>
    %277 = vector.extract_strided_slice %200 {offsets = [0, 24], sizes = [16, 8], strides = [1, 1]} : vector<16x32xf32> to vector<16x8xf32>
    %cst_124 = arith.constant dense<0.000000e+00> : vector<16x8xf32>
    %278 = tpu.matmul %276, %277, %cst_124 {dimension_numbers = #tpu.dot_dimension_numbers<[1], [0], [0], [1], [0, 0, 1, 1], [], []>} : vector<16x16xf32>, vector<16x8xf32>, vector<16x8xf32> -> vector<16x8xf32>
    %279 = vector.extract_strided_slice %202 {offsets = [24, 0], sizes = [8, 32], strides = [1, 1]} : vector<32x32xf32> to vector<8x32xf32>
    %cst_125 = arith.constant dense<0.000000e+00> : vector<16x32xf32>
    %280 = tpu.matmul %278, %279, %cst_125 {dimension_numbers = #tpu.dot_dimension_numbers<[1], [0], [0], [1], [0, 0, 1, 1], [], []>} : vector<16x8xf32>, vector<8x32xf32>, vector<16x32xf32> -> vector<16x32xf32>
    %281 = arith.addf %261, %280 : vector<16x32xf32>
    %c0_126 = arith.constant 0 : index
    %c0_127 = arith.constant 0 : index
    %c0_128 = arith.constant 0 : index
    %282 = vector.load %arg23[%c0_126, %c0_127, %c0_128] : memref<2x1x32xf32, #tpu.memory_space<vmem>>, vector<1x1x32xf32>
    %283 = vector.shape_cast %282 : vector<1x1x32xf32> to vector<1x32xf32>
    %284 = vector.broadcast %283 : vector<1x32xf32> to vector<16x32xf32>
    %285 = arith.addf %281, %284 : vector<16x32xf32>
    %286 = vector.broadcast %47 : vector<1x32xf32> to vector<16x32xf32>
    %287 = arith.mulf %286, %285 : vector<16x32xf32>
    %288 = arith.addf %168, %287 : vector<16x32xf32>
    %cst_129 = arith.constant dense<0.000000e+00> : vector<16xf32>
    %289 = vector.multi_reduction <add>, %288, %cst_129 [1] : vector<16x32xf32> to vector<16xf32>
    %290 = vector.shape_cast %289 : vector<16xf32> to vector<16x1xf32>
    %cst_130 = arith.constant 3.200000e+01 : f32
    %291 = vector.broadcast %cst_130 : f32 to vector<16x1xf32>
    %292 = arith.divf %290, %291 : vector<16x1xf32>
    %293 = vector.broadcast %292 : vector<16x1xf32> to vector<16x32xf32>
    %294 = arith.subf %288, %293 : vector<16x32xf32>
    %295 = arith.mulf %294, %294 : vector<16x32xf32>
    %cst_131 = arith.constant dense<0.000000e+00> : vector<16xf32>
    %296 = vector.multi_reduction <add>, %295, %cst_131 [1] : vector<16x32xf32> to vector<16xf32>
    %297 = vector.shape_cast %296 : vector<16xf32> to vector<16x1xf32>
    %cst_132 = arith.constant 3.200000e+01 : f32
    %298 = vector.broadcast %cst_132 : f32 to vector<16x1xf32>
    %299 = arith.divf %297, %298 : vector<16x1xf32>
    %cst_133 = arith.constant 9.99999997E-7 : f32
    %300 = vector.broadcast %cst_133 : f32 to vector<16x1xf32>
    %301 = arith.addf %299, %300 : vector<16x1xf32>
    %302 = math.rsqrt %301 : vector<16x1xf32>
    %303 = vector.broadcast %302 : vector<16x1xf32> to vector<16x32xf32>
    %304 = arith.mulf %294, %303 : vector<16x32xf32>
    %cst_134 = arith.constant 1.000000e+00 : f32
    %305 = vector.broadcast %cst_134 : f32 to vector<1x32xf32>
    %306 = arith.addf %305, %49 : vector<1x32xf32>
    %307 = vector.broadcast %306 : vector<1x32xf32> to vector<16x32xf32>
    %308 = arith.mulf %304, %307 : vector<16x32xf32>
    %309 = vector.broadcast %48 : vector<1x32xf32> to vector<16x32xf32>
    %310 = arith.addf %308, %309 : vector<16x32xf32>
    %c0_135 = arith.constant 0 : index
    %c0_136 = arith.constant 0 : index
    %c0_137 = arith.constant 0 : index
    %311 = vector.load %arg24[%c0_135, %c0_136, %c0_137] : memref<2x32x128xf32, #tpu.memory_space<vmem>>, vector<1x32x128xf32>
    %312 = vector.shape_cast %311 : vector<1x32x128xf32> to vector<32x128xf32>
    %cst_138 = arith.constant dense<0.000000e+00> : vector<16x128xf32>
    %313 = tpu.matmul %310, %312, %cst_138 {dimension_numbers = #tpu.dot_dimension_numbers<[1], [0], [0], [1], [0, 0, 1, 1], [], []>} : vector<16x32xf32>, vector<32x128xf32>, vector<16x128xf32> -> vector<16x128xf32>
    %c0_139 = arith.constant 0 : index
    %c0_140 = arith.constant 0 : index
    %c0_141 = arith.constant 0 : index
    %314 = vector.load %arg25[%c0_139, %c0_140, %c0_141] : memref<2x1x128xf32, #tpu.memory_space<vmem>>, vector<1x1x128xf32>
    %315 = vector.shape_cast %314 : vector<1x1x128xf32> to vector<1x128xf32>
    %316 = vector.broadcast %315 : vector<1x128xf32> to vector<16x128xf32>
    %317 = arith.addf %313, %316 : vector<16x128xf32>
    %cst_142 = arith.constant 5.000000e-01 : f32
    %318 = vector.broadcast %cst_142 : f32 to vector<16x128xf32>
    %319 = arith.mulf %318, %317 : vector<16x128xf32>
    %cst_143 = arith.constant 4.471500e-02 : f32
    %320 = vector.broadcast %cst_143 : f32 to vector<16x128xf32>
    %321 = arith.mulf %320, %317 : vector<16x128xf32>
    %322 = arith.mulf %321, %317 : vector<16x128xf32>
    %323 = arith.mulf %322, %317 : vector<16x128xf32>
    %324 = arith.addf %317, %323 : vector<16x128xf32>
    %cst_144 = arith.constant 0.797884583 : f32
    %325 = vector.broadcast %cst_144 : f32 to vector<16x128xf32>
    %326 = arith.mulf %325, %324 : vector<16x128xf32>
    %327 = math.tanh %326 : vector<16x128xf32>
    %cst_145 = arith.constant 1.000000e+00 : f32
    %328 = vector.broadcast %cst_145 : f32 to vector<16x128xf32>
    %329 = arith.addf %328, %327 : vector<16x128xf32>
    %330 = arith.mulf %319, %329 : vector<16x128xf32>
    %c0_146 = arith.constant 0 : index
    %c0_147 = arith.constant 0 : index
    %c0_148 = arith.constant 0 : index
    %331 = vector.load %arg26[%c0_146, %c0_147, %c0_148] : memref<2x128x32xf32, #tpu.memory_space<vmem>>, vector<1x128x32xf32>
    %332 = vector.shape_cast %331 : vector<1x128x32xf32> to vector<128x32xf32>
    %cst_149 = arith.constant dense<0.000000e+00> : vector<16x32xf32>
    %333 = tpu.matmul %330, %332, %cst_149 {dimension_numbers = #tpu.dot_dimension_numbers<[1], [0], [0], [1], [0, 0, 1, 1], [], []>} : vector<16x128xf32>, vector<128x32xf32>, vector<16x32xf32> -> vector<16x32xf32>
    %c0_150 = arith.constant 0 : index
    %c0_151 = arith.constant 0 : index
    %c0_152 = arith.constant 0 : index
    %334 = vector.load %arg27[%c0_150, %c0_151, %c0_152] : memref<2x1x32xf32, #tpu.memory_space<vmem>>, vector<1x1x32xf32>
    %335 = vector.shape_cast %334 : vector<1x1x32xf32> to vector<1x32xf32>
    %336 = vector.broadcast %335 : vector<1x32xf32> to vector<16x32xf32>
    %337 = arith.addf %333, %336 : vector<16x32xf32>
    %338 = vector.broadcast %50 : vector<1x32xf32> to vector<16x32xf32>
    %339 = arith.mulf %338, %337 : vector<16x32xf32>
    %340 = arith.addf %288, %339 : vector<16x32xf32>
    %c1 = arith.constant 1 : index
    %c0_153 = arith.constant 0 : index
    %c0_154 = arith.constant 0 : index
    %341 = vector.load %arg12[%c1, %c0_153, %c0_154] : memref<2x32x192xf32, #tpu.memory_space<vmem>>, vector<1x32x192xf32>
    %342 = vector.shape_cast %341 : vector<1x32x192xf32> to vector<32x192xf32>
    %cst_155 = arith.constant dense<0.000000e+00> : vector<1x192xf32>
    %343 = tpu.matmul %38, %342, %cst_155 {dimension_numbers = #tpu.dot_dimension_numbers<[1], [0], [0], [1], [0, 0, 1, 1], [], []>} : vector<1x32xf32>, vector<32x192xf32>, vector<1x192xf32> -> vector<1x192xf32>
    %c1_156 = arith.constant 1 : index
    %c0_157 = arith.constant 0 : index
    %c0_158 = arith.constant 0 : index
    %344 = vector.load %arg13[%c1_156, %c0_157, %c0_158] : memref<2x1x192xf32, #tpu.memory_space<vmem>>, vector<1x1x192xf32>
    %345 = vector.shape_cast %344 : vector<1x1x192xf32> to vector<1x192xf32>
    %346 = arith.addf %343, %345 : vector<1x192xf32>
    %347 = vector.extract_strided_slice %346 {offsets = [0, 0], sizes = [1, 32], strides = [1, 1]} : vector<1x192xf32> to vector<1x32xf32>
    %348 = vector.extract_strided_slice %346 {offsets = [0, 32], sizes = [1, 32], strides = [1, 1]} : vector<1x192xf32> to vector<1x32xf32>
    %349 = vector.extract_strided_slice %346 {offsets = [0, 64], sizes = [1, 32], strides = [1, 1]} : vector<1x192xf32> to vector<1x32xf32>
    %350 = vector.extract_strided_slice %346 {offsets = [0, 96], sizes = [1, 32], strides = [1, 1]} : vector<1x192xf32> to vector<1x32xf32>
    %351 = vector.extract_strided_slice %346 {offsets = [0, 128], sizes = [1, 32], strides = [1, 1]} : vector<1x192xf32> to vector<1x32xf32>
    %352 = vector.extract_strided_slice %346 {offsets = [0, 160], sizes = [1, 32], strides = [1, 1]} : vector<1x192xf32> to vector<1x32xf32>
    %cst_159 = arith.constant dense<0.000000e+00> : vector<16xf32>
    %353 = vector.multi_reduction <add>, %340, %cst_159 [1] : vector<16x32xf32> to vector<16xf32>
    %354 = vector.shape_cast %353 : vector<16xf32> to vector<16x1xf32>
    %cst_160 = arith.constant 3.200000e+01 : f32
    %355 = vector.broadcast %cst_160 : f32 to vector<16x1xf32>
    %356 = arith.divf %354, %355 : vector<16x1xf32>
    %357 = vector.broadcast %356 : vector<16x1xf32> to vector<16x32xf32>
    %358 = arith.subf %340, %357 : vector<16x32xf32>
    %359 = arith.mulf %358, %358 : vector<16x32xf32>
    %cst_161 = arith.constant dense<0.000000e+00> : vector<16xf32>
    %360 = vector.multi_reduction <add>, %359, %cst_161 [1] : vector<16x32xf32> to vector<16xf32>
    %361 = vector.shape_cast %360 : vector<16xf32> to vector<16x1xf32>
    %cst_162 = arith.constant 3.200000e+01 : f32
    %362 = vector.broadcast %cst_162 : f32 to vector<16x1xf32>
    %363 = arith.divf %361, %362 : vector<16x1xf32>
    %cst_163 = arith.constant 9.99999997E-7 : f32
    %364 = vector.broadcast %cst_163 : f32 to vector<16x1xf32>
    %365 = arith.addf %363, %364 : vector<16x1xf32>
    %366 = math.rsqrt %365 : vector<16x1xf32>
    %367 = vector.broadcast %366 : vector<16x1xf32> to vector<16x32xf32>
    %368 = arith.mulf %358, %367 : vector<16x32xf32>
    %c1_164 = arith.constant 1 : index
    %c0_165 = arith.constant 0 : index
    %c0_166 = arith.constant 0 : index
    %369 = vector.load %arg14[%c1_164, %c0_165, %c0_166] : memref<2x32x32xf32, #tpu.memory_space<vmem>>, vector<1x32x32xf32>
    %370 = vector.shape_cast %369 : vector<1x32x32xf32> to vector<32x32xf32>
    %cst_167 = arith.constant dense<0.000000e+00> : vector<16x32xf32>
    %371 = tpu.matmul %368, %370, %cst_167 {dimension_numbers = #tpu.dot_dimension_numbers<[1], [0], [0], [1], [0, 0, 1, 1], [], []>} : vector<16x32xf32>, vector<32x32xf32>, vector<16x32xf32> -> vector<16x32xf32>
    %c1_168 = arith.constant 1 : index
    %c0_169 = arith.constant 0 : index
    %c0_170 = arith.constant 0 : index
    %372 = vector.load %arg15[%c1_168, %c0_169, %c0_170] : memref<2x1x32xf32, #tpu.memory_space<vmem>>, vector<1x1x32xf32>
    %373 = vector.shape_cast %372 : vector<1x1x32xf32> to vector<1x32xf32>
    %374 = vector.broadcast %373 : vector<1x32xf32> to vector<16x32xf32>
    %375 = arith.addf %371, %374 : vector<16x32xf32>
    %c1_171 = arith.constant 1 : index
    %c0_172 = arith.constant 0 : index
    %c0_173 = arith.constant 0 : index
    %376 = vector.load %arg16[%c1_171, %c0_172, %c0_173] : memref<2x32x64xf32, #tpu.memory_space<vmem>>, vector<1x32x64xf32>
    %377 = vector.shape_cast %376 : vector<1x32x64xf32> to vector<32x64xf32>
    %cst_174 = arith.constant dense<0.000000e+00> : vector<32x64xf32>
    %378 = tpu.matmul %16, %377, %cst_174 {dimension_numbers = #tpu.dot_dimension_numbers<[1], [0], [0], [1], [0, 0, 1, 1], [], []>} : vector<32x32xf32>, vector<32x64xf32>, vector<32x64xf32> -> vector<32x64xf32>
    %c1_175 = arith.constant 1 : index
    %c0_176 = arith.constant 0 : index
    %c0_177 = arith.constant 0 : index
    %379 = vector.load %arg17[%c1_175, %c0_176, %c0_177] : memref<2x1x64xf32, #tpu.memory_space<vmem>>, vector<1x1x64xf32>
    %380 = vector.shape_cast %379 : vector<1x1x64xf32> to vector<1x64xf32>
    %381 = vector.broadcast %380 : vector<1x64xf32> to vector<32x64xf32>
    %382 = arith.addf %378, %381 : vector<32x64xf32>
    %383 = vector.extract_strided_slice %382 {offsets = [0, 0], sizes = [32, 32], strides = [1, 1]} : vector<32x64xf32> to vector<32x32xf32>
    %384 = vector.extract_strided_slice %382 {offsets = [0, 32], sizes = [32, 32], strides = [1, 1]} : vector<32x64xf32> to vector<32x32xf32>
    %c1_178 = arith.constant 1 : index
    %c0_179 = arith.constant 0 : index
    %c0_180 = arith.constant 0 : index
    %385 = vector.load %arg18[%c1_178, %c0_179, %c0_180] : memref<2x32x32xf32, #tpu.memory_space<vmem>>, vector<1x32x32xf32>
    %386 = vector.shape_cast %385 : vector<1x32x32xf32> to vector<32x32xf32>
    %387 = vector.extract_strided_slice %375 {offsets = [0, 0], sizes = [16, 8], strides = [1, 1]} : vector<16x32xf32> to vector<16x8xf32>
    %388 = vector.extract_strided_slice %383 {offsets = [0, 0], sizes = [32, 8], strides = [1, 1]} : vector<32x32xf32> to vector<32x8xf32>
    %cst_181 = arith.constant dense<0.000000e+00> : vector<16x32xf32>
    %389 = tpu.matmul %387, %388, %cst_181 {dimension_numbers = #tpu.dot_dimension_numbers<[1], [1], [0], [0], [0, 0, 1, 0], [], []>} : vector<16x8xf32>, vector<32x8xf32>, vector<16x32xf32> -> vector<16x32xf32>
    %cst_182 = arith.constant 0.353553385 : f32
    %390 = vector.broadcast %cst_182 : f32 to vector<16x32xf32>
    %391 = arith.mulf %389, %390 : vector<16x32xf32>
    %cst_183 = arith.constant dense<0xFF800000> : vector<16xf32>
    %392 = vector.multi_reduction <maximumf>, %391, %cst_183 [1] : vector<16x32xf32> to vector<16xf32>
    %393 = vector.shape_cast %392 : vector<16xf32> to vector<16x1xf32>
    %394 = vector.broadcast %393 : vector<16x1xf32> to vector<16x32xf32>
    %395 = arith.subf %391, %394 : vector<16x32xf32>
    %396 = math.exp %395 : vector<16x32xf32>
    %cst_184 = arith.constant dense<0.000000e+00> : vector<16xf32>
    %397 = vector.multi_reduction <add>, %396, %cst_184 [1] : vector<16x32xf32> to vector<16xf32>
    %398 = vector.shape_cast %397 : vector<16xf32> to vector<16x1xf32>
    %399 = tpu.reciprocal %398 {approx = true} : vector<16x1xf32> -> vector<16x1xf32>
    %400 = vector.broadcast %399 : vector<16x1xf32> to vector<16x32xf32>
    %401 = arith.mulf %396, %400 : vector<16x32xf32>
    %402 = vector.extract_strided_slice %384 {offsets = [0, 0], sizes = [32, 8], strides = [1, 1]} : vector<32x32xf32> to vector<32x8xf32>
    %cst_185 = arith.constant dense<0.000000e+00> : vector<16x8xf32>
    %403 = tpu.matmul %401, %402, %cst_185 {dimension_numbers = #tpu.dot_dimension_numbers<[1], [0], [0], [1], [0, 0, 1, 1], [], []>} : vector<16x32xf32>, vector<32x8xf32>, vector<16x8xf32> -> vector<16x8xf32>
    %404 = vector.extract_strided_slice %386 {offsets = [0, 0], sizes = [8, 32], strides = [1, 1]} : vector<32x32xf32> to vector<8x32xf32>
    %cst_186 = arith.constant dense<0.000000e+00> : vector<16x32xf32>
    %405 = tpu.matmul %403, %404, %cst_186 {dimension_numbers = #tpu.dot_dimension_numbers<[1], [0], [0], [1], [0, 0, 1, 1], [], []>} : vector<16x8xf32>, vector<8x32xf32>, vector<16x32xf32> -> vector<16x32xf32>
    %406 = vector.extract_strided_slice %375 {offsets = [0, 8], sizes = [16, 8], strides = [1, 1]} : vector<16x32xf32> to vector<16x8xf32>
    %407 = vector.extract_strided_slice %383 {offsets = [0, 8], sizes = [32, 8], strides = [1, 1]} : vector<32x32xf32> to vector<32x8xf32>
    %cst_187 = arith.constant dense<0.000000e+00> : vector<16x32xf32>
    %408 = tpu.matmul %406, %407, %cst_187 {dimension_numbers = #tpu.dot_dimension_numbers<[1], [1], [0], [0], [0, 0, 1, 0], [], []>} : vector<16x8xf32>, vector<32x8xf32>, vector<16x32xf32> -> vector<16x32xf32>
    %cst_188 = arith.constant 0.353553385 : f32
    %409 = vector.broadcast %cst_188 : f32 to vector<16x32xf32>
    %410 = arith.mulf %408, %409 : vector<16x32xf32>
    %cst_189 = arith.constant dense<0xFF800000> : vector<16xf32>
    %411 = vector.multi_reduction <maximumf>, %410, %cst_189 [1] : vector<16x32xf32> to vector<16xf32>
    %412 = vector.shape_cast %411 : vector<16xf32> to vector<16x1xf32>
    %413 = vector.broadcast %412 : vector<16x1xf32> to vector<16x32xf32>
    %414 = arith.subf %410, %413 : vector<16x32xf32>
    %415 = math.exp %414 : vector<16x32xf32>
    %cst_190 = arith.constant dense<0.000000e+00> : vector<16xf32>
    %416 = vector.multi_reduction <add>, %415, %cst_190 [1] : vector<16x32xf32> to vector<16xf32>
    %417 = vector.shape_cast %416 : vector<16xf32> to vector<16x1xf32>
    %418 = tpu.reciprocal %417 {approx = true} : vector<16x1xf32> -> vector<16x1xf32>
    %419 = vector.broadcast %418 : vector<16x1xf32> to vector<16x32xf32>
    %420 = arith.mulf %415, %419 : vector<16x32xf32>
    %421 = vector.extract_strided_slice %384 {offsets = [0, 8], sizes = [32, 8], strides = [1, 1]} : vector<32x32xf32> to vector<32x8xf32>
    %cst_191 = arith.constant dense<0.000000e+00> : vector<16x8xf32>
    %422 = tpu.matmul %420, %421, %cst_191 {dimension_numbers = #tpu.dot_dimension_numbers<[1], [0], [0], [1], [0, 0, 1, 1], [], []>} : vector<16x32xf32>, vector<32x8xf32>, vector<16x8xf32> -> vector<16x8xf32>
    %423 = vector.extract_strided_slice %386 {offsets = [8, 0], sizes = [8, 32], strides = [1, 1]} : vector<32x32xf32> to vector<8x32xf32>
    %cst_192 = arith.constant dense<0.000000e+00> : vector<16x32xf32>
    %424 = tpu.matmul %422, %423, %cst_192 {dimension_numbers = #tpu.dot_dimension_numbers<[1], [0], [0], [1], [0, 0, 1, 1], [], []>} : vector<16x8xf32>, vector<8x32xf32>, vector<16x32xf32> -> vector<16x32xf32>
    %425 = arith.addf %405, %424 : vector<16x32xf32>
    %426 = vector.extract_strided_slice %375 {offsets = [0, 16], sizes = [16, 8], strides = [1, 1]} : vector<16x32xf32> to vector<16x8xf32>
    %427 = vector.extract_strided_slice %383 {offsets = [0, 16], sizes = [32, 8], strides = [1, 1]} : vector<32x32xf32> to vector<32x8xf32>
    %cst_193 = arith.constant dense<0.000000e+00> : vector<16x32xf32>
    %428 = tpu.matmul %426, %427, %cst_193 {dimension_numbers = #tpu.dot_dimension_numbers<[1], [1], [0], [0], [0, 0, 1, 0], [], []>} : vector<16x8xf32>, vector<32x8xf32>, vector<16x32xf32> -> vector<16x32xf32>
    %cst_194 = arith.constant 0.353553385 : f32
    %429 = vector.broadcast %cst_194 : f32 to vector<16x32xf32>
    %430 = arith.mulf %428, %429 : vector<16x32xf32>
    %cst_195 = arith.constant dense<0xFF800000> : vector<16xf32>
    %431 = vector.multi_reduction <maximumf>, %430, %cst_195 [1] : vector<16x32xf32> to vector<16xf32>
    %432 = vector.shape_cast %431 : vector<16xf32> to vector<16x1xf32>
    %433 = vector.broadcast %432 : vector<16x1xf32> to vector<16x32xf32>
    %434 = arith.subf %430, %433 : vector<16x32xf32>
    %435 = math.exp %434 : vector<16x32xf32>
    %cst_196 = arith.constant dense<0.000000e+00> : vector<16xf32>
    %436 = vector.multi_reduction <add>, %435, %cst_196 [1] : vector<16x32xf32> to vector<16xf32>
    %437 = vector.shape_cast %436 : vector<16xf32> to vector<16x1xf32>
    %438 = tpu.reciprocal %437 {approx = true} : vector<16x1xf32> -> vector<16x1xf32>
    %439 = vector.broadcast %438 : vector<16x1xf32> to vector<16x32xf32>
    %440 = arith.mulf %435, %439 : vector<16x32xf32>
    %441 = vector.extract_strided_slice %384 {offsets = [0, 16], sizes = [32, 8], strides = [1, 1]} : vector<32x32xf32> to vector<32x8xf32>
    %cst_197 = arith.constant dense<0.000000e+00> : vector<16x8xf32>
    %442 = tpu.matmul %440, %441, %cst_197 {dimension_numbers = #tpu.dot_dimension_numbers<[1], [0], [0], [1], [0, 0, 1, 1], [], []>} : vector<16x32xf32>, vector<32x8xf32>, vector<16x8xf32> -> vector<16x8xf32>
    %443 = vector.extract_strided_slice %386 {offsets = [16, 0], sizes = [8, 32], strides = [1, 1]} : vector<32x32xf32> to vector<8x32xf32>
    %cst_198 = arith.constant dense<0.000000e+00> : vector<16x32xf32>
    %444 = tpu.matmul %442, %443, %cst_198 {dimension_numbers = #tpu.dot_dimension_numbers<[1], [0], [0], [1], [0, 0, 1, 1], [], []>} : vector<16x8xf32>, vector<8x32xf32>, vector<16x32xf32> -> vector<16x32xf32>
    %445 = arith.addf %425, %444 : vector<16x32xf32>
    %446 = vector.extract_strided_slice %375 {offsets = [0, 24], sizes = [16, 8], strides = [1, 1]} : vector<16x32xf32> to vector<16x8xf32>
    %447 = vector.extract_strided_slice %383 {offsets = [0, 24], sizes = [32, 8], strides = [1, 1]} : vector<32x32xf32> to vector<32x8xf32>
    %cst_199 = arith.constant dense<0.000000e+00> : vector<16x32xf32>
    %448 = tpu.matmul %446, %447, %cst_199 {dimension_numbers = #tpu.dot_dimension_numbers<[1], [1], [0], [0], [0, 0, 1, 0], [], []>} : vector<16x8xf32>, vector<32x8xf32>, vector<16x32xf32> -> vector<16x32xf32>
    %cst_200 = arith.constant 0.353553385 : f32
    %449 = vector.broadcast %cst_200 : f32 to vector<16x32xf32>
    %450 = arith.mulf %448, %449 : vector<16x32xf32>
    %cst_201 = arith.constant dense<0xFF800000> : vector<16xf32>
    %451 = vector.multi_reduction <maximumf>, %450, %cst_201 [1] : vector<16x32xf32> to vector<16xf32>
    %452 = vector.shape_cast %451 : vector<16xf32> to vector<16x1xf32>
    %453 = vector.broadcast %452 : vector<16x1xf32> to vector<16x32xf32>
    %454 = arith.subf %450, %453 : vector<16x32xf32>
    %455 = math.exp %454 : vector<16x32xf32>
    %cst_202 = arith.constant dense<0.000000e+00> : vector<16xf32>
    %456 = vector.multi_reduction <add>, %455, %cst_202 [1] : vector<16x32xf32> to vector<16xf32>
    %457 = vector.shape_cast %456 : vector<16xf32> to vector<16x1xf32>
    %458 = tpu.reciprocal %457 {approx = true} : vector<16x1xf32> -> vector<16x1xf32>
    %459 = vector.broadcast %458 : vector<16x1xf32> to vector<16x32xf32>
    %460 = arith.mulf %455, %459 : vector<16x32xf32>
    %461 = vector.extract_strided_slice %384 {offsets = [0, 24], sizes = [32, 8], strides = [1, 1]} : vector<32x32xf32> to vector<32x8xf32>
    %cst_203 = arith.constant dense<0.000000e+00> : vector<16x8xf32>
    %462 = tpu.matmul %460, %461, %cst_203 {dimension_numbers = #tpu.dot_dimension_numbers<[1], [0], [0], [1], [0, 0, 1, 1], [], []>} : vector<16x32xf32>, vector<32x8xf32>, vector<16x8xf32> -> vector<16x8xf32>
    %463 = vector.extract_strided_slice %386 {offsets = [24, 0], sizes = [8, 32], strides = [1, 1]} : vector<32x32xf32> to vector<8x32xf32>
    %cst_204 = arith.constant dense<0.000000e+00> : vector<16x32xf32>
    %464 = tpu.matmul %462, %463, %cst_204 {dimension_numbers = #tpu.dot_dimension_numbers<[1], [0], [0], [1], [0, 0, 1, 1], [], []>} : vector<16x8xf32>, vector<8x32xf32>, vector<16x32xf32> -> vector<16x32xf32>
    %465 = arith.addf %445, %464 : vector<16x32xf32>
    %466 = arith.addf %340, %465 : vector<16x32xf32>
    %c1_205 = arith.constant 1 : index
    %c0_206 = arith.constant 0 : index
    %c0_207 = arith.constant 0 : index
    %467 = vector.load %arg19[%c1_205, %c0_206, %c0_207] : memref<2x1x32xf32, #tpu.memory_space<vmem>>, vector<1x1x32xf32>
    %468 = vector.shape_cast %467 : vector<1x1x32xf32> to vector<1x32xf32>
    %469 = vector.broadcast %468 : vector<1x32xf32> to vector<16x32xf32>
    %470 = arith.addf %466, %469 : vector<16x32xf32>
    %cst_208 = arith.constant dense<0.000000e+00> : vector<16xf32>
    %471 = vector.multi_reduction <add>, %470, %cst_208 [1] : vector<16x32xf32> to vector<16xf32>
    %472 = vector.shape_cast %471 : vector<16xf32> to vector<16x1xf32>
    %cst_209 = arith.constant 3.200000e+01 : f32
    %473 = vector.broadcast %cst_209 : f32 to vector<16x1xf32>
    %474 = arith.divf %472, %473 : vector<16x1xf32>
    %475 = vector.broadcast %474 : vector<16x1xf32> to vector<16x32xf32>
    %476 = arith.subf %470, %475 : vector<16x32xf32>
    %477 = arith.mulf %476, %476 : vector<16x32xf32>
    %cst_210 = arith.constant dense<0.000000e+00> : vector<16xf32>
    %478 = vector.multi_reduction <add>, %477, %cst_210 [1] : vector<16x32xf32> to vector<16xf32>
    %479 = vector.shape_cast %478 : vector<16xf32> to vector<16x1xf32>
    %cst_211 = arith.constant 3.200000e+01 : f32
    %480 = vector.broadcast %cst_211 : f32 to vector<16x1xf32>
    %481 = arith.divf %479, %480 : vector<16x1xf32>
    %cst_212 = arith.constant 9.99999997E-7 : f32
    %482 = vector.broadcast %cst_212 : f32 to vector<16x1xf32>
    %483 = arith.addf %481, %482 : vector<16x1xf32>
    %484 = math.rsqrt %483 : vector<16x1xf32>
    %485 = vector.broadcast %484 : vector<16x1xf32> to vector<16x32xf32>
    %486 = arith.mulf %476, %485 : vector<16x32xf32>
    %cst_213 = arith.constant 1.000000e+00 : f32
    %487 = vector.broadcast %cst_213 : f32 to vector<1x32xf32>
    %488 = arith.addf %487, %348 : vector<1x32xf32>
    %489 = vector.broadcast %488 : vector<1x32xf32> to vector<16x32xf32>
    %490 = arith.mulf %486, %489 : vector<16x32xf32>
    %491 = vector.broadcast %347 : vector<1x32xf32> to vector<16x32xf32>
    %492 = arith.addf %490, %491 : vector<16x32xf32>
    %c1_214 = arith.constant 1 : index
    %c0_215 = arith.constant 0 : index
    %c0_216 = arith.constant 0 : index
    %493 = vector.load %arg20[%c1_214, %c0_215, %c0_216] : memref<2x32x96xf32, #tpu.memory_space<vmem>>, vector<1x32x96xf32>
    %494 = vector.shape_cast %493 : vector<1x32x96xf32> to vector<32x96xf32>
    %cst_217 = arith.constant dense<0.000000e+00> : vector<16x96xf32>
    %495 = tpu.matmul %492, %494, %cst_217 {dimension_numbers = #tpu.dot_dimension_numbers<[1], [0], [0], [1], [0, 0, 1, 1], [], []>} : vector<16x32xf32>, vector<32x96xf32>, vector<16x96xf32> -> vector<16x96xf32>
    %c1_218 = arith.constant 1 : index
    %c0_219 = arith.constant 0 : index
    %c0_220 = arith.constant 0 : index
    %496 = vector.load %arg21[%c1_218, %c0_219, %c0_220] : memref<2x1x96xf32, #tpu.memory_space<vmem>>, vector<1x1x96xf32>
    %497 = vector.shape_cast %496 : vector<1x1x96xf32> to vector<1x96xf32>
    %498 = vector.broadcast %497 : vector<1x96xf32> to vector<16x96xf32>
    %499 = arith.addf %495, %498 : vector<16x96xf32>
    %500 = vector.extract_strided_slice %499 {offsets = [0, 0], sizes = [16, 32], strides = [1, 1]} : vector<16x96xf32> to vector<16x32xf32>
    %501 = vector.extract_strided_slice %499 {offsets = [0, 32], sizes = [16, 32], strides = [1, 1]} : vector<16x96xf32> to vector<16x32xf32>
    %502 = vector.extract_strided_slice %499 {offsets = [0, 64], sizes = [16, 32], strides = [1, 1]} : vector<16x96xf32> to vector<16x32xf32>
    %c1_221 = arith.constant 1 : index
    %c0_222 = arith.constant 0 : index
    %c0_223 = arith.constant 0 : index
    %503 = vector.load %arg22[%c1_221, %c0_222, %c0_223] : memref<2x32x32xf32, #tpu.memory_space<vmem>>, vector<1x32x32xf32>
    %504 = vector.shape_cast %503 : vector<1x32x32xf32> to vector<32x32xf32>
    %505 = vector.extract_strided_slice %500 {offsets = [0, 0], sizes = [16, 8], strides = [1, 1]} : vector<16x32xf32> to vector<16x8xf32>
    %506 = vector.extract_strided_slice %501 {offsets = [0, 0], sizes = [16, 8], strides = [1, 1]} : vector<16x32xf32> to vector<16x8xf32>
    %cst_224 = arith.constant dense<0.000000e+00> : vector<16x16xf32>
    %507 = tpu.matmul %505, %506, %cst_224 {dimension_numbers = #tpu.dot_dimension_numbers<[1], [1], [0], [0], [0, 0, 1, 0], [], []>} : vector<16x8xf32>, vector<16x8xf32>, vector<16x16xf32> -> vector<16x16xf32>
    %cst_225 = arith.constant 0.353553385 : f32
    %508 = vector.broadcast %cst_225 : f32 to vector<16x16xf32>
    %509 = arith.mulf %507, %508 : vector<16x16xf32>
    %cst_226 = arith.constant dense<0xFF800000> : vector<16xf32>
    %510 = vector.multi_reduction <maximumf>, %509, %cst_226 [1] : vector<16x16xf32> to vector<16xf32>
    %511 = vector.shape_cast %510 : vector<16xf32> to vector<16x1xf32>
    %512 = vector.broadcast %511 : vector<16x1xf32> to vector<16x16xf32>
    %513 = arith.subf %509, %512 : vector<16x16xf32>
    %514 = math.exp %513 : vector<16x16xf32>
    %cst_227 = arith.constant dense<0.000000e+00> : vector<16xf32>
    %515 = vector.multi_reduction <add>, %514, %cst_227 [1] : vector<16x16xf32> to vector<16xf32>
    %516 = vector.shape_cast %515 : vector<16xf32> to vector<16x1xf32>
    %517 = tpu.reciprocal %516 {approx = true} : vector<16x1xf32> -> vector<16x1xf32>
    %518 = vector.broadcast %517 : vector<16x1xf32> to vector<16x16xf32>
    %519 = arith.mulf %514, %518 : vector<16x16xf32>
    %520 = vector.extract_strided_slice %502 {offsets = [0, 0], sizes = [16, 8], strides = [1, 1]} : vector<16x32xf32> to vector<16x8xf32>
    %cst_228 = arith.constant dense<0.000000e+00> : vector<16x8xf32>
    %521 = tpu.matmul %519, %520, %cst_228 {dimension_numbers = #tpu.dot_dimension_numbers<[1], [0], [0], [1], [0, 0, 1, 1], [], []>} : vector<16x16xf32>, vector<16x8xf32>, vector<16x8xf32> -> vector<16x8xf32>
    %522 = vector.extract_strided_slice %504 {offsets = [0, 0], sizes = [8, 32], strides = [1, 1]} : vector<32x32xf32> to vector<8x32xf32>
    %cst_229 = arith.constant dense<0.000000e+00> : vector<16x32xf32>
    %523 = tpu.matmul %521, %522, %cst_229 {dimension_numbers = #tpu.dot_dimension_numbers<[1], [0], [0], [1], [0, 0, 1, 1], [], []>} : vector<16x8xf32>, vector<8x32xf32>, vector<16x32xf32> -> vector<16x32xf32>
    %524 = vector.extract_strided_slice %500 {offsets = [0, 8], sizes = [16, 8], strides = [1, 1]} : vector<16x32xf32> to vector<16x8xf32>
    %525 = vector.extract_strided_slice %501 {offsets = [0, 8], sizes = [16, 8], strides = [1, 1]} : vector<16x32xf32> to vector<16x8xf32>
    %cst_230 = arith.constant dense<0.000000e+00> : vector<16x16xf32>
    %526 = tpu.matmul %524, %525, %cst_230 {dimension_numbers = #tpu.dot_dimension_numbers<[1], [1], [0], [0], [0, 0, 1, 0], [], []>} : vector<16x8xf32>, vector<16x8xf32>, vector<16x16xf32> -> vector<16x16xf32>
    %cst_231 = arith.constant 0.353553385 : f32
    %527 = vector.broadcast %cst_231 : f32 to vector<16x16xf32>
    %528 = arith.mulf %526, %527 : vector<16x16xf32>
    %cst_232 = arith.constant dense<0xFF800000> : vector<16xf32>
    %529 = vector.multi_reduction <maximumf>, %528, %cst_232 [1] : vector<16x16xf32> to vector<16xf32>
    %530 = vector.shape_cast %529 : vector<16xf32> to vector<16x1xf32>
    %531 = vector.broadcast %530 : vector<16x1xf32> to vector<16x16xf32>
    %532 = arith.subf %528, %531 : vector<16x16xf32>
    %533 = math.exp %532 : vector<16x16xf32>
    %cst_233 = arith.constant dense<0.000000e+00> : vector<16xf32>
    %534 = vector.multi_reduction <add>, %533, %cst_233 [1] : vector<16x16xf32> to vector<16xf32>
    %535 = vector.shape_cast %534 : vector<16xf32> to vector<16x1xf32>
    %536 = tpu.reciprocal %535 {approx = true} : vector<16x1xf32> -> vector<16x1xf32>
    %537 = vector.broadcast %536 : vector<16x1xf32> to vector<16x16xf32>
    %538 = arith.mulf %533, %537 : vector<16x16xf32>
    %539 = vector.extract_strided_slice %502 {offsets = [0, 8], sizes = [16, 8], strides = [1, 1]} : vector<16x32xf32> to vector<16x8xf32>
    %cst_234 = arith.constant dense<0.000000e+00> : vector<16x8xf32>
    %540 = tpu.matmul %538, %539, %cst_234 {dimension_numbers = #tpu.dot_dimension_numbers<[1], [0], [0], [1], [0, 0, 1, 1], [], []>} : vector<16x16xf32>, vector<16x8xf32>, vector<16x8xf32> -> vector<16x8xf32>
    %541 = vector.extract_strided_slice %504 {offsets = [8, 0], sizes = [8, 32], strides = [1, 1]} : vector<32x32xf32> to vector<8x32xf32>
    %cst_235 = arith.constant dense<0.000000e+00> : vector<16x32xf32>
    %542 = tpu.matmul %540, %541, %cst_235 {dimension_numbers = #tpu.dot_dimension_numbers<[1], [0], [0], [1], [0, 0, 1, 1], [], []>} : vector<16x8xf32>, vector<8x32xf32>, vector<16x32xf32> -> vector<16x32xf32>
    %543 = arith.addf %523, %542 : vector<16x32xf32>
    %544 = vector.extract_strided_slice %500 {offsets = [0, 16], sizes = [16, 8], strides = [1, 1]} : vector<16x32xf32> to vector<16x8xf32>
    %545 = vector.extract_strided_slice %501 {offsets = [0, 16], sizes = [16, 8], strides = [1, 1]} : vector<16x32xf32> to vector<16x8xf32>
    %cst_236 = arith.constant dense<0.000000e+00> : vector<16x16xf32>
    %546 = tpu.matmul %544, %545, %cst_236 {dimension_numbers = #tpu.dot_dimension_numbers<[1], [1], [0], [0], [0, 0, 1, 0], [], []>} : vector<16x8xf32>, vector<16x8xf32>, vector<16x16xf32> -> vector<16x16xf32>
    %cst_237 = arith.constant 0.353553385 : f32
    %547 = vector.broadcast %cst_237 : f32 to vector<16x16xf32>
    %548 = arith.mulf %546, %547 : vector<16x16xf32>
    %cst_238 = arith.constant dense<0xFF800000> : vector<16xf32>
    %549 = vector.multi_reduction <maximumf>, %548, %cst_238 [1] : vector<16x16xf32> to vector<16xf32>
    %550 = vector.shape_cast %549 : vector<16xf32> to vector<16x1xf32>
    %551 = vector.broadcast %550 : vector<16x1xf32> to vector<16x16xf32>
    %552 = arith.subf %548, %551 : vector<16x16xf32>
    %553 = math.exp %552 : vector<16x16xf32>
    %cst_239 = arith.constant dense<0.000000e+00> : vector<16xf32>
    %554 = vector.multi_reduction <add>, %553, %cst_239 [1] : vector<16x16xf32> to vector<16xf32>
    %555 = vector.shape_cast %554 : vector<16xf32> to vector<16x1xf32>
    %556 = tpu.reciprocal %555 {approx = true} : vector<16x1xf32> -> vector<16x1xf32>
    %557 = vector.broadcast %556 : vector<16x1xf32> to vector<16x16xf32>
    %558 = arith.mulf %553, %557 : vector<16x16xf32>
    %559 = vector.extract_strided_slice %502 {offsets = [0, 16], sizes = [16, 8], strides = [1, 1]} : vector<16x32xf32> to vector<16x8xf32>
    %cst_240 = arith.constant dense<0.000000e+00> : vector<16x8xf32>
    %560 = tpu.matmul %558, %559, %cst_240 {dimension_numbers = #tpu.dot_dimension_numbers<[1], [0], [0], [1], [0, 0, 1, 1], [], []>} : vector<16x16xf32>, vector<16x8xf32>, vector<16x8xf32> -> vector<16x8xf32>
    %561 = vector.extract_strided_slice %504 {offsets = [16, 0], sizes = [8, 32], strides = [1, 1]} : vector<32x32xf32> to vector<8x32xf32>
    %cst_241 = arith.constant dense<0.000000e+00> : vector<16x32xf32>
    %562 = tpu.matmul %560, %561, %cst_241 {dimension_numbers = #tpu.dot_dimension_numbers<[1], [0], [0], [1], [0, 0, 1, 1], [], []>} : vector<16x8xf32>, vector<8x32xf32>, vector<16x32xf32> -> vector<16x32xf32>
    %563 = arith.addf %543, %562 : vector<16x32xf32>
    %564 = vector.extract_strided_slice %500 {offsets = [0, 24], sizes = [16, 8], strides = [1, 1]} : vector<16x32xf32> to vector<16x8xf32>
    %565 = vector.extract_strided_slice %501 {offsets = [0, 24], sizes = [16, 8], strides = [1, 1]} : vector<16x32xf32> to vector<16x8xf32>
    %cst_242 = arith.constant dense<0.000000e+00> : vector<16x16xf32>
    %566 = tpu.matmul %564, %565, %cst_242 {dimension_numbers = #tpu.dot_dimension_numbers<[1], [1], [0], [0], [0, 0, 1, 0], [], []>} : vector<16x8xf32>, vector<16x8xf32>, vector<16x16xf32> -> vector<16x16xf32>
    %cst_243 = arith.constant 0.353553385 : f32
    %567 = vector.broadcast %cst_243 : f32 to vector<16x16xf32>
    %568 = arith.mulf %566, %567 : vector<16x16xf32>
    %cst_244 = arith.constant dense<0xFF800000> : vector<16xf32>
    %569 = vector.multi_reduction <maximumf>, %568, %cst_244 [1] : vector<16x16xf32> to vector<16xf32>
    %570 = vector.shape_cast %569 : vector<16xf32> to vector<16x1xf32>
    %571 = vector.broadcast %570 : vector<16x1xf32> to vector<16x16xf32>
    %572 = arith.subf %568, %571 : vector<16x16xf32>
    %573 = math.exp %572 : vector<16x16xf32>
    %cst_245 = arith.constant dense<0.000000e+00> : vector<16xf32>
    %574 = vector.multi_reduction <add>, %573, %cst_245 [1] : vector<16x16xf32> to vector<16xf32>
    %575 = vector.shape_cast %574 : vector<16xf32> to vector<16x1xf32>
    %576 = tpu.reciprocal %575 {approx = true} : vector<16x1xf32> -> vector<16x1xf32>
    %577 = vector.broadcast %576 : vector<16x1xf32> to vector<16x16xf32>
    %578 = arith.mulf %573, %577 : vector<16x16xf32>
    %579 = vector.extract_strided_slice %502 {offsets = [0, 24], sizes = [16, 8], strides = [1, 1]} : vector<16x32xf32> to vector<16x8xf32>
    %cst_246 = arith.constant dense<0.000000e+00> : vector<16x8xf32>
    %580 = tpu.matmul %578, %579, %cst_246 {dimension_numbers = #tpu.dot_dimension_numbers<[1], [0], [0], [1], [0, 0, 1, 1], [], []>} : vector<16x16xf32>, vector<16x8xf32>, vector<16x8xf32> -> vector<16x8xf32>
    %581 = vector.extract_strided_slice %504 {offsets = [24, 0], sizes = [8, 32], strides = [1, 1]} : vector<32x32xf32> to vector<8x32xf32>
    %cst_247 = arith.constant dense<0.000000e+00> : vector<16x32xf32>
    %582 = tpu.matmul %580, %581, %cst_247 {dimension_numbers = #tpu.dot_dimension_numbers<[1], [0], [0], [1], [0, 0, 1, 1], [], []>} : vector<16x8xf32>, vector<8x32xf32>, vector<16x32xf32> -> vector<16x32xf32>
    %583 = arith.addf %563, %582 : vector<16x32xf32>
    %c1_248 = arith.constant 1 : index
    %c0_249 = arith.constant 0 : index
    %c0_250 = arith.constant 0 : index
    %584 = vector.load %arg23[%c1_248, %c0_249, %c0_250] : memref<2x1x32xf32, #tpu.memory_space<vmem>>, vector<1x1x32xf32>
    %585 = vector.shape_cast %584 : vector<1x1x32xf32> to vector<1x32xf32>
    %586 = vector.broadcast %585 : vector<1x32xf32> to vector<16x32xf32>
    %587 = arith.addf %583, %586 : vector<16x32xf32>
    %588 = vector.broadcast %349 : vector<1x32xf32> to vector<16x32xf32>
    %589 = arith.mulf %588, %587 : vector<16x32xf32>
    %590 = arith.addf %470, %589 : vector<16x32xf32>
    %cst_251 = arith.constant dense<0.000000e+00> : vector<16xf32>
    %591 = vector.multi_reduction <add>, %590, %cst_251 [1] : vector<16x32xf32> to vector<16xf32>
    %592 = vector.shape_cast %591 : vector<16xf32> to vector<16x1xf32>
    %cst_252 = arith.constant 3.200000e+01 : f32
    %593 = vector.broadcast %cst_252 : f32 to vector<16x1xf32>
    %594 = arith.divf %592, %593 : vector<16x1xf32>
    %595 = vector.broadcast %594 : vector<16x1xf32> to vector<16x32xf32>
    %596 = arith.subf %590, %595 : vector<16x32xf32>
    %597 = arith.mulf %596, %596 : vector<16x32xf32>
    %cst_253 = arith.constant dense<0.000000e+00> : vector<16xf32>
    %598 = vector.multi_reduction <add>, %597, %cst_253 [1] : vector<16x32xf32> to vector<16xf32>
    %599 = vector.shape_cast %598 : vector<16xf32> to vector<16x1xf32>
    %cst_254 = arith.constant 3.200000e+01 : f32
    %600 = vector.broadcast %cst_254 : f32 to vector<16x1xf32>
    %601 = arith.divf %599, %600 : vector<16x1xf32>
    %cst_255 = arith.constant 9.99999997E-7 : f32
    %602 = vector.broadcast %cst_255 : f32 to vector<16x1xf32>
    %603 = arith.addf %601, %602 : vector<16x1xf32>
    %604 = math.rsqrt %603 : vector<16x1xf32>
    %605 = vector.broadcast %604 : vector<16x1xf32> to vector<16x32xf32>
    %606 = arith.mulf %596, %605 : vector<16x32xf32>
    %cst_256 = arith.constant 1.000000e+00 : f32
    %607 = vector.broadcast %cst_256 : f32 to vector<1x32xf32>
    %608 = arith.addf %607, %351 : vector<1x32xf32>
    %609 = vector.broadcast %608 : vector<1x32xf32> to vector<16x32xf32>
    %610 = arith.mulf %606, %609 : vector<16x32xf32>
    %611 = vector.broadcast %350 : vector<1x32xf32> to vector<16x32xf32>
    %612 = arith.addf %610, %611 : vector<16x32xf32>
    %c1_257 = arith.constant 1 : index
    %c0_258 = arith.constant 0 : index
    %c0_259 = arith.constant 0 : index
    %613 = vector.load %arg24[%c1_257, %c0_258, %c0_259] : memref<2x32x128xf32, #tpu.memory_space<vmem>>, vector<1x32x128xf32>
    %614 = vector.shape_cast %613 : vector<1x32x128xf32> to vector<32x128xf32>
    %cst_260 = arith.constant dense<0.000000e+00> : vector<16x128xf32>
    %615 = tpu.matmul %612, %614, %cst_260 {dimension_numbers = #tpu.dot_dimension_numbers<[1], [0], [0], [1], [0, 0, 1, 1], [], []>} : vector<16x32xf32>, vector<32x128xf32>, vector<16x128xf32> -> vector<16x128xf32>
    %c1_261 = arith.constant 1 : index
    %c0_262 = arith.constant 0 : index
    %c0_263 = arith.constant 0 : index
    %616 = vector.load %arg25[%c1_261, %c0_262, %c0_263] : memref<2x1x128xf32, #tpu.memory_space<vmem>>, vector<1x1x128xf32>
    %617 = vector.shape_cast %616 : vector<1x1x128xf32> to vector<1x128xf32>
    %618 = vector.broadcast %617 : vector<1x128xf32> to vector<16x128xf32>
    %619 = arith.addf %615, %618 : vector<16x128xf32>
    %cst_264 = arith.constant 5.000000e-01 : f32
    %620 = vector.broadcast %cst_264 : f32 to vector<16x128xf32>
    %621 = arith.mulf %620, %619 : vector<16x128xf32>
    %cst_265 = arith.constant 4.471500e-02 : f32
    %622 = vector.broadcast %cst_265 : f32 to vector<16x128xf32>
    %623 = arith.mulf %622, %619 : vector<16x128xf32>
    %624 = arith.mulf %623, %619 : vector<16x128xf32>
    %625 = arith.mulf %624, %619 : vector<16x128xf32>
    %626 = arith.addf %619, %625 : vector<16x128xf32>
    %cst_266 = arith.constant 0.797884583 : f32
    %627 = vector.broadcast %cst_266 : f32 to vector<16x128xf32>
    %628 = arith.mulf %627, %626 : vector<16x128xf32>
    %629 = math.tanh %628 : vector<16x128xf32>
    %cst_267 = arith.constant 1.000000e+00 : f32
    %630 = vector.broadcast %cst_267 : f32 to vector<16x128xf32>
    %631 = arith.addf %630, %629 : vector<16x128xf32>
    %632 = arith.mulf %621, %631 : vector<16x128xf32>
    %c1_268 = arith.constant 1 : index
    %c0_269 = arith.constant 0 : index
    %c0_270 = arith.constant 0 : index
    %633 = vector.load %arg26[%c1_268, %c0_269, %c0_270] : memref<2x128x32xf32, #tpu.memory_space<vmem>>, vector<1x128x32xf32>
    %634 = vector.shape_cast %633 : vector<1x128x32xf32> to vector<128x32xf32>
    %cst_271 = arith.constant dense<0.000000e+00> : vector<16x32xf32>
    %635 = tpu.matmul %632, %634, %cst_271 {dimension_numbers = #tpu.dot_dimension_numbers<[1], [0], [0], [1], [0, 0, 1, 1], [], []>} : vector<16x128xf32>, vector<128x32xf32>, vector<16x32xf32> -> vector<16x32xf32>
    %c1_272 = arith.constant 1 : index
    %c0_273 = arith.constant 0 : index
    %c0_274 = arith.constant 0 : index
    %636 = vector.load %arg27[%c1_272, %c0_273, %c0_274] : memref<2x1x32xf32, #tpu.memory_space<vmem>>, vector<1x1x32xf32>
    %637 = vector.shape_cast %636 : vector<1x1x32xf32> to vector<1x32xf32>
    %638 = vector.broadcast %637 : vector<1x32xf32> to vector<16x32xf32>
    %639 = arith.addf %635, %638 : vector<16x32xf32>
    %640 = vector.broadcast %352 : vector<1x32xf32> to vector<16x32xf32>
    %641 = arith.mulf %640, %639 : vector<16x32xf32>
    %642 = arith.addf %590, %641 : vector<16x32xf32>
    %c0_275 = arith.constant 0 : index
    %c0_276 = arith.constant 0 : index
    %643 = vector.load %arg28[%c0_275, %c0_276] : memref<32x64xf32, #tpu.memory_space<vmem>>, vector<32x64xf32>
    %cst_277 = arith.constant dense<0.000000e+00> : vector<1x64xf32>
    %644 = tpu.matmul %38, %643, %cst_277 {dimension_numbers = #tpu.dot_dimension_numbers<[1], [0], [0], [1], [0, 0, 1, 1], [], []>} : vector<1x32xf32>, vector<32x64xf32>, vector<1x64xf32> -> vector<1x64xf32>
    %c0_278 = arith.constant 0 : index
    %c0_279 = arith.constant 0 : index
    %645 = vector.load %arg29[%c0_278, %c0_279] : memref<1x64xf32, #tpu.memory_space<vmem>>, vector<1x64xf32>
    %646 = arith.addf %644, %645 : vector<1x64xf32>
    %cst_280 = arith.constant dense<0.000000e+00> : vector<16xf32>
    %647 = vector.multi_reduction <add>, %642, %cst_280 [1] : vector<16x32xf32> to vector<16xf32>
    %648 = vector.shape_cast %647 : vector<16xf32> to vector<16x1xf32>
    %cst_281 = arith.constant 3.200000e+01 : f32
    %649 = vector.broadcast %cst_281 : f32 to vector<16x1xf32>
    %650 = arith.divf %648, %649 : vector<16x1xf32>
    %651 = vector.broadcast %650 : vector<16x1xf32> to vector<16x32xf32>
    %652 = arith.subf %642, %651 : vector<16x32xf32>
    %653 = arith.mulf %652, %652 : vector<16x32xf32>
    %cst_282 = arith.constant dense<0.000000e+00> : vector<16xf32>
    %654 = vector.multi_reduction <add>, %653, %cst_282 [1] : vector<16x32xf32> to vector<16xf32>
    %655 = vector.shape_cast %654 : vector<16xf32> to vector<16x1xf32>
    %cst_283 = arith.constant 3.200000e+01 : f32
    %656 = vector.broadcast %cst_283 : f32 to vector<16x1xf32>
    %657 = arith.divf %655, %656 : vector<16x1xf32>
    %cst_284 = arith.constant 9.99999997E-7 : f32
    %658 = vector.broadcast %cst_284 : f32 to vector<16x1xf32>
    %659 = arith.addf %657, %658 : vector<16x1xf32>
    %660 = math.rsqrt %659 : vector<16x1xf32>
    %661 = vector.broadcast %660 : vector<16x1xf32> to vector<16x32xf32>
    %662 = arith.mulf %652, %661 : vector<16x32xf32>
    %663 = vector.extract_strided_slice %646 {offsets = [0, 32], sizes = [1, 32], strides = [1, 1]} : vector<1x64xf32> to vector<1x32xf32>
    %cst_285 = arith.constant 1.000000e+00 : f32
    %664 = vector.broadcast %cst_285 : f32 to vector<1x32xf32>
    %665 = arith.addf %664, %663 : vector<1x32xf32>
    %666 = vector.broadcast %665 : vector<1x32xf32> to vector<16x32xf32>
    %667 = arith.mulf %662, %666 : vector<16x32xf32>
    %668 = vector.extract_strided_slice %646 {offsets = [0, 0], sizes = [1, 32], strides = [1, 1]} : vector<1x64xf32> to vector<1x32xf32>
    %669 = vector.broadcast %668 : vector<1x32xf32> to vector<16x32xf32>
    %670 = arith.addf %667, %669 : vector<16x32xf32>
    %c0_286 = arith.constant 0 : index
    %c0_287 = arith.constant 0 : index
    %671 = vector.load %arg30[%c0_286, %c0_287] : memref<32x128xf32, #tpu.memory_space<vmem>>, vector<32x128xf32>
    %cst_288 = arith.constant dense<0.000000e+00> : vector<16x128xf32>
    %672 = tpu.matmul %670, %671, %cst_288 {dimension_numbers = #tpu.dot_dimension_numbers<[1], [0], [0], [1], [0, 0, 1, 1], [], []>} : vector<16x32xf32>, vector<32x128xf32>, vector<16x128xf32> -> vector<16x128xf32>
    %c0_289 = arith.constant 0 : index
    %c0_290 = arith.constant 0 : index
    %673 = vector.load %arg31[%c0_289, %c0_290] : memref<1x128xf32, #tpu.memory_space<vmem>>, vector<1x128xf32>
    %674 = vector.broadcast %673 : vector<1x128xf32> to vector<16x128xf32>
    %675 = arith.addf %672, %674 : vector<16x128xf32>
    %c0_291 = arith.constant 0 : index
    %c0_292 = arith.constant 0 : index
    %c0_293 = arith.constant 0 : index
    %676 = vector.load %arg32[%c0_291, %c0_292, %c0_293] : memref<1x16x128xf32, #tpu.memory_space<vmem>>, vector<1x16x128xf32>
    %677 = vector.shape_cast %676 : vector<1x16x128xf32> to vector<16x128xf32>
    %678 = vector.shape_cast %675 : vector<16x128xf32> to vector<1x16x128xf32>
    tpu.vector_store %arg32[%c0_291, %c0_292, %c0_293], %678 {strides = array<i32>} : memref<1x16x128xf32, #tpu.memory_space<vmem>>, vector<1x16x128xf32>,
    return
  }
  func.func @transform_0(%arg0: i32) -> (i32, i32, i32) {
    %c0_i32 = arith.constant 0 : i32
    %c0_i32_0 = arith.constant 0 : i32
    %c0_i32_1 = arith.constant 0 : i32
    return %arg0, %c0_i32, %c0_i32_0 : i32, i32, i32
  }
  func.func @transform_1(%arg0: i32) -> (i32, i32, i32) {
    %c0_i32 = arith.constant 0 : i32
    %c0_i32_0 = arith.constant 0 : i32
    %c0_i32_1 = arith.constant 0 : i32
    return %arg0, %c0_i32, %c0_i32_0 : i32, i32, i32
  }
  func.func @transform_2(%arg0: i32) -> (i32, i32, i32) {
    %c0_i32 = arith.constant 0 : i32
    %c0_i32_0 = arith.constant 0 : i32
    %c0_i32_1 = arith.constant 0 : i32
    return %arg0, %c0_i32, %c0_i32_0 : i32, i32, i32
  }
  func.func @transform_3(%arg0: i32) -> (i32, i32, i32) {
    %c0_i32 = arith.constant 0 : i32
    %c0_i32_0 = arith.constant 0 : i32
    %c0_i32_1 = arith.constant 0 : i32
    return %arg0, %c0_i32, %c0_i32_0 : i32, i32, i32
  }
  func.func @transform_4(%arg0: i32) -> (i32, i32) {
    %c0_i32 = arith.constant 0 : i32
    %c0_i32_0 = arith.constant 0 : i32
    %c0_i32_1 = arith.constant 0 : i32
    return %c0_i32, %c0_i32_0 : i32, i32
  }
  func.func @transform_5(%arg0: i32) -> (i32, i32) {
    %c0_i32 = arith.constant 0 : i32
    %c0_i32_0 = arith.constant 0 : i32
    %c0_i32_1 = arith.constant 0 : i32
    return %c0_i32, %c0_i32_0 : i32, i32
  }
  func.func @transform_6(%arg0: i32) -> (i32, i32) {
    %c0_i32 = arith.constant 0 : i32
    %c0_i32_0 = arith.constant 0 : i32
    %c0_i32_1 = arith.constant 0 : i32
    return %c0_i32, %c0_i32_0 : i32, i32
  }
  func.func @transform_7(%arg0: i32) -> (i32, i32) {
    %c0_i32 = arith.constant 0 : i32
    %c0_i32_0 = arith.constant 0 : i32
    %c0_i32_1 = arith.constant 0 : i32
    return %c0_i32, %c0_i32_0 : i32, i32
  }
  func.func @transform_8(%arg0: i32) -> (i32, i32) {
    %c0_i32 = arith.constant 0 : i32
    %c0_i32_0 = arith.constant 0 : i32
    %c0_i32_1 = arith.constant 0 : i32
    return %c0_i32, %c0_i32_0 : i32, i32
  }
  func.func @transform_9(%arg0: i32) -> (i32, i32) {
    %c0_i32 = arith.constant 0 : i32
    %c0_i32_0 = arith.constant 0 : i32
    %c0_i32_1 = arith.constant 0 : i32
    return %c0_i32, %c0_i32_0 : i32, i32
  }
  func.func @transform_10(%arg0: i32) -> (i32, i32) {
    %c0_i32 = arith.constant 0 : i32
    %c0_i32_0 = arith.constant 0 : i32
    %c0_i32_1 = arith.constant 0 : i32
    return %c0_i32, %c0_i32_0 : i32, i32
  }
  func.func @transform_11(%arg0: i32) -> (i32, i32, i32) {
    %c0_i32 = arith.constant 0 : i32
    %c0_i32_0 = arith.constant 0 : i32
    %c0_i32_1 = arith.constant 0 : i32
    %c0_i32_2 = arith.constant 0 : i32
    return %c0_i32, %c0_i32_0, %c0_i32_1 : i32, i32, i32
  }
  func.func @transform_12(%arg0: i32) -> (i32, i32, i32) {
    %c0_i32 = arith.constant 0 : i32
    %c0_i32_0 = arith.constant 0 : i32
    %c0_i32_1 = arith.constant 0 : i32
    %c0_i32_2 = arith.constant 0 : i32
    return %c0_i32, %c0_i32_0, %c0_i32_1 : i32, i32, i32
  }
  func.func @transform_13(%arg0: i32) -> (i32, i32, i32) {
    %c0_i32 = arith.constant 0 : i32
    %c0_i32_0 = arith.constant 0 : i32
    %c0_i32_1 = arith.constant 0 : i32
    %c0_i32_2 = arith.constant 0 : i32
    return %c0_i32, %c0_i32_0, %c0_i32_1 : i32, i32, i32
  }
  func.func @transform_14(%arg0: i32) -> (i32, i32, i32) {
    %c0_i32 = arith.constant 0 : i32
    %c0_i32_0 = arith.constant 0 : i32
    %c0_i32_1 = arith.constant 0 : i32
    %c0_i32_2 = arith.constant 0 : i32
    return %c0_i32, %c0_i32_0, %c0_i32_1 : i32, i32, i32
  }
  func.func @transform_15(%arg0: i32) -> (i32, i32, i32) {
    %c0_i32 = arith.constant 0 : i32
    %c0_i32_0 = arith.constant 0 : i32
    %c0_i32_1 = arith.constant 0 : i32
    %c0_i32_2 = arith.constant 0 : i32
    return %c0_i32, %c0_i32_0, %c0_i32_1 : i32, i32, i32
  }
  func.func @transform_16(%arg0: i32) -> (i32, i32, i32) {
    %c0_i32 = arith.constant 0 : i32
    %c0_i32_0 = arith.constant 0 : i32
    %c0_i32_1 = arith.constant 0 : i32
    %c0_i32_2 = arith.constant 0 : i32
    return %c0_i32, %c0_i32_0, %c0_i32_1 : i32, i32, i32
  }
  func.func @transform_17(%arg0: i32) -> (i32, i32, i32) {
    %c0_i32 = arith.constant 0 : i32
    %c0_i32_0 = arith.constant 0 : i32
    %c0_i32_1 = arith.constant 0 : i32
    %c0_i32_2 = arith.constant 0 : i32
    return %c0_i32, %c0_i32_0, %c0_i32_1 : i32, i32, i32
  }
  func.func @transform_18(%arg0: i32) -> (i32, i32, i32) {
    %c0_i32 = arith.constant 0 : i32
    %c0_i32_0 = arith.constant 0 : i32
    %c0_i32_1 = arith.constant 0 : i32
    %c0_i32_2 = arith.constant 0 : i32
    return %c0_i32, %c0_i32_0, %c0_i32_1 : i32, i32, i32
  }
  func.func @transform_19(%arg0: i32) -> (i32, i32, i32) {
    %c0_i32 = arith.constant 0 : i32
    %c0_i32_0 = arith.constant 0 : i32
    %c0_i32_1 = arith.constant 0 : i32
    %c0_i32_2 = arith.constant 0 : i32
    return %c0_i32, %c0_i32_0, %c0_i32_1 : i32, i32, i32
  }
  func.func @transform_20(%arg0: i32) -> (i32, i32, i32) {
    %c0_i32 = arith.constant 0 : i32
    %c0_i32_0 = arith.constant 0 : i32
    %c0_i32_1 = arith.constant 0 : i32
    %c0_i32_2 = arith.constant 0 : i32
    return %c0_i32, %c0_i32_0, %c0_i32_1 : i32, i32, i32
  }
  func.func @transform_21(%arg0: i32) -> (i32, i32, i32) {
    %c0_i32 = arith.constant 0 : i32
    %c0_i32_0 = arith.constant 0 : i32
    %c0_i32_1 = arith.constant 0 : i32
    %c0_i32_2 = arith.constant 0 : i32
    return %c0_i32, %c0_i32_0, %c0_i32_1 : i32, i32, i32
  }
  func.func @transform_22(%arg0: i32) -> (i32, i32, i32) {
    %c0_i32 = arith.constant 0 : i32
    %c0_i32_0 = arith.constant 0 : i32
    %c0_i32_1 = arith.constant 0 : i32
    %c0_i32_2 = arith.constant 0 : i32
    return %c0_i32, %c0_i32_0, %c0_i32_1 : i32, i32, i32
  }
  func.func @transform_23(%arg0: i32) -> (i32, i32, i32) {
    %c0_i32 = arith.constant 0 : i32
    %c0_i32_0 = arith.constant 0 : i32
    %c0_i32_1 = arith.constant 0 : i32
    %c0_i32_2 = arith.constant 0 : i32
    return %c0_i32, %c0_i32_0, %c0_i32_1 : i32, i32, i32
  }
  func.func @transform_24(%arg0: i32) -> (i32, i32, i32) {
    %c0_i32 = arith.constant 0 : i32
    %c0_i32_0 = arith.constant 0 : i32
    %c0_i32_1 = arith.constant 0 : i32
    %c0_i32_2 = arith.constant 0 : i32
    return %c0_i32, %c0_i32_0, %c0_i32_1 : i32, i32, i32
  }
  func.func @transform_25(%arg0: i32) -> (i32, i32, i32) {
    %c0_i32 = arith.constant 0 : i32
    %c0_i32_0 = arith.constant 0 : i32
    %c0_i32_1 = arith.constant 0 : i32
    %c0_i32_2 = arith.constant 0 : i32
    return %c0_i32, %c0_i32_0, %c0_i32_1 : i32, i32, i32
  }
  func.func @transform_26(%arg0: i32) -> (i32, i32, i32) {
    %c0_i32 = arith.constant 0 : i32
    %c0_i32_0 = arith.constant 0 : i32
    %c0_i32_1 = arith.constant 0 : i32
    %c0_i32_2 = arith.constant 0 : i32
    return %c0_i32, %c0_i32_0, %c0_i32_1 : i32, i32, i32
  }
  func.func @transform_27(%arg0: i32) -> (i32, i32) {
    %c0_i32 = arith.constant 0 : i32
    %c0_i32_0 = arith.constant 0 : i32
    %c0_i32_1 = arith.constant 0 : i32
    return %c0_i32, %c0_i32_0 : i32, i32
  }
  func.func @transform_28(%arg0: i32) -> (i32, i32) {
    %c0_i32 = arith.constant 0 : i32
    %c0_i32_0 = arith.constant 0 : i32
    %c0_i32_1 = arith.constant 0 : i32
    return %c0_i32, %c0_i32_0 : i32, i32
  }
  func.func @transform_29(%arg0: i32) -> (i32, i32) {
    %c0_i32 = arith.constant 0 : i32
    %c0_i32_0 = arith.constant 0 : i32
    %c0_i32_1 = arith.constant 0 : i32
    return %c0_i32, %c0_i32_0 : i32, i32
  }
  func.func @transform_30(%arg0: i32) -> (i32, i32) {
    %c0_i32 = arith.constant 0 : i32
    %c0_i32_0 = arith.constant 0 : i32
    %c0_i32_1 = arith.constant 0 : i32
    return %c0_i32, %c0_i32_0 : i32, i32
  }
  func.func @transform_31(%arg0: i32) -> (i32, i32, i32) {
    %c0_i32 = arith.constant 0 : i32
    %c0_i32_0 = arith.constant 0 : i32
    %c0_i32_1 = arith.constant 0 : i32
    return %arg0, %c0_i32, %c0_i32_0 : i32, i32, i32
  }
}

</mosaic_0001>

<llo_original>
// kernel: dit_forward.1
$region0: #{dit_forward.1}
  #allocation0 [shape = 'u32[]', space=smem, size = 0x4, offset = 0x4, fixed_abs, tag = 'smem constant byte address 0x4 - core index']
  #allocation1 [shape = 'u32[144,128]{1,0:T(1,128)}', space=vmem, size = 0x12000, scoped, tag = 'internal scratch']
  %s0 = inlined_call_operand.smem [shape: u32[32], index: -1, kind: input, shape index: {}]
  %s1 = sld [smem:[%s0]]
  %s2 = scalar_lea.smem %s0, 1
  %s3 = sld [smem:[%s2]]
  %s4 = scalar_lea.smem %s0, 2
  %s5 = sld [smem:[%s4]]
  %s6 = scalar_lea.smem %s0, 3
  %s7 = sld [smem:[%s6]]
  %s8 = scalar_lea.smem %s0, 4
  %s9 = sld [smem:[%s8]]
  %s10 = scalar_lea.smem %s0, 5
  %s11 = sld [smem:[%s10]]
  %s12 = scalar_lea.smem %s0, 6
  %s13 = sld [smem:[%s12]]
  %s14 = scalar_lea.smem %s0, 7
  %s15 = sld [smem:[%s14]]
  %s16 = scalar_lea.smem %s0, 8
  %s17 = sld [smem:[%s16]]
  %s18 = scalar_lea.smem %s0, 9
  %s19 = sld [smem:[%s18]]
  %s20 = scalar_lea.smem %s0, 10
  %s21 = sld [smem:[%s20]]
  %s22 = scalar_lea.smem %s0, 11
  %s23 = sld [smem:[%s22]]
  %s24 = scalar_lea.smem %s0, 12
  %s25 = sld [smem:[%s24]]
  %s26 = scalar_lea.smem %s0, 13
  %s27 = sld [smem:[%s26]]
  %s28 = scalar_lea.smem %s0, 14
  %s29 = sld [smem:[%s28]]
  %s30 = scalar_lea.smem %s0, 15
  %s31 = sld [smem:[%s30]]
  %s32 = scalar_lea.smem %s0, 16
  %s33 = sld [smem:[%s32]]
  %s34 = scalar_lea.smem %s0, 17
  %s35 = sld [smem:[%s34]]
  %s36 = scalar_lea.smem %s0, 18
  %s37 = sld [smem:[%s36]]
  %s38 = scalar_lea.smem %s0, 19
  %s39 = sld [smem:[%s38]]
  %s40 = scalar_lea.smem %s0, 20
  %s41 = sld [smem:[%s40]]
  %s42 = scalar_lea.smem %s0, 21
  %s43 = sld [smem:[%s42]]
  %s44 = scalar_lea.smem %s0, 22
  %s45 = sld [smem:[%s44]]
  %s46 = scalar_lea.smem %s0, 23
  %s47 = sld [smem:[%s46]]
  %s48 = scalar_lea.smem %s0, 24
  %s49 = sld [smem:[%s48]]
  %s50 = scalar_lea.smem %s0, 25
  %s51 = sld [smem:[%s50]]
  %s52 = scalar_lea.smem %s0, 26
  %s53 = sld [smem:[%s52]]
  %s54 = scalar_lea.smem %s0, 27
  %s55 = sld [smem:[%s54]]
  %s56 = scalar_lea.smem %s0, 28
  %s57 = sld [smem:[%s56]]
  %s58 = scalar_lea.smem %s0, 29
  %s59 = sld [smem:[%s58]]
  %s60 = scalar_lea.smem %s0, 30
  %s61 = sld [smem:[%s60]]
  %s62 = scalar_lea.smem %s0, 31
  %s63 = sld [smem:[%s62]]
  %s64 = sld [smem:[#allocation0]]
  $region157: #{dit_forward.1} parent=0
    _
  %s66 = ssub.s32 1, %s64
  %s67 = scalar_select 0, %s66, %s64
  loop: start=0, step=1, limit=4
  $region2: #{dit_forward.1} parent=0 // loop_pre_header
    _
  $region3: #{dit_forward.1} parent=0 // loop_header
    %s69 = sphi 0, %s73
    %p70 = scmp.ge.s32.totalorder %s69, 4
    %s79 = sphi 0, %s81
    %s82 = sphi 0, %s79
    %s83 = sphi 0, %s82
    %s99 = sphi 0, %s83
    %s105 = sphi 0, %s107
    %s108 = sphi 0, %s105
    %s109 = sphi 0, %s108
    %s125 = sphi 0, %s109
    %s131 = sphi 0, %s133
    %s134 = sphi 0, %s131
    %s135 = sphi 0, %s134
    %s151 = sphi 0, %s135
    %s157 = sphi 0, %s159
    %s160 = sphi 0, %s157
    %s161 = sphi 0, %s160
    %s177 = sphi 0, %s161
    %s181 = sphi 0, %s181
    %s183 = sphi 0, %s181
    %s184 = sphi 0, %s183
    %s198 = sphi 0, %s184
    %s202 = sphi 0, %s202
    %s204 = sphi 0, %s202
    %s205 = sphi 0, %s204
    %s219 = sphi 0, %s205
    %s223 = sphi 0, %s223
    %s225 = sphi 0, %s223
    %s226 = sphi 0, %s225
    %s240 = sphi 0, %s226
    %s244 = sphi 0, %s244
    %s246 = sphi 0, %s244
    %s247 = sphi 0, %s246
    %s261 = sphi 0, %s247
    %s265 = sphi 0, %s265
    %s267 = sphi 0, %s265
    %s268 = sphi 0, %s267
    %s282 = sphi 0, %s268
    %s286 = sphi 0, %s286
    %s288 = sphi 0, %s286
    %s289 = sphi 0, %s288
    %s303 = sphi 0, %s289
    %s307 = sphi 0, %s307
    %s309 = sphi 0, %s307
    %s310 = sphi 0, %s309
    %s324 = sphi 0, %s310
    %s328 = sphi 0, %s328
    %s330 = sphi 0, %s328
    %s331 = sphi 0, %s330
    %s345 = sphi 0, %s331
    %s349 = sphi 0, %s349
    %s351 = sphi 0, %s349
    %s352 = sphi 0, %s351
    %s366 = sphi 0, %s352
    %s370 = sphi 0, %s370
    %s372 = sphi 0, %s370
    %s373 = sphi 0, %s372
    %s387 = sphi 0, %s373
    %s391 = sphi 0, %s391
    %s393 = sphi 0, %s391
    %s394 = sphi 0, %s393
    %s408 = sphi 0, %s394
    %s412 = sphi 0, %s412
    %s414 = sphi 0, %s412
    %s415 = sphi 0, %s414
    %s429 = sphi 0, %s415
    %s433 = sphi 0, %s433
    %s435 = sphi 0, %s433
    %s436 = sphi 0, %s435
    %s450 = sphi 0, %s436
    %s454 = sphi 0, %s454
    %s456 = sphi 0, %s454
    %s457 = sphi 0, %s456
    %s471 = sphi 0, %s457
    %s475 = sphi 0, %s475
    %s477 = sphi 0, %s475
    %s478 = sphi 0, %s477
    %s492 = sphi 0, %s478
    %s496 = sphi 0, %s496
    %s498 = sphi 0, %s496
    %s499 = sphi 0, %s498
    %s513 = sphi 0, %s499
    %s517 = sphi 0, %s517
    %s519 = sphi 0, %s517
    %s520 = sphi 0, %s519
    %s534 = sphi 0, %s520
    %s538 = sphi 0, %s538
    %s540 = sphi 0, %s538
    %s541 = sphi 0, %s540
    %s555 = sphi 0, %s541
    %s559 = sphi 0, %s559
    %s561 = sphi 0, %s559
    %s562 = sphi 0, %s561
    %s576 = sphi 0, %s562
    %s580 = sphi 0, %s580
    %s582 = sphi 0, %s580
    %s583 = sphi 0, %s582
    %s597 = sphi 0, %s583
    %s601 = sphi 0, %s601
    %s603 = sphi 0, %s601
    %s604 = sphi 0, %s603
    %s618 = sphi 0, %s604
    %s622 = sphi 0, %s622
    %s624 = sphi 0, %s622
    %s625 = sphi 0, %s624
    %s639 = sphi 0, %s625
    %s643 = sphi 0, %s643
    %s645 = sphi 0, %s643
    %s646 = sphi 0, %s645
    %s660 = sphi 0, %s646
    %s664 = sphi 0, %s664
    %s666 = sphi 0, %s664
    %s667 = sphi 0, %s666
    %s681 = sphi 0, %s667
    %s685 = sphi 0, %s685
    %s687 = sphi 0, %s685
    %s688 = sphi 0, %s687
    %s702 = sphi 0, %s688
    %s706 = sphi 0, %s706
    %s708 = sphi 0, %s706
    %s709 = sphi 0, %s708
    %s723 = sphi 0, %s709
    %s727 = sphi 0, %s727
    %s729 = sphi 0, %s727
    %s730 = sphi 0, %s729
    %s744 = sphi 0, %s730
    %s750 = sphi 0, %s752
    %s753 = sphi 0, %s750
    %s754 = sphi 0, %s753
    %s770 = sphi 0, %s754
  $region4: #{dit_forward.1} parent=0 // loop_header_branch
    %72 = sbr.rel (%p70) target = $region8
  $region5: #{dit_forward.1} parent=0 // loop_body
    %s74 = ssub.s32 %s69, 1
    %s75 = ssub.s32 %s69, 2
    %s76 = sadd.s32 %s69, 1
    %s77 = ssub.s32 %s69, %s76
    %p78 = scmp.eq.s32.totalorder %s77, 0
    %s80 = sadd.s32 %s79, 1
    %s81 = scalar_select %p78, %s79, %s80
    %p84 = pneg %p78
    %p85 = scmp.eq.s32.totalorder %s69, 1
    %p86 = por %p84, %p85
    %p87 = scmp.ne.s32.totalorder %s79, %s82
    %p88 = scmp.eq.s32.totalorder %s69, 0
    %p89 = por %p87, %p88
    %p90 = scmp.ne.s32.totalorder %s79, %s82
    %p91 = scmp.eq.s32.totalorder %s74, 1
    %p92 = por %p90, %p91
    %p93 = scmp.ne.s32.totalorder %s82, %s83
    %p94 = scmp.eq.s32.totalorder %s74, 0
    %p95 = por %p93, %p94
    %p96 = scmp.ne.s32.totalorder %s82, %s83
    %p97 = scmp.eq.s32.totalorder %s75, 1
    %p98 = por %p96, %p97
    %p100 = scmp.ne.s32.totalorder %s83, %s99
    %p101 = scmp.eq.s32.totalorder %s75, 0
    %p102 = por %p100, %p101
    %s103 = ssub.s32 %s69, %s76
    %p104 = scmp.eq.s32.totalorder %s103, 0
    %s106 = sadd.s32 %s105, 1
    %s107 = scalar_select %p104, %s105, %s106
    %p110 = pneg %p104
    %p111 = scmp.eq.s32.totalorder %s69, 1
    %p112 = por %p110, %p111
    %p113 = scmp.ne.s32.totalorder %s105, %s108
    %p114 = scmp.eq.s32.totalorder %s69, 0
    %p115 = por %p113, %p114
    %p116 = scmp.ne.s32.totalorder %s105, %s108
    %p117 = scmp.eq.s32.totalorder %s74, 1
    %p118 = por %p116, %p117
    %p119 = scmp.ne.s32.totalorder %s108, %s109
    %p120 = scmp.eq.s32.totalorder %s74, 0
    %p121 = por %p119, %p120
    %p122 = scmp.ne.s32.totalorder %s108, %s109
    %p123 = scmp.eq.s32.totalorder %s75, 1
    %p124 = por %p122, %p123
    %p126 = scmp.ne.s32.totalorder %s109, %s125
    %p127 = scmp.eq.s32.totalorder %s75, 0
    %p128 = por %p126, %p127
    %s129 = ssub.s32 %s69, %s76
    %p130 = scmp.eq.s32.totalorder %s129, 0
    %s132 = sadd.s32 %s131, 1
    %s133 = scalar_select %p130, %s131, %s132
    %p136 = pneg %p130
    %p137 = scmp.eq.s32.totalorder %s69, 1
    %p138 = por %p136, %p137
    %p139 = scmp.ne.s32.totalorder %s131, %s134
    %p140 = scmp.eq.s32.totalorder %s69, 0
    %p141 = por %p139, %p140
    %p142 = scmp.ne.s32.totalorder %s131, %s134
    %p143 = scmp.eq.s32.totalorder %s74, 1
    %p144 = por %p142, %p143
    %p145 = scmp.ne.s32.totalorder %s134, %s135
    %p146 = scmp.eq.s32.totalorder %s74, 0
    %p147 = por %p145, %p146
    %p148 = scmp.ne.s32.totalorder %s134, %s135
    %p149 = scmp.eq.s32.totalorder %s75, 1
    %p150 = por %p148, %p149
    %p152 = scmp.ne.s32.totalorder %s135, %s151
    %p153 = scmp.eq.s32.totalorder %s75, 0
    %p154 = por %p152, %p153
    %s155 = ssub.s32 %s69, %s76
    %p156 = scmp.eq.s32.totalorder %s155, 0
    %s158 = sadd.s32 %s157, 1
    %s159 = scalar_select %p156, %s157, %s158
    %p162 = pneg %p156
    %p163 = scmp.eq.s32.totalorder %s69, 1
    %p164 = por %p162, %p163
    %p165 = scmp.ne.s32.totalorder %s157, %s160
    %p166 = scmp.eq.s32.totalorder %s69, 0
    %p167 = por %p165, %p166
    %p168 = scmp.ne.s32.totalorder %s157, %s160
    %p169 = scmp.eq.s32.totalorder %s74, 1
    %p170 = por %p168, %p169
    %p171 = scmp.ne.s32.totalorder %s160, %s161
    %p172 = scmp.eq.s32.totalorder %s74, 0
    %p173 = por %p171, %p172
    %p174 = scmp.ne.s32.totalorder %s160, %s161
    %p175 = scmp.eq.s32.totalorder %s75, 1
    %p176 = por %p174, %p175
    %p178 = scmp.ne.s32.totalorder %s161, %s177
    %p179 = scmp.eq.s32.totalorder %s75, 0
    %p180 = por %p178, %p179
    %s182 = sadd.s32 %s181, 1
    %p185 = scmp.eq.s32.totalorder %s69, 1
    %p186 = scmp.ne.s32.totalorder %s181, %s183
    %p187 = scmp.eq.s32.totalorder %s69, 0
    %p188 = por %p186, %p187
    %p189 = scmp.ne.s32.totalorder %s181, %s183
    %p190 = scmp.eq.s32.totalorder %s74, 1
    %p191 = por %p189, %p190
    %p192 = scmp.ne.s32.totalorder %s183, %s184
    %p193 = scmp.eq.s32.totalorder %s74, 0
    %p194 = por %p192, %p193
    %p195 = scmp.ne.s32.totalorder %s183, %s184
    %p196 = scmp.eq.s32.totalorder %s75, 1
    %p197 = por %p195, %p196
    %p199 = scmp.ne.s32.totalorder %s184, %s198
    %p200 = scmp.eq.s32.totalorder %s75, 0
    %p201 = por %p199, %p200
    %s203 = sadd.s32 %s202, 1
    %p206 = scmp.eq.s32.totalorder %s69, 1
    %p207 = scmp.ne.s32.totalorder %s202, %s204
    %p208 = scmp.eq.s32.totalorder %s69, 0
    %p209 = por %p207, %p208
    %p210 = scmp.ne.s32.totalorder %s202, %s204
    %p211 = scmp.eq.s32.totalorder %s74, 1
    %p212 = por %p210, %p211
    %p213 = scmp.ne.s32.totalorder %s204, %s205
    %p214 = scmp.eq.s32.totalorder %s74, 0
    %p215 = por %p213, %p214
    %p216 = scmp.ne.s32.totalorder %s204, %s205
    %p217 = scmp.eq.s32.totalorder %s75, 1
    %p218 = por %p216, %p217
    %p220 = scmp.ne.s32.totalorder %s205, %s219
    %p221 = scmp.eq.s32.totalorder %s75, 0
    %p222 = por %p220, %p221
    %s224 = sadd.s32 %s223, 1
    %p227 = scmp.eq.s32.totalorder %s69, 1
    %p228 = scmp.ne.s32.totalorder %s223, %s225
    %p229 = scmp.eq.s32.totalorder %s69, 0
    %p230 = por %p228, %p229
    %p231 = scmp.ne.s32.totalorder %s223, %s225
    %p232 = scmp.eq.s32.totalorder %s74, 1
    %p233 = por %p231, %p232
    %p234 = scmp.ne.s32.totalorder %s225, %s226
    %p235 = scmp.eq.s32.totalorder %s74, 0
    %p236 = por %p234, %p235
    %p237 = scmp.ne.s32.totalorder %s225, %s226
    %p238 = scmp.eq.s32.totalorder %s75, 1
    %p239 = por %p237, %p238
    %p241 = scmp.ne.s32.totalorder %s226, %s240
    %p242 = scmp.eq.s32.totalorder %s75, 0
    %p243 = por %p241, %p242
    %s245 = sadd.s32 %s244, 1
    %p248 = scmp.eq.s32.totalorder %s69, 1
    %p249 = scmp.ne.s32.totalorder %s244, %s246
    %p250 = scmp.eq.s32.totalorder %s69, 0
    %p251 = por %p249, %p250
    %p252 = scmp.ne.s32.totalorder %s244, %s246
    %p253 = scmp.eq.s32.totalorder %s74, 1
    %p254 = por %p252, %p253
    %p255 = scmp.ne.s32.totalorder %s246, %s247
    %p256 = scmp.eq.s32.totalorder %s74, 0
    %p257 = por %p255, %p256
    %p258 = scmp.ne.s32.totalorder %s246, %s247
    %p259 = scmp.eq.s32.totalorder %s75, 1
    %p260 = por %p258, %p259
    %p262 = scmp.ne.s32.totalorder %s247, %s261
    %p263 = scmp.eq.s32.totalorder %s75, 0
    %p264 = por %p262, %p263
    %s266 = sadd.s32 %s265, 1
    %p269 = scmp.eq.s32.totalorder %s69, 1
    %p270 = scmp.ne.s32.totalorder %s265, %s267
    %p271 = scmp.eq.s32.totalorder %s69, 0
    %p272 = por %p270, %p271
    %p273 = scmp.ne.s32.totalorder %s265, %s267
    %p274 = scmp.eq.s32.totalorder %s74, 1
    %p275 = por %p273, %p274
    %p276 = scmp.ne.s32.totalorder %s267, %s268
    %p277 = scmp.eq.s32.totalorder %s74, 0
    %p278 = por %p276, %p277
    %p279 = scmp.ne.s32.totalorder %s267, %s268
    %p280 = scmp.eq.s32.totalorder %s75, 1
    %p281 = por %p279, %p280
    %p283 = scmp.ne.s32.totalorder %s268, %s282
    %p284 = scmp.eq.s32.totalorder %s75, 0
    %p285 = por %p283, %p284
    %s287 = sadd.s32 %s286, 1
    %p290 = scmp.eq.s32.totalorder %s69, 1
    %p291 = scmp.ne.s32.totalorder %s286, %s288
    %p292 = scmp.eq.s32.totalorder %s69, 0
    %p293 = por %p291, %p292
    %p294 = scmp.ne.s32.totalorder %s286, %s288
    %p295 = scmp.eq.s32.totalorder %s74, 1
    %p296 = por %p294, %p295
    %p297 = scmp.ne.s32.totalorder %s288, %s289
    %p298 = scmp.eq.s32.totalorder %s74, 0
    %p299 = por %p297, %p298
    %p300 = scmp.ne.s32.totalorder %s288, %s289
    %p301 = scmp.eq.s32.totalorder %s75, 1
    %p302 = por %p300, %p301
    %p304 = scmp.ne.s32.totalorder %s289, %s303
    %p305 = scmp.eq.s32.totalorder %s75, 0
    %p306 = por %p304, %p305
    %s308 = sadd.s32 %s307, 1
    %p311 = scmp.eq.s32.totalorder %s69, 1
    %p312 = scmp.ne.s32.totalorder %s307, %s309
    %p313 = scmp.eq.s32.totalorder %s69, 0
    %p314 = por %p312, %p313
    %p315 = scmp.ne.s32.totalorder %s307, %s309
    %p316 = scmp.eq.s32.totalorder %s74, 1
    %p317 = por %p315, %p316
    %p318 = scmp.ne.s32.totalorder %s309, %s310
    %p319 = scmp.eq.s32.totalorder %s74, 0
    %p320 = por %p318, %p319
    %p321 = scmp.ne.s32.totalorder %s309, %s310
    %p322 = scmp.eq.s32.totalorder %s75, 1
    %p323 = por %p321, %p322
    %p325 = scmp.ne.s32.totalorder %s310, %s324
    %p326 = scmp.eq.s32.totalorder %s75, 0
    %p327 = por %p325, %p326
    %s329 = sadd.s32 %s328, 1
    %p332 = scmp.eq.s32.totalorder %s69, 1
    %p333 = scmp.ne.s32.totalorder %s328, %s330
    %p334 = scmp.eq.s32.totalorder %s69, 0
    %p335 = por %p333, %p334
    %p336 = scmp.ne.s32.totalorder %s328, %s330
    %p337 = scmp.eq.s32.totalorder %s74, 1
    %p338 = por %p336, %p337
    %p339 = scmp.ne.s32.totalorder %s330, %s331
    %p340 = scmp.eq.s32.totalorder %s74, 0
    %p341 = por %p339, %p340
    %p342 = scmp.ne.s32.totalorder %s330, %s331
    %p343 = scmp.eq.s32.totalorder %s75, 1
    %p344 = por %p342, %p343
    %p346 = scmp.ne.s32.totalorder %s331, %s345
    %p347 = scmp.eq.s32.totalorder %s75, 0
    %p348 = por %p346, %p347
    %s350 = sadd.s32 %s349, 1
    %p353 = scmp.eq.s32.totalorder %s69, 1
    %p354 = scmp.ne.s32.totalorder %s349, %s351
    %p355 = scmp.eq.s32.totalorder %s69, 0
    %p356 = por %p354, %p355
    %p357 = scmp.ne.s32.totalorder %s349, %s351
    %p358 = scmp.eq.s32.totalorder %s74, 1
    %p359 = por %p357, %p358
    %p360 = scmp.ne.s32.totalorder %s351, %s352
    %p361 = scmp.eq.s32.totalorder %s74, 0
    %p362 = por %p360, %p361
    %p363 = scmp.ne.s32.totalorder %s351, %s352
    %p364 = scmp.eq.s32.totalorder %s75, 1
    %p365 = por %p363, %p364
    %p367 = scmp.ne.s32.totalorder %s352, %s366
    %p368 = scmp.eq.s32.totalorder %s75, 0
    %p369 = por %p367, %p368
    %s371 = sadd.s32 %s370, 1
    %p374 = scmp.eq.s32.totalorder %s69, 1
    %p375 = scmp.ne.s32.totalorder %s370, %s372
    %p376 = scmp.eq.s32.totalorder %s69, 0
    %p377 = por %p375, %p376
    %p378 = scmp.ne.s32.totalorder %s370, %s372
    %p379 = scmp.eq.s32.totalorder %s74, 1
    %p380 = por %p378, %p379
    %p381 = scmp.ne.s32.totalorder %s372, %s373
    %p382 = scmp.eq.s32.totalorder %s74, 0
    %p383 = por %p381, %p382
    %p384 = scmp.ne.s32.totalorder %s372, %s373
    %p385 = scmp.eq.s32.totalorder %s75, 1
    %p386 = por %p384, %p385
    %p388 = scmp.ne.s32.totalorder %s373, %s387
    %p389 = scmp.eq.s32.totalorder %s75, 0
    %p390 = por %p388, %p389
    %s392 = sadd.s32 %s391, 1
    %p395 = scmp.eq.s32.totalorder %s69, 1
    %p396 = scmp.ne.s32.totalorder %s391, %s393
    %p397 = scmp.eq.s32.totalorder %s69, 0
    %p398 = por %p396, %p397
    %p399 = scmp.ne.s32.totalorder %s391, %s393
    %p400 = scmp.eq.s32.totalorder %s74, 1
    %p401 = por %p399, %p400
    %p402 = scmp.ne.s32.totalorder %s393, %s394
    %p403 = scmp.eq.s32.totalorder %s74, 0
    %p404 = por %p402, %p403
    %p405 = scmp.ne.s32.totalorder %s393, %s394
    %p406 = scmp.eq.s32.totalorder %s75, 1
    %p407 = por %p405, %p406
    %p409 = scmp.ne.s32.totalorder %s394, %s408
    %p410 = scmp.eq.s32.totalorder %s75, 0
    %p411 = por %p409, %p410
    %s413 = sadd.s32 %s412, 1
    %p416 = scmp.eq.s32.totalorder %s69, 1
    %p417 = scmp.ne.s32.totalorder %s412, %s414
    %p418 = scmp.eq.s32.totalorder %s69, 0
    %p419 = por %p417, %p418
    %p420 = scmp.ne.s32.totalorder %s412, %s414
    %p421 = scmp.eq.s32.totalorder %s74, 1
    %p422 = por %p420, %p421
    %p423 = scmp.ne.s32.totalorder %s414, %s415
    %p424 = scmp.eq.s32.totalorder %s74, 0
    %p425 = por %p423, %p424
    %p426 = scmp.ne.s32.totalorder %s414, %s415
    %p427 = scmp.eq.s32.totalorder %s75, 1
    %p428 = por %p426, %p427
    %p430 = scmp.ne.s32.totalorder %s415, %s429
    %p431 = scmp.eq.s32.totalorder %s75, 0
    %p432 = por %p430, %p431
    %s434 = sadd.s32 %s433, 1
    %p437 = scmp.eq.s32.totalorder %s69, 1
    %p438 = scmp.ne.s32.totalorder %s433, %s435
    %p439 = scmp.eq.s32.totalorder %s69, 0
    %p440 = por %p438, %p439
    %p441 = scmp.ne.s32.totalorder %s433, %s435
    %p442 = scmp.eq.s32.totalorder %s74, 1
    %p443 = por %p441, %p442
    %p444 = scmp.ne.s32.totalorder %s435, %s436
    %p445 = scmp.eq.s32.totalorder %s74, 0
    %p446 = por %p444, %p445
    %p447 = scmp.ne.s32.totalorder %s435, %s436
    %p448 = scmp.eq.s32.totalorder %s75, 1
    %p449 = por %p447, %p448
    %p451 = scmp.ne.s32.totalorder %s436, %s450
    %p452 = scmp.eq.s32.totalorder %s75, 0
    %p453 = por %p451, %p452
    %s455 = sadd.s32 %s454, 1
    %p458 = scmp.eq.s32.totalorder %s69, 1
    %p459 = scmp.ne.s32.totalorder %s454, %s456
    %p460 = scmp.eq.s32.totalorder %s69, 0
    %p461 = por %p459, %p460
    %p462 = scmp.ne.s32.totalorder %s454, %s456
    %p463 = scmp.eq.s32.totalorder %s74, 1
    %p464 = por %p462, %p463
    %p465 = scmp.ne.s32.totalorder %s456, %s457
    %p466 = scmp.eq.s32.totalorder %s74, 0
    %p467 = por %p465, %p466
    %p468 = scmp.ne.s32.totalorder %s456, %s457
    %p469 = scmp.eq.s32.totalorder %s75, 1
    %p470 = por %p468, %p469
    %p472 = scmp.ne.s32.totalorder %s457, %s471
    %p473 = scmp.eq.s32.totalorder %s75, 0
    %p474 = por %p472, %p473
    %s476 = sadd.s32 %s475, 1
    %p479 = scmp.eq.s32.totalorder %s69, 1
    %p480 = scmp.ne.s32.totalorder %s475, %s477
    %p481 = scmp.eq.s32.totalorder %s69, 0
    %p482 = por %p480, %p481
    %p483 = scmp.ne.s32.totalorder %s475, %s477
    %p484 = scmp.eq.s32.totalorder %s74, 1
    %p485 = por %p483, %p484
    %p486 = scmp.ne.s32.totalorder %s477, %s478
    %p487 = scmp.eq.s32.totalorder %s74, 0
    %p488 = por %p486, %p487
    %p489 = scmp.ne.s32.totalorder %s477, %s478
    %p490 = scmp.eq.s32.totalorder %s75, 1
    %p491 = por %p489, %p490
    %p493 = scmp.ne.s32.totalorder %s478, %s492
    %p494 = scmp.eq.s32.totalorder %s75, 0
    %p495 = por %p493, %p494
    %s497 = sadd.s32 %s496, 1
    %p500 = scmp.eq.s32.totalorder %s69, 1
    %p501 = scmp.ne.s32.totalorder %s496, %s498
    %p502 = scmp.eq.s32.totalorder %s69, 0
    %p503 = por %p501, %p502
    %p504 = scmp.ne.s32.totalorder %s496, %s498
    %p505 = scmp.eq.s32.totalorder %s74, 1
    %p506 = por %p504, %p505
    %p507 = scmp.ne.s32.totalorder %s498, %s499
    %p508 = scmp.eq.s32.totalorder %s74, 0
    %p509 = por %p507, %p508
    %p510 = scmp.ne.s32.totalorder %s498, %s499
    %p511 = scmp.eq.s32.totalorder %s75, 1
    %p512 = por %p510, %p511
    %p514 = scmp.ne.s32.totalorder %s499, %s513
    %p515 = scmp.eq.s32.totalorder %s75, 0
    %p516 = por %p514, %p515
    %s518 = sadd.s32 %s517, 1
    %p521 = scmp.eq.s32.totalorder %s69, 1
    %p522 = scmp.ne.s32.totalorder %s517, %s519
    %p523 = scmp.eq.s32.totalorder %s69, 0
    %p524 = por %p522, %p523
    %p525 = scmp.ne.s32.totalorder %s517, %s519
    %p526 = scmp.eq.s32.totalorder %s74, 1
    %p527 = por %p525, %p526
    %p528 = scmp.ne.s32.totalorder %s519, %s520
    %p529 = scmp.eq.s32.totalorder %s74, 0
    %p530 = por %p528, %p529
    %p531 = scmp.ne.s32.totalorder %s519, %s520
    %p532 = scmp.eq.s32.totalorder %s75, 1
    %p533 = por %p531, %p532
    %p535 = scmp.ne.s32.totalorder %s520, %s534
    %p536 = scmp.eq.s32.totalorder %s75, 0
    %p537 = por %p535, %p536
    %s539 = sadd.s32 %s538, 1
    %p542 = scmp.eq.s32.totalorder %s69, 1
    %p543 = scmp.ne.s32.totalorder %s538, %s540
    %p544 = scmp.eq.s32.totalorder %s69, 0
    %p545 = por %p543, %p544
    %p546 = scmp.ne.s32.totalorder %s538, %s540
    %p547 = scmp.eq.s32.totalorder %s74, 1
    %p548 = por %p546, %p547
    %p549 = scmp.ne.s32.totalorder %s540, %s541
    %p550 = scmp.eq.s32.totalorder %s74, 0
    %p551 = por %p549, %p550
    %p552 = scmp.ne.s32.totalorder %s540, %s541
    %p553 = scmp.eq.s32.totalorder %s75, 1
    %p554 = por %p552, %p553
    %p556 = scmp.ne.s32.totalorder %s541, %s555
    %p557 = scmp.eq.s32.totalorder %s75, 0
    %p558 = por %p556, %p557
    %s560 = sadd.s32 %s559, 1
    %p563 = scmp.eq.s32.totalorder %s69, 1
    %p564 = scmp.ne.s32.totalorder %s559, %s561
    %p565 = scmp.eq.s32.totalorder %s69, 0
    %p566 = por %p564, %p565
    %p567 = scmp.ne.s32.totalorder %s559, %s561
    %p568 = scmp.eq.s32.totalorder %s74, 1
    %p569 = por %p567, %p568
    %p570 = scmp.ne.s32.totalorder %s561, %s562
    %p571 = scmp.eq.s32.totalorder %s74, 0
    %p572 = por %p570, %p571
    %p573 = scmp.ne.s32.totalorder %s561, %s562
    %p574 = scmp.eq.s32.totalorder %s75, 1
    %p575 = por %p573, %p574
    %p577 = scmp.ne.s32.totalorder %s562, %s576
    %p578 = scmp.eq.s32.totalorder %s75, 0
    %p579 = por %p577, %p578
    %s581 = sadd.s32 %s580, 1
    %p584 = scmp.eq.s32.totalorder %s69, 1
    %p585 = scmp.ne.s32.totalorder %s580, %s582
    %p586 = scmp.eq.s32.totalorder %s69, 0
    %p587 = por %p585, %p586
    %p588 = scmp.ne.s32.totalorder %s580, %s582
    %p589 = scmp.eq.s32.totalorder %s74, 1
    %p590 = por %p588, %p589
    %p591 = scmp.ne.s32.totalorder %s582, %s583
    %p592 = scmp.eq.s32.totalorder %s74, 0
    %p593 = por %p591, %p592
    %p594 = scmp.ne.s32.totalorder %s582, %s583
    %p595 = scmp.eq.s32.totalorder %s75, 1
    %p596 = por %p594, %p595
    %p598 = scmp.ne.s32.totalorder %s583, %s597
    %p599 = scmp.eq.s32.totalorder %s75, 0
    %p600 = por %p598, %p599
    %s602 = sadd.s32 %s601, 1
    %p605 = scmp.eq.s32.totalorder %s69, 1
    %p606 = scmp.ne.s32.totalorder %s601, %s603
    %p607 = scmp.eq.s32.totalorder %s69, 0
    %p608 = por %p606, %p607
    %p609 = scmp.ne.s32.totalorder %s601, %s603
    %p610 = scmp.eq.s32.totalorder %s74, 1
    %p611 = por %p609, %p610
    %p612 = scmp.ne.s32.totalorder %s603, %s604
    %p613 = scmp.eq.s32.totalorder %s74, 0
    %p614 = por %p612, %p613
    %p615 = scmp.ne.s32.totalorder %s603, %s604
    %p616 = scmp.eq.s32.totalorder %s75, 1
    %p617 = por %p615, %p616
    %p619 = scmp.ne.s32.totalorder %s604, %s618
    %p620 = scmp.eq.s32.totalorder %s75, 0
    %p621 = por %p619, %p620
    %s623 = sadd.s32 %s622, 1
    %p626 = scmp.eq.s32.totalorder %s69, 1
    %p627 = scmp.ne.s32.totalorder %s622, %s624
    %p628 = scmp.eq.s32.totalorder %s69, 0
    %p629 = por %p627, %p628
    %p630 = scmp.ne.s32.totalorder %s622, %s624
    %p631 = scmp.eq.s32.totalorder %s74, 1
    %p632 = por %p630, %p631
    %p633 = scmp.ne.s32.totalorder %s624, %s625
    %p634 = scmp.eq.s32.totalorder %s74, 0
    %p635 = por %p633, %p634
    %p636 = scmp.ne.s32.totalorder %s624, %s625
    %p637 = scmp.eq.s32.totalorder %s75, 1
    %p638 = por %p636, %p637
    %p640 = scmp.ne.s32.totalorder %s625, %s639
    %p641 = scmp.eq.s32.totalorder %s75, 0
    %p642 = por %p640, %p641
    %s644 = sadd.s32 %s643, 1
    %p647 = scmp.eq.s32.totalorder %s69, 1
    %p648 = scmp.ne.s32.totalorder %s643, %s645
    %p649 = scmp.eq.s32.totalorder %s69, 0
    %p650 = por %p648, %p649
    %p651 = scmp.ne.s32.totalorder %s643, %s645
    %p652 = scmp.eq.s32.totalorder %s74, 1
    %p653 = por %p651, %p652
    %p654 = scmp.ne.s32.totalorder %s645, %s646
    %p655 = scmp.eq.s32.totalorder %s74, 0
    %p656 = por %p654, %p655
    %p657 = scmp.ne.s32.totalorder %s645, %s646
    %p658 = scmp.eq.s32.totalorder %s75, 1
    %p659 = por %p657, %p658
    %p661 = scmp.ne.s32.totalorder %s646, %s660
    %p662 = scmp.eq.s32.totalorder %s75, 0
    %p663 = por %p661, %p662
    %s665 = sadd.s32 %s664, 1
    %p668 = scmp.eq.s32.totalorder %s69, 1
    %p669 = scmp.ne.s32.totalorder %s664, %s666
    %p670 = scmp.eq.s32.totalorder %s69, 0
    %p671 = por %p669, %p670
    %p672 = scmp.ne.s32.totalorder %s664, %s666
    %p673 = scmp.eq.s32.totalorder %s74, 1
    %p674 = por %p672, %p673
    %p675 = scmp.ne.s32.totalorder %s666, %s667
    %p676 = scmp.eq.s32.totalorder %s74, 0
    %p677 = por %p675, %p676
    %p678 = scmp.ne.s32.totalorder %s666, %s667
    %p679 = scmp.eq.s32.totalorder %s75, 1
    %p680 = por %p678, %p679
    %p682 = scmp.ne.s32.totalorder %s667, %s681
    %p683 = scmp.eq.s32.totalorder %s75, 0
    %p684 = por %p682, %p683
    %s686 = sadd.s32 %s685, 1
    %p689 = scmp.eq.s32.totalorder %s69, 1
    %p690 = scmp.ne.s32.totalorder %s685, %s687
    %p691 = scmp.eq.s32.totalorder %s69, 0
    %p692 = por %p690, %p691
    %p693 = scmp.ne.s32.totalorder %s685, %s687
    %p694 = scmp.eq.s32.totalorder %s74, 1
    %p695 = por %p693, %p694
    %p696 = scmp.ne.s32.totalorder %s687, %s688
    %p697 = scmp.eq.s32.totalorder %s74, 0
    %p698 = por %p696, %p697
    %p699 = scmp.ne.s32.totalorder %s687, %s688
    %p700 = scmp.eq.s32.totalorder %s75, 1
    %p701 = por %p699, %p700
    %p703 = scmp.ne.s32.totalorder %s688, %s702
    %p704 = scmp.eq.s32.totalorder %s75, 0
    %p705 = por %p703, %p704
    %s707 = sadd.s32 %s706, 1
    %p710 = scmp.eq.s32.totalorder %s69, 1
    %p711 = scmp.ne.s32.totalorder %s706, %s708
    %p712 = scmp.eq.s32.totalorder %s69, 0
    %p713 = por %p711, %p712
    %p714 = scmp.ne.s32.totalorder %s706, %s708
    %p715 = scmp.eq.s32.totalorder %s74, 1
    %p716 = por %p714, %p715
    %p717 = scmp.ne.s32.totalorder %s708, %s709
    %p718 = scmp.eq.s32.totalorder %s74, 0
    %p719 = por %p717, %p718
    %p720 = scmp.ne.s32.totalorder %s708, %s709
    %p721 = scmp.eq.s32.totalorder %s75, 1
    %p722 = por %p720, %p721
    %p724 = scmp.ne.s32.totalorder %s709, %s723
    %p725 = scmp.eq.s32.totalorder %s75, 0
    %p726 = por %p724, %p725
    %s728 = sadd.s32 %s727, 1
    %p731 = scmp.eq.s32.totalorder %s69, 1
    %p732 = scmp.ne.s32.totalorder %s727, %s729
    %p733 = scmp.eq.s32.totalorder %s69, 0
    %p734 = por %p732, %p733
    %p735 = scmp.ne.s32.totalorder %s727, %s729
    %p736 = scmp.eq.s32.totalorder %s74, 1
    %p737 = por %p735, %p736
    %p738 = scmp.ne.s32.totalorder %s729, %s730
    %p739 = scmp.eq.s32.totalorder %s74, 0
    %p740 = por %p738, %p739
    %p741 = scmp.ne.s32.totalorder %s729, %s730
    %p742 = scmp.eq.s32.totalorder %s75, 1
    %p743 = por %p741, %p742
    %p745 = scmp.ne.s32.totalorder %s730, %s744
    %p746 = scmp.eq.s32.totalorder %s75, 0
    %p747 = por %p745, %p746
    %s748 = ssub.s32 %s69, %s76
    %p749 = scmp.eq.s32.totalorder %s748, 0
    %s751 = sadd.s32 %s750, 1
    %s752 = scalar_select %p749, %s750, %s751
    %p755 = pneg %p749
    %p756 = scmp.eq.s32.totalorder %s69, 1
    %p757 = por %p755, %p756
    %p758 = scmp.ne.s32.totalorder %s750, %s753
    %p759 = scmp.eq.s32.totalorder %s69, 0
    %p760 = por %p758, %p759
    %p761 = scmp.ne.s32.totalorder %s750, %s753
    %p762 = scmp.eq.s32.totalorder %s74, 1
    %p763 = por %p761, %p762
    %p764 = scmp.ne.s32.totalorder %s753, %s754
    %p765 = scmp.eq.s32.totalorder %s74, 0
    %p766 = por %p764, %p765
    %p767 = scmp.ne.s32.totalorder %s753, %s754
    %p768 = scmp.eq.s32.totalorder %s75, 1
    %p769 = por %p767, %p768
    %p771 = scmp.ne.s32.totalorder %s754, %s770
    %p772 = scmp.eq.s32.totalorder %s75, 0
    %p773 = por %p771, %p772
    %p774 = scmp.le.s32.totalorder 1, %s69
    %p775 = scmp.lt.s32.totalorder %s69, 3
    %p776 = pnand %p774, %p775
    %p777 = pneg %p776
    // Predicated region
    $region9: #{dit_forward.1} parent=5 // pred_check
      _
    $region10: #{dit_forward.1} parent=5 // pred_check_branch
      %779 = sbr.rel (%p776) target = $region12
    $region11: #{dit_forward.1} parent=5 // pred_region
      %s780 = ssub.s32 %s69, 1
      // Predicated region
      $region13: #{dit_forward.1} parent=11 // pred_check
        %p781 = pneg %p194
      $region14: #{dit_forward.1} parent=11 // pred_check_branch
        %783 = sbr.rel (%p781) target = $region16
      $region15: #{dit_forward.1} parent=11 // pred_region
        _
      $region16: #{dit_forward.1} parent=11 // pred_fallthru
        _
      // Predicated region
      $region17: #{dit_forward.1} parent=11 // pred_check
        %p784 = pneg %p215
      $region18: #{dit_forward.1} parent=11 // pred_check_branch
        %786 = sbr.rel (%p784) target = $region20
      $region19: #{dit_forward.1} parent=11 // pred_region
        _
      $region20: #{dit_forward.1} parent=11 // pred_fallthru
        _
      // Predicated region
      $region21: #{dit_forward.1} parent=11 // pred_check
        %p787 = pneg %p236
      $region22: #{dit_forward.1} parent=11 // pred_check_branch
        %789 = sbr.rel (%p787) target = $region24
      $region23: #{dit_forward.1} parent=11 // pred_region
        _
      $region24: #{dit_forward.1} parent=11 // pred_fallthru
        _
      // Predicated region
      $region25: #{dit_forward.1} parent=11 // pred_check
        %p790 = pneg %p257
      $region26: #{dit_forward.1} parent=11 // pred_check_branch
        %792 = sbr.rel (%p790) target = $region28
      $region27: #{dit_forward.1} parent=11 // pred_region
        _
      $region28: #{dit_forward.1} parent=11 // pred_fallthru
        _
      // Predicated region
      $region29: #{dit_forward.1} parent=11 // pred_check
        %p793 = pneg %p278
      $region30: #{dit_forward.1} parent=11 // pred_check_branch
        %795 = sbr.rel (%p793) target = $region32
      $region31: #{dit_forward.1} parent=11 // pred_region
        _
      $region32: #{dit_forward.1} parent=11 // pred_fallthru
        _
      // Predicated region
      $region33: #{dit_forward.1} parent=11 // pred_check
        %p796 = pneg %p299
      $region34: #{dit_forward.1} parent=11 // pred_check_branch
        %798 = sbr.rel (%p796) target = $region36
      $region35: #{dit_forward.1} parent=11 // pred_region
        _
      $region36: #{dit_forward.1} parent=11 // pred_fallthru
        _
      // Predicated region
      $region37: #{dit_forward.1} parent=11 // pred_check
        %p799 = pneg %p320
      $region38: #{dit_forward.1} parent=11 // pred_check_branch
        %801 = sbr.rel (%p799) target = $region40
      $region39: #{dit_forward.1} parent=11 // pred_region
        _
      $region40: #{dit_forward.1} parent=11 // pred_fallthru
        _
      // Predicated region
      $region41: #{dit_forward.1} parent=11 // pred_check
        %p802 = pneg %p341
      $region42: #{dit_forward.1} parent=11 // pred_check_branch
        %804 = sbr.rel (%p802) target = $region44
      $region43: #{dit_forward.1} parent=11 // pred_region
        _
      $region44: #{dit_forward.1} parent=11 // pred_fallthru
        _
      // Predicated region
      $region45: #{dit_forward.1} parent=11 // pred_check
        %p805 = pneg %p362
      $region46: #{dit_forward.1} parent=11 // pred_check_branch
        %807 = sbr.rel (%p805) target = $region48
      $region47: #{dit_forward.1} parent=11 // pred_region
        _
      $region48: #{dit_forward.1} parent=11 // pred_fallthru
        _
      // Predicated region
      $region49: #{dit_forward.1} parent=11 // pred_check
        %p808 = pneg %p383
      $region50: #{dit_forward.1} parent=11 // pred_check_branch
        %810 = sbr.rel (%p808) target = $region52
      $region51: #{dit_forward.1} parent=11 // pred_region
        _
      $region52: #{dit_forward.1} parent=11 // pred_fallthru
        _
      // Predicated region
      $region53: #{dit_forward.1} parent=11 // pred_check
        %p811 = pneg %p404
      $region54: #{dit_forward.1} parent=11 // pred_check_branch
        %813 = sbr.rel (%p811) target = $region56
      $region55: #{dit_forward.1} parent=11 // pred_region
        _
      $region56: #{dit_forward.1} parent=11 // pred_fallthru
        _
      // Predicated region
      $region57: #{dit_forward.1} parent=11 // pred_check
        %p814 = pneg %p425
      $region58: #{dit_forward.1} parent=11 // pred_check_branch
        %816 = sbr.rel (%p814) target = $region60
      $region59: #{dit_forward.1} parent=11 // pred_region
        _
      $region60: #{dit_forward.1} parent=11 // pred_fallthru
        _
      // Predicated region
      $region61: #{dit_forward.1} parent=11 // pred_check
        %p817 = pneg %p446
      $region62: #{dit_forward.1} parent=11 // pred_check_branch
        %819 = sbr.rel (%p817) target = $region64
      $region63: #{dit_forward.1} parent=11 // pred_region
        _
      $region64: #{dit_forward.1} parent=11 // pred_fallthru
        _
      // Predicated region
      $region65: #{dit_forward.1} parent=11 // pred_check
        %p820 = pneg %p467
      $region66: #{dit_forward.1} parent=11 // pred_check_branch
        %822 = sbr.rel (%p820) target = $region68
      $region67: #{dit_forward.1} parent=11 // pred_region
        _
      $region68: #{dit_forward.1} parent=11 // pred_fallthru
        _
      // Predicated region
      $region69: #{dit_forward.1} parent=11 // pred_check
        %p823 = pneg %p488
      $region70: #{dit_forward.1} parent=11 // pred_check_branch
        %825 = sbr.rel (%p823) target = $region72
      $region71: #{dit_forward.1} parent=11 // pred_region
        _
      $region72: #{dit_forward.1} parent=11 // pred_fallthru
        _
      // Predicated region
      $region73: #{dit_forward.1} parent=11 // pred_check
        %p826 = pneg %p509
      $region74: #{dit_forward.1} parent=11 // pred_check_branch
        %828 = sbr.rel (%p826) target = $region76
      $region75: #{dit_forward.1} parent=11 // pred_region
        _
      $region76: #{dit_forward.1} parent=11 // pred_fallthru
        _
      // Predicated region
      $region77: #{dit_forward.1} parent=11 // pred_check
        %p829 = pneg %p530
      $region78: #{dit_forward.1} parent=11 // pred_check_branch
        %831 = sbr.rel (%p829) target = $region80
      $region79: #{dit_forward.1} parent=11 // pred_region
        _
      $region80: #{dit_forward.1} parent=11 // pred_fallthru
        _
      // Predicated region
      $region81: #{dit_forward.1} parent=11 // pred_check
        %p832 = pneg %p551
      $region82: #{dit_forward.1} parent=11 // pred_check_branch
        %834 = sbr.rel (%p832) target = $region84
      $region83: #{dit_forward.1} parent=11 // pred_region
        _
      $region84: #{dit_forward.1} parent=11 // pred_fallthru
        _
      // Predicated region
      $region85: #{dit_forward.1} parent=11 // pred_check
        %p835 = pneg %p572
      $region86: #{dit_forward.1} parent=11 // pred_check_branch
        %837 = sbr.rel (%p835) target = $region88
      $region87: #{dit_forward.1} parent=11 // pred_region
        _
      $region88: #{dit_forward.1} parent=11 // pred_fallthru
        _
      // Predicated region
      $region89: #{dit_forward.1} parent=11 // pred_check
        %p838 = pneg %p593
      $region90: #{dit_forward.1} parent=11 // pred_check_branch
        %840 = sbr.rel (%p838) target = $region92
      $region91: #{dit_forward.1} parent=11 // pred_region
        _
      $region92: #{dit_forward.1} parent=11 // pred_fallthru
        _
      // Predicated region
      $region93: #{dit_forward.1} parent=11 // pred_check
        %p841 = pneg %p614
      $region94: #{dit_forward.1} parent=11 // pred_check_branch
        %843 = sbr.rel (%p841) target = $region96
      $region95: #{dit_forward.1} parent=11 // pred_region
        _
      $region96: #{dit_forward.1} parent=11 // pred_fallthru
        _
      // Predicated region
      $region97: #{dit_forward.1} parent=11 // pred_check
        %p844 = pneg %p635
      $region98: #{dit_forward.1} parent=11 // pred_check_branch
        %846 = sbr.rel (%p844) target = $region100
      $region99: #{dit_forward.1} parent=11 // pred_region
        _
      $region100: #{dit_forward.1} parent=11 // pred_fallthru
        _
      // Predicated region
      $region101: #{dit_forward.1} parent=11 // pred_check
        %p847 = pneg %p656
      $region102: #{dit_forward.1} parent=11 // pred_check_branch
        %849 = sbr.rel (%p847) target = $region104
      $region103: #{dit_forward.1} parent=11 // pred_region
        _
      $region104: #{dit_forward.1} parent=11 // pred_fallthru
        _
      // Predicated region
      $region105: #{dit_forward.1} parent=11 // pred_check
        %p850 = pneg %p677
      $region106: #{dit_forward.1} parent=11 // pred_check_branch
        %852 = sbr.rel (%p850) target = $region108
      $region107: #{dit_forward.1} parent=11 // pred_region
        _
      $region108: #{dit_forward.1} parent=11 // pred_fallthru
        _
      // Predicated region
      $region109: #{dit_forward.1} parent=11 // pred_check
        %p853 = pneg %p698
      $region110: #{dit_forward.1} parent=11 // pred_check_branch
        %855 = sbr.rel (%p853) target = $region112
      $region111: #{dit_forward.1} parent=11 // pred_region
        _
      $region112: #{dit_forward.1} parent=11 // pred_fallthru
        _
      // Predicated region
      $region113: #{dit_forward.1} parent=11 // pred_check
        %p856 = pneg %p719
      $region114: #{dit_forward.1} parent=11 // pred_check_branch
        %858 = sbr.rel (%p856) target = $region116
      $region115: #{dit_forward.1} parent=11 // pred_region
        _
      $region116: #{dit_forward.1} parent=11 // pred_fallthru
        _
      // Predicated region
      $region117: #{dit_forward.1} parent=11 // pred_check
        %p859 = pneg %p740
      $region118: #{dit_forward.1} parent=11 // pred_check_branch
        %861 = sbr.rel (%p859) target = $region120
      $region119: #{dit_forward.1} parent=11 // pred_region
        _
      $region120: #{dit_forward.1} parent=11 // pred_fallthru
        _
    $region12: #{dit_forward.1} parent=5 // pred_fallthru
      _
    %p862 = scmp.lt.s32.totalorder %s69, 2
    // Predicated region
    $region121: #{dit_forward.1} parent=5 // pred_check
      %p863 = pneg %p862
    $region122: #{dit_forward.1} parent=5 // pred_check_branch
      %865 = sbr.rel (%p863) target = $region124
    $region123: #{dit_forward.1} parent=5 // pred_region
      // Predicated region
      $region125: #{dit_forward.1} parent=123 // pred_check
        %p866 = pneg %p89
      $region126: #{dit_forward.1} parent=123 // pred_check_branch
        %868 = sbr.rel (%p866) target = $region128
      $region127: #{dit_forward.1} parent=123 // pred_region
        %p869 = scmp.lt.s32.totalorder %s69, 1
        %s870 = scalar_select %p869, %s69, 1
        %s871 = smul.addr %s870, 2
        %s872 = smul.addr %s871, 8
        %s873 = scalar_lea.vmem %s1, %s872
      $region128: #{dit_forward.1} parent=123 // pred_fallthru
        _
      // Predicated region
      $region129: #{dit_forward.1} parent=123 // pred_check
        %p874 = pneg %p115
      $region130: #{dit_forward.1} parent=123 // pred_check_branch
        %876 = sbr.rel (%p874) target = $region132
      $region131: #{dit_forward.1} parent=123 // pred_region
        %p877 = scmp.lt.s32.totalorder %s69, 1
        %s878 = scalar_select %p877, %s69, 1
        %s879 = smul.addr %s878, 4
        %s880 = smul.addr %s879, 8
        %s881 = scalar_lea.vmem %s3, %s880
      $region132: #{dit_forward.1} parent=123 // pred_fallthru
        _
      // Predicated region
      $region133: #{dit_forward.1} parent=123 // pred_check
        %p882 = pneg %p141
      $region134: #{dit_forward.1} parent=123 // pred_check_branch
        %884 = sbr.rel (%p882) target = $region136
      $region135: #{dit_forward.1} parent=123 // pred_region
        %p885 = scmp.lt.s32.totalorder %s69, 1
        %s886 = scalar_select %p885, %s69, 1
        %s887 = smul.addr %s886, 4
        %s888 = smul.addr %s887, 8
        %s889 = scalar_lea.vmem %s5, %s888
      $region136: #{dit_forward.1} parent=123 // pred_fallthru
        _
      // Predicated region
      $region137: #{dit_forward.1} parent=123 // pred_check
        %p890 = pneg %p167
      $region138: #{dit_forward.1} parent=123 // pred_check_branch
        %892 = sbr.rel (%p890) target = $region140
      $region139: #{dit_forward.1} parent=123 // pred_region
        %p893 = scmp.lt.s32.totalorder %s69, 1
        %s894 = scalar_select %p893, %s69, 1
        %s895 = scalar_lea.vmem %s7, %s894
      $region140: #{dit_forward.1} parent=123 // pred_fallthru
        _
    $region124: #{dit_forward.1} parent=5 // pred_fallthru
      _
    %p896 = scmp.le.s32.totalorder 1, %s69
    %p897 = scmp.lt.s32.totalorder %s69, 3
    %p898 = pnand %p896, %p897
    %p899 = pneg %p898
    // Predicated region
    $region141: #{dit_forward.1} parent=5 // pred_check
      _
    $region142: #{dit_forward.1} parent=5 // pred_check_branch
      %901 = sbr.rel (%p898) target = $region144
    $region143: #{dit_forward.1} parent=5 // pred_region
      %s902 = ssub.s32 %s69, 1
      %p903 = scmp.lt.s32.totalorder %s74, 1
      %s904 = scalar_select %p903, %s74, 1
      %s905 = smul.addr %s904, 2
      %s906 = smul.addr %s905, 8
      %s907 = scalar_lea.vmem %s1, %s906
      %p908 = pneg %p95
      %p909 = pneg %p92
      %p910 = scmp.lt.s32.totalorder %s74, 1
      %s911 = scalar_select %p910, %s74, 1
      %s912 = smul.addr %s911, 4
      %s913 = smul.addr %s912, 8
      %s914 = scalar_lea.vmem %s3, %s913
      %p915 = pneg %p121
      %p916 = pneg %p118
      %p917 = scmp.lt.s32.totalorder %s74, 1
      %s918 = scalar_select %p917, %s74, 1
      %s919 = smul.addr %s918, 4
      %s920 = smul.addr %s919, 8
      %s921 = scalar_lea.vmem %s5, %s920
      %p922 = pneg %p147
      %p923 = pneg %p144
      %p924 = scmp.lt.s32.totalorder %s74, 1
      %s925 = scalar_select %p924, %s74, 1
      %s926 = scalar_lea.vmem %s7, %s925
      %p927 = pneg %p173
      %p928 = pneg %p170
      %p929 = pneg %p194
      %p930 = pneg %p191
      %p931 = pneg %p215
      %p932 = pneg %p212
      %p933 = pneg %p236
      %p934 = pneg %p233
      %p935 = pneg %p257
      %p936 = pneg %p254
      %p937 = pneg %p278
      %p938 = pneg %p275
      %p939 = pneg %p299
      %p940 = pneg %p296
      %p941 = pneg %p320
      %p942 = pneg %p317
      %p943 = pneg %p341
      %p944 = pneg %p338
      %p945 = pneg %p362
      %p946 = pneg %p359
      %p947 = pneg %p383
      %p948 = pneg %p380
      %p949 = pneg %p404
      %p950 = pneg %p401
      %p951 = pneg %p425
      %p952 = pneg %p422
      %p953 = pneg %p446
      %p954 = pneg %p443
      %p955 = pneg %p467
      %p956 = pneg %p464
      %p957 = pneg %p488
      %p958 = pneg %p485
      %p959 = pneg %p509
      %p960 = pneg %p506
      %p961 = pneg %p530
      %p962 = pneg %p527
      %p963 = pneg %p551
      %p964 = pneg %p548
      %p965 = pneg %p572
      %p966 = pneg %p569
      %p967 = pneg %p593
      %p968 = pneg %p590
      %p969 = pneg %p614
      %p970 = pneg %p611
      %p971 = pneg %p635
      %p972 = pneg %p632
      %p973 = pneg %p656
      %p974 = pneg %p653
      %p975 = pneg %p677
      %p976 = pneg %p674
      %p977 = pneg %p698
      %p978 = pneg %p695
      %p979 = pneg %p719
      %p980 = pneg %p716
      %p981 = pneg %p740
      %p982 = pneg %p737
      %p983 = pneg %p766
      %p984 = pneg %p763
      %p985 = scmp.lt.s32.totalorder %s74, 1
      %s986 = scalar_select %p985, %s74, 1
      %s987 = smul.addr %s986, 2
      %s988 = smul.addr %s987, 8
      %s989 = scalar_lea.vmem %s63, %s988
      %p990 = scmp.lt.s32.totalorder %s74, 1
      %s991 = scalar_select %p990, %s74, 1
      %s992 = smul.addr %s991, 2
      %s993 = smul.addr %s992, 8
      %s994 = scalar_lea.vmem %s1, %s993
      %p995 = scmp.lt.s32.totalorder %s74, 1
      %s996 = scalar_select %p995, %s74, 1
      %s997 = smul.addr %s996, 4
      %s998 = smul.addr %s997, 8
      %s999 = scalar_lea.vmem %s3, %s998
      %p1000 = scmp.lt.s32.totalorder %s74, 1
      %s1001 = scalar_select %p1000, %s74, 1
      %s1002 = smul.addr %s1001, 4
      %s1003 = smul.addr %s1002, 8
      %s1004 = scalar_lea.vmem %s5, %s1003
      %p1005 = scmp.lt.s32.totalorder %s74, 1
      %s1006 = scalar_select %p1005, %s74, 1
      %s1007 = scalar_lea.vmem %s7, %s1006
      %p1008 = scmp.lt.s32.totalorder %s74, 1
      %s1009 = scalar_select %p1008, %s74, 1
      %s1010 = smul.addr %s1009, 2
      %s1011 = smul.addr %s1010, 8
      %s1012 = scalar_lea.vmem %s63, %s1011
      %v1013 = vld [vmem:[%s9] sm:$0xff]
      %v1014 = vld [vmem:[%s9 + $0x8] sm:$0xff]
      %v1015 = vld [vmem:[%s9 + $0x10] sm:$0xff]
      %v1016 = vld [vmem:[%s9 + $0x18] sm:$0xff]
      %v1017 = vld [vmem:[%s9 + $0x20] sm:$0xff]
      %v1018 = vld [vmem:[%s9 + $0x28] sm:$0xff]
      %v1019 = vld [vmem:[%s9 + $0x30] sm:$0xff]
      %v1020 = vld [vmem:[%s9 + $0x38] sm:$0xff]
      %v1021 = vld [vmem:[%s11] sm:$0x1]
      %v1022 = vld [vmem:[%s994] sm:$0xff]
      %v1023 = vld [vmem:[%s994 + $0x8] sm:$0xff]
      %v1025 = vlaneseq
      %v1026 = vshrl.u32 %v1025, 7
      %v1027 = vsub.s32 0, %v1026
      %v1028 = vrot.slane %v1021, %v1027
      %vm1030 = vcmask 523264
      %v1032 = vsel %vm1030, %v1022, 0
      %v1035 = vsel %vm1030, %v1023, 0
      %1037 = vmatprep.subr.mxu0 0.0
      %1038 = vmatpush1.msra.mxu0 0.0
      %1039 = vmatprep.subr.mxu0 0.0
      %1040 = vmatpush1.msra.mxu0 0.0
      %1041 = vmatprep.subr.mxu0 0.0
      %1042 = vmatpush1.msra.mxu0 0.0
      %1043 = vmatprep.subr.mxu0 0.0
      %1044 = vmatpush1.msra.mxu0 0.0
      %1045 = vmatprep.subr.mxu0 0.0
      %1046 = vmatpush1.msra.mxu0 0.0
      %1047 = vmatprep.subr.mxu0 0.0
      %1048 = vmatpush1.msra.mxu0 0.0
      %1049 = vmatprep.subr.mxu0 0.0
      %1050 = vmatpush1.msra.mxu0 0.0
      %1051 = vmatprep.subr.mxu0 0.0
      %1052 = vmatpush1.msra.mxu0 0.0
      %1053 = vmatprep.subr.mxu0 0.0
      %1054 = vmatpush1.msra.mxu0 %v1020
      %1055 = vmatprep.subr.mxu0 0.0
      %1056 = vmatpush1.msra.mxu0 %v1019
      %1057 = vmatprep.subr.mxu0 0.0
      %1058 = vmatpush1.msra.mxu0 %v1018
      %1059 = vmatprep.subr.mxu0 0.0
      %1060 = vmatpush1.msra.mxu0 %v1017
      %1061 = vmatprep.subr.mxu0 0.0
      %1062 = vmatpush1.msra.mxu0 %v1016
      %1063 = vmatprep.subr.mxu0 0.0
      %1064 = vmatpush1.msra.mxu0 %v1015
      %1065 = vmatprep.subr.mxu0 0.0
      %1066 = vmatpush1.msra.mxu0 %v1014
      %1067 = vmatprep.subr.mxu0 0.0
      %1068 = vmatpush1.msra.mxu0 %v1013
      %1069 = vmatprep.subr.mxu0 0.0
      %1070 = vmatpush2.msra.mxu0 0.0
      %1071 = vmatprep.subr.mxu0 0.0
      %1072 = vmatpush2.msra.mxu0 0.0
      %1073 = vmatprep.subr.mxu0 0.0
      %1074 = vmatpush2.msra.mxu0 0.0
      %1075 = vmatprep.subr.mxu0 0.0
      %1076 = vmatpush2.msra.mxu0 0.0
      %1077 = vmatprep.subr.mxu0 0.0
      %1078 = vmatpush2.msra.mxu0 0.0
      %1079 = vmatprep.subr.mxu0 0.0
      %1080 = vmatpush2.msra.mxu0 0.0
      %1081 = vmatprep.subr.mxu0 0.0
      %1082 = vmatpush2.msra.mxu0 0.0
      %1083 = vmatprep.subr.mxu0 0.0
      %1084 = vmatpush2.msra.mxu0 0.0
      %1085 = vmatprep.subr.mxu0 0.0
      %1086 = vmatpush2.msra.mxu0 0.0
      %1087 = vmatprep.subr.mxu0 0.0
      %1088 = vmatpush2.msra.mxu0 0.0
      %1089 = vmatprep.subr.mxu0 0.0
      %1090 = vmatpush2.msra.mxu0 0.0
      %1091 = vmatprep.subr.mxu0 0.0
      %1092 = vmatpush2.msra.mxu0 0.0
      %1093 = vmatprep.subr.mxu0 0.0
      %1094 = vmatpush2.msra.mxu0 0.0
      %1095 = vmatprep.subr.mxu0 0.0
      %1096 = vmatpush2.msra.mxu0 0.0
      %1097 = vmatprep.subr.mxu0 0.0
      %1098 = vmatpush2.msra.mxu0 0.0
      %1099 = vmatprep.subr.mxu0 0.0
      %1100 = vmatpush2.msra.mxu0 0.0
      %1101 = vmatprep.mubr.f32.mxu0 0.0
      %1102 = vmatmul.mubr.f32.gmra.mxu0 %v1032
      %v1103 = vpop.f32.mrf.mxu0
      %v1104 = vadd.f32 %v1028, %v1103
      %v1105 = vpop.f32.mrf.mxu0
      %1106 = vmatprep.mubr.f32.mxu0 0.0
      %1107 = vmatmul.mubr.f32.gmra.mxu0 %v1035
      %v1108 = vpop.f32.mrf.mxu0
      %v1109 = vadd.f32 %v1028, %v1108
      %v1110 = vpop.f32.mrf.mxu0
      %1111 = vdwg.mxu0
      %v1112 = vld [vmem:[%s13] sm:$0xff]
      %v1113 = vld [vmem:[%s13 + $0x8] sm:$0xff]
      %v1114 = vadd.f32 %v1104, %v1112
      %v1115 = vadd.f32 %v1109, %v1113
      %v1116 = vld [vmem:[%s999] sm:$0xff]
      %v1117 = vld [vmem:[%s999 + $0x8] sm:$0xff]
      %v1118 = vld [vmem:[%s999 + $0x10] sm:$0xff]
      %v1119 = vld [vmem:[%s999 + $0x18] sm:$0xff]
      %v1121 = vsel %vm1030, %v1116, 0
      %v1124 = vsel %vm1030, %v1117, 0
      %v1127 = vsel %vm1030, %v1118, 0
      %v1130 = vsel %vm1030, %v1119, 0
      %1132 = vmatprep.subr.mxu0 0.0
      %1133 = vmatpush1.msra.mxu0 0.0
      %1134 = vmatprep.subr.mxu0 0.0
      %1135 = vmatpush1.msra.mxu0 0.0
      %1136 = vmatprep.subr.mxu0 0.0
      %1137 = vmatpush1.msra.mxu0 0.0
      %1138 = vmatprep.subr.mxu0 0.0
      %1139 = vmatpush1.msra.mxu0 0.0
      %1140 = vmatprep.subr.mxu0 0.0
      %1141 = vmatpush1.msra.mxu0 0.0
      %1142 = vmatprep.subr.mxu0 0.0
      %1143 = vmatpush1.msra.mxu0 0.0
      %1144 = vmatprep.subr.mxu0 0.0
      %1145 = vmatpush1.msra.mxu0 0.0
      %1146 = vmatprep.subr.mxu0 0.0
      %1147 = vmatpush1.msra.mxu0 0.0
      %1148 = vmatprep.subr.mxu0 0.0
      %1149 = vmatpush1.msra.mxu0 %v1020
      %1150 = vmatprep.subr.mxu0 0.0
      %1151 = vmatpush1.msra.mxu0 %v1019
      %1152 = vmatprep.subr.mxu0 0.0
      %1153 = vmatpush1.msra.mxu0 %v1018
      %1154 = vmatprep.subr.mxu0 0.0
      %1155 = vmatpush1.msra.mxu0 %v1017
      %1156 = vmatprep.subr.mxu0 0.0
      %1157 = vmatpush1.msra.mxu0 %v1016
      %1158 = vmatprep.subr.mxu0 0.0
      %1159 = vmatpush1.msra.mxu0 %v1015
      %1160 = vmatprep.subr.mxu0 0.0
      %1161 = vmatpush1.msra.mxu0 %v1014
      %1162 = vmatprep.subr.mxu0 0.0
      %1163 = vmatpush1.msra.mxu0 %v1013
      %1164 = vmatprep.subr.mxu0 0.0
      %1165 = vmatpush2.msra.mxu0 0.0
      %1166 = vmatprep.subr.mxu0 0.0
      %1167 = vmatpush2.msra.mxu0 0.0
      %1168 = vmatprep.subr.mxu0 0.0
      %1169 = vmatpush2.msra.mxu0 0.0
      %1170 = vmatprep.subr.mxu0 0.0
      %1171 = vmatpush2.msra.mxu0 0.0
      %1172 = vmatprep.subr.mxu0 0.0
      %1173 = vmatpush2.msra.mxu0 0.0
      %1174 = vmatprep.subr.mxu0 0.0
      %1175 = vmatpush2.msra.mxu0 0.0
      %1176 = vmatprep.subr.mxu0 0.0
      %1177 = vmatpush2.msra.mxu0 0.0
      %1178 = vmatprep.subr.mxu0 0.0
      %1179 = vmatpush2.msra.mxu0 0.0
      %1180 = vmatprep.subr.mxu0 0.0
      %1181 = vmatpush2.msra.mxu0 0.0
      %1182 = vmatprep.subr.mxu0 0.0
      %1183 = vmatpush2.msra.mxu0 0.0
      %1184 = vmatprep.subr.mxu0 0.0
      %1185 = vmatpush2.msra.mxu0 0.0
      %1186 = vmatprep.subr.mxu0 0.0
      %1187 = vmatpush2.msra.mxu0 0.0
      %1188 = vmatprep.subr.mxu0 0.0
      %1189 = vmatpush2.msra.mxu0 0.0
      %1190 = vmatprep.subr.mxu0 0.0
      %1191 = vmatpush2.msra.mxu0 0.0
      %1192 = vmatprep.subr.mxu0 0.0
      %1193 = vmatpush2.msra.mxu0 0.0
      %1194 = vmatprep.subr.mxu0 0.0
      %1195 = vmatpush2.msra.mxu0 0.0
      %1196 = vmatprep.mubr.f32.mxu0 0.0
      %1197 = vmatmul.mubr.f32.gmra.mxu0 %v1121
      %v1198 = vpop.f32.mrf.mxu0
      %v1199 = vadd.f32 %v1028, %v1198
      %v1200 = vpop.f32.mrf.mxu0
      %1201 = vmatprep.mubr.f32.mxu0 0.0
      %1202 = vmatmul.mubr.f32.gmra.mxu0 %v1124
      %v1203 = vpop.f32.mrf.mxu0
      %v1204 = vadd.f32 %v1028, %v1203
      %v1205 = vpop.f32.mrf.mxu0
      %1206 = vmatprep.mubr.f32.mxu0 0.0
      %1207 = vmatmul.mubr.f32.gmra.mxu0 %v1127
      %v1208 = vpop.f32.mrf.mxu0
      %v1209 = vadd.f32 %v1028, %v1208
      %v1210 = vpop.f32.mrf.mxu0
      %1211 = vmatprep.mubr.f32.mxu0 0.0
      %1212 = vmatmul.mubr.f32.gmra.mxu0 %v1130
      %v1213 = vpop.f32.mrf.mxu0
      %v1214 = vadd.f32 %v1028, %v1213
      %v1215 = vpop.f32.mrf.mxu0
      %1216 = vdwg.mxu0
      %v1217 = vld [vmem:[%s1004] sm:$0xff]
      %v1218 = vld [vmem:[%s1004 + $0x8] sm:$0xff]
      %v1219 = vld [vmem:[%s1004 + $0x10] sm:$0xff]
      %v1220 = vld [vmem:[%s1004 + $0x18] sm:$0xff]
      %v1221 = vadd.f32 %v1199, %v1217
      %v1222 = vadd.f32 %v1204, %v1218
      %v1223 = vadd.f32 %v1209, %v1219
      %v1224 = vadd.f32 %v1214, %v1220
      %v1225 = vld [vmem:[%s1007] sm:$0x1]
      %v1226 = vld [vmem:[%s15] sm:$0xff]
      %v1227 = vld [vmem:[%s15 + $0x8] sm:$0xff]
      %v1228 = vld [vmem:[%s15 + $0x10] sm:$0xff]
      %v1229 = vld [vmem:[%s15 + $0x18] sm:$0xff]
      %v1230 = vld [vmem:[%s17] sm:$0x1]
      %vm1231 = vcmask 261120
      %v1233 = vsel %vm1231, %v1225, 0
      %1235 = vmatprep.subr.mxu0 0.0
      %1236 = vmatpush1.msra.mxu0 0.0
      %1237 = vmatprep.subr.mxu0 0.0
      %1238 = vmatpush1.msra.mxu0 0.0
      %1239 = vmatprep.subr.mxu0 0.0
      %1240 = vmatpush1.msra.mxu0 0.0
      %1241 = vmatprep.subr.mxu0 0.0
      %1242 = vmatpush1.msra.mxu0 0.0
      %1243 = vmatprep.subr.mxu0 0.0
      %1244 = vmatpush1.msra.mxu0 0.0
      %1245 = vmatprep.subr.mxu0 0.0
      %1246 = vmatpush1.msra.mxu0 0.0
      %1247 = vmatprep.subr.mxu0 0.0
      %1248 = vmatpush1.msra.mxu0 0.0
      %1249 = vmatprep.subr.mxu0 0.0
      %1250 = vmatpush1.msra.mxu0 0.0
      %1251 = vmatprep.subr.mxu0 0.0
      %1252 = vmatpush1.msra.mxu0 0.0
      %1253 = vmatprep.subr.mxu0 0.0
      %1254 = vmatpush1.msra.mxu0 0.0
      %1255 = vmatprep.subr.mxu0 0.0
      %1256 = vmatpush1.msra.mxu0 0.0
      %1257 = vmatprep.subr.mxu0 0.0
      %1258 = vmatpush1.msra.mxu0 0.0
      %1259 = vmatprep.subr.mxu0 0.0
      %1260 = vmatpush1.msra.mxu0 %v1229
      %1261 = vmatprep.subr.mxu0 0.0
      %1262 = vmatpush1.msra.mxu0 %v1228
      %1263 = vmatprep.subr.mxu0 0.0
      %1264 = vmatpush1.msra.mxu0 %v1227
      %1265 = vmatprep.subr.mxu0 0.0
      %1266 = vmatpush1.msra.mxu0 %v1226
      %1267 = vmatprep.subr.mxu0 0.0
      %1268 = vmatpush2.msra.mxu0 0.0
      %1269 = vmatprep.subr.mxu0 0.0
      %1270 = vmatpush2.msra.mxu0 0.0
      %1271 = vmatprep.subr.mxu0 0.0
      %1272 = vmatpush2.msra.mxu0 0.0
      %1273 = vmatprep.subr.mxu0 0.0
      %1274 = vmatpush2.msra.mxu0 0.0
      %1275 = vmatprep.subr.mxu0 0.0
      %1276 = vmatpush2.msra.mxu0 0.0
      %1277 = vmatprep.subr.mxu0 0.0
      %1278 = vmatpush2.msra.mxu0 0.0
      %1279 = vmatprep.subr.mxu0 0.0
      %1280 = vmatpush2.msra.mxu0 0.0
      %1281 = vmatprep.subr.mxu0 0.0
      %1282 = vmatpush2.msra.mxu0 0.0
      %1283 = vmatprep.subr.mxu0 0.0
      %1284 = vmatpush2.msra.mxu0 0.0
      %1285 = vmatprep.subr.mxu0 0.0
      %1286 = vmatpush2.msra.mxu0 0.0
      %1287 = vmatprep.subr.mxu0 0.0
      %1288 = vmatpush2.msra.mxu0 0.0
      %1289 = vmatprep.subr.mxu0 0.0
      %1290 = vmatpush2.msra.mxu0 0.0
      %1291 = vmatprep.subr.mxu0 0.0
      %1292 = vmatpush2.msra.mxu0 0.0
      %1293 = vmatprep.subr.mxu0 0.0
      %1294 = vmatpush2.msra.mxu0 0.0
      %1295 = vmatprep.subr.mxu0 0.0
      %1296 = vmatpush2.msra.mxu0 0.0
      %1297 = vmatprep.subr.mxu0 0.0
      %1298 = vmatpush2.msra.mxu0 0.0
      %1299 = vmatprep.mubr.f32.mxu0 0.0
      %1300 = vmatmul.mubr.f32.gmra.mxu0 %v1233
      %v1301 = vpop.f32.mrf.mxu0
      %v1302 = vadd.f32 %v1230, %v1301
      %v1303 = vpop.f32.mrf.mxu0
      %1304 = vdwg.mxu0
      %v1305 = vxor.u32 %v1302, 2147483648
      %v1306 = vmul.f32 %v1305, 1.442695
      %v1307 = vpow.pop %v1306
      %v1308 = vadd.f32 %v1307, 1.0
      %v1309 = vrcp.pop %v1308
      %v1310 = vmul.f32 1.0, %v1309
      %v1311 = vmul.f32 %v1302, %v1310
      %v1312 = vld [vmem:[%s19] sm:$0xff]
      %v1313 = vld [vmem:[%s19 + $0x8] sm:$0xff]
      %v1314 = vld [vmem:[%s19 + $0x10] sm:$0xff]
      %v1315 = vld [vmem:[%s19 + $0x18] sm:$0xff]
      %v1316 = vld [vmem:[%s21] sm:$0x1]
      %v1318 = vsel %vm1231, %v1311, 0
      %1320 = vmatprep.subr.mxu0 0.0
      %1321 = vmatpush1.msra.mxu0 0.0
      %1322 = vmatprep.subr.mxu0 0.0
      %1323 = vmatpush1.msra.mxu0 0.0
      %1324 = vmatprep.subr.mxu0 0.0
      %1325 = vmatpush1.msra.mxu0 0.0
      %1326 = vmatprep.subr.mxu0 0.0
      %1327 = vmatpush1.msra.mxu0 0.0
      %1328 = vmatprep.subr.mxu0 0.0
      %1329 = vmatpush1.msra.mxu0 0.0
      %1330 = vmatprep.subr.mxu0 0.0
      %1331 = vmatpush1.msra.mxu0 0.0
      %1332 = vmatprep.subr.mxu0 0.0
      %1333 = vmatpush1.msra.mxu0 0.0
      %1334 = vmatprep.subr.mxu0 0.0
      %1335 = vmatpush1.msra.mxu0 0.0
      %1336 = vmatprep.subr.mxu0 0.0
      %1337 = vmatpush1.msra.mxu0 0.0
      %1338 = vmatprep.subr.mxu0 0.0
      %1339 = vmatpush1.msra.mxu0 0.0
      %1340 = vmatprep.subr.mxu0 0.0
      %1341 = vmatpush1.msra.mxu0 0.0
      %1342 = vmatprep.subr.mxu0 0.0
      %1343 = vmatpush1.msra.mxu0 0.0
      %1344 = vmatprep.subr.mxu0 0.0
      %1345 = vmatpush1.msra.mxu0 %v1315
      %1346 = vmatprep.subr.mxu0 0.0
      %1347 = vmatpush1.msra.mxu0 %v1314
      %1348 = vmatprep.subr.mxu0 0.0
      %1349 = vmatpush1.msra.mxu0 %v1313
      %1350 = vmatprep.subr.mxu0 0.0
      %1351 = vmatpush1.msra.mxu0 %v1312
      %1352 = vmatprep.subr.mxu0 0.0
      %1353 = vmatpush2.msra.mxu0 0.0
      %1354 = vmatprep.subr.mxu0 0.0
      %1355 = vmatpush2.msra.mxu0 0.0
      %1356 = vmatprep.subr.mxu0 0.0
      %1357 = vmatpush2.msra.mxu0 0.0
      %1358 = vmatprep.subr.mxu0 0.0
      %1359 = vmatpush2.msra.mxu0 0.0
      %1360 = vmatprep.subr.mxu0 0.0
      %1361 = vmatpush2.msra.mxu0 0.0
      %1362 = vmatprep.subr.mxu0 0.0
      %1363 = vmatpush2.msra.mxu0 0.0
      %1364 = vmatprep.subr.mxu0 0.0
      %1365 = vmatpush2.msra.mxu0 0.0
      %1366 = vmatprep.subr.mxu0 0.0
      %1367 = vmatpush2.msra.mxu0 0.0
      %1368 = vmatprep.subr.mxu0 0.0
      %1369 = vmatpush2.msra.mxu0 0.0
      %1370 = vmatprep.subr.mxu0 0.0
      %1371 = vmatpush2.msra.mxu0 0.0
      %1372 = vmatprep.subr.mxu0 0.0
      %1373 = vmatpush2.msra.mxu0 0.0
      %1374 = vmatprep.subr.mxu0 0.0
      %1375 = vmatpush2.msra.mxu0 0.0
      %1376 = vmatprep.subr.mxu0 0.0
      %1377 = vmatpush2.msra.mxu0 0.0
      %1378 = vmatprep.subr.mxu0 0.0
      %1379 = vmatpush2.msra.mxu0 0.0
      %1380 = vmatprep.subr.mxu0 0.0
      %1381 = vmatpush2.msra.mxu0 0.0
      %1382 = vmatprep.subr.mxu0 0.0
      %1383 = vmatpush2.msra.mxu0 0.0
      %1384 = vmatprep.mubr.f32.mxu0 0.0
      %1385 = vmatmul.mubr.f32.gmra.mxu0 %v1318
      %v1386 = vpop.f32.mrf.mxu0
      %v1387 = vadd.f32 %v1316, %v1386
      %v1388 = vpop.f32.mrf.mxu0
      %1389 = vdwg.mxu0
      %v1390 = vxor.u32 %v1387, 2147483648
      %v1391 = vmul.f32 %v1390, 1.442695
      %v1392 = vpow.pop %v1391
      %v1393 = vadd.f32 %v1392, 1.0
      %v1394 = vrcp.pop %v1393
      %v1395 = vmul.f32 1.0, %v1394
      %v1396 = vmul.f32 %v1387, %v1395
      %v1397 = vld [vmem:[%s23] sm:$0xff]
      %v1398 = vld [vmem:[%s23 + $0x8] sm:$0xff]
      %v1399 = vld [vmem:[%s23 + $0x10] sm:$0xff]
      %v1400 = vld [vmem:[%s23 + $0x18] sm:$0xff]
      %v1401 = vld [vmem:[%s23 + $0x20] sm:$0xff]
      %v1402 = vld [vmem:[%s23 + $0x28] sm:$0xff]
      %v1403 = vld [vmem:[%s23 + $0x30] sm:$0xff]
      %v1404 = vld [vmem:[%s23 + $0x38] sm:$0xff]
      %v1405 = vld [vmem:[%s25] sm:$0x3]
      %v1407 = vlaneseq
      %v1408 = vshrl.u32 %v1407, 7
      %v1409 = vsub.s32 0, %v1408
      %v1410 = vrot.slane %v1405, %v1409
      %v1411 = vlaneseq
      %v1412 = vshrl.u32 %v1411, 7
      %v1413 = vsub.s32 1, %v1412
      %v1414 = vrot.slane %v1405, %v1413
      %v1418 = vsel %vm1231, %v1396, 0
      %1420 = vmatprep.subr.mxu0 0.0
      %1421 = vmatpush1.msra.mxu0 0.0
      %1422 = vmatprep.subr.mxu0 0.0
      %1423 = vmatpush1.msra.mxu0 0.0
      %1424 = vmatprep.subr.mxu0 0.0
      %1425 = vmatpush1.msra.mxu0 0.0
      %1426 = vmatprep.subr.mxu0 0.0
      %1427 = vmatpush1.msra.mxu0 0.0
      %1428 = vmatprep.subr.mxu0 0.0
      %1429 = vmatpush1.msra.mxu0 0.0
      %1430 = vmatprep.subr.mxu0 0.0
      %1431 = vmatpush1.msra.mxu0 0.0
      %1432 = vmatprep.subr.mxu0 0.0
      %1433 = vmatpush1.msra.mxu0 0.0
      %1434 = vmatprep.subr.mxu0 0.0
      %1435 = vmatpush1.msra.mxu0 0.0
      %1436 = vmatprep.subr.mxu0 0.0
      %1437 = vmatpush1.msra.mxu0 0.0
      %1438 = vmatprep.subr.mxu0 0.0
      %1439 = vmatpush1.msra.mxu0 0.0
      %1440 = vmatprep.subr.mxu0 0.0
      %1441 = vmatpush1.msra.mxu0 0.0
      %1442 = vmatprep.subr.mxu0 0.0
      %1443 = vmatpush1.msra.mxu0 0.0
      %1444 = vmatprep.subr.mxu0 %v1404
      %1445 = vmatpush1.msra.mxu0 %v1403
      %1446 = vmatprep.subr.mxu0 %v1402
      %1447 = vmatpush1.msra.mxu0 %v1401
      %1448 = vmatprep.subr.mxu0 %v1400
      %1449 = vmatpush1.msra.mxu0 %v1399
      %1450 = vmatprep.subr.mxu0 %v1398
      %1451 = vmatpush1.msra.mxu0 %v1397
      %1452 = vmatprep.subr.mxu0 0.0
      %1453 = vmatpush2.msra.mxu0 0.0
      %1454 = vmatprep.subr.mxu0 0.0
      %1455 = vmatpush2.msra.mxu0 0.0
      %1456 = vmatprep.subr.mxu0 0.0
      %1457 = vmatpush2.msra.mxu0 0.0
      %1458 = vmatprep.subr.mxu0 0.0
      %1459 = vmatpush2.msra.mxu0 0.0
      %1460 = vmatprep.subr.mxu0 0.0
      %1461 = vmatpush2.msra.mxu0 0.0
      %1462 = vmatprep.subr.mxu0 0.0
      %1463 = vmatpush2.msra.mxu0 0.0
      %1464 = vmatprep.subr.mxu0 0.0
      %1465 = vmatpush2.msra.mxu0 0.0
      %1466 = vmatprep.subr.mxu0 0.0
      %1467 = vmatpush2.msra.mxu0 0.0
      %1468 = vmatprep.subr.mxu0 0.0
      %1469 = vmatpush2.msra.mxu0 0.0
      %1470 = vmatprep.subr.mxu0 0.0
      %1471 = vmatpush2.msra.mxu0 0.0
      %1472 = vmatprep.subr.mxu0 0.0
      %1473 = vmatpush2.msra.mxu0 0.0
      %1474 = vmatprep.subr.mxu0 0.0
      %1475 = vmatpush2.msra.mxu0 0.0
      %1476 = vmatprep.subr.mxu0 0.0
      %1477 = vmatpush2.msra.mxu0 0.0
      %1478 = vmatprep.subr.mxu0 0.0
      %1479 = vmatpush2.msra.mxu0 0.0
      %1480 = vmatprep.subr.mxu0 0.0
      %1481 = vmatpush2.msra.mxu0 0.0
      %1482 = vmatprep.subr.mxu0 0.0
      %1483 = vmatpush2.msra.mxu0 0.0
      %1484 = vmatprep.mubr.f32.mxu0 0.0
      %1485 = vmatmul.mubr.f32.gmra.mxu0 %v1418
      %v1486 = vpop.f32.mrf.mxu0
      %v1487 = vadd.f32 %v1410, %v1486
      %v1488 = vpop.f32.mrf.mxu0
      %v1489 = vadd.f32 %v1414, %v1488
      %1490 = vdwg.mxu0
      %v1491 = vsel %vm1231, %v1114, 0.0
      %1492 = vadd.xlane.f32.xlu0 %v1491
      %v1493 = vpop.xlane.xlu0 %1492
      %v1494 = vsel %vm1231, %v1115, 0.0
      %1495 = vadd.xlane.f32.xlu0 %v1494
      %v1496 = vpop.xlane.xlu0 %1495
      %v1497 = vrcp.pop 32.0
      %v1498 = vmul.f32 %v1493, %v1497
      %v1499 = vmul.f32 %v1496, %v1497
      %v1500 = vsub.f32 %v1114, %v1498
      %v1501 = vsub.f32 %v1115, %v1499
      %v1502 = vmul.f32 %v1500, %v1500
      %v1503 = vmul.f32 %v1501, %v1501
      %v1504 = vsel %vm1231, %v1502, 0.0
      %1505 = vadd.xlane.f32.xlu0 %v1504
      %v1506 = vpop.xlane.xlu0 %1505
      %v1507 = vsel %vm1231, %v1503, 0.0
      %1508 = vadd.xlane.f32.xlu0 %v1507
      %v1509 = vpop.xlane.xlu0 %1508
      %v1510 = vmul.f32 %v1506, %v1497
      %v1511 = vmul.f32 %v1509, %v1497
      %v1512 = vadd.f32 %v1510, 1e-06
      %v1513 = vadd.f32 %v1511, 1e-06
      %v1514 = vrsqrt.pop %v1512
      %v1515 = vrsqrt.pop %v1513
      %v1516 = vmul.f32 %v1500, %v1514
      %v1517 = vmul.f32 %v1501, %v1515
      %v1518 = vld [vmem:[%s27] sm:$0xff]
      %v1519 = vld [vmem:[%s27 + $0x8] sm:$0xff]
      %v1520 = vld [vmem:[%s27 + $0x10] sm:$0xff]
      %v1521 = vld [vmem:[%s27 + $0x18] sm:$0xff]
      %v1522 = vld [vmem:[%s29] sm:$0x1]
      %v1524 = vlaneseq
      %v1525 = vshrl.u32 %v1524, 7
      %v1526 = vsub.s32 0, %v1525
      %v1527 = vrot.slane %v1522, %v1526
      %v1530 = vsel %vm1231, %v1516, 0
      %v1533 = vsel %vm1231, %v1517, 0
      %1535 = vmatprep.subr.mxu0 0.0
      %1536 = vmatpush1.msra.mxu0 0.0
      %1537 = vmatprep.subr.mxu0 0.0
      %1538 = vmatpush1.msra.mxu0 0.0
      %1539 = vmatprep.subr.mxu0 0.0
      %1540 = vmatpush1.msra.mxu0 0.0
      %1541 = vmatprep.subr.mxu0 0.0
      %1542 = vmatpush1.msra.mxu0 0.0
      %1543 = vmatprep.subr.mxu0 0.0
      %1544 = vmatpush1.msra.mxu0 0.0
      %1545 = vmatprep.subr.mxu0 0.0
      %1546 = vmatpush1.msra.mxu0 0.0
      %1547 = vmatprep.subr.mxu0 0.0
      %1548 = vmatpush1.msra.mxu0 0.0
      %1549 = vmatprep.subr.mxu0 0.0
      %1550 = vmatpush1.msra.mxu0 0.0
      %1551 = vmatprep.subr.mxu0 0.0
      %1552 = vmatpush1.msra.mxu0 0.0
      %1553 = vmatprep.subr.mxu0 0.0
      %1554 = vmatpush1.msra.mxu0 0.0
      %1555 = vmatprep.subr.mxu0 0.0
      %1556 = vmatpush1.msra.mxu0 0.0
      %1557 = vmatprep.subr.mxu0 0.0
      %1558 = vmatpush1.msra.mxu0 0.0
      %1559 = vmatprep.subr.mxu0 0.0
      %1560 = vmatpush1.msra.mxu0 %v1521
      %1561 = vmatprep.subr.mxu0 0.0
      %1562 = vmatpush1.msra.mxu0 %v1520
      %1563 = vmatprep.subr.mxu0 0.0
      %1564 = vmatpush1.msra.mxu0 %v1519
      %1565 = vmatprep.subr.mxu0 0.0
      %1566 = vmatpush1.msra.mxu0 %v1518
      %1567 = vmatprep.subr.mxu0 0.0
      %1568 = vmatpush2.msra.mxu0 0.0
      %1569 = vmatprep.subr.mxu0 0.0
      %1570 = vmatpush2.msra.mxu0 0.0
      %1571 = vmatprep.subr.mxu0 0.0
      %1572 = vmatpush2.msra.mxu0 0.0
      %1573 = vmatprep.subr.mxu0 0.0
      %1574 = vmatpush2.msra.mxu0 0.0
      %1575 = vmatprep.subr.mxu0 0.0
      %1576 = vmatpush2.msra.mxu0 0.0
      %1577 = vmatprep.subr.mxu0 0.0
      %1578 = vmatpush2.msra.mxu0 0.0
      %1579 = vmatprep.subr.mxu0 0.0
      %1580 = vmatpush2.msra.mxu0 0.0
      %1581 = vmatprep.subr.mxu0 0.0
      %1582 = vmatpush2.msra.mxu0 0.0
      %1583 = vmatprep.subr.mxu0 0.0
      %1584 = vmatpush2.msra.mxu0 0.0
      %1585 = vmatprep.subr.mxu0 0.0
      %1586 = vmatpush2.msra.mxu0 0.0
      %1587 = vmatprep.subr.mxu0 0.0
      %1588 = vmatpush2.msra.mxu0 0.0
      %1589 = vmatprep.subr.mxu0 0.0
      %1590 = vmatpush2.msra.mxu0 0.0
      %1591 = vmatprep.subr.mxu0 0.0
      %1592 = vmatpush2.msra.mxu0 0.0
      %1593 = vmatprep.subr.mxu0 0.0
      %1594 = vmatpush2.msra.mxu0 0.0
      %1595 = vmatprep.subr.mxu0 0.0
      %1596 = vmatpush2.msra.mxu0 0.0
      %1597 = vmatprep.subr.mxu0 0.0
      %1598 = vmatpush2.msra.mxu0 0.0
      %1599 = vmatprep.mubr.f32.mxu0 0.0
      %1600 = vmatmul.mubr.f32.gmra.mxu0 %v1530
      %v1601 = vpop.f32.mrf.mxu0
      %v1602 = vadd.f32 %v1527, %v1601
      %v1603 = vpop.f32.mrf.mxu0
      %1604 = vmatprep.mubr.f32.mxu0 0.0
      %1605 = vmatmul.mubr.f32.gmra.mxu0 %v1533
      %v1606 = vpop.f32.mrf.mxu0
      %v1607 = vadd.f32 %v1527, %v1606
      %v1608 = vpop.f32.mrf.mxu0
      %1609 = vdwg.mxu0
      %v1610 = vld [vmem:[%s31] sm:$0xff]
      %v1611 = vld [vmem:[%s31 + $0x8] sm:$0xff]
      %v1612 = vld [vmem:[%s31 + $0x10] sm:$0xff]
      %v1613 = vld [vmem:[%s31 + $0x18] sm:$0xff]
      %v1614 = vld [vmem:[%s33] sm:$0x1]
      %v1616 = vlaneseq
      %v1617 = vshrl.u32 %v1616, 7
      %v1618 = vsub.s32 0, %v1617
      %v1619 = vrot.slane %v1614, %v1618
      %v1622 = vsel %vm1231, %v1221, 0
      %v1625 = vsel %vm1231, %v1222, 0
      %v1628 = vsel %vm1231, %v1223, 0
      %v1631 = vsel %vm1231, %v1224, 0
      %1633 = vmatprep.subr.mxu0 0.0
      %1634 = vmatpush1.msra.mxu0 0.0
      %1635 = vmatprep.subr.mxu0 0.0
      %1636 = vmatpush1.msra.mxu0 0.0
      %1637 = vmatprep.subr.mxu0 0.0
      %1638 = vmatpush1.msra.mxu0 0.0
      %1639 = vmatprep.subr.mxu0 0.0
      %1640 = vmatpush1.msra.mxu0 0.0
      %1641 = vmatprep.subr.mxu0 0.0
      %1642 = vmatpush1.msra.mxu0 0.0
      %1643 = vmatprep.subr.mxu0 0.0
      %1644 = vmatpush1.msra.mxu0 0.0
      %1645 = vmatprep.subr.mxu0 0.0
      %1646 = vmatpush1.msra.mxu0 0.0
      %1647 = vmatprep.subr.mxu0 0.0
      %1648 = vmatpush1.msra.mxu0 0.0
      %1649 = vmatprep.subr.mxu0 0.0
      %1650 = vmatpush1.msra.mxu0 0.0
      %1651 = vmatprep.subr.mxu0 0.0
      %1652 = vmatpush1.msra.mxu0 0.0
      %1653 = vmatprep.subr.mxu0 0.0
      %1654 = vmatpush1.msra.mxu0 0.0
      %1655 = vmatprep.subr.mxu0 0.0
      %1656 = vmatpush1.msra.mxu0 0.0
      %1657 = vmatprep.subr.mxu0 0.0
      %1658 = vmatpush1.msra.mxu0 %v1613
      %1659 = vmatprep.subr.mxu0 0.0
      %1660 = vmatpush1.msra.mxu0 %v1612
      %1661 = vmatprep.subr.mxu0 0.0
      %1662 = vmatpush1.msra.mxu0 %v1611
      %1663 = vmatprep.subr.mxu0 0.0
      %1664 = vmatpush1.msra.mxu0 %v1610
      %1665 = vmatprep.subr.mxu0 0.0
      %1666 = vmatpush2.msra.mxu0 0.0
      %1667 = vmatprep.subr.mxu0 0.0
      %1668 = vmatpush2.msra.mxu0 0.0
      %1669 = vmatprep.subr.mxu0 0.0
      %1670 = vmatpush2.msra.mxu0 0.0
      %1671 = vmatprep.subr.mxu0 0.0
      %1672 = vmatpush2.msra.mxu0 0.0
      %1673 = vmatprep.subr.mxu0 0.0
      %1674 = vmatpush2.msra.mxu0 0.0
      %1675 = vmatprep.subr.mxu0 0.0
      %1676 = vmatpush2.msra.mxu0 0.0
      %1677 = vmatprep.subr.mxu0 0.0
      %1678 = vmatpush2.msra.mxu0 0.0
      %1679 = vmatprep.subr.mxu0 0.0
      %1680 = vmatpush2.msra.mxu0 0.0
      %1681 = vmatprep.subr.mxu0 0.0
      %1682 = vmatpush2.msra.mxu0 0.0
      %1683 = vmatprep.subr.mxu0 0.0
      %1684 = vmatpush2.msra.mxu0 0.0
      %1685 = vmatprep.subr.mxu0 0.0
      %1686 = vmatpush2.msra.mxu0 0.0
      %1687 = vmatprep.subr.mxu0 0.0
      %1688 = vmatpush2.msra.mxu0 0.0
      %1689 = vmatprep.subr.mxu0 0.0
      %1690 = vmatpush2.msra.mxu0 0.0
      %1691 = vmatprep.subr.mxu0 0.0
      %1692 = vmatpush2.msra.mxu0 0.0
      %1693 = vmatprep.subr.mxu0 0.0
      %1694 = vmatpush2.msra.mxu0 0.0
      %1695 = vmatprep.subr.mxu0 0.0
      %1696 = vmatpush2.msra.mxu0 0.0
      %1697 = vmatprep.mubr.f32.mxu0 0.0
      %1698 = vmatmul.mubr.f32.gmra.mxu0 %v1622
      %v1699 = vpop.f32.mrf.mxu0
      %v1700 = vadd.f32 %v1619, %v1699
      %v1701 = vpop.f32.mrf.mxu0
      %1702 = vmatprep.mubr.f32.mxu0 0.0
      %1703 = vmatmul.mubr.f32.gmra.mxu0 %v1625
      %v1704 = vpop.f32.mrf.mxu0
      %v1705 = vadd.f32 %v1619, %v1704
      %v1706 = vpop.f32.mrf.mxu0
      %1707 = vmatprep.mubr.f32.mxu0 0.0
      %1708 = vmatmul.mubr.f32.gmra.mxu0 %v1628
      %v1709 = vpop.f32.mrf.mxu0
      %v1710 = vadd.f32 %v1619, %v1709
      %v1711 = vpop.f32.mrf.mxu0
      %1712 = vmatprep.mubr.f32.mxu0 0.0
      %1713 = vmatmul.mubr.f32.gmra.mxu0 %v1631
      %v1714 = vpop.f32.mrf.mxu0
      %v1715 = vadd.f32 %v1619, %v1714
      %v1716 = vpop.f32.mrf.mxu0
      %1717 = vdwg.mxu0
      %v1718 = vld [vmem:[%s35] sm:$0xff]
      %v1719 = vld [vmem:[%s35 + $0x8] sm:$0xff]
      %v1720 = vld [vmem:[%s35 + $0x10] sm:$0xff]
      %v1721 = vld [vmem:[%s35 + $0x18] sm:$0xff]
      %vm1722 = vcmask 64512
      %v1724 = vsel %vm1722, %v1602, 0
      %v1727 = vsel %vm1722, %v1607, 0
      %v1730 = vsel %vm1722, %v1700, 0
      %v1733 = vsel %vm1722, %v1705, 0
      %v1736 = vsel %vm1722, %v1710, 0
      %v1739 = vsel %vm1722, %v1715, 0
      %1741 = vmatprep.subr.mxu0 0.0
      %1742 = vmatpush1.xpose.msra.mxu0 0.0
      %1743 = vmatprep.subr.mxu0 0.0
      %1744 = vmatpush1.xpose.msra.mxu0 0.0
      %1745 = vmatprep.subr.mxu0 0.0
      %1746 = vmatpush1.xpose.msra.mxu0 0.0
      %1747 = vmatprep.subr.mxu0 0.0
      %1748 = vmatpush1.xpose.msra.mxu0 0.0
      %1749 = vmatprep.subr.mxu0 0.0
      %1750 = vmatpush1.xpose.msra.mxu0 0.0
      %1751 = vmatprep.subr.mxu0 0.0
      %1752 = vmatpush1.xpose.msra.mxu0 0.0
      %1753 = vmatprep.subr.mxu0 0.0
      %1754 = vmatpush1.xpose.msra.mxu0 0.0
      %1755 = vmatprep.subr.mxu0 0.0
      %1756 = vmatpush1.xpose.msra.mxu0 0.0
      %1757 = vmatprep.subr.mxu0 0.0
      %1758 = vmatpush1.xpose.msra.mxu0 0.0
      %1759 = vmatprep.subr.mxu0 0.0
      %1760 = vmatpush1.xpose.msra.mxu0 0.0
      %1761 = vmatprep.subr.mxu0 0.0
      %1762 = vmatpush1.xpose.msra.mxu0 0.0
      %1763 = vmatprep.subr.mxu0 0.0
      %1764 = vmatpush1.xpose.msra.mxu0 0.0
      %1765 = vmatprep.subr.mxu0 0.0
      %1766 = vmatpush1.xpose.msra.mxu0 %v1739
      %1767 = vmatprep.subr.mxu0 0.0
      %1768 = vmatpush1.xpose.msra.mxu0 %v1736
      %1769 = vmatprep.subr.mxu0 0.0
      %1770 = vmatpush1.xpose.msra.mxu0 %v1733
      %1771 = vmatprep.subr.mxu0 0.0
      %1772 = vmatpush1.xpose.msra.mxu0 %v1730
      %1773 = vmatprep.subr.mxu0 0.0
      %1774 = vmatpush2.xpose.msra.mxu0 0.0
      %1775 = vmatprep.subr.mxu0 0.0
      %1776 = vmatpush2.xpose.msra.mxu0 0.0
      %1777 = vmatprep.subr.mxu0 0.0
      %1778 = vmatpush2.xpose.msra.mxu0 0.0
      %1779 = vmatprep.subr.mxu0 0.0
      %1780 = vmatpush2.xpose.msra.mxu0 0.0
      %1781 = vmatprep.subr.mxu0 0.0
      %1782 = vmatpush2.xpose.msra.mxu0 0.0
      %1783 = vmatprep.subr.mxu0 0.0
      %1784 = vmatpush2.xpose.msra.mxu0 0.0
      %1785 = vmatprep.subr.mxu0 0.0
      %1786 = vmatpush2.xpose.msra.mxu0 0.0
      %1787 = vmatprep.subr.mxu0 0.0
      %1788 = vmatpush2.xpose.msra.mxu0 0.0
      %1789 = vmatprep.subr.mxu0 0.0
      %1790 = vmatpush2.xpose.msra.mxu0 0.0
      %1791 = vmatprep.subr.mxu0 0.0
      %1792 = vmatpush2.xpose.msra.mxu0 0.0
      %1793 = vmatprep.subr.mxu0 0.0
      %1794 = vmatpush2.xpose.msra.mxu0 0.0
      %1795 = vmatprep.subr.mxu0 0.0
      %1796 = vmatpush2.xpose.msra.mxu0 0.0
      %1797 = vmatprep.subr.mxu0 0.0
      %1798 = vmatpush2.xpose.msra.mxu0 0.0
      %1799 = vmatprep.subr.mxu0 0.0
      %1800 = vmatpush2.xpose.msra.mxu0 0.0
      %1801 = vmatprep.subr.mxu0 0.0
      %1802 = vmatpush2.xpose.msra.mxu0 0.0
      %1803 = vmatprep.subr.mxu0 0.0
      %1804 = vmatpush2.xpose.msra.mxu0 0.0
      %1805 = vmatprep.mubr.f32.mxu0 0.0
      %1806 = vmatmul.mubr.f32.gmra.mxu0 %v1724
      %v1807 = vpop.f32.mrf.mxu0
      %v1808 = vadd.f32 0.0, %v1807
      %v1809 = vpop.f32.mrf.mxu0
      %1810 = vmatprep.mubr.f32.mxu0 0.0
      %1811 = vmatmul.mubr.f32.gmra.mxu0 %v1727
      %v1812 = vpop.f32.mrf.mxu0
      %v1813 = vadd.f32 0.0, %v1812
      %v1814 = vpop.f32.mrf.mxu0
      %1815 = vdwg.mxu0
      %v1816 = vmul.f32 %v1808, 0.35355338
      %v1817 = vmul.f32 %v1813, 0.35355338
      %v1818 = vsel %vm1231, %v1816, -inf
      %1819 = vmax.xlane.f32.xlu0 %v1818
      %v1820 = vpop.xlane.xlu0 %1819
      %v1821 = vsel %vm1231, %v1817, -inf
      %1822 = vmax.xlane.f32.xlu0 %v1821
      %v1823 = vpop.xlane.xlu0 %1822
      %v1824 = vsub.f32 %v1816, %v1820
      %v1825 = vsub.f32 %v1817, %v1823
      %v1826 = vmul.f32 %v1824, 1.442695
      %v1827 = vpow.pop %v1826
      %v1828 = vmul.f32 %v1825, 1.442695
      %v1829 = vpow.pop %v1828
      %v1830 = vsel %vm1231, %v1827, 0.0
      %1831 = vadd.xlane.f32.xlu0 %v1830
      %v1832 = vpop.xlane.xlu0 %1831
      %v1833 = vsel %vm1231, %v1829, 0.0
      %1834 = vadd.xlane.f32.xlu0 %v1833
      %v1835 = vpop.xlane.xlu0 %1834
      %v1836 = vrcp.pop %v1832
      %v1837 = vrcp.pop %v1835
      %v1838 = vmul.f32 %v1827, %v1836
      %v1839 = vmul.f32 %v1829, %v1837
      %1840 = vrot.lane.b32.xlu0 %v1700, 96
      %v1841 = vpop.permute.xlu0 %1840
      %1842 = vrot.lane.b32.xlu0 %v1705, 96
      %v1843 = vpop.permute.xlu0 %1842
      %1844 = vrot.lane.b32.xlu0 %v1710, 96
      %v1845 = vpop.permute.xlu0 %1844
      %1846 = vrot.lane.b32.xlu0 %v1715, 96
      %v1847 = vpop.permute.xlu0 %1846
      %v1853 = vsel %vm1231, %v1838, 0
      %v1856 = vsel %vm1231, %v1839, 0
      %1858 = vmatprep.subr.mxu0 0.0
      %1859 = vmatpush1.msra.mxu0 0.0
      %1860 = vmatprep.subr.mxu0 0.0
      %1861 = vmatpush1.msra.mxu0 0.0
      %1862 = vmatprep.subr.mxu0 0.0
      %1863 = vmatpush1.msra.mxu0 0.0
      %1864 = vmatprep.subr.mxu0 0.0
      %1865 = vmatpush1.msra.mxu0 0.0
      %1866 = vmatprep.subr.mxu0 0.0
      %1867 = vmatpush1.msra.mxu0 0.0
      %1868 = vmatprep.subr.mxu0 0.0
      %1869 = vmatpush1.msra.mxu0 0.0
      %1870 = vmatprep.subr.mxu0 0.0
      %1871 = vmatpush1.msra.mxu0 0.0
      %1872 = vmatprep.subr.mxu0 0.0
      %1873 = vmatpush1.msra.mxu0 0.0
      %1874 = vmatprep.subr.mxu0 0.0
      %1875 = vmatpush1.msra.mxu0 0.0
      %1876 = vmatprep.subr.mxu0 0.0
      %1877 = vmatpush1.msra.mxu0 0.0
      %1878 = vmatprep.subr.mxu0 0.0
      %1879 = vmatpush1.msra.mxu0 0.0
      %1880 = vmatprep.subr.mxu0 0.0
      %1881 = vmatpush1.msra.mxu0 0.0
      %1882 = vmatprep.subr.mxu0 0.0
      %1883 = vmatpush1.msra.mxu0 %v1847
      %1884 = vmatprep.subr.mxu0 0.0
      %1885 = vmatpush1.msra.mxu0 %v1845
      %1886 = vmatprep.subr.mxu0 0.0
      %1887 = vmatpush1.msra.mxu0 %v1843
      %1888 = vmatprep.subr.mxu0 0.0
      %1889 = vmatpush1.msra.mxu0 %v1841
      %1890 = vmatprep.subr.mxu0 0.0
      %1891 = vmatpush2.msra.mxu0 0.0
      %1892 = vmatprep.subr.mxu0 0.0
      %1893 = vmatpush2.msra.mxu0 0.0
      %1894 = vmatprep.subr.mxu0 0.0
      %1895 = vmatpush2.msra.mxu0 0.0
      %1896 = vmatprep.subr.mxu0 0.0
      %1897 = vmatpush2.msra.mxu0 0.0
      %1898 = vmatprep.subr.mxu0 0.0
      %1899 = vmatpush2.msra.mxu0 0.0
      %1900 = vmatprep.subr.mxu0 0.0
      %1901 = vmatpush2.msra.mxu0 0.0
      %1902 = vmatprep.subr.mxu0 0.0
      %1903 = vmatpush2.msra.mxu0 0.0
      %1904 = vmatprep.subr.mxu0 0.0
      %1905 = vmatpush2.msra.mxu0 0.0
      %1906 = vmatprep.subr.mxu0 0.0
      %1907 = vmatpush2.msra.mxu0 0.0
      %1908 = vmatprep.subr.mxu0 0.0
      %1909 = vmatpush2.msra.mxu0 0.0
      %1910 = vmatprep.subr.mxu0 0.0
      %1911 = vmatpush2.msra.mxu0 0.0
      %1912 = vmatprep.subr.mxu0 0.0
      %1913 = vmatpush2.msra.mxu0 0.0
      %1914 = vmatprep.subr.mxu0 0.0
      %1915 = vmatpush2.msra.mxu0 0.0
      %1916 = vmatprep.subr.mxu0 0.0
      %1917 = vmatpush2.msra.mxu0 0.0
      %1918 = vmatprep.subr.mxu0 0.0
      %1919 = vmatpush2.msra.mxu0 0.0
      %1920 = vmatprep.subr.mxu0 0.0
      %1921 = vmatpush2.msra.mxu0 0.0
      %1922 = vmatprep.mubr.f32.mxu0 0.0
      %1923 = vmatmul.mubr.f32.gmra.mxu0 %v1853
      %v1924 = vpop.f32.mrf.mxu0
      %v1925 = vadd.f32 0.0, %v1924
      %v1926 = vpop.f32.mrf.mxu0
      %1927 = vmatprep.mubr.f32.mxu0 0.0
      %1928 = vmatmul.mubr.f32.gmra.mxu0 %v1856
      %v1929 = vpop.f32.mrf.mxu0
      %v1930 = vadd.f32 0.0, %v1929
      %v1931 = vpop.f32.mrf.mxu0
      %1932 = vdwg.mxu0
      %1933 = vrot.lane.b32.xlu0 %v1602, 120
      %v1934 = vpop.permute.xlu0 %1933
      %1935 = vrot.lane.b32.xlu0 %v1607, 120
      %v1936 = vpop.permute.xlu0 %1935
      %1937 = vrot.lane.b32.xlu0 %v1700, 120
      %v1938 = vpop.permute.xlu0 %1937
      %1939 = vrot.lane.b32.xlu0 %v1705, 120
      %v1940 = vpop.permute.xlu0 %1939
      %1941 = vrot.lane.b32.xlu0 %v1710, 120
      %v1942 = vpop.permute.xlu0 %1941
      %1943 = vrot.lane.b32.xlu0 %v1715, 120
      %v1944 = vpop.permute.xlu0 %1943
      %v1945 = vsel %vm1722, %v1934, 0
      %v1947 = vsel %vm1722, %v1936, 0
      %v1949 = vsel %vm1722, %v1938, 0
      %v1951 = vsel %vm1722, %v1940, 0
      %v1953 = vsel %vm1722, %v1942, 0
      %v1955 = vsel %vm1722, %v1944, 0
      %1957 = vmatprep.subr.mxu0 0.0
      %1958 = vmatpush1.xpose.msra.mxu0 0.0
      %1959 = vmatprep.subr.mxu0 0.0
      %1960 = vmatpush1.xpose.msra.mxu0 0.0
      %1961 = vmatprep.subr.mxu0 0.0
      %1962 = vmatpush1.xpose.msra.mxu0 0.0
      %1963 = vmatprep.subr.mxu0 0.0
      %1964 = vmatpush1.xpose.msra.mxu0 0.0
      %1965 = vmatprep.subr.mxu0 0.0
      %1966 = vmatpush1.xpose.msra.mxu0 0.0
      %1967 = vmatprep.subr.mxu0 0.0
      %1968 = vmatpush1.xpose.msra.mxu0 0.0
      %1969 = vmatprep.subr.mxu0 0.0
      %1970 = vmatpush1.xpose.msra.mxu0 0.0
      %1971 = vmatprep.subr.mxu0 0.0
      %1972 = vmatpush1.xpose.msra.mxu0 0.0
      %1973 = vmatprep.subr.mxu0 0.0
      %1974 = vmatpush1.xpose.msra.mxu0 0.0
      %1975 = vmatprep.subr.mxu0 0.0
      %1976 = vmatpush1.xpose.msra.mxu0 0.0
      %1977 = vmatprep.subr.mxu0 0.0
      %1978 = vmatpush1.xpose.msra.mxu0 0.0
      %1979 = vmatprep.subr.mxu0 0.0
      %1980 = vmatpush1.xpose.msra.mxu0 0.0
      %1981 = vmatprep.subr.mxu0 0.0
      %1982 = vmatpush1.xpose.msra.mxu0 %v1955
      %1983 = vmatprep.subr.mxu0 0.0
      %1984 = vmatpush1.xpose.msra.mxu0 %v1953
      %1985 = vmatprep.subr.mxu0 0.0
      %1986 = vmatpush1.xpose.msra.mxu0 %v1951
      %1987 = vmatprep.subr.mxu0 0.0
      %1988 = vmatpush1.xpose.msra.mxu0 %v1949
      %1989 = vmatprep.subr.mxu0 0.0
      %1990 = vmatpush2.xpose.msra.mxu0 0.0
      %1991 = vmatprep.subr.mxu0 0.0
      %1992 = vmatpush2.xpose.msra.mxu0 0.0
      %1993 = vmatprep.subr.mxu0 0.0
      %1994 = vmatpush2.xpose.msra.mxu0 0.0
      %1995 = vmatprep.subr.mxu0 0.0
      %1996 = vmatpush2.xpose.msra.mxu0 0.0
      %1997 = vmatprep.subr.mxu0 0.0
      %1998 = vmatpush2.xpose.msra.mxu0 0.0
      %1999 = vmatprep.subr.mxu0 0.0
      %2000 = vmatpush2.xpose.msra.mxu0 0.0
      %2001 = vmatprep.subr.mxu0 0.0
      %2002 = vmatpush2.xpose.msra.mxu0 0.0
      %2003 = vmatprep.subr.mxu0 0.0
      %2004 = vmatpush2.xpose.msra.mxu0 0.0
      %2005 = vmatprep.subr.mxu0 0.0
      %2006 = vmatpush2.xpose.msra.mxu0 0.0
      %2007 = vmatprep.subr.mxu0 0.0
      %2008 = vmatpush2.xpose.msra.mxu0 0.0
      %2009 = vmatprep.subr.mxu0 0.0
      %2010 = vmatpush2.xpose.msra.mxu0 0.0
      %2011 = vmatprep.subr.mxu0 0.0
      %2012 = vmatpush2.xpose.msra.mxu0 0.0
      %2013 = vmatprep.subr.mxu0 0.0
      %2014 = vmatpush2.xpose.msra.mxu0 0.0
      %2015 = vmatprep.subr.mxu0 0.0
      %2016 = vmatpush2.xpose.msra.mxu0 0.0
      %2017 = vmatprep.subr.mxu0 0.0
      %2018 = vmatpush2.xpose.msra.mxu0 0.0
      %2019 = vmatprep.subr.mxu0 0.0
      %2020 = vmatpush2.xpose.msra.mxu0 0.0
      %2021 = vmatprep.mubr.f32.mxu0 0.0
      %2022 = vmatmul.mubr.f32.gmra.mxu0 %v1945
      %v2023 = vpop.f32.mrf.mxu0
      %v2024 = vadd.f32 0.0, %v2023
      %v2025 = vpop.f32.mrf.mxu0
      %2026 = vmatprep.mubr.f32.mxu0 0.0
      %2027 = vmatmul.mubr.f32.gmra.mxu0 %v1947
      %v2028 = vpop.f32.mrf.mxu0
      %v2029 = vadd.f32 0.0, %v2028
      %v2030 = vpop.f32.mrf.mxu0
      %2031 = vdwg.mxu0
      %v2032 = vmul.f32 %v2024, 0.35355338
      %v2033 = vmul.f32 %v2029, 0.35355338
      %v2034 = vsel %vm1231, %v2032, -inf
      %2035 = vmax.xlane.f32.xlu0 %v2034
      %v2036 = vpop.xlane.xlu0 %2035
      %v2037 = vsel %vm1231, %v2033, -inf
      %2038 = vmax.xlane.f32.xlu0 %v2037
      %v2039 = vpop.xlane.xlu0 %2038
      %v2040 = vsub.f32 %v2032, %v2036
      %v2041 = vsub.f32 %v2033, %v2039
      %v2042 = vmul.f32 %v2040, 1.442695
      %v2043 = vpow.pop %v2042
      %v2044 = vmul.f32 %v2041, 1.442695
      %v2045 = vpow.pop %v2044
      %v2046 = vsel %vm1231, %v2043, 0.0
      %2047 = vadd.xlane.f32.xlu0 %v2046
      %v2048 = vpop.xlane.xlu0 %2047
      %v2049 = vsel %vm1231, %v2045, 0.0
      %2050 = vadd.xlane.f32.xlu0 %v2049
      %v2051 = vpop.xlane.xlu0 %2050
      %v2052 = vrcp.pop %v2048
      %v2053 = vrcp.pop %v2051
      %v2054 = vmul.f32 %v2043, %v2052
      %v2055 = vmul.f32 %v2045, %v2053
      %2056 = vrot.lane.b32.xlu0 %v1700, 88
      %v2057 = vpop.permute.xlu0 %2056
      %2058 = vrot.lane.b32.xlu0 %v1705, 88
      %v2059 = vpop.permute.xlu0 %2058
      %2060 = vrot.lane.b32.xlu0 %v1710, 88
      %v2061 = vpop.permute.xlu0 %2060
      %2062 = vrot.lane.b32.xlu0 %v1715, 88
      %v2063 = vpop.permute.xlu0 %2062
      %v2069 = vsel %vm1231, %v2054, 0
      %v2072 = vsel %vm1231, %v2055, 0
      %2074 = vmatprep.subr.mxu0 0.0
      %2075 = vmatpush1.msra.mxu0 0.0
      %2076 = vmatprep.subr.mxu0 0.0
      %2077 = vmatpush1.msra.mxu0 0.0
      %2078 = vmatprep.subr.mxu0 0.0
      %2079 = vmatpush1.msra.mxu0 0.0
      %2080 = vmatprep.subr.mxu0 0.0
      %2081 = vmatpush1.msra.mxu0 0.0
      %2082 = vmatprep.subr.mxu0 0.0
      %2083 = vmatpush1.msra.mxu0 0.0
      %2084 = vmatprep.subr.mxu0 0.0
      %2085 = vmatpush1.msra.mxu0 0.0
      %2086 = vmatprep.subr.mxu0 0.0
      %2087 = vmatpush1.msra.mxu0 0.0
      %2088 = vmatprep.subr.mxu0 0.0
      %2089 = vmatpush1.msra.mxu0 0.0
      %2090 = vmatprep.subr.mxu0 0.0
      %2091 = vmatpush1.msra.mxu0 0.0
      %2092 = vmatprep.subr.mxu0 0.0
      %2093 = vmatpush1.msra.mxu0 0.0
      %2094 = vmatprep.subr.mxu0 0.0
      %2095 = vmatpush1.msra.mxu0 0.0
      %2096 = vmatprep.subr.mxu0 0.0
      %2097 = vmatpush1.msra.mxu0 0.0
      %2098 = vmatprep.subr.mxu0 0.0
      %2099 = vmatpush1.msra.mxu0 %v2063
      %2100 = vmatprep.subr.mxu0 0.0
      %2101 = vmatpush1.msra.mxu0 %v2061
      %2102 = vmatprep.subr.mxu0 0.0
      %2103 = vmatpush1.msra.mxu0 %v2059
      %2104 = vmatprep.subr.mxu0 0.0
      %2105 = vmatpush1.msra.mxu0 %v2057
      %2106 = vmatprep.subr.mxu0 0.0
      %2107 = vmatpush2.msra.mxu0 0.0
      %2108 = vmatprep.subr.mxu0 0.0
      %2109 = vmatpush2.msra.mxu0 0.0
      %2110 = vmatprep.subr.mxu0 0.0
      %2111 = vmatpush2.msra.mxu0 0.0
      %2112 = vmatprep.subr.mxu0 0.0
      %2113 = vmatpush2.msra.mxu0 0.0
      %2114 = vmatprep.subr.mxu0 0.0
      %2115 = vmatpush2.msra.mxu0 0.0
      %2116 = vmatprep.subr.mxu0 0.0
      %2117 = vmatpush2.msra.mxu0 0.0
      %2118 = vmatprep.subr.mxu0 0.0
      %2119 = vmatpush2.msra.mxu0 0.0
      %2120 = vmatprep.subr.mxu0 0.0
      %2121 = vmatpush2.msra.mxu0 0.0
      %2122 = vmatprep.subr.mxu0 0.0
      %2123 = vmatpush2.msra.mxu0 0.0
      %2124 = vmatprep.subr.mxu0 0.0
      %2125 = vmatpush2.msra.mxu0 0.0
      %2126 = vmatprep.subr.mxu0 0.0
      %2127 = vmatpush2.msra.mxu0 0.0
      %2128 = vmatprep.subr.mxu0 0.0
      %2129 = vmatpush2.msra.mxu0 0.0
      %2130 = vmatprep.subr.mxu0 0.0
      %2131 = vmatpush2.msra.mxu0 0.0
      %2132 = vmatprep.subr.mxu0 0.0
      %2133 = vmatpush2.msra.mxu0 0.0
      %2134 = vmatprep.subr.mxu0 0.0
      %2135 = vmatpush2.msra.mxu0 0.0
      %2136 = vmatprep.subr.mxu0 0.0
      %2137 = vmatpush2.msra.mxu0 0.0
      %2138 = vmatprep.mubr.f32.mxu0 0.0
      %2139 = vmatmul.mubr.f32.gmra.mxu0 %v2069
      %v2140 = vpop.f32.mrf.mxu0
      %v2141 = vadd.f32 0.0, %v2140
      %v2142 = vpop.f32.mrf.mxu0
      %2143 = vmatprep.mubr.f32.mxu0 0.0
      %2144 = vmatmul.mubr.f32.gmra.mxu0 %v2072
      %v2145 = vpop.f32.mrf.mxu0
      %v2146 = vadd.f32 0.0, %v2145
      %v2147 = vpop.f32.mrf.mxu0
      %2148 = vdwg.mxu0
      %v2150 = vsel %vm1722, %v2141, 0
      %v2153 = vsel %vm1722, %v2146, 0
      %2155 = vmatprep.subr.mxu0 0.0
      %2156 = vmatpush1.msra.mxu0 0.0
      %2157 = vmatprep.subr.mxu0 0.0
      %2158 = vmatpush1.msra.mxu0 0.0
      %2159 = vmatprep.subr.mxu0 0.0
      %2160 = vmatpush1.msra.mxu0 0.0
      %2161 = vmatprep.subr.mxu0 0.0
      %2162 = vmatpush1.msra.mxu0 0.0
      %2163 = vmatprep.subr.mxu0 0.0
      %2164 = vmatpush1.msra.mxu0 0.0
      %2165 = vmatprep.subr.mxu0 0.0
      %2166 = vmatpush1.msra.mxu0 0.0
      %2167 = vmatprep.subr.mxu0 0.0
      %2168 = vmatpush1.msra.mxu0 0.0
      %2169 = vmatprep.subr.mxu0 0.0
      %2170 = vmatpush1.msra.mxu0 0.0
      %2171 = vmatprep.subr.mxu0 0.0
      %2172 = vmatpush1.msra.mxu0 0.0
      %2173 = vmatprep.subr.mxu0 0.0
      %2174 = vmatpush1.msra.mxu0 0.0
      %2175 = vmatprep.subr.mxu0 0.0
      %2176 = vmatpush1.msra.mxu0 0.0
      %2177 = vmatprep.subr.mxu0 0.0
      %2178 = vmatpush1.msra.mxu0 0.0
      %2179 = vmatprep.subr.mxu0 0.0
      %2180 = vmatpush1.msra.mxu0 0.0
      %2181 = vmatprep.subr.mxu0 0.0
      %2182 = vmatpush1.msra.mxu0 0.0
      %2183 = vmatprep.subr.mxu0 0.0
      %2184 = vmatpush1.msra.mxu0 0.0
      %2185 = vmatprep.subr.mxu0 0.0
      %2186 = vmatpush1.msra.mxu0 %v1719
      %2187 = vmatprep.subr.mxu0 0.0
      %2188 = vmatpush2.msra.mxu0 0.0
      %2189 = vmatprep.subr.mxu0 0.0
      %2190 = vmatpush2.msra.mxu0 0.0
      %2191 = vmatprep.subr.mxu0 0.0
      %2192 = vmatpush2.msra.mxu0 0.0
      %2193 = vmatprep.subr.mxu0 0.0
      %2194 = vmatpush2.msra.mxu0 0.0
      %2195 = vmatprep.subr.mxu0 0.0
      %2196 = vmatpush2.msra.mxu0 0.0
      %2197 = vmatprep.subr.mxu0 0.0
      %2198 = vmatpush2.msra.mxu0 0.0
      %2199 = vmatprep.subr.mxu0 0.0
      %2200 = vmatpush2.msra.mxu0 0.0
      %2201 = vmatprep.subr.mxu0 0.0
      %2202 = vmatpush2.msra.mxu0 0.0
      %2203 = vmatprep.subr.mxu0 0.0
      %2204 = vmatpush2.msra.mxu0 0.0
      %2205 = vmatprep.subr.mxu0 0.0
      %2206 = vmatpush2.msra.mxu0 0.0
      %2207 = vmatprep.subr.mxu0 0.0
      %2208 = vmatpush2.msra.mxu0 0.0
      %2209 = vmatprep.subr.mxu0 0.0
      %2210 = vmatpush2.msra.mxu0 0.0
      %2211 = vmatprep.subr.mxu0 0.0
      %2212 = vmatpush2.msra.mxu0 0.0
      %2213 = vmatprep.subr.mxu0 0.0
      %2214 = vmatpush2.msra.mxu0 0.0
      %2215 = vmatprep.subr.mxu0 0.0
      %2216 = vmatpush2.msra.mxu0 0.0
      %2217 = vmatprep.subr.mxu0 0.0
      %2218 = vmatpush2.msra.mxu0 0.0
      %2219 = vmatprep.mubr.f32.mxu0 0.0
      %2220 = vmatmul.mubr.f32.gmra.mxu0 %v2150
      %v2221 = vpop.f32.mrf.mxu0
      %v2222 = vadd.f32 0.0, %v2221
      %v2223 = vpop.f32.mrf.mxu0
      %2224 = vmatprep.mubr.f32.mxu0 0.0
      %2225 = vmatmul.mubr.f32.gmra.mxu0 %v2153
      %v2226 = vpop.f32.mrf.mxu0
      %v2227 = vadd.f32 0.0, %v2226
      %v2228 = vpop.f32.mrf.mxu0
      %2229 = vdwg.mxu0
      %v2231 = vsel %vm1722, %v1925, 0
      %v2234 = vsel %vm1722, %v1930, 0
      %2236 = vmatprep.subr.mxu0 0.0
      %2237 = vmatpush1.msra.mxu0 0.0
      %2238 = vmatprep.subr.mxu0 0.0
      %2239 = vmatpush1.msra.mxu0 0.0
      %2240 = vmatprep.subr.mxu0 0.0
      %2241 = vmatpush1.msra.mxu0 0.0
      %2242 = vmatprep.subr.mxu0 0.0
      %2243 = vmatpush1.msra.mxu0 0.0
      %2244 = vmatprep.subr.mxu0 0.0
      %2245 = vmatpush1.msra.mxu0 0.0
      %2246 = vmatprep.subr.mxu0 0.0
      %2247 = vmatpush1.msra.mxu0 0.0
      %2248 = vmatprep.subr.mxu0 0.0
      %2249 = vmatpush1.msra.mxu0 0.0
      %2250 = vmatprep.subr.mxu0 0.0
      %2251 = vmatpush1.msra.mxu0 0.0
      %2252 = vmatprep.subr.mxu0 0.0
      %2253 = vmatpush1.msra.mxu0 0.0
      %2254 = vmatprep.subr.mxu0 0.0
      %2255 = vmatpush1.msra.mxu0 0.0
      %2256 = vmatprep.subr.mxu0 0.0
      %2257 = vmatpush1.msra.mxu0 0.0
      %2258 = vmatprep.subr.mxu0 0.0
      %2259 = vmatpush1.msra.mxu0 0.0
      %2260 = vmatprep.subr.mxu0 0.0
      %2261 = vmatpush1.msra.mxu0 0.0
      %2262 = vmatprep.subr.mxu0 0.0
      %2263 = vmatpush1.msra.mxu0 0.0
      %2264 = vmatprep.subr.mxu0 0.0
      %2265 = vmatpush1.msra.mxu0 0.0
      %2266 = vmatprep.subr.mxu0 0.0
      %2267 = vmatpush1.msra.mxu0 %v1718
      %2268 = vmatprep.subr.mxu0 0.0
      %2269 = vmatpush2.msra.mxu0 0.0
      %2270 = vmatprep.subr.mxu0 0.0
      %2271 = vmatpush2.msra.mxu0 0.0
      %2272 = vmatprep.subr.mxu0 0.0
      %2273 = vmatpush2.msra.mxu0 0.0
      %2274 = vmatprep.subr.mxu0 0.0
      %2275 = vmatpush2.msra.mxu0 0.0
      %2276 = vmatprep.subr.mxu0 0.0
      %2277 = vmatpush2.msra.mxu0 0.0
      %2278 = vmatprep.subr.mxu0 0.0
      %2279 = vmatpush2.msra.mxu0 0.0
      %2280 = vmatprep.subr.mxu0 0.0
      %2281 = vmatpush2.msra.mxu0 0.0
      %2282 = vmatprep.subr.mxu0 0.0
      %2283 = vmatpush2.msra.mxu0 0.0
      %2284 = vmatprep.subr.mxu0 0.0
      %2285 = vmatpush2.msra.mxu0 0.0
      %2286 = vmatprep.subr.mxu0 0.0
      %2287 = vmatpush2.msra.mxu0 0.0
      %2288 = vmatprep.subr.mxu0 0.0
      %2289 = vmatpush2.msra.mxu0 0.0
      %2290 = vmatprep.subr.mxu0 0.0
      %2291 = vmatpush2.msra.mxu0 0.0
      %2292 = vmatprep.subr.mxu0 0.0
      %2293 = vmatpush2.msra.mxu0 0.0
      %2294 = vmatprep.subr.mxu0 0.0
      %2295 = vmatpush2.msra.mxu0 0.0
      %2296 = vmatprep.subr.mxu0 0.0
      %2297 = vmatpush2.msra.mxu0 0.0
      %2298 = vmatprep.subr.mxu0 0.0
      %2299 = vmatpush2.msra.mxu0 0.0
      %2300 = vmatprep.mubr.f32.mxu0 0.0
      %2301 = vmatmul.mubr.f32.gmra.mxu0 %v2231
      %v2302 = vpop.f32.mrf.mxu0
      %v2303 = vadd.f32 %v2222, %v2302
      %v2304 = vpop.f32.mrf.mxu0
      %2305 = vmatprep.mubr.f32.mxu0 0.0
      %2306 = vmatmul.mubr.f32.gmra.mxu0 %v2234
      %v2307 = vpop.f32.mrf.mxu0
      %v2308 = vadd.f32 %v2227, %v2307
      %v2309 = vpop.f32.mrf.mxu0
      %2310 = vdwg.mxu0
      %2311 = vrot.lane.b32.xlu0 %v1602, 112
      %v2312 = vpop.permute.xlu0 %2311
      %2313 = vrot.lane.b32.xlu0 %v1607, 112
      %v2314 = vpop.permute.xlu0 %2313
      %2315 = vrot.lane.b32.xlu0 %v1700, 112
      %v2316 = vpop.permute.xlu0 %2315
      %2317 = vrot.lane.b32.xlu0 %v1705, 112
      %v2318 = vpop.permute.xlu0 %2317
      %2319 = vrot.lane.b32.xlu0 %v1710, 112
      %v2320 = vpop.permute.xlu0 %2319
      %2321 = vrot.lane.b32.xlu0 %v1715, 112
      %v2322 = vpop.permute.xlu0 %2321
      %v2323 = vsel %vm1722, %v2312, 0
      %v2325 = vsel %vm1722, %v2314, 0
      %v2327 = vsel %vm1722, %v2316, 0
      %v2329 = vsel %vm1722, %v2318, 0
      %v2331 = vsel %vm1722, %v2320, 0
      %v2333 = vsel %vm1722, %v2322, 0
      %2335 = vmatprep.subr.mxu0 0.0
      %2336 = vmatpush1.xpose.msra.mxu0 0.0
      %2337 = vmatprep.subr.mxu0 0.0
      %2338 = vmatpush1.xpose.msra.mxu0 0.0
      %2339 = vmatprep.subr.mxu0 0.0
      %2340 = vmatpush1.xpose.msra.mxu0 0.0
      %2341 = vmatprep.subr.mxu0 0.0
      %2342 = vmatpush1.xpose.msra.mxu0 0.0
      %2343 = vmatprep.subr.mxu0 0.0
      %2344 = vmatpush1.xpose.msra.mxu0 0.0
      %2345 = vmatprep.subr.mxu0 0.0
      %2346 = vmatpush1.xpose.msra.mxu0 0.0
      %2347 = vmatprep.subr.mxu0 0.0
      %2348 = vmatpush1.xpose.msra.mxu0 0.0
      %2349 = vmatprep.subr.mxu0 0.0
      %2350 = vmatpush1.xpose.msra.mxu0 0.0
      %2351 = vmatprep.subr.mxu0 0.0
      %2352 = vmatpush1.xpose.msra.mxu0 0.0
      %2353 = vmatprep.subr.mxu0 0.0
      %2354 = vmatpush1.xpose.msra.mxu0 0.0
      %2355 = vmatprep.subr.mxu0 0.0
      %2356 = vmatpush1.xpose.msra.mxu0 0.0
      %2357 = vmatprep.subr.mxu0 0.0
      %2358 = vmatpush1.xpose.msra.mxu0 0.0
      %2359 = vmatprep.subr.mxu0 0.0
      %2360 = vmatpush1.xpose.msra.mxu0 %v2333
      %2361 = vmatprep.subr.mxu0 0.0
      %2362 = vmatpush1.xpose.msra.mxu0 %v2331
      %2363 = vmatprep.subr.mxu0 0.0
      %2364 = vmatpush1.xpose.msra.mxu0 %v2329
      %2365 = vmatprep.subr.mxu0 0.0
      %2366 = vmatpush1.xpose.msra.mxu0 %v2327
      %2367 = vmatprep.subr.mxu0 0.0
      %2368 = vmatpush2.xpose.msra.mxu0 0.0
      %2369 = vmatprep.subr.mxu0 0.0
      %2370 = vmatpush2.xpose.msra.mxu0 0.0
      %2371 = vmatprep.subr.mxu0 0.0
      %2372 = vmatpush2.xpose.msra.mxu0 0.0
      %2373 = vmatprep.subr.mxu0 0.0
      %2374 = vmatpush2.xpose.msra.mxu0 0.0
      %2375 = vmatprep.subr.mxu0 0.0
      %2376 = vmatpush2.xpose.msra.mxu0 0.0
      %2377 = vmatprep.subr.mxu0 0.0
      %2378 = vmatpush2.xpose.msra.mxu0 0.0
      %2379 = vmatprep.subr.mxu0 0.0
      %2380 = vmatpush2.xpose.msra.mxu0 0.0
      %2381 = vmatprep.subr.mxu0 0.0
      %2382 = vmatpush2.xpose.msra.mxu0 0.0
      %2383 = vmatprep.subr.mxu0 0.0
      %2384 = vmatpush2.xpose.msra.mxu0 0.0
      %2385 = vmatprep.subr.mxu0 0.0
      %2386 = vmatpush2.xpose.msra.mxu0 0.0
      %2387 = vmatprep.subr.mxu0 0.0
      %2388 = vmatpush2.xpose.msra.mxu0 0.0
      %2389 = vmatprep.subr.mxu0 0.0
      %2390 = vmatpush2.xpose.msra.mxu0 0.0
      %2391 = vmatprep.subr.mxu0 0.0
      %2392 = vmatpush2.xpose.msra.mxu0 0.0
      %2393 = vmatprep.subr.mxu0 0.0
      %2394 = vmatpush2.xpose.msra.mxu0 0.0
      %2395 = vmatprep.subr.mxu0 0.0
      %2396 = vmatpush2.xpose.msra.mxu0 0.0
      %2397 = vmatprep.subr.mxu0 0.0
      %2398 = vmatpush2.xpose.msra.mxu0 0.0
      %2399 = vmatprep.mubr.f32.mxu0 0.0
      %2400 = vmatmul.mubr.f32.gmra.mxu0 %v2323
      %v2401 = vpop.f32.mrf.mxu0
      %v2402 = vadd.f32 0.0, %v2401
      %v2403 = vpop.f32.mrf.mxu0
      %2404 = vmatprep.mubr.f32.mxu0 0.0
      %2405 = vmatmul.mubr.f32.gmra.mxu0 %v2325
      %v2406 = vpop.f32.mrf.mxu0
      %v2407 = vadd.f32 0.0, %v2406
      %v2408 = vpop.f32.mrf.mxu0
      %2409 = vdwg.mxu0
      %v2410 = vmul.f32 %v2402, 0.35355338
      %v2411 = vmul.f32 %v2407, 0.35355338
      %v2412 = vsel %vm1231, %v2410, -inf
      %2413 = vmax.xlane.f32.xlu0 %v2412
      %v2414 = vpop.xlane.xlu0 %2413
      %v2415 = vsel %vm1231, %v2411, -inf
      %2416 = vmax.xlane.f32.xlu0 %v2415
      %v2417 = vpop.xlane.xlu0 %2416
      %v2418 = vsub.f32 %v2410, %v2414
      %v2419 = vsub.f32 %v2411, %v2417
      %v2420 = vmul.f32 %v2418, 1.442695
      %v2421 = vpow.pop %v2420
      %v2422 = vmul.f32 %v2419, 1.442695
      %v2423 = vpow.pop %v2422
      %v2424 = vsel %vm1231, %v2421, 0.0
      %2425 = vadd.xlane.f32.xlu0 %v2424
      %v2426 = vpop.xlane.xlu0 %2425
      %v2427 = vsel %vm1231, %v2423, 0.0
      %2428 = vadd.xlane.f32.xlu0 %v2427
      %v2429 = vpop.xlane.xlu0 %2428
      %v2430 = vrcp.pop %v2426
      %v2431 = vrcp.pop %v2429
      %v2432 = vmul.f32 %v2421, %v2430
      %v2433 = vmul.f32 %v2423, %v2431
      %2434 = vrot.lane.b32.xlu0 %v1700, 80
      %v2435 = vpop.permute.xlu0 %2434
      %2436 = vrot.lane.b32.xlu0 %v1705, 80
      %v2437 = vpop.permute.xlu0 %2436
      %2438 = vrot.lane.b32.xlu0 %v1710, 80
      %v2439 = vpop.permute.xlu0 %2438
      %2440 = vrot.lane.b32.xlu0 %v1715, 80
      %v2441 = vpop.permute.xlu0 %2440
      %v2447 = vsel %vm1231, %v2432, 0
      %v2450 = vsel %vm1231, %v2433, 0
      %2452 = vmatprep.subr.mxu0 0.0
      %2453 = vmatpush1.msra.mxu0 0.0
      %2454 = vmatprep.subr.mxu0 0.0
      %2455 = vmatpush1.msra.mxu0 0.0
      %2456 = vmatprep.subr.mxu0 0.0
      %2457 = vmatpush1.msra.mxu0 0.0
      %2458 = vmatprep.subr.mxu0 0.0
      %2459 = vmatpush1.msra.mxu0 0.0
      %2460 = vmatprep.subr.mxu0 0.0
      %2461 = vmatpush1.msra.mxu0 0.0
      %2462 = vmatprep.subr.mxu0 0.0
      %2463 = vmatpush1.msra.mxu0 0.0
      %2464 = vmatprep.subr.mxu0 0.0
      %2465 = vmatpush1.msra.mxu0 0.0
      %2466 = vmatprep.subr.mxu0 0.0
      %2467 = vmatpush1.msra.mxu0 0.0
      %2468 = vmatprep.subr.mxu0 0.0
      %2469 = vmatpush1.msra.mxu0 0.0
      %2470 = vmatprep.subr.mxu0 0.0
      %2471 = vmatpush1.msra.mxu0 0.0
      %2472 = vmatprep.subr.mxu0 0.0
      %2473 = vmatpush1.msra.mxu0 0.0
      %2474 = vmatprep.subr.mxu0 0.0
      %2475 = vmatpush1.msra.mxu0 0.0
      %2476 = vmatprep.subr.mxu0 0.0
      %2477 = vmatpush1.msra.mxu0 %v2441
      %2478 = vmatprep.subr.mxu0 0.0
      %2479 = vmatpush1.msra.mxu0 %v2439
      %2480 = vmatprep.subr.mxu0 0.0
      %2481 = vmatpush1.msra.mxu0 %v2437
      %2482 = vmatprep.subr.mxu0 0.0
      %2483 = vmatpush1.msra.mxu0 %v2435
      %2484 = vmatprep.subr.mxu0 0.0
      %2485 = vmatpush2.msra.mxu0 0.0
      %2486 = vmatprep.subr.mxu0 0.0
      %2487 = vmatpush2.msra.mxu0 0.0
      %2488 = vmatprep.subr.mxu0 0.0
      %2489 = vmatpush2.msra.mxu0 0.0
      %2490 = vmatprep.subr.mxu0 0.0
      %2491 = vmatpush2.msra.mxu0 0.0
      %2492 = vmatprep.subr.mxu0 0.0
      %2493 = vmatpush2.msra.mxu0 0.0
      %2494 = vmatprep.subr.mxu0 0.0
      %2495 = vmatpush2.msra.mxu0 0.0
      %2496 = vmatprep.subr.mxu0 0.0
      %2497 = vmatpush2.msra.mxu0 0.0
      %2498 = vmatprep.subr.mxu0 0.0
      %2499 = vmatpush2.msra.mxu0 0.0
      %2500 = vmatprep.subr.mxu0 0.0
      %2501 = vmatpush2.msra.mxu0 0.0
      %2502 = vmatprep.subr.mxu0 0.0
      %2503 = vmatpush2.msra.mxu0 0.0
      %2504 = vmatprep.subr.mxu0 0.0
      %2505 = vmatpush2.msra.mxu0 0.0
      %2506 = vmatprep.subr.mxu0 0.0
      %2507 = vmatpush2.msra.mxu0 0.0
      %2508 = vmatprep.subr.mxu0 0.0
      %2509 = vmatpush2.msra.mxu0 0.0
      %2510 = vmatprep.subr.mxu0 0.0
      %2511 = vmatpush2.msra.mxu0 0.0
      %2512 = vmatprep.subr.mxu0 0.0
      %2513 = vmatpush2.msra.mxu0 0.0
      %2514 = vmatprep.subr.mxu0 0.0
      %2515 = vmatpush2.msra.mxu0 0.0
      %2516 = vmatprep.mubr.f32.mxu0 0.0
      %2517 = vmatmul.mubr.f32.gmra.mxu0 %v2447
      %v2518 = vpop.f32.mrf.mxu0
      %v2519 = vadd.f32 0.0, %v2518
      %v2520 = vpop.f32.mrf.mxu0
      %2521 = vmatprep.mubr.f32.mxu0 0.0
      %2522 = vmatmul.mubr.f32.gmra.mxu0 %v2450
      %v2523 = vpop.f32.mrf.mxu0
      %v2524 = vadd.f32 0.0, %v2523
      %v2525 = vpop.f32.mrf.mxu0
      %2526 = vdwg.mxu0
      %v2528 = vsel %vm1722, %v2519, 0
      %v2531 = vsel %vm1722, %v2524, 0
      %2533 = vmatprep.subr.mxu0 0.0
      %2534 = vmatpush1.msra.mxu0 0.0
      %2535 = vmatprep.subr.mxu0 0.0
      %2536 = vmatpush1.msra.mxu0 0.0
      %2537 = vmatprep.subr.mxu0 0.0
      %2538 = vmatpush1.msra.mxu0 0.0
      %2539 = vmatprep.subr.mxu0 0.0
      %2540 = vmatpush1.msra.mxu0 0.0
      %2541 = vmatprep.subr.mxu0 0.0
      %2542 = vmatpush1.msra.mxu0 0.0
      %2543 = vmatprep.subr.mxu0 0.0
      %2544 = vmatpush1.msra.mxu0 0.0
      %2545 = vmatprep.subr.mxu0 0.0
      %2546 = vmatpush1.msra.mxu0 0.0
      %2547 = vmatprep.subr.mxu0 0.0
      %2548 = vmatpush1.msra.mxu0 0.0
      %2549 = vmatprep.subr.mxu0 0.0
      %2550 = vmatpush1.msra.mxu0 0.0
      %2551 = vmatprep.subr.mxu0 0.0
      %2552 = vmatpush1.msra.mxu0 0.0
      %2553 = vmatprep.subr.mxu0 0.0
      %2554 = vmatpush1.msra.mxu0 0.0
      %2555 = vmatprep.subr.mxu0 0.0
      %2556 = vmatpush1.msra.mxu0 0.0
      %2557 = vmatprep.subr.mxu0 0.0
      %2558 = vmatpush1.msra.mxu0 0.0
      %2559 = vmatprep.subr.mxu0 0.0
      %2560 = vmatpush1.msra.mxu0 0.0
      %2561 = vmatprep.subr.mxu0 0.0
      %2562 = vmatpush1.msra.mxu0 0.0
      %2563 = vmatprep.subr.mxu0 0.0
      %2564 = vmatpush1.msra.mxu0 %v1720
      %2565 = vmatprep.subr.mxu0 0.0
      %2566 = vmatpush2.msra.mxu0 0.0
      %2567 = vmatprep.subr.mxu0 0.0
      %2568 = vmatpush2.msra.mxu0 0.0
      %2569 = vmatprep.subr.mxu0 0.0
      %2570 = vmatpush2.msra.mxu0 0.0
      %2571 = vmatprep.subr.mxu0 0.0
      %2572 = vmatpush2.msra.mxu0 0.0
      %2573 = vmatprep.subr.mxu0 0.0
      %2574 = vmatpush2.msra.mxu0 0.0
      %2575 = vmatprep.subr.mxu0 0.0
      %2576 = vmatpush2.msra.mxu0 0.0
      %2577 = vmatprep.subr.mxu0 0.0
      %2578 = vmatpush2.msra.mxu0 0.0
      %2579 = vmatprep.subr.mxu0 0.0
      %2580 = vmatpush2.msra.mxu0 0.0
      %2581 = vmatprep.subr.mxu0 0.0
      %2582 = vmatpush2.msra.mxu0 0.0
      %2583 = vmatprep.subr.mxu0 0.0
      %2584 = vmatpush2.msra.mxu0 0.0
      %2585 = vmatprep.subr.mxu0 0.0
      %2586 = vmatpush2.msra.mxu0 0.0
      %2587 = vmatprep.subr.mxu0 0.0
      %2588 = vmatpush2.msra.mxu0 0.0
      %2589 = vmatprep.subr.mxu0 0.0
      %2590 = vmatpush2.msra.mxu0 0.0
      %2591 = vmatprep.subr.mxu0 0.0
      %2592 = vmatpush2.msra.mxu0 0.0
      %2593 = vmatprep.subr.mxu0 0.0
      %2594 = vmatpush2.msra.mxu0 0.0
      %2595 = vmatprep.subr.mxu0 0.0
      %2596 = vmatpush2.msra.mxu0 0.0
      %2597 = vmatprep.mubr.f32.mxu0 0.0
      %2598 = vmatmul.mubr.f32.gmra.mxu0 %v2528
      %v2599 = vpop.f32.mrf.mxu0
      %v2600 = vadd.f32 0.0, %v2599
      %v2601 = vpop.f32.mrf.mxu0
      %2602 = vmatprep.mubr.f32.mxu0 0.0
      %2603 = vmatmul.mubr.f32.gmra.mxu0 %v2531
      %v2604 = vpop.f32.mrf.mxu0
      %v2605 = vadd.f32 0.0, %v2604
      %v2606 = vpop.f32.mrf.mxu0
      %2607 = vdwg.mxu0
      %v2608 = vadd.f32 %v2303, %v2600
      %v2609 = vadd.f32 %v2308, %v2605
      %2610 = vrot.lane.b32.xlu0 %v1602, 104
      %v2611 = vpop.permute.xlu0 %2610
      %2612 = vrot.lane.b32.xlu0 %v1607, 104
      %v2613 = vpop.permute.xlu0 %2612
      %2614 = vrot.lane.b32.xlu0 %v1700, 104
      %v2615 = vpop.permute.xlu0 %2614
      %2616 = vrot.lane.b32.xlu0 %v1705, 104
      %v2617 = vpop.permute.xlu0 %2616
      %2618 = vrot.lane.b32.xlu0 %v1710, 104
      %v2619 = vpop.permute.xlu0 %2618
      %2620 = vrot.lane.b32.xlu0 %v1715, 104
      %v2621 = vpop.permute.xlu0 %2620
      %v2622 = vsel %vm1722, %v2611, 0
      %v2624 = vsel %vm1722, %v2613, 0
      %v2626 = vsel %vm1722, %v2615, 0
      %v2628 = vsel %vm1722, %v2617, 0
      %v2630 = vsel %vm1722, %v2619, 0
      %v2632 = vsel %vm1722, %v2621, 0
      %2634 = vmatprep.subr.mxu0 0.0
      %2635 = vmatpush1.xpose.msra.mxu0 0.0
      %2636 = vmatprep.subr.mxu0 0.0
      %2637 = vmatpush1.xpose.msra.mxu0 0.0
      %2638 = vmatprep.subr.mxu0 0.0
      %2639 = vmatpush1.xpose.msra.mxu0 0.0
      %2640 = vmatprep.subr.mxu0 0.0
      %2641 = vmatpush1.xpose.msra.mxu0 0.0
      %2642 = vmatprep.subr.mxu0 0.0
      %2643 = vmatpush1.xpose.msra.mxu0 0.0
      %2644 = vmatprep.subr.mxu0 0.0
      %2645 = vmatpush1.xpose.msra.mxu0 0.0
      %2646 = vmatprep.subr.mxu0 0.0
      %2647 = vmatpush1.xpose.msra.mxu0 0.0
      %2648 = vmatprep.subr.mxu0 0.0
      %2649 = vmatpush1.xpose.msra.mxu0 0.0
      %2650 = vmatprep.subr.mxu0 0.0
      %2651 = vmatpush1.xpose.msra.mxu0 0.0
      %2652 = vmatprep.subr.mxu0 0.0
      %2653 = vmatpush1.xpose.msra.mxu0 0.0
      %2654 = vmatprep.subr.mxu0 0.0
      %2655 = vmatpush1.xpose.msra.mxu0 0.0
      %2656 = vmatprep.subr.mxu0 0.0
      %2657 = vmatpush1.xpose.msra.mxu0 0.0
      %2658 = vmatprep.subr.mxu0 0.0
      %2659 = vmatpush1.xpose.msra.mxu0 %v2632
      %2660 = vmatprep.subr.mxu0 0.0
      %2661 = vmatpush1.xpose.msra.mxu0 %v2630
      %2662 = vmatprep.subr.mxu0 0.0
      %2663 = vmatpush1.xpose.msra.mxu0 %v2628
      %2664 = vmatprep.subr.mxu0 0.0
      %2665 = vmatpush1.xpose.msra.mxu0 %v2626
      %2666 = vmatprep.subr.mxu0 0.0
      %2667 = vmatpush2.xpose.msra.mxu0 0.0
      %2668 = vmatprep.subr.mxu0 0.0
      %2669 = vmatpush2.xpose.msra.mxu0 0.0
      %2670 = vmatprep.subr.mxu0 0.0
      %2671 = vmatpush2.xpose.msra.mxu0 0.0
      %2672 = vmatprep.subr.mxu0 0.0
      %2673 = vmatpush2.xpose.msra.mxu0 0.0
      %2674 = vmatprep.subr.mxu0 0.0
      %2675 = vmatpush2.xpose.msra.mxu0 0.0
      %2676 = vmatprep.subr.mxu0 0.0
      %2677 = vmatpush2.xpose.msra.mxu0 0.0
      %2678 = vmatprep.subr.mxu0 0.0
      %2679 = vmatpush2.xpose.msra.mxu0 0.0
      %2680 = vmatprep.subr.mxu0 0.0
      %2681 = vmatpush2.xpose.msra.mxu0 0.0
      %2682 = vmatprep.subr.mxu0 0.0
      %2683 = vmatpush2.xpose.msra.mxu0 0.0
      %2684 = vmatprep.subr.mxu0 0.0
      %2685 = vmatpush2.xpose.msra.mxu0 0.0
      %2686 = vmatprep.subr.mxu0 0.0
      %2687 = vmatpush2.xpose.msra.mxu0 0.0
      %2688 = vmatprep.subr.mxu0 0.0
      %2689 = vmatpush2.xpose.msra.mxu0 0.0
      %2690 = vmatprep.subr.mxu0 0.0
      %2691 = vmatpush2.xpose.msra.mxu0 0.0
      %2692 = vmatprep.subr.mxu0 0.0
      %2693 = vmatpush2.xpose.msra.mxu0 0.0
      %2694 = vmatprep.subr.mxu0 0.0
      %2695 = vmatpush2.xpose.msra.mxu0 0.0
      %2696 = vmatprep.subr.mxu0 0.0
      %2697 = vmatpush2.xpose.msra.mxu0 0.0
      %2698 = vmatprep.mubr.f32.mxu0 0.0
      %2699 = vmatmul.mubr.f32.gmra.mxu0 %v2622
      %v2700 = vpop.f32.mrf.mxu0
      %v2701 = vadd.f32 0.0, %v2700
      %v2702 = vpop.f32.mrf.mxu0
      %2703 = vmatprep.mubr.f32.mxu0 0.0
      %2704 = vmatmul.mubr.f32.gmra.mxu0 %v2624
      %v2705 = vpop.f32.mrf.mxu0
      %v2706 = vadd.f32 0.0, %v2705
      %v2707 = vpop.f32.mrf.mxu0
      %2708 = vdwg.mxu0
      %v2709 = vmul.f32 %v2701, 0.35355338
      %v2710 = vmul.f32 %v2706, 0.35355338
      %v2711 = vsel %vm1231, %v2709, -inf
      %2712 = vmax.xlane.f32.xlu0 %v2711
      %v2713 = vpop.xlane.xlu0 %2712
      %v2714 = vsel %vm1231, %v2710, -inf
      %2715 = vmax.xlane.f32.xlu0 %v2714
      %v2716 = vpop.xlane.xlu0 %2715
      %v2717 = vsub.f32 %v2709, %v2713
      %v2718 = vsub.f32 %v2710, %v2716
      %v2719 = vmul.f32 %v2717, 1.442695
      %v2720 = vpow.pop %v2719
      %v2721 = vmul.f32 %v2718, 1.442695
      %v2722 = vpow.pop %v2721
      %v2723 = vsel %vm1231, %v2720, 0.0
      %2724 = vadd.xlane.f32.xlu0 %v2723
      %v2725 = vpop.xlane.xlu0 %2724
      %v2726 = vsel %vm1231, %v2722, 0.0
      %2727 = vadd.xlane.f32.xlu0 %v2726
      %v2728 = vpop.xlane.xlu0 %2727
      %v2729 = vrcp.pop %v2725
      %v2730 = vrcp.pop %v2728
      %v2731 = vmul.f32 %v2720, %v2729
      %v2732 = vmul.f32 %v2722, %v2730
      %2733 = vrot.lane.b32.xlu0 %v1700, 72
      %v2734 = vpop.permute.xlu0 %2733
      %2735 = vrot.lane.b32.xlu0 %v1705, 72
      %v2736 = vpop.permute.xlu0 %2735
      %2737 = vrot.lane.b32.xlu0 %v1710, 72
      %v2738 = vpop.permute.xlu0 %2737
      %2739 = vrot.lane.b32.xlu0 %v1715, 72
      %v2740 = vpop.permute.xlu0 %2739
      %v2746 = vsel %vm1231, %v2731, 0
      %v2749 = vsel %vm1231, %v2732, 0
      %2751 = vmatprep.subr.mxu0 0.0
      %2752 = vmatpush1.msra.mxu0 0.0
      %2753 = vmatprep.subr.mxu0 0.0
      %2754 = vmatpush1.msra.mxu0 0.0
      %2755 = vmatprep.subr.mxu0 0.0
      %2756 = vmatpush1.msra.mxu0 0.0
      %2757 = vmatprep.subr.mxu0 0.0
      %2758 = vmatpush1.msra.mxu0 0.0
      %2759 = vmatprep.subr.mxu0 0.0
      %2760 = vmatpush1.msra.mxu0 0.0
      %2761 = vmatprep.subr.mxu0 0.0
      %2762 = vmatpush1.msra.mxu0 0.0
      %2763 = vmatprep.subr.mxu0 0.0
      %2764 = vmatpush1.msra.mxu0 0.0
      %2765 = vmatprep.subr.mxu0 0.0
      %2766 = vmatpush1.msra.mxu0 0.0
      %2767 = vmatprep.subr.mxu0 0.0
      %2768 = vmatpush1.msra.mxu0 0.0
      %2769 = vmatprep.subr.mxu0 0.0
      %2770 = vmatpush1.msra.mxu0 0.0
      %2771 = vmatprep.subr.mxu0 0.0
      %2772 = vmatpush1.msra.mxu0 0.0
      %2773 = vmatprep.subr.mxu0 0.0
      %2774 = vmatpush1.msra.mxu0 0.0
      %2775 = vmatprep.subr.mxu0 0.0
      %2776 = vmatpush1.msra.mxu0 %v2740
      %2777 = vmatprep.subr.mxu0 0.0
      %2778 = vmatpush1.msra.mxu0 %v2738
      %2779 = vmatprep.subr.mxu0 0.0
      %2780 = vmatpush1.msra.mxu0 %v2736
      %2781 = vmatprep.subr.mxu0 0.0
      %2782 = vmatpush1.msra.mxu0 %v2734
      %2783 = vmatprep.subr.mxu0 0.0
      %2784 = vmatpush2.msra.mxu0 0.0
      %2785 = vmatprep.subr.mxu0 0.0
      %2786 = vmatpush2.msra.mxu0 0.0
      %2787 = vmatprep.subr.mxu0 0.0
      %2788 = vmatpush2.msra.mxu0 0.0
      %2789 = vmatprep.subr.mxu0 0.0
      %2790 = vmatpush2.msra.mxu0 0.0
      %2791 = vmatprep.subr.mxu0 0.0
      %2792 = vmatpush2.msra.mxu0 0.0
      %2793 = vmatprep.subr.mxu0 0.0
      %2794 = vmatpush2.msra.mxu0 0.0
      %2795 = vmatprep.subr.mxu0 0.0
      %2796 = vmatpush2.msra.mxu0 0.0
      %2797 = vmatprep.subr.mxu0 0.0
      %2798 = vmatpush2.msra.mxu0 0.0
      %2799 = vmatprep.subr.mxu0 0.0
      %2800 = vmatpush2.msra.mxu0 0.0
      %2801 = vmatprep.subr.mxu0 0.0
      %2802 = vmatpush2.msra.mxu0 0.0
      %2803 = vmatprep.subr.mxu0 0.0
      %2804 = vmatpush2.msra.mxu0 0.0
      %2805 = vmatprep.subr.mxu0 0.0
      %2806 = vmatpush2.msra.mxu0 0.0
      %2807 = vmatprep.subr.mxu0 0.0
      %2808 = vmatpush2.msra.mxu0 0.0
      %2809 = vmatprep.subr.mxu0 0.0
      %2810 = vmatpush2.msra.mxu0 0.0
      %2811 = vmatprep.subr.mxu0 0.0
      %2812 = vmatpush2.msra.mxu0 0.0
      %2813 = vmatprep.subr.mxu0 0.0
      %2814 = vmatpush2.msra.mxu0 0.0
      %2815 = vmatprep.mubr.f32.mxu0 0.0
      %2816 = vmatmul.mubr.f32.gmra.mxu0 %v2746
      %v2817 = vpop.f32.mrf.mxu0
      %v2818 = vadd.f32 0.0, %v2817
      %v2819 = vpop.f32.mrf.mxu0
      %2820 = vmatprep.mubr.f32.mxu0 0.0
      %2821 = vmatmul.mubr.f32.gmra.mxu0 %v2749
      %v2822 = vpop.f32.mrf.mxu0
      %v2823 = vadd.f32 0.0, %v2822
      %v2824 = vpop.f32.mrf.mxu0
      %2825 = vdwg.mxu0
      %v2827 = vsel %vm1722, %v2818, 0
      %v2830 = vsel %vm1722, %v2823, 0
      %2832 = vmatprep.subr.mxu0 0.0
      %2833 = vmatpush1.msra.mxu0 0.0
      %2834 = vmatprep.subr.mxu0 0.0
      %2835 = vmatpush1.msra.mxu0 0.0
      %2836 = vmatprep.subr.mxu0 0.0
      %2837 = vmatpush1.msra.mxu0 0.0
      %2838 = vmatprep.subr.mxu0 0.0
      %2839 = vmatpush1.msra.mxu0 0.0
      %2840 = vmatprep.subr.mxu0 0.0
      %2841 = vmatpush1.msra.mxu0 0.0
      %2842 = vmatprep.subr.mxu0 0.0
      %2843 = vmatpush1.msra.mxu0 0.0
      %2844 = vmatprep.subr.mxu0 0.0
      %2845 = vmatpush1.msra.mxu0 0.0
      %2846 = vmatprep.subr.mxu0 0.0
      %2847 = vmatpush1.msra.mxu0 0.0
      %2848 = vmatprep.subr.mxu0 0.0
      %2849 = vmatpush1.msra.mxu0 0.0
      %2850 = vmatprep.subr.mxu0 0.0
      %2851 = vmatpush1.msra.mxu0 0.0
      %2852 = vmatprep.subr.mxu0 0.0
      %2853 = vmatpush1.msra.mxu0 0.0
      %2854 = vmatprep.subr.mxu0 0.0
      %2855 = vmatpush1.msra.mxu0 0.0
      %2856 = vmatprep.subr.mxu0 0.0
      %2857 = vmatpush1.msra.mxu0 0.0
      %2858 = vmatprep.subr.mxu0 0.0
      %2859 = vmatpush1.msra.mxu0 0.0
      %2860 = vmatprep.subr.mxu0 0.0
      %2861 = vmatpush1.msra.mxu0 0.0
      %2862 = vmatprep.subr.mxu0 0.0
      %2863 = vmatpush1.msra.mxu0 %v1721
      %2864 = vmatprep.subr.mxu0 0.0
      %2865 = vmatpush2.msra.mxu0 0.0
      %2866 = vmatprep.subr.mxu0 0.0
      %2867 = vmatpush2.msra.mxu0 0.0
      %2868 = vmatprep.subr.mxu0 0.0
      %2869 = vmatpush2.msra.mxu0 0.0
      %2870 = vmatprep.subr.mxu0 0.0
      %2871 = vmatpush2.msra.mxu0 0.0
      %2872 = vmatprep.subr.mxu0 0.0
      %2873 = vmatpush2.msra.mxu0 0.0
      %2874 = vmatprep.subr.mxu0 0.0
      %2875 = vmatpush2.msra.mxu0 0.0
      %2876 = vmatprep.subr.mxu0 0.0
      %2877 = vmatpush2.msra.mxu0 0.0
      %2878 = vmatprep.subr.mxu0 0.0
      %2879 = vmatpush2.msra.mxu0 0.0
      %2880 = vmatprep.subr.mxu0 0.0
      %2881 = vmatpush2.msra.mxu0 0.0
      %2882 = vmatprep.subr.mxu0 0.0
      %2883 = vmatpush2.msra.mxu0 0.0
      %2884 = vmatprep.subr.mxu0 0.0
      %2885 = vmatpush2.msra.mxu0 0.0
      %2886 = vmatprep.subr.mxu0 0.0
      %2887 = vmatpush2.msra.mxu0 0.0
      %2888 = vmatprep.subr.mxu0 0.0
      %2889 = vmatpush2.msra.mxu0 0.0
      %2890 = vmatprep.subr.mxu0 0.0
      %2891 = vmatpush2.msra.mxu0 0.0
      %2892 = vmatprep.subr.mxu0 0.0
      %2893 = vmatpush2.msra.mxu0 0.0
      %2894 = vmatprep.subr.mxu0 0.0
      %2895 = vmatpush2.msra.mxu0 0.0
      %2896 = vmatprep.mubr.f32.mxu0 0.0
      %2897 = vmatmul.mubr.f32.gmra.mxu0 %v2827
      %v2898 = vpop.f32.mrf.mxu0
      %v2899 = vadd.f32 0.0, %v2898
      %v2900 = vpop.f32.mrf.mxu0
      %2901 = vmatprep.mubr.f32.mxu0 0.0
      %2902 = vmatmul.mubr.f32.gmra.mxu0 %v2830
      %v2903 = vpop.f32.mrf.mxu0
      %v2904 = vadd.f32 0.0, %v2903
      %v2905 = vpop.f32.mrf.mxu0
      %2906 = vdwg.mxu0
      %v2907 = vadd.f32 %v2608, %v2899
      %v2908 = vadd.f32 %v2609, %v2904
      %v2909 = vadd.f32 %v1114, %v2907
      %v2910 = vadd.f32 %v1115, %v2908
      %v2911 = vld [vmem:[%s37] sm:$0x1]
      %v2913 = vlaneseq
      %v2914 = vshrl.u32 %v2913, 7
      %v2915 = vsub.s32 0, %v2914
      %v2916 = vrot.slane %v2911, %v2915
      %v2918 = vadd.f32 %v2909, %v2916
      %v2919 = vadd.f32 %v2910, %v2916
      %v2920 = vsel %vm1231, %v2918, 0.0
      %2921 = vadd.xlane.f32.xlu0 %v2920
      %v2922 = vpop.xlane.xlu0 %2921
      %v2923 = vsel %vm1231, %v2919, 0.0
      %2924 = vadd.xlane.f32.xlu0 %v2923
      %v2925 = vpop.xlane.xlu0 %2924
      %v2926 = vmul.f32 %v2922, %v1497
      %v2927 = vmul.f32 %v2925, %v1497
      %v2928 = vsub.f32 %v2918, %v2926
      %v2929 = vsub.f32 %v2919, %v2927
      %v2930 = vmul.f32 %v2928, %v2928
      %v2931 = vmul.f32 %v2929, %v2929
      %v2932 = vsel %vm1231, %v2930, 0.0
      %2933 = vadd.xlane.f32.xlu0 %v2932
      %v2934 = vpop.xlane.xlu0 %2933
      %v2935 = vsel %vm1231, %v2931, 0.0
      %2936 = vadd.xlane.f32.xlu0 %v2935
      %v2937 = vpop.xlane.xlu0 %2936
      %v2938 = vmul.f32 %v2934, %v1497
      %v2939 = vmul.f32 %v2937, %v1497
      %v2940 = vadd.f32 %v2938, 1e-06
      %v2941 = vadd.f32 %v2939, 1e-06
      %v2942 = vrsqrt.pop %v2940
      %v2943 = vrsqrt.pop %v2941
      %v2944 = vmul.f32 %v2928, %v2942
      %v2945 = vmul.f32 %v2929, %v2943
      %v2946 = vadd.f32 %v1487, 1.0
      %v2947 = vlaneseq
      %v2948 = vshrl.u32 %v2947, 7
      %v2949 = vsub.s32 0, %v2948
      %v2950 = vrot.slane %v2946, %v2949
      %2952 = vrot.lane.b32.xlu0 %v2950, 96
      %v2953 = vpop.permute.xlu0 %2952
      %v2955 = vmul.f32 %v2944, %v2953
      %v2956 = vmul.f32 %v2945, %v2953
      %v2957 = vlaneseq
      %v2958 = vshrl.u32 %v2957, 7
      %v2959 = vsub.s32 0, %v2958
      %v2960 = vrot.slane %v1487, %v2959
      %v2961 = vadd.f32 %v2955, %v2960
      %v2962 = vadd.f32 %v2956, %v2960
      %v2963 = vld [vmem:[%s39] sm:$0xff]
      %v2964 = vld [vmem:[%s39 + $0x8] sm:$0xff]
      %v2965 = vld [vmem:[%s39 + $0x10] sm:$0xff]
      %v2966 = vld [vmem:[%s39 + $0x18] sm:$0xff]
      %v2967 = vld [vmem:[%s41] sm:$0x1]
      %v2969 = vlaneseq
      %v2970 = vshrl.u32 %v2969, 7
      %v2971 = vsub.s32 0, %v2970
      %v2972 = vrot.slane %v2967, %v2971
      %v2975 = vsel %vm1231, %v2961, 0
      %v2978 = vsel %vm1231, %v2962, 0
      %2980 = vmatprep.subr.mxu0 0.0
      %2981 = vmatpush1.msra.mxu0 0.0
      %2982 = vmatprep.subr.mxu0 0.0
      %2983 = vmatpush1.msra.mxu0 0.0
      %2984 = vmatprep.subr.mxu0 0.0
      %2985 = vmatpush1.msra.mxu0 0.0
      %2986 = vmatprep.subr.mxu0 0.0
      %2987 = vmatpush1.msra.mxu0 0.0
      %2988 = vmatprep.subr.mxu0 0.0
      %2989 = vmatpush1.msra.mxu0 0.0
      %2990 = vmatprep.subr.mxu0 0.0
      %2991 = vmatpush1.msra.mxu0 0.0
      %2992 = vmatprep.subr.mxu0 0.0
      %2993 = vmatpush1.msra.mxu0 0.0
      %2994 = vmatprep.subr.mxu0 0.0
      %2995 = vmatpush1.msra.mxu0 0.0
      %2996 = vmatprep.subr.mxu0 0.0
      %2997 = vmatpush1.msra.mxu0 0.0
      %2998 = vmatprep.subr.mxu0 0.0
      %2999 = vmatpush1.msra.mxu0 0.0
      %3000 = vmatprep.subr.mxu0 0.0
      %3001 = vmatpush1.msra.mxu0 0.0
      %3002 = vmatprep.subr.mxu0 0.0
      %3003 = vmatpush1.msra.mxu0 0.0
      %3004 = vmatprep.subr.mxu0 0.0
      %3005 = vmatpush1.msra.mxu0 %v2966
      %3006 = vmatprep.subr.mxu0 0.0
      %3007 = vmatpush1.msra.mxu0 %v2965
      %3008 = vmatprep.subr.mxu0 0.0
      %3009 = vmatpush1.msra.mxu0 %v2964
      %3010 = vmatprep.subr.mxu0 0.0
      %3011 = vmatpush1.msra.mxu0 %v2963
      %3012 = vmatprep.subr.mxu0 0.0
      %3013 = vmatpush2.msra.mxu0 0.0
      %3014 = vmatprep.subr.mxu0 0.0
      %3015 = vmatpush2.msra.mxu0 0.0
      %3016 = vmatprep.subr.mxu0 0.0
      %3017 = vmatpush2.msra.mxu0 0.0
      %3018 = vmatprep.subr.mxu0 0.0
      %3019 = vmatpush2.msra.mxu0 0.0
      %3020 = vmatprep.subr.mxu0 0.0
      %3021 = vmatpush2.msra.mxu0 0.0
      %3022 = vmatprep.subr.mxu0 0.0
      %3023 = vmatpush2.msra.mxu0 0.0
      %3024 = vmatprep.subr.mxu0 0.0
      %3025 = vmatpush2.msra.mxu0 0.0
      %3026 = vmatprep.subr.mxu0 0.0
      %3027 = vmatpush2.msra.mxu0 0.0
      %3028 = vmatprep.subr.mxu0 0.0
      %3029 = vmatpush2.msra.mxu0 0.0
      %3030 = vmatprep.subr.mxu0 0.0
      %3031 = vmatpush2.msra.mxu0 0.0
      %3032 = vmatprep.subr.mxu0 0.0
      %3033 = vmatpush2.msra.mxu0 0.0
      %3034 = vmatprep.subr.mxu0 0.0
      %3035 = vmatpush2.msra.mxu0 0.0
      %3036 = vmatprep.subr.mxu0 0.0
      %3037 = vmatpush2.msra.mxu0 0.0
      %3038 = vmatprep.subr.mxu0 0.0
      %3039 = vmatpush2.msra.mxu0 0.0
      %3040 = vmatprep.subr.mxu0 0.0
      %3041 = vmatpush2.msra.mxu0 0.0
      %3042 = vmatprep.subr.mxu0 0.0
      %3043 = vmatpush2.msra.mxu0 0.0
      %3044 = vmatprep.mubr.f32.mxu0 0.0
      %3045 = vmatmul.mubr.f32.gmra.mxu0 %v2975
      %v3046 = vpop.f32.mrf.mxu0
      %v3047 = vadd.f32 %v2972, %v3046
      %v3048 = vpop.f32.mrf.mxu0
      %3049 = vmatprep.mubr.f32.mxu0 0.0
      %3050 = vmatmul.mubr.f32.gmra.mxu0 %v2978
      %v3051 = vpop.f32.mrf.mxu0
      %v3052 = vadd.f32 %v2972, %v3051
      %v3053 = vpop.f32.mrf.mxu0
      %3054 = vdwg.mxu0
      %v3055 = vld [vmem:[%s43] sm:$0xff]
      %v3056 = vld [vmem:[%s43 + $0x8] sm:$0xff]
      %v3057 = vld [vmem:[%s43 + $0x10] sm:$0xff]
      %v3058 = vld [vmem:[%s43 + $0x18] sm:$0xff]
      %3061 = vrot.lane.b32.xlu0 %v3047, 96
      %v3062 = vpop.permute.xlu0 %3061
      %3063 = vrot.lane.b32.xlu0 %v3052, 96
      %v3064 = vpop.permute.xlu0 %3063
      %v3065 = vsel %vm1722, %v3047, 0
      %v3067 = vsel %vm1722, %v3052, 0
      %v3069 = vsel %vm1722, %v3062, 0
      %v3071 = vsel %vm1722, %v3064, 0
      %3073 = vmatprep.subr.mxu0 0.0
      %3074 = vmatpush1.xpose.msra.mxu0 0.0
      %3075 = vmatprep.subr.mxu0 0.0
      %3076 = vmatpush1.xpose.msra.mxu0 0.0
      %3077 = vmatprep.subr.mxu0 0.0
      %3078 = vmatpush1.xpose.msra.mxu0 0.0
      %3079 = vmatprep.subr.mxu0 0.0
      %3080 = vmatpush1.xpose.msra.mxu0 0.0
      %3081 = vmatprep.subr.mxu0 0.0
      %3082 = vmatpush1.xpose.msra.mxu0 0.0
      %3083 = vmatprep.subr.mxu0 0.0
      %3084 = vmatpush1.xpose.msra.mxu0 0.0
      %3085 = vmatprep.subr.mxu0 0.0
      %3086 = vmatpush1.xpose.msra.mxu0 0.0
      %3087 = vmatprep.subr.mxu0 0.0
      %3088 = vmatpush1.xpose.msra.mxu0 0.0
      %3089 = vmatprep.subr.mxu0 0.0
      %3090 = vmatpush1.xpose.msra.mxu0 0.0
      %3091 = vmatprep.subr.mxu0 0.0
      %3092 = vmatpush1.xpose.msra.mxu0 0.0
      %3093 = vmatprep.subr.mxu0 0.0
      %3094 = vmatpush1.xpose.msra.mxu0 0.0
      %3095 = vmatprep.subr.mxu0 0.0
      %3096 = vmatpush1.xpose.msra.mxu0 0.0
      %3097 = vmatprep.subr.mxu0 0.0
      %3098 = vmatpush1.xpose.msra.mxu0 0.0
      %3099 = vmatprep.subr.mxu0 0.0
      %3100 = vmatpush1.xpose.msra.mxu0 0.0
      %3101 = vmatprep.subr.mxu0 0.0
      %3102 = vmatpush1.xpose.msra.mxu0 %v3071
      %3103 = vmatprep.subr.mxu0 0.0
      %3104 = vmatpush1.xpose.msra.mxu0 %v3069
      %3105 = vmatprep.subr.mxu0 0.0
      %3106 = vmatpush2.xpose.msra.mxu0 0.0
      %3107 = vmatprep.subr.mxu0 0.0
      %3108 = vmatpush2.xpose.msra.mxu0 0.0
      %3109 = vmatprep.subr.mxu0 0.0
      %3110 = vmatpush2.xpose.msra.mxu0 0.0
      %3111 = vmatprep.subr.mxu0 0.0
      %3112 = vmatpush2.xpose.msra.mxu0 0.0
      %3113 = vmatprep.subr.mxu0 0.0
      %3114 = vmatpush2.xpose.msra.mxu0 0.0
      %3115 = vmatprep.subr.mxu0 0.0
      %3116 = vmatpush2.xpose.msra.mxu0 0.0
      %3117 = vmatprep.subr.mxu0 0.0
      %3118 = vmatpush2.xpose.msra.mxu0 0.0
      %3119 = vmatprep.subr.mxu0 0.0
      %3120 = vmatpush2.xpose.msra.mxu0 0.0
      %3121 = vmatprep.subr.mxu0 0.0
      %3122 = vmatpush2.xpose.msra.mxu0 0.0
      %3123 = vmatprep.subr.mxu0 0.0
      %3124 = vmatpush2.xpose.msra.mxu0 0.0
      %3125 = vmatprep.subr.mxu0 0.0
      %3126 = vmatpush2.xpose.msra.mxu0 0.0
      %3127 = vmatprep.subr.mxu0 0.0
      %3128 = vmatpush2.xpose.msra.mxu0 0.0
      %3129 = vmatprep.subr.mxu0 0.0
      %3130 = vmatpush2.xpose.msra.mxu0 0.0
      %3131 = vmatprep.subr.mxu0 0.0
      %3132 = vmatpush2.xpose.msra.mxu0 0.0
      %3133 = vmatprep.subr.mxu0 0.0
      %3134 = vmatpush2.xpose.msra.mxu0 0.0
      %3135 = vmatprep.subr.mxu0 0.0
      %3136 = vmatpush2.xpose.msra.mxu0 0.0
      %3137 = vmatprep.mubr.f32.mxu0 0.0
      %3138 = vmatmul.mubr.f32.gmra.mxu0 %v3065
      %v3139 = vpop.f32.mrf.mxu0
      %v3140 = vadd.f32 0.0, %v3139
      %v3141 = vpop.f32.mrf.mxu0
      %3142 = vmatprep.mubr.f32.mxu0 0.0
      %3143 = vmatmul.mubr.f32.gmra.mxu0 %v3067
      %v3144 = vpop.f32.mrf.mxu0
      %v3145 = vadd.f32 0.0, %v3144
      %v3146 = vpop.f32.mrf.mxu0
      %3147 = vdwg.mxu0
      %v3148 = vmul.f32 %v3140, 0.35355338
      %v3149 = vmul.f32 %v3145, 0.35355338
      %vm3150 = vcmask 130048
      %v3151 = vsel %vm3150, %v3148, -inf
      %3152 = vmax.xlane.f32.xlu0 %v3151
      %v3153 = vpop.xlane.xlu0 %3152
      %v3154 = vsel %vm3150, %v3149, -inf
      %3155 = vmax.xlane.f32.xlu0 %v3154
      %v3156 = vpop.xlane.xlu0 %3155
      %v3157 = vsub.f32 %v3148, %v3153
      %v3158 = vsub.f32 %v3149, %v3156
      %v3159 = vmul.f32 %v3157, 1.442695
      %v3160 = vpow.pop %v3159
      %v3161 = vmul.f32 %v3158, 1.442695
      %v3162 = vpow.pop %v3161
      %v3163 = vsel %vm3150, %v3160, 0.0
      %3164 = vadd.xlane.f32.xlu0 %v3163
      %v3165 = vpop.xlane.xlu0 %3164
      %v3166 = vsel %vm3150, %v3162, 0.0
      %3167 = vadd.xlane.f32.xlu0 %v3166
      %v3168 = vpop.xlane.xlu0 %3167
      %v3169 = vrcp.pop %v3165
      %v3170 = vrcp.pop %v3168
      %v3171 = vmul.f32 %v3160, %v3169
      %v3172 = vmul.f32 %v3162, %v3170
      %3173 = vrot.lane.b32.xlu0 %v3047, 64
      %v3174 = vpop.permute.xlu0 %3173
      %3175 = vrot.lane.b32.xlu0 %v3052, 64
      %v3176 = vpop.permute.xlu0 %3175
      %v3180 = vsel %vm3150, %v3171, 0
      %v3183 = vsel %vm3150, %v3172, 0
      %3185 = vmatprep.subr.mxu0 0.0
      %3186 = vmatpush1.msra.mxu0 0.0
      %3187 = vmatprep.subr.mxu0 0.0
      %3188 = vmatpush1.msra.mxu0 0.0
      %3189 = vmatprep.subr.mxu0 0.0
      %3190 = vmatpush1.msra.mxu0 0.0
      %3191 = vmatprep.subr.mxu0 0.0
      %3192 = vmatpush1.msra.mxu0 0.0
      %3193 = vmatprep.subr.mxu0 0.0
      %3194 = vmatpush1.msra.mxu0 0.0
      %3195 = vmatprep.subr.mxu0 0.0
      %3196 = vmatpush1.msra.mxu0 0.0
      %3197 = vmatprep.subr.mxu0 0.0
      %3198 = vmatpush1.msra.mxu0 0.0
      %3199 = vmatprep.subr.mxu0 0.0
      %3200 = vmatpush1.msra.mxu0 0.0
      %3201 = vmatprep.subr.mxu0 0.0
      %3202 = vmatpush1.msra.mxu0 0.0
      %3203 = vmatprep.subr.mxu0 0.0
      %3204 = vmatpush1.msra.mxu0 0.0
      %3205 = vmatprep.subr.mxu0 0.0
      %3206 = vmatpush1.msra.mxu0 0.0
      %3207 = vmatprep.subr.mxu0 0.0
      %3208 = vmatpush1.msra.mxu0 0.0
      %3209 = vmatprep.subr.mxu0 0.0
      %3210 = vmatpush1.msra.mxu0 0.0
      %3211 = vmatprep.subr.mxu0 0.0
      %3212 = vmatpush1.msra.mxu0 0.0
      %3213 = vmatprep.subr.mxu0 0.0
      %3214 = vmatpush1.msra.mxu0 %v3176
      %3215 = vmatprep.subr.mxu0 0.0
      %3216 = vmatpush1.msra.mxu0 %v3174
      %3217 = vmatprep.subr.mxu0 0.0
      %3218 = vmatpush2.msra.mxu0 0.0
      %3219 = vmatprep.subr.mxu0 0.0
      %3220 = vmatpush2.msra.mxu0 0.0
      %3221 = vmatprep.subr.mxu0 0.0
      %3222 = vmatpush2.msra.mxu0 0.0
      %3223 = vmatprep.subr.mxu0 0.0
      %3224 = vmatpush2.msra.mxu0 0.0
      %3225 = vmatprep.subr.mxu0 0.0
      %3226 = vmatpush2.msra.mxu0 0.0
      %3227 = vmatprep.subr.mxu0 0.0
      %3228 = vmatpush2.msra.mxu0 0.0
      %3229 = vmatprep.subr.mxu0 0.0
      %3230 = vmatpush2.msra.mxu0 0.0
      %3231 = vmatprep.subr.mxu0 0.0
      %3232 = vmatpush2.msra.mxu0 0.0
      %3233 = vmatprep.subr.mxu0 0.0
      %3234 = vmatpush2.msra.mxu0 0.0
      %3235 = vmatprep.subr.mxu0 0.0
      %3236 = vmatpush2.msra.mxu0 0.0
      %3237 = vmatprep.subr.mxu0 0.0
      %3238 = vmatpush2.msra.mxu0 0.0
      %3239 = vmatprep.subr.mxu0 0.0
      %3240 = vmatpush2.msra.mxu0 0.0
      %3241 = vmatprep.subr.mxu0 0.0
      %3242 = vmatpush2.msra.mxu0 0.0
      %3243 = vmatprep.subr.mxu0 0.0
      %3244 = vmatpush2.msra.mxu0 0.0
      %3245 = vmatprep.subr.mxu0 0.0
      %3246 = vmatpush2.msra.mxu0 0.0
      %3247 = vmatprep.subr.mxu0 0.0
      %3248 = vmatpush2.msra.mxu0 0.0
      %3249 = vmatprep.mubr.f32.mxu0 0.0
      %3250 = vmatmul.mubr.f32.gmra.mxu0 %v3180
      %v3251 = vpop.f32.mrf.mxu0
      %v3252 = vadd.f32 0.0, %v3251
      %v3253 = vpop.f32.mrf.mxu0
      %3254 = vmatprep.mubr.f32.mxu0 0.0
      %3255 = vmatmul.mubr.f32.gmra.mxu0 %v3183
      %v3256 = vpop.f32.mrf.mxu0
      %v3257 = vadd.f32 0.0, %v3256
      %v3258 = vpop.f32.mrf.mxu0
      %3259 = vdwg.mxu0
      %3260 = vrot.lane.b32.xlu0 %v3047, 120
      %v3261 = vpop.permute.xlu0 %3260
      %3262 = vrot.lane.b32.xlu0 %v3052, 120
      %v3263 = vpop.permute.xlu0 %3262
      %3264 = vrot.lane.b32.xlu0 %v3047, 88
      %v3265 = vpop.permute.xlu0 %3264
      %3266 = vrot.lane.b32.xlu0 %v3052, 88
      %v3267 = vpop.permute.xlu0 %3266
      %v3268 = vsel %vm1722, %v3261, 0
      %v3270 = vsel %vm1722, %v3263, 0
      %v3272 = vsel %vm1722, %v3265, 0
      %v3274 = vsel %vm1722, %v3267, 0
      %3276 = vmatprep.subr.mxu0 0.0
      %3277 = vmatpush1.xpose.msra.mxu0 0.0
      %3278 = vmatprep.subr.mxu0 0.0
      %3279 = vmatpush1.xpose.msra.mxu0 0.0
      %3280 = vmatprep.subr.mxu0 0.0
      %3281 = vmatpush1.xpose.msra.mxu0 0.0
      %3282 = vmatprep.subr.mxu0 0.0
      %3283 = vmatpush1.xpose.msra.mxu0 0.0
      %3284 = vmatprep.subr.mxu0 0.0
      %3285 = vmatpush1.xpose.msra.mxu0 0.0
      %3286 = vmatprep.subr.mxu0 0.0
      %3287 = vmatpush1.xpose.msra.mxu0 0.0
      %3288 = vmatprep.subr.mxu0 0.0
      %3289 = vmatpush1.xpose.msra.mxu0 0.0
      %3290 = vmatprep.subr.mxu0 0.0
      %3291 = vmatpush1.xpose.msra.mxu0 0.0
      %3292 = vmatprep.subr.mxu0 0.0
      %3293 = vmatpush1.xpose.msra.mxu0 0.0
      %3294 = vmatprep.subr.mxu0 0.0
      %3295 = vmatpush1.xpose.msra.mxu0 0.0
      %3296 = vmatprep.subr.mxu0 0.0
      %3297 = vmatpush1.xpose.msra.mxu0 0.0
      %3298 = vmatprep.subr.mxu0 0.0
      %3299 = vmatpush1.xpose.msra.mxu0 0.0
      %3300 = vmatprep.subr.mxu0 0.0
      %3301 = vmatpush1.xpose.msra.mxu0 0.0
      %3302 = vmatprep.subr.mxu0 0.0
      %3303 = vmatpush1.xpose.msra.mxu0 0.0
      %3304 = vmatprep.subr.mxu0 0.0
      %3305 = vmatpush1.xpose.msra.mxu0 %v3274
      %3306 = vmatprep.subr.mxu0 0.0
      %3307 = vmatpush1.xpose.msra.mxu0 %v3272
      %3308 = vmatprep.subr.mxu0 0.0
      %3309 = vmatpush2.xpose.msra.mxu0 0.0
      %3310 = vmatprep.subr.mxu0 0.0
      %3311 = vmatpush2.xpose.msra.mxu0 0.0
      %3312 = vmatprep.subr.mxu0 0.0
      %3313 = vmatpush2.xpose.msra.mxu0 0.0
      %3314 = vmatprep.subr.mxu0 0.0
      %3315 = vmatpush2.xpose.msra.mxu0 0.0
      %3316 = vmatprep.subr.mxu0 0.0
      %3317 = vmatpush2.xpose.msra.mxu0 0.0
      %3318 = vmatprep.subr.mxu0 0.0
      %3319 = vmatpush2.xpose.msra.mxu0 0.0
      %3320 = vmatprep.subr.mxu0 0.0
      %3321 = vmatpush2.xpose.msra.mxu0 0.0
      %3322 = vmatprep.subr.mxu0 0.0
      %3323 = vmatpush2.xpose.msra.mxu0 0.0
      %3324 = vmatprep.subr.mxu0 0.0
      %3325 = vmatpush2.xpose.msra.mxu0 0.0
      %3326 = vmatprep.subr.mxu0 0.0
      %3327 = vmatpush2.xpose.msra.mxu0 0.0
      %3328 = vmatprep.subr.mxu0 0.0
      %3329 = vmatpush2.xpose.msra.mxu0 0.0
      %3330 = vmatprep.subr.mxu0 0.0
      %3331 = vmatpush2.xpose.msra.mxu0 0.0
      %3332 = vmatprep.subr.mxu0 0.0
      %3333 = vmatpush2.xpose.msra.mxu0 0.0
      %3334 = vmatprep.subr.mxu0 0.0
      %3335 = vmatpush2.xpose.msra.mxu0 0.0
      %3336 = vmatprep.subr.mxu0 0.0
      %3337 = vmatpush2.xpose.msra.mxu0 0.0
      %3338 = vmatprep.subr.mxu0 0.0
      %3339 = vmatpush2.xpose.msra.mxu0 0.0
      %3340 = vmatprep.mubr.f32.mxu0 0.0
      %3341 = vmatmul.mubr.f32.gmra.mxu0 %v3268
      %v3342 = vpop.f32.mrf.mxu0
      %v3343 = vadd.f32 0.0, %v3342
      %v3344 = vpop.f32.mrf.mxu0
      %3345 = vmatprep.mubr.f32.mxu0 0.0
      %3346 = vmatmul.mubr.f32.gmra.mxu0 %v3270
      %v3347 = vpop.f32.mrf.mxu0
      %v3348 = vadd.f32 0.0, %v3347
      %v3349 = vpop.f32.mrf.mxu0
      %3350 = vdwg.mxu0
      %v3351 = vmul.f32 %v3343, 0.35355338
      %v3352 = vmul.f32 %v3348, 0.35355338
      %v3353 = vsel %vm3150, %v3351, -inf
      %3354 = vmax.xlane.f32.xlu0 %v3353
      %v3355 = vpop.xlane.xlu0 %3354
      %v3356 = vsel %vm3150, %v3352, -inf
      %3357 = vmax.xlane.f32.xlu0 %v3356
      %v3358 = vpop.xlane.xlu0 %3357
      %v3359 = vsub.f32 %v3351, %v3355
      %v3360 = vsub.f32 %v3352, %v3358
      %v3361 = vmul.f32 %v3359, 1.442695
      %v3362 = vpow.pop %v3361
      %v3363 = vmul.f32 %v3360, 1.442695
      %v3364 = vpow.pop %v3363
      %v3365 = vsel %vm3150, %v3362, 0.0
      %3366 = vadd.xlane.f32.xlu0 %v3365
      %v3367 = vpop.xlane.xlu0 %3366
      %v3368 = vsel %vm3150, %v3364, 0.0
      %3369 = vadd.xlane.f32.xlu0 %v3368
      %v3370 = vpop.xlane.xlu0 %3369
      %v3371 = vrcp.pop %v3367
      %v3372 = vrcp.pop %v3370
      %v3373 = vmul.f32 %v3362, %v3371
      %v3374 = vmul.f32 %v3364, %v3372
      %3375 = vrot.lane.b32.xlu0 %v3047, 56
      %v3376 = vpop.permute.xlu0 %3375
      %3377 = vrot.lane.b32.xlu0 %v3052, 56
      %v3378 = vpop.permute.xlu0 %3377
      %v3382 = vsel %vm3150, %v3373, 0
      %v3385 = vsel %vm3150, %v3374, 0
      %3387 = vmatprep.subr.mxu0 0.0
      %3388 = vmatpush1.msra.mxu0 0.0
      %3389 = vmatprep.subr.mxu0 0.0
      %3390 = vmatpush1.msra.mxu0 0.0
      %3391 = vmatprep.subr.mxu0 0.0
      %3392 = vmatpush1.msra.mxu0 0.0
      %3393 = vmatprep.subr.mxu0 0.0
      %3394 = vmatpush1.msra.mxu0 0.0
      %3395 = vmatprep.subr.mxu0 0.0
      %3396 = vmatpush1.msra.mxu0 0.0
      %3397 = vmatprep.subr.mxu0 0.0
      %3398 = vmatpush1.msra.mxu0 0.0
      %3399 = vmatprep.subr.mxu0 0.0
      %3400 = vmatpush1.msra.mxu0 0.0
      %3401 = vmatprep.subr.mxu0 0.0
      %3402 = vmatpush1.msra.mxu0 0.0
      %3403 = vmatprep.subr.mxu0 0.0
      %3404 = vmatpush1.msra.mxu0 0.0
      %3405 = vmatprep.subr.mxu0 0.0
      %3406 = vmatpush1.msra.mxu0 0.0
      %3407 = vmatprep.subr.mxu0 0.0
      %3408 = vmatpush1.msra.mxu0 0.0
      %3409 = vmatprep.subr.mxu0 0.0
      %3410 = vmatpush1.msra.mxu0 0.0
      %3411 = vmatprep.subr.mxu0 0.0
      %3412 = vmatpush1.msra.mxu0 0.0
      %3413 = vmatprep.subr.mxu0 0.0
      %3414 = vmatpush1.msra.mxu0 0.0
      %3415 = vmatprep.subr.mxu0 0.0
      %3416 = vmatpush1.msra.mxu0 %v3378
      %3417 = vmatprep.subr.mxu0 0.0
      %3418 = vmatpush1.msra.mxu0 %v3376
      %3419 = vmatprep.subr.mxu0 0.0
      %3420 = vmatpush2.msra.mxu0 0.0
      %3421 = vmatprep.subr.mxu0 0.0
      %3422 = vmatpush2.msra.mxu0 0.0
      %3423 = vmatprep.subr.mxu0 0.0
      %3424 = vmatpush2.msra.mxu0 0.0
      %3425 = vmatprep.subr.mxu0 0.0
      %3426 = vmatpush2.msra.mxu0 0.0
      %3427 = vmatprep.subr.mxu0 0.0
      %3428 = vmatpush2.msra.mxu0 0.0
      %3429 = vmatprep.subr.mxu0 0.0
      %3430 = vmatpush2.msra.mxu0 0.0
      %3431 = vmatprep.subr.mxu0 0.0
      %3432 = vmatpush2.msra.mxu0 0.0
      %3433 = vmatprep.subr.mxu0 0.0
      %3434 = vmatpush2.msra.mxu0 0.0
      %3435 = vmatprep.subr.mxu0 0.0
      %3436 = vmatpush2.msra.mxu0 0.0
      %3437 = vmatprep.subr.mxu0 0.0
      %3438 = vmatpush2.msra.mxu0 0.0
      %3439 = vmatprep.subr.mxu0 0.0
      %3440 = vmatpush2.msra.mxu0 0.0
      %3441 = vmatprep.subr.mxu0 0.0
      %3442 = vmatpush2.msra.mxu0 0.0
      %3443 = vmatprep.subr.mxu0 0.0
      %3444 = vmatpush2.msra.mxu0 0.0
      %3445 = vmatprep.subr.mxu0 0.0
      %3446 = vmatpush2.msra.mxu0 0.0
      %3447 = vmatprep.subr.mxu0 0.0
      %3448 = vmatpush2.msra.mxu0 0.0
      %3449 = vmatprep.subr.mxu0 0.0
      %3450 = vmatpush2.msra.mxu0 0.0
      %3451 = vmatprep.mubr.f32.mxu0 0.0
      %3452 = vmatmul.mubr.f32.gmra.mxu0 %v3382
      %v3453 = vpop.f32.mrf.mxu0
      %v3454 = vadd.f32 0.0, %v3453
      %v3455 = vpop.f32.mrf.mxu0
      %3456 = vmatprep.mubr.f32.mxu0 0.0
      %3457 = vmatmul.mubr.f32.gmra.mxu0 %v3385
      %v3458 = vpop.f32.mrf.mxu0
      %v3459 = vadd.f32 0.0, %v3458
      %v3460 = vpop.f32.mrf.mxu0
      %3461 = vdwg.mxu0
      %v3463 = vsel %vm1722, %v3454, 0
      %v3466 = vsel %vm1722, %v3459, 0
      %3468 = vmatprep.subr.mxu0 0.0
      %3469 = vmatpush1.msra.mxu0 0.0
      %3470 = vmatprep.subr.mxu0 0.0
      %3471 = vmatpush1.msra.mxu0 0.0
      %3472 = vmatprep.subr.mxu0 0.0
      %3473 = vmatpush1.msra.mxu0 0.0
      %3474 = vmatprep.subr.mxu0 0.0
      %3475 = vmatpush1.msra.mxu0 0.0
      %3476 = vmatprep.subr.mxu0 0.0
      %3477 = vmatpush1.msra.mxu0 0.0
      %3478 = vmatprep.subr.mxu0 0.0
      %3479 = vmatpush1.msra.mxu0 0.0
      %3480 = vmatprep.subr.mxu0 0.0
      %3481 = vmatpush1.msra.mxu0 0.0
      %3482 = vmatprep.subr.mxu0 0.0
      %3483 = vmatpush1.msra.mxu0 0.0
      %3484 = vmatprep.subr.mxu0 0.0
      %3485 = vmatpush1.msra.mxu0 0.0
      %3486 = vmatprep.subr.mxu0 0.0
      %3487 = vmatpush1.msra.mxu0 0.0
      %3488 = vmatprep.subr.mxu0 0.0
      %3489 = vmatpush1.msra.mxu0 0.0
      %3490 = vmatprep.subr.mxu0 0.0
      %3491 = vmatpush1.msra.mxu0 0.0
      %3492 = vmatprep.subr.mxu0 0.0
      %3493 = vmatpush1.msra.mxu0 0.0
      %3494 = vmatprep.subr.mxu0 0.0
      %3495 = vmatpush1.msra.mxu0 0.0
      %3496 = vmatprep.subr.mxu0 0.0
      %3497 = vmatpush1.msra.mxu0 0.0
      %3498 = vmatprep.subr.mxu0 0.0
      %3499 = vmatpush1.msra.mxu0 %v3056
      %3500 = vmatprep.subr.mxu0 0.0
      %3501 = vmatpush2.msra.mxu0 0.0
      %3502 = vmatprep.subr.mxu0 0.0
      %3503 = vmatpush2.msra.mxu0 0.0
      %3504 = vmatprep.subr.mxu0 0.0
      %3505 = vmatpush2.msra.mxu0 0.0
      %3506 = vmatprep.subr.mxu0 0.0
      %3507 = vmatpush2.msra.mxu0 0.0
      %3508 = vmatprep.subr.mxu0 0.0
      %3509 = vmatpush2.msra.mxu0 0.0
      %3510 = vmatprep.subr.mxu0 0.0
      %3511 = vmatpush2.msra.mxu0 0.0
      %3512 = vmatprep.subr.mxu0 0.0
      %3513 = vmatpush2.msra.mxu0 0.0
      %3514 = vmatprep.subr.mxu0 0.0
      %3515 = vmatpush2.msra.mxu0 0.0
      %3516 = vmatprep.subr.mxu0 0.0
      %3517 = vmatpush2.msra.mxu0 0.0
      %3518 = vmatprep.subr.mxu0 0.0
      %3519 = vmatpush2.msra.mxu0 0.0
      %3520 = vmatprep.subr.mxu0 0.0
      %3521 = vmatpush2.msra.mxu0 0.0
      %3522 = vmatprep.subr.mxu0 0.0
      %3523 = vmatpush2.msra.mxu0 0.0
      %3524 = vmatprep.subr.mxu0 0.0
      %3525 = vmatpush2.msra.mxu0 0.0
      %3526 = vmatprep.subr.mxu0 0.0
      %3527 = vmatpush2.msra.mxu0 0.0
      %3528 = vmatprep.subr.mxu0 0.0
      %3529 = vmatpush2.msra.mxu0 0.0
      %3530 = vmatprep.subr.mxu0 0.0
      %3531 = vmatpush2.msra.mxu0 0.0
      %3532 = vmatprep.mubr.f32.mxu0 0.0
      %3533 = vmatmul.mubr.f32.gmra.mxu0 %v3463
      %v3534 = vpop.f32.mrf.mxu0
      %v3535 = vadd.f32 0.0, %v3534
      %v3536 = vpop.f32.mrf.mxu0
      %3537 = vmatprep.mubr.f32.mxu0 0.0
      %3538 = vmatmul.mubr.f32.gmra.mxu0 %v3466
      %v3539 = vpop.f32.mrf.mxu0
      %v3540 = vadd.f32 0.0, %v3539
      %v3541 = vpop.f32.mrf.mxu0
      %3542 = vdwg.mxu0
      %v3544 = vsel %vm1722, %v3252, 0
      %v3547 = vsel %vm1722, %v3257, 0
      %3549 = vmatprep.subr.mxu0 0.0
      %3550 = vmatpush1.msra.mxu0 0.0
      %3551 = vmatprep.subr.mxu0 0.0
      %3552 = vmatpush1.msra.mxu0 0.0
      %3553 = vmatprep.subr.mxu0 0.0
      %3554 = vmatpush1.msra.mxu0 0.0
      %3555 = vmatprep.subr.mxu0 0.0
      %3556 = vmatpush1.msra.mxu0 0.0
      %3557 = vmatprep.subr.mxu0 0.0
      %3558 = vmatpush1.msra.mxu0 0.0
      %3559 = vmatprep.subr.mxu0 0.0
      %3560 = vmatpush1.msra.mxu0 0.0
      %3561 = vmatprep.subr.mxu0 0.0
      %3562 = vmatpush1.msra.mxu0 0.0
      %3563 = vmatprep.subr.mxu0 0.0
      %3564 = vmatpush1.msra.mxu0 0.0
      %3565 = vmatprep.subr.mxu0 0.0
      %3566 = vmatpush1.msra.mxu0 0.0
      %3567 = vmatprep.subr.mxu0 0.0
      %3568 = vmatpush1.msra.mxu0 0.0
      %3569 = vmatprep.subr.mxu0 0.0
      %3570 = vmatpush1.msra.mxu0 0.0
      %3571 = vmatprep.subr.mxu0 0.0
      %3572 = vmatpush1.msra.mxu0 0.0
      %3573 = vmatprep.subr.mxu0 0.0
      %3574 = vmatpush1.msra.mxu0 0.0
      %3575 = vmatprep.subr.mxu0 0.0
      %3576 = vmatpush1.msra.mxu0 0.0
      %3577 = vmatprep.subr.mxu0 0.0
      %3578 = vmatpush1.msra.mxu0 0.0
      %3579 = vmatprep.subr.mxu0 0.0
      %3580 = vmatpush1.msra.mxu0 %v3055
      %3581 = vmatprep.subr.mxu0 0.0
      %3582 = vmatpush2.msra.mxu0 0.0
      %3583 = vmatprep.subr.mxu0 0.0
      %3584 = vmatpush2.msra.mxu0 0.0
      %3585 = vmatprep.subr.mxu0 0.0
      %3586 = vmatpush2.msra.mxu0 0.0
      %3587 = vmatprep.subr.mxu0 0.0
      %3588 = vmatpush2.msra.mxu0 0.0
      %3589 = vmatprep.subr.mxu0 0.0
      %3590 = vmatpush2.msra.mxu0 0.0
      %3591 = vmatprep.subr.mxu0 0.0
      %3592 = vmatpush2.msra.mxu0 0.0
      %3593 = vmatprep.subr.mxu0 0.0
      %3594 = vmatpush2.msra.mxu0 0.0
      %3595 = vmatprep.subr.mxu0 0.0
      %3596 = vmatpush2.msra.mxu0 0.0
      %3597 = vmatprep.subr.mxu0 0.0
      %3598 = vmatpush2.msra.mxu0 0.0
      %3599 = vmatprep.subr.mxu0 0.0
      %3600 = vmatpush2.msra.mxu0 0.0
      %3601 = vmatprep.subr.mxu0 0.0
      %3602 = vmatpush2.msra.mxu0 0.0
      %3603 = vmatprep.subr.mxu0 0.0
      %3604 = vmatpush2.msra.mxu0 0.0
      %3605 = vmatprep.subr.mxu0 0.0
      %3606 = vmatpush2.msra.mxu0 0.0
      %3607 = vmatprep.subr.mxu0 0.0
      %3608 = vmatpush2.msra.mxu0 0.0
      %3609 = vmatprep.subr.mxu0 0.0
      %3610 = vmatpush2.msra.mxu0 0.0
      %3611 = vmatprep.subr.mxu0 0.0
      %3612 = vmatpush2.msra.mxu0 0.0
      %3613 = vmatprep.mubr.f32.mxu0 0.0
      %3614 = vmatmul.mubr.f32.gmra.mxu0 %v3544
      %v3615 = vpop.f32.mrf.mxu0
      %v3616 = vadd.f32 %v3535, %v3615
      %v3617 = vpop.f32.mrf.mxu0
      %3618 = vmatprep.mubr.f32.mxu0 0.0
      %3619 = vmatmul.mubr.f32.gmra.mxu0 %v3547
      %v3620 = vpop.f32.mrf.mxu0
      %v3621 = vadd.f32 %v3540, %v3620
      %v3622 = vpop.f32.mrf.mxu0
      %3623 = vdwg.mxu0
      %3624 = vrot.lane.b32.xlu0 %v3047, 112
      %v3625 = vpop.permute.xlu0 %3624
      %3626 = vrot.lane.b32.xlu0 %v3052, 112
      %v3627 = vpop.permute.xlu0 %3626
      %3628 = vrot.lane.b32.xlu0 %v3047, 80
      %v3629 = vpop.permute.xlu0 %3628
      %3630 = vrot.lane.b32.xlu0 %v3052, 80
      %v3631 = vpop.permute.xlu0 %3630
      %v3632 = vsel %vm1722, %v3625, 0
      %v3634 = vsel %vm1722, %v3627, 0
      %v3636 = vsel %vm1722, %v3629, 0
      %v3638 = vsel %vm1722, %v3631, 0
      %3640 = vmatprep.subr.mxu0 0.0
      %3641 = vmatpush1.xpose.msra.mxu0 0.0
      %3642 = vmatprep.subr.mxu0 0.0
      %3643 = vmatpush1.xpose.msra.mxu0 0.0
      %3644 = vmatprep.subr.mxu0 0.0
      %3645 = vmatpush1.xpose.msra.mxu0 0.0
      %3646 = vmatprep.subr.mxu0 0.0
      %3647 = vmatpush1.xpose.msra.mxu0 0.0
      %3648 = vmatprep.subr.mxu0 0.0
      %3649 = vmatpush1.xpose.msra.mxu0 0.0
      %3650 = vmatprep.subr.mxu0 0.0
      %3651 = vmatpush1.xpose.msra.mxu0 0.0
      %3652 = vmatprep.subr.mxu0 0.0
      %3653 = vmatpush1.xpose.msra.mxu0 0.0
      %3654 = vmatprep.subr.mxu0 0.0
      %3655 = vmatpush1.xpose.msra.mxu0 0.0
      %3656 = vmatprep.subr.mxu0 0.0
      %3657 = vmatpush1.xpose.msra.mxu0 0.0
      %3658 = vmatprep.subr.mxu0 0.0
      %3659 = vmatpush1.xpose.msra.mxu0 0.0
      %3660 = vmatprep.subr.mxu0 0.0
      %3661 = vmatpush1.xpose.msra.mxu0 0.0
      %3662 = vmatprep.subr.mxu0 0.0
      %3663 = vmatpush1.xpose.msra.mxu0 0.0
      %3664 = vmatprep.subr.mxu0 0.0
      %3665 = vmatpush1.xpose.msra.mxu0 0.0
      %3666 = vmatprep.subr.mxu0 0.0
      %3667 = vmatpush1.xpose.msra.mxu0 0.0
      %3668 = vmatprep.subr.mxu0 0.0
      %3669 = vmatpush1.xpose.msra.mxu0 %v3638
      %3670 = vmatprep.subr.mxu0 0.0
      %3671 = vmatpush1.xpose.msra.mxu0 %v3636
      %3672 = vmatprep.subr.mxu0 0.0
      %3673 = vmatpush2.xpose.msra.mxu0 0.0
      %3674 = vmatprep.subr.mxu0 0.0
      %3675 = vmatpush2.xpose.msra.mxu0 0.0
      %3676 = vmatprep.subr.mxu0 0.0
      %3677 = vmatpush2.xpose.msra.mxu0 0.0
      %3678 = vmatprep.subr.mxu0 0.0
      %3679 = vmatpush2.xpose.msra.mxu0 0.0
      %3680 = vmatprep.subr.mxu0 0.0
      %3681 = vmatpush2.xpose.msra.mxu0 0.0
      %3682 = vmatprep.subr.mxu0 0.0
      %3683 = vmatpush2.xpose.msra.mxu0 0.0
      %3684 = vmatprep.subr.mxu0 0.0
      %3685 = vmatpush2.xpose.msra.mxu0 0.0
      %3686 = vmatprep.subr.mxu0 0.0
      %3687 = vmatpush2.xpose.msra.mxu0 0.0
      %3688 = vmatprep.subr.mxu0 0.0
      %3689 = vmatpush2.xpose.msra.mxu0 0.0
      %3690 = vmatprep.subr.mxu0 0.0
      %3691 = vmatpush2.xpose.msra.mxu0 0.0
      %3692 = vmatprep.subr.mxu0 0.0
      %3693 = vmatpush2.xpose.msra.mxu0 0.0
      %3694 = vmatprep.subr.mxu0 0.0
      %3695 = vmatpush2.xpose.msra.mxu0 0.0
      %3696 = vmatprep.subr.mxu0 0.0
      %3697 = vmatpush2.xpose.msra.mxu0 0.0
      %3698 = vmatprep.subr.mxu0 0.0
      %3699 = vmatpush2.xpose.msra.mxu0 0.0
      %3700 = vmatprep.subr.mxu0 0.0
      %3701 = vmatpush2.xpose.msra.mxu0 0.0
      %3702 = vmatprep.subr.mxu0 0.0
      %3703 = vmatpush2.xpose.msra.mxu0 0.0
      %3704 = vmatprep.mubr.f32.mxu0 0.0
      %3705 = vmatmul.mubr.f32.gmra.mxu0 %v3632
      %v3706 = vpop.f32.mrf.mxu0
      %v3707 = vadd.f32 0.0, %v3706
      %v3708 = vpop.f32.mrf.mxu0
      %3709 = vmatprep.mubr.f32.mxu0 0.0
      %3710 = vmatmul.mubr.f32.gmra.mxu0 %v3634
      %v3711 = vpop.f32.mrf.mxu0
      %v3712 = vadd.f32 0.0, %v3711
      %v3713 = vpop.f32.mrf.mxu0
      %3714 = vdwg.mxu0
      %v3715 = vmul.f32 %v3707, 0.35355338
      %v3716 = vmul.f32 %v3712, 0.35355338
      %v3717 = vsel %vm3150, %v3715, -inf
      %3718 = vmax.xlane.f32.xlu0 %v3717
      %v3719 = vpop.xlane.xlu0 %3718
      %v3720 = vsel %vm3150, %v3716, -inf
      %3721 = vmax.xlane.f32.xlu0 %v3720
      %v3722 = vpop.xlane.xlu0 %3721
      %v3723 = vsub.f32 %v3715, %v3719
      %v3724 = vsub.f32 %v3716, %v3722
      %v3725 = vmul.f32 %v3723, 1.442695
      %v3726 = vpow.pop %v3725
      %v3727 = vmul.f32 %v3724, 1.442695
      %v3728 = vpow.pop %v3727
      %v3729 = vsel %vm3150, %v3726, 0.0
      %3730 = vadd.xlane.f32.xlu0 %v3729
      %v3731 = vpop.xlane.xlu0 %3730
      %v3732 = vsel %vm3150, %v3728, 0.0
      %3733 = vadd.xlane.f32.xlu0 %v3732
      %v3734 = vpop.xlane.xlu0 %3733
      %v3735 = vrcp.pop %v3731
      %v3736 = vrcp.pop %v3734
      %v3737 = vmul.f32 %v3726, %v3735
      %v3738 = vmul.f32 %v3728, %v3736
      %3739 = vrot.lane.b32.xlu0 %v3047, 48
      %v3740 = vpop.permute.xlu0 %3739
      %3741 = vrot.lane.b32.xlu0 %v3052, 48
      %v3742 = vpop.permute.xlu0 %3741
      %v3746 = vsel %vm3150, %v3737, 0
      %v3749 = vsel %vm3150, %v3738, 0
      %3751 = vmatprep.subr.mxu0 0.0
      %3752 = vmatpush1.msra.mxu0 0.0
      %3753 = vmatprep.subr.mxu0 0.0
      %3754 = vmatpush1.msra.mxu0 0.0
      %3755 = vmatprep.subr.mxu0 0.0
      %3756 = vmatpush1.msra.mxu0 0.0
      %3757 = vmatprep.subr.mxu0 0.0
      %3758 = vmatpush1.msra.mxu0 0.0
      %3759 = vmatprep.subr.mxu0 0.0
      %3760 = vmatpush1.msra.mxu0 0.0
      %3761 = vmatprep.subr.mxu0 0.0
      %3762 = vmatpush1.msra.mxu0 0.0
      %3763 = vmatprep.subr.mxu0 0.0
      %3764 = vmatpush1.msra.mxu0 0.0
      %3765 = vmatprep.subr.mxu0 0.0
      %3766 = vmatpush1.msra.mxu0 0.0
      %3767 = vmatprep.subr.mxu0 0.0
      %3768 = vmatpush1.msra.mxu0 0.0
      %3769 = vmatprep.subr.mxu0 0.0
      %3770 = vmatpush1.msra.mxu0 0.0
      %3771 = vmatprep.subr.mxu0 0.0
      %3772 = vmatpush1.msra.mxu0 0.0
      %3773 = vmatprep.subr.mxu0 0.0
      %3774 = vmatpush1.msra.mxu0 0.0
      %3775 = vmatprep.subr.mxu0 0.0
      %3776 = vmatpush1.msra.mxu0 0.0
      %3777 = vmatprep.subr.mxu0 0.0
      %3778 = vmatpush1.msra.mxu0 0.0
      %3779 = vmatprep.subr.mxu0 0.0
      %3780 = vmatpush1.msra.mxu0 %v3742
      %3781 = vmatprep.subr.mxu0 0.0
      %3782 = vmatpush1.msra.mxu0 %v3740
      %3783 = vmatprep.subr.mxu0 0.0
      %3784 = vmatpush2.msra.mxu0 0.0
      %3785 = vmatprep.subr.mxu0 0.0
      %3786 = vmatpush2.msra.mxu0 0.0
      %3787 = vmatprep.subr.mxu0 0.0
      %3788 = vmatpush2.msra.mxu0 0.0
      %3789 = vmatprep.subr.mxu0 0.0
      %3790 = vmatpush2.msra.mxu0 0.0
      %3791 = vmatprep.subr.mxu0 0.0
      %3792 = vmatpush2.msra.mxu0 0.0
      %3793 = vmatprep.subr.mxu0 0.0
      %3794 = vmatpush2.msra.mxu0 0.0
      %3795 = vmatprep.subr.mxu0 0.0
      %3796 = vmatpush2.msra.mxu0 0.0
      %3797 = vmatprep.subr.mxu0 0.0
      %3798 = vmatpush2.msra.mxu0 0.0
      %3799 = vmatprep.subr.mxu0 0.0
      %3800 = vmatpush2.msra.mxu0 0.0
      %3801 = vmatprep.subr.mxu0 0.0
      %3802 = vmatpush2.msra.mxu0 0.0
      %3803 = vmatprep.subr.mxu0 0.0
      %3804 = vmatpush2.msra.mxu0 0.0
      %3805 = vmatprep.subr.mxu0 0.0
      %3806 = vmatpush2.msra.mxu0 0.0
      %3807 = vmatprep.subr.mxu0 0.0
      %3808 = vmatpush2.msra.mxu0 0.0
      %3809 = vmatprep.subr.mxu0 0.0
      %3810 = vmatpush2.msra.mxu0 0.0
      %3811 = vmatprep.subr.mxu0 0.0
      %3812 = vmatpush2.msra.mxu0 0.0
      %3813 = vmatprep.subr.mxu0 0.0
      %3814 = vmatpush2.msra.mxu0 0.0
      %3815 = vmatprep.mubr.f32.mxu0 0.0
      %3816 = vmatmul.mubr.f32.gmra.mxu0 %v3746
      %v3817 = vpop.f32.mrf.mxu0
      %v3818 = vadd.f32 0.0, %v3817
      %v3819 = vpop.f32.mrf.mxu0
      %3820 = vmatprep.mubr.f32.mxu0 0.0
      %3821 = vmatmul.mubr.f32.gmra.mxu0 %v3749
      %v3822 = vpop.f32.mrf.mxu0
      %v3823 = vadd.f32 0.0, %v3822
      %v3824 = vpop.f32.mrf.mxu0
      %3825 = vdwg.mxu0
      %v3827 = vsel %vm1722, %v3818, 0
      %v3830 = vsel %vm1722, %v3823, 0
      %3832 = vmatprep.subr.mxu0 0.0
      %3833 = vmatpush1.msra.mxu0 0.0
      %3834 = vmatprep.subr.mxu0 0.0
      %3835 = vmatpush1.msra.mxu0 0.0
      %3836 = vmatprep.subr.mxu0 0.0
      %3837 = vmatpush1.msra.mxu0 0.0
      %3838 = vmatprep.subr.mxu0 0.0
      %3839 = vmatpush1.msra.mxu0 0.0
      %3840 = vmatprep.subr.mxu0 0.0
      %3841 = vmatpush1.msra.mxu0 0.0
      %3842 = vmatprep.subr.mxu0 0.0
      %3843 = vmatpush1.msra.mxu0 0.0
      %3844 = vmatprep.subr.mxu0 0.0
      %3845 = vmatpush1.msra.mxu0 0.0
      %3846 = vmatprep.subr.mxu0 0.0
      %3847 = vmatpush1.msra.mxu0 0.0
      %3848 = vmatprep.subr.mxu0 0.0
      %3849 = vmatpush1.msra.mxu0 0.0
      %3850 = vmatprep.subr.mxu0 0.0
      %3851 = vmatpush1.msra.mxu0 0.0
      %3852 = vmatprep.subr.mxu0 0.0
      %3853 = vmatpush1.msra.mxu0 0.0
      %3854 = vmatprep.subr.mxu0 0.0
      %3855 = vmatpush1.msra.mxu0 0.0
      %3856 = vmatprep.subr.mxu0 0.0
      %3857 = vmatpush1.msra.mxu0 0.0
      %3858 = vmatprep.subr.mxu0 0.0
      %3859 = vmatpush1.msra.mxu0 0.0
      %3860 = vmatprep.subr.mxu0 0.0
      %3861 = vmatpush1.msra.mxu0 0.0
      %3862 = vmatprep.subr.mxu0 0.0
      %3863 = vmatpush1.msra.mxu0 %v3057
      %3864 = vmatprep.subr.mxu0 0.0
      %3865 = vmatpush2.msra.mxu0 0.0
      %3866 = vmatprep.subr.mxu0 0.0
      %3867 = vmatpush2.msra.mxu0 0.0
      %3868 = vmatprep.subr.mxu0 0.0
      %3869 = vmatpush2.msra.mxu0 0.0
      %3870 = vmatprep.subr.mxu0 0.0
      %3871 = vmatpush2.msra.mxu0 0.0
      %3872 = vmatprep.subr.mxu0 0.0
      %3873 = vmatpush2.msra.mxu0 0.0
      %3874 = vmatprep.subr.mxu0 0.0
      %3875 = vmatpush2.msra.mxu0 0.0
      %3876 = vmatprep.subr.mxu0 0.0
      %3877 = vmatpush2.msra.mxu0 0.0
      %3878 = vmatprep.subr.mxu0 0.0
      %3879 = vmatpush2.msra.mxu0 0.0
      %3880 = vmatprep.subr.mxu0 0.0
      %3881 = vmatpush2.msra.mxu0 0.0
      %3882 = vmatprep.subr.mxu0 0.0
      %3883 = vmatpush2.msra.mxu0 0.0
      %3884 = vmatprep.subr.mxu0 0.0
      %3885 = vmatpush2.msra.mxu0 0.0
      %3886 = vmatprep.subr.mxu0 0.0
      %3887 = vmatpush2.msra.mxu0 0.0
      %3888 = vmatprep.subr.mxu0 0.0
      %3889 = vmatpush2.msra.mxu0 0.0
      %3890 = vmatprep.subr.mxu0 0.0
      %3891 = vmatpush2.msra.mxu0 0.0
      %3892 = vmatprep.subr.mxu0 0.0
      %3893 = vmatpush2.msra.mxu0 0.0
      %3894 = vmatprep.subr.mxu0 0.0
      %3895 = vmatpush2.msra.mxu0 0.0
      %3896 = vmatprep.mubr.f32.mxu0 0.0
      %3897 = vmatmul.mubr.f32.gmra.mxu0 %v3827
      %v3898 = vpop.f32.mrf.mxu0
      %v3899 = vadd.f32 0.0, %v3898
      %v3900 = vpop.f32.mrf.mxu0
      %3901 = vmatprep.mubr.f32.mxu0 0.0
      %3902 = vmatmul.mubr.f32.gmra.mxu0 %v3830
      %v3903 = vpop.f32.mrf.mxu0
      %v3904 = vadd.f32 0.0, %v3903
      %v3905 = vpop.f32.mrf.mxu0
      %3906 = vdwg.mxu0
      %v3907 = vadd.f32 %v3616, %v3899
      %v3908 = vadd.f32 %v3621, %v3904
      %3909 = vrot.lane.b32.xlu0 %v3047, 104
      %v3910 = vpop.permute.xlu0 %3909
      %3911 = vrot.lane.b32.xlu0 %v3052, 104
      %v3912 = vpop.permute.xlu0 %3911
      %3913 = vrot.lane.b32.xlu0 %v3047, 72
      %v3914 = vpop.permute.xlu0 %3913
      %3915 = vrot.lane.b32.xlu0 %v3052, 72
      %v3916 = vpop.permute.xlu0 %3915
      %v3917 = vsel %vm1722, %v3910, 0
      %v3919 = vsel %vm1722, %v3912, 0
      %v3921 = vsel %vm1722, %v3914, 0
      %v3923 = vsel %vm1722, %v3916, 0
      %3925 = vmatprep.subr.mxu0 0.0
      %3926 = vmatpush1.xpose.msra.mxu0 0.0
      %3927 = vmatprep.subr.mxu0 0.0
      %3928 = vmatpush1.xpose.msra.mxu0 0.0
      %3929 = vmatprep.subr.mxu0 0.0
      %3930 = vmatpush1.xpose.msra.mxu0 0.0
      %3931 = vmatprep.subr.mxu0 0.0
      %3932 = vmatpush1.xpose.msra.mxu0 0.0
      %3933 = vmatprep.subr.mxu0 0.0
      %3934 = vmatpush1.xpose.msra.mxu0 0.0
      %3935 = vmatprep.subr.mxu0 0.0
      %3936 = vmatpush1.xpose.msra.mxu0 0.0
      %3937 = vmatprep.subr.mxu0 0.0
      %3938 = vmatpush1.xpose.msra.mxu0 0.0
      %3939 = vmatprep.subr.mxu0 0.0
      %3940 = vmatpush1.xpose.msra.mxu0 0.0
      %3941 = vmatprep.subr.mxu0 0.0
      %3942 = vmatpush1.xpose.msra.mxu0 0.0
      %3943 = vmatprep.subr.mxu0 0.0
      %3944 = vmatpush1.xpose.msra.mxu0 0.0
      %3945 = vmatprep.subr.mxu0 0.0
      %3946 = vmatpush1.xpose.msra.mxu0 0.0
      %3947 = vmatprep.subr.mxu0 0.0
      %3948 = vmatpush1.xpose.msra.mxu0 0.0
      %3949 = vmatprep.subr.mxu0 0.0
      %3950 = vmatpush1.xpose.msra.mxu0 0.0
      %3951 = vmatprep.subr.mxu0 0.0
      %3952 = vmatpush1.xpose.msra.mxu0 0.0
      %3953 = vmatprep.subr.mxu0 0.0
      %3954 = vmatpush1.xpose.msra.mxu0 %v3923
      %3955 = vmatprep.subr.mxu0 0.0
      %3956 = vmatpush1.xpose.msra.mxu0 %v3921
      %3957 = vmatprep.subr.mxu0 0.0
      %3958 = vmatpush2.xpose.msra.mxu0 0.0
      %3959 = vmatprep.subr.mxu0 0.0
      %3960 = vmatpush2.xpose.msra.mxu0 0.0
      %3961 = vmatprep.subr.mxu0 0.0
      %3962 = vmatpush2.xpose.msra.mxu0 0.0
      %3963 = vmatprep.subr.mxu0 0.0
      %3964 = vmatpush2.xpose.msra.mxu0 0.0
      %3965 = vmatprep.subr.mxu0 0.0
      %3966 = vmatpush2.xpose.msra.mxu0 0.0
      %3967 = vmatprep.subr.mxu0 0.0
      %3968 = vmatpush2.xpose.msra.mxu0 0.0
      %3969 = vmatprep.subr.mxu0 0.0
      %3970 = vmatpush2.xpose.msra.mxu0 0.0
      %3971 = vmatprep.subr.mxu0 0.0
      %3972 = vmatpush2.xpose.msra.mxu0 0.0
      %3973 = vmatprep.subr.mxu0 0.0
      %3974 = vmatpush2.xpose.msra.mxu0 0.0
      %3975 = vmatprep.subr.mxu0 0.0
      %3976 = vmatpush2.xpose.msra.mxu0 0.0
      %3977 = vmatprep.subr.mxu0 0.0
      %3978 = vmatpush2.xpose.msra.mxu0 0.0
      %3979 = vmatprep.subr.mxu0 0.0
      %3980 = vmatpush2.xpose.msra.mxu0 0.0
      %3981 = vmatprep.subr.mxu0 0.0
      %3982 = vmatpush2.xpose.msra.mxu0 0.0
      %3983 = vmatprep.subr.mxu0 0.0
      %3984 = vmatpush2.xpose.msra.mxu0 0.0
      %3985 = vmatprep.subr.mxu0 0.0
      %3986 = vmatpush2.xpose.msra.mxu0 0.0
      %3987 = vmatprep.subr.mxu0 0.0
      %3988 = vmatpush2.xpose.msra.mxu0 0.0
      %3989 = vmatprep.mubr.f32.mxu0 0.0
      %3990 = vmatmul.mubr.f32.gmra.mxu0 %v3917
      %v3991 = vpop.f32.mrf.mxu0
      %v3992 = vadd.f32 0.0, %v3991
      %v3993 = vpop.f32.mrf.mxu0
      %3994 = vmatprep.mubr.f32.mxu0 0.0
      %3995 = vmatmul.mubr.f32.gmra.mxu0 %v3919
      %v3996 = vpop.f32.mrf.mxu0
      %v3997 = vadd.f32 0.0, %v3996
      %v3998 = vpop.f32.mrf.mxu0
      %3999 = vdwg.mxu0
      %v4000 = vmul.f32 %v3992, 0.35355338
      %v4001 = vmul.f32 %v3997, 0.35355338
      %v4002 = vsel %vm3150, %v4000, -inf
      %4003 = vmax.xlane.f32.xlu0 %v4002
      %v4004 = vpop.xlane.xlu0 %4003
      %v4005 = vsel %vm3150, %v4001, -inf
      %4006 = vmax.xlane.f32.xlu0 %v4005
      %v4007 = vpop.xlane.xlu0 %4006
      %v4008 = vsub.f32 %v4000, %v4004
      %v4009 = vsub.f32 %v4001, %v4007
      %v4010 = vmul.f32 %v4008, 1.442695
      %v4011 = vpow.pop %v4010
      %v4012 = vmul.f32 %v4009, 1.442695
      %v4013 = vpow.pop %v4012
      %v4014 = vsel %vm3150, %v4011, 0.0
      %4015 = vadd.xlane.f32.xlu0 %v4014
      %v4016 = vpop.xlane.xlu0 %4015
      %v4017 = vsel %vm3150, %v4013, 0.0
      %4018 = vadd.xlane.f32.xlu0 %v4017
      %v4019 = vpop.xlane.xlu0 %4018
      %v4020 = vrcp.pop %v4016
      %v4021 = vrcp.pop %v4019
      %v4022 = vmul.f32 %v4011, %v4020
      %v4023 = vmul.f32 %v4013, %v4021
      %4024 = vrot.lane.b32.xlu0 %v3047, 40
      %v4025 = vpop.permute.xlu0 %4024
      %4026 = vrot.lane.b32.xlu0 %v3052, 40
      %v4027 = vpop.permute.xlu0 %4026
      %v4031 = vsel %vm3150, %v4022, 0
      %v4034 = vsel %vm3150, %v4023, 0
      %4036 = vmatprep.subr.mxu0 0.0
      %4037 = vmatpush1.msra.mxu0 0.0
      %4038 = vmatprep.subr.mxu0 0.0
      %4039 = vmatpush1.msra.mxu0 0.0
      %4040 = vmatprep.subr.mxu0 0.0
      %4041 = vmatpush1.msra.mxu0 0.0
      %4042 = vmatprep.subr.mxu0 0.0
      %4043 = vmatpush1.msra.mxu0 0.0
      %4044 = vmatprep.subr.mxu0 0.0
      %4045 = vmatpush1.msra.mxu0 0.0
      %4046 = vmatprep.subr.mxu0 0.0
      %4047 = vmatpush1.msra.mxu0 0.0
      %4048 = vmatprep.subr.mxu0 0.0
      %4049 = vmatpush1.msra.mxu0 0.0
      %4050 = vmatprep.subr.mxu0 0.0
      %4051 = vmatpush1.msra.mxu0 0.0
      %4052 = vmatprep.subr.mxu0 0.0
      %4053 = vmatpush1.msra.mxu0 0.0
      %4054 = vmatprep.subr.mxu0 0.0
      %4055 = vmatpush1.msra.mxu0 0.0
      %4056 = vmatprep.subr.mxu0 0.0
      %4057 = vmatpush1.msra.mxu0 0.0
      %4058 = vmatprep.subr.mxu0 0.0
      %4059 = vmatpush1.msra.mxu0 0.0
      %4060 = vmatprep.subr.mxu0 0.0
      %4061 = vmatpush1.msra.mxu0 0.0
      %4062 = vmatprep.subr.mxu0 0.0
      %4063 = vmatpush1.msra.mxu0 0.0
      %4064 = vmatprep.subr.mxu0 0.0
      %4065 = vmatpush1.msra.mxu0 %v4027
      %4066 = vmatprep.subr.mxu0 0.0
      %4067 = vmatpush1.msra.mxu0 %v4025
      %4068 = vmatprep.subr.mxu0 0.0
      %4069 = vmatpush2.msra.mxu0 0.0
      %4070 = vmatprep.subr.mxu0 0.0
      %4071 = vmatpush2.msra.mxu0 0.0
      %4072 = vmatprep.subr.mxu0 0.0
      %4073 = vmatpush2.msra.mxu0 0.0
      %4074 = vmatprep.subr.mxu0 0.0
      %4075 = vmatpush2.msra.mxu0 0.0
      %4076 = vmatprep.subr.mxu0 0.0
      %4077 = vmatpush2.msra.mxu0 0.0
      %4078 = vmatprep.subr.mxu0 0.0
      %4079 = vmatpush2.msra.mxu0 0.0
      %4080 = vmatprep.subr.mxu0 0.0
      %4081 = vmatpush2.msra.mxu0 0.0
      %4082 = vmatprep.subr.mxu0 0.0
      %4083 = vmatpush2.msra.mxu0 0.0
      %4084 = vmatprep.subr.mxu0 0.0
      %4085 = vmatpush2.msra.mxu0 0.0
      %4086 = vmatprep.subr.mxu0 0.0
      %4087 = vmatpush2.msra.mxu0 0.0
      %4088 = vmatprep.subr.mxu0 0.0
      %4089 = vmatpush2.msra.mxu0 0.0
      %4090 = vmatprep.subr.mxu0 0.0
      %4091 = vmatpush2.msra.mxu0 0.0
      %4092 = vmatprep.subr.mxu0 0.0
      %4093 = vmatpush2.msra.mxu0 0.0
      %4094 = vmatprep.subr.mxu0 0.0
      %4095 = vmatpush2.msra.mxu0 0.0
      %4096 = vmatprep.subr.mxu0 0.0
      %4097 = vmatpush2.msra.mxu0 0.0
      %4098 = vmatprep.subr.mxu0 0.0
      %4099 = vmatpush2.msra.mxu0 0.0
      %4100 = vmatprep.mubr.f32.mxu0 0.0
      %4101 = vmatmul.mubr.f32.gmra.mxu0 %v4031
      %v4102 = vpop.f32.mrf.mxu0
      %v4103 = vadd.f32 0.0, %v4102
      %v4104 = vpop.f32.mrf.mxu0
      %4105 = vmatprep.mubr.f32.mxu0 0.0
      %4106 = vmatmul.mubr.f32.gmra.mxu0 %v4034
      %v4107 = vpop.f32.mrf.mxu0
      %v4108 = vadd.f32 0.0, %v4107
      %v4109 = vpop.f32.mrf.mxu0
      %4110 = vdwg.mxu0
      %v4112 = vsel %vm1722, %v4103, 0
      %v4115 = vsel %vm1722, %v4108, 0
      %4117 = vmatprep.subr.mxu0 0.0
      %4118 = vmatpush1.msra.mxu0 0.0
      %4119 = vmatprep.subr.mxu0 0.0
      %4120 = vmatpush1.msra.mxu0 0.0
      %4121 = vmatprep.subr.mxu0 0.0
      %4122 = vmatpush1.msra.mxu0 0.0
      %4123 = vmatprep.subr.mxu0 0.0
      %4124 = vmatpush1.msra.mxu0 0.0
      %4125 = vmatprep.subr.mxu0 0.0
      %4126 = vmatpush1.msra.mxu0 0.0
      %4127 = vmatprep.subr.mxu0 0.0
      %4128 = vmatpush1.msra.mxu0 0.0
      %4129 = vmatprep.subr.mxu0 0.0
      %4130 = vmatpush1.msra.mxu0 0.0
      %4131 = vmatprep.subr.mxu0 0.0
      %4132 = vmatpush1.msra.mxu0 0.0
      %4133 = vmatprep.subr.mxu0 0.0
      %4134 = vmatpush1.msra.mxu0 0.0
      %4135 = vmatprep.subr.mxu0 0.0
      %4136 = vmatpush1.msra.mxu0 0.0
      %4137 = vmatprep.subr.mxu0 0.0
      %4138 = vmatpush1.msra.mxu0 0.0
      %4139 = vmatprep.subr.mxu0 0.0
      %4140 = vmatpush1.msra.mxu0 0.0
      %4141 = vmatprep.subr.mxu0 0.0
      %4142 = vmatpush1.msra.mxu0 0.0
      %4143 = vmatprep.subr.mxu0 0.0
      %4144 = vmatpush1.msra.mxu0 0.0
      %4145 = vmatprep.subr.mxu0 0.0
      %4146 = vmatpush1.msra.mxu0 0.0
      %4147 = vmatprep.subr.mxu0 0.0
      %4148 = vmatpush1.msra.mxu0 %v3058
      %4149 = vmatprep.subr.mxu0 0.0
      %4150 = vmatpush2.msra.mxu0 0.0
      %4151 = vmatprep.subr.mxu0 0.0
      %4152 = vmatpush2.msra.mxu0 0.0
      %4153 = vmatprep.subr.mxu0 0.0
      %4154 = vmatpush2.msra.mxu0 0.0
      %4155 = vmatprep.subr.mxu0 0.0
      %4156 = vmatpush2.msra.mxu0 0.0
      %4157 = vmatprep.subr.mxu0 0.0
      %4158 = vmatpush2.msra.mxu0 0.0
      %4159 = vmatprep.subr.mxu0 0.0
      %4160 = vmatpush2.msra.mxu0 0.0
      %4161 = vmatprep.subr.mxu0 0.0
      %4162 = vmatpush2.msra.mxu0 0.0
      %4163 = vmatprep.subr.mxu0 0.0
      %4164 = vmatpush2.msra.mxu0 0.0
      %4165 = vmatprep.subr.mxu0 0.0
      %4166 = vmatpush2.msra.mxu0 0.0
      %4167 = vmatprep.subr.mxu0 0.0
      %4168 = vmatpush2.msra.mxu0 0.0
      %4169 = vmatprep.subr.mxu0 0.0
      %4170 = vmatpush2.msra.mxu0 0.0
      %4171 = vmatprep.subr.mxu0 0.0
      %4172 = vmatpush2.msra.mxu0 0.0
      %4173 = vmatprep.subr.mxu0 0.0
      %4174 = vmatpush2.msra.mxu0 0.0
      %4175 = vmatprep.subr.mxu0 0.0
      %4176 = vmatpush2.msra.mxu0 0.0
      %4177 = vmatprep.subr.mxu0 0.0
      %4178 = vmatpush2.msra.mxu0 0.0
      %4179 = vmatprep.subr.mxu0 0.0
      %4180 = vmatpush2.msra.mxu0 0.0
      %4181 = vmatprep.mubr.f32.mxu0 0.0
      %4182 = vmatmul.mubr.f32.gmra.mxu0 %v4112
      %v4183 = vpop.f32.mrf.mxu0
      %v4184 = vadd.f32 0.0, %v4183
      %v4185 = vpop.f32.mrf.mxu0
      %4186 = vmatprep.mubr.f32.mxu0 0.0
      %4187 = vmatmul.mubr.f32.gmra.mxu0 %v4115
      %v4188 = vpop.f32.mrf.mxu0
      %v4189 = vadd.f32 0.0, %v4188
      %v4190 = vpop.f32.mrf.mxu0
      %4191 = vdwg.mxu0
      %v4192 = vadd.f32 %v3907, %v4184
      %v4193 = vadd.f32 %v3908, %v4189
      %v4194 = vld [vmem:[%s45] sm:$0x1]
      %v4196 = vlaneseq
      %v4197 = vshrl.u32 %v4196, 7
      %v4198 = vsub.s32 0, %v4197
      %v4199 = vrot.slane %v4194, %v4198
      %v4201 = vadd.f32 %v4192, %v4199
      %v4202 = vadd.f32 %v4193, %v4199
      %4205 = vrot.lane.b32.xlu0 %v4201, 64
      %v4206 = vpop.permute.xlu0 %4205
      %4207 = vrot.lane.b32.xlu0 %v4202, 64
      %v4208 = vpop.permute.xlu0 %4207
      %v4211 = vmul.f32 %v2960, %v4206
      %v4212 = vmul.f32 %v2960, %v4208
      %4215 = vrot.lane.b32.xlu0 %v4211, 64
      %v4216 = vpop.permute.xlu0 %4215
      %4217 = vrot.lane.b32.xlu0 %v4212, 64
      %v4218 = vpop.permute.xlu0 %4217
      %v4221 = vadd.f32 %v2918, %v4216
      %v4222 = vadd.f32 %v2919, %v4218
      %v4223 = vsel %vm1231, %v4221, 0.0
      %4224 = vadd.xlane.f32.xlu0 %v4223
      %v4225 = vpop.xlane.xlu0 %4224
      %v4226 = vsel %vm1231, %v4222, 0.0
      %4227 = vadd.xlane.f32.xlu0 %v4226
      %v4228 = vpop.xlane.xlu0 %4227
      %v4229 = vmul.f32 %v4225, %v1497
      %v4230 = vmul.f32 %v4228, %v1497
      %v4231 = vsub.f32 %v4221, %v4229
      %v4232 = vsub.f32 %v4222, %v4230
      %v4233 = vmul.f32 %v4231, %v4231
      %v4234 = vmul.f32 %v4232, %v4232
      %v4235 = vsel %vm1231, %v4233, 0.0
      %4236 = vadd.xlane.f32.xlu0 %v4235
      %v4237 = vpop.xlane.xlu0 %4236
      %v4238 = vsel %vm1231, %v4234, 0.0
      %4239 = vadd.xlane.f32.xlu0 %v4238
      %v4240 = vpop.xlane.xlu0 %4239
      %v4241 = vmul.f32 %v4237, %v1497
      %v4242 = vmul.f32 %v4240, %v1497
      %v4243 = vadd.f32 %v4241, 1e-06
      %v4244 = vadd.f32 %v4242, 1e-06
      %v4245 = vrsqrt.pop %v4243
      %v4246 = vrsqrt.pop %v4244
      %v4247 = vmul.f32 %v4231, %v4245
      %v4248 = vmul.f32 %v4232, %v4246
      %v4249 = vadd.f32 %v1489, 1.0
      %v4250 = vlaneseq
      %v4251 = vshrl.u32 %v4250, 7
      %v4252 = vsub.s32 0, %v4251
      %v4253 = vrot.slane %v4249, %v4252
      %v4254 = vmul.f32 %v4247, %v4253
      %v4255 = vmul.f32 %v4248, %v4253
      %4257 = vrot.lane.b32.xlu0 %v2960, 32
      %v4258 = vpop.permute.xlu0 %4257
      %v4260 = vadd.f32 %v4254, %v4258
      %v4261 = vadd.f32 %v4255, %v4258
      %v4262 = vld [vmem:[%s47] sm:$0xff]
      %v4263 = vld [vmem:[%s47 + $0x8] sm:$0xff]
      %v4264 = vld [vmem:[%s47 + $0x10] sm:$0xff]
      %v4265 = vld [vmem:[%s47 + $0x18] sm:$0xff]
      %v4266 = vld [vmem:[%s49] sm:$0x1]
      %v4268 = vlaneseq
      %v4269 = vshrl.u32 %v4268, 7
      %v4270 = vsub.s32 0, %v4269
      %v4271 = vrot.slane %v4266, %v4270
      %v4274 = vsel %vm1231, %v4260, 0
      %v4277 = vsel %vm1231, %v4261, 0
      %4279 = vmatprep.subr.mxu0 0.0
      %4280 = vmatpush1.msra.mxu0 0.0
      %4281 = vmatprep.subr.mxu0 0.0
      %4282 = vmatpush1.msra.mxu0 0.0
      %4283 = vmatprep.subr.mxu0 0.0
      %4284 = vmatpush1.msra.mxu0 0.0
      %4285 = vmatprep.subr.mxu0 0.0
      %4286 = vmatpush1.msra.mxu0 0.0
      %4287 = vmatprep.subr.mxu0 0.0
      %4288 = vmatpush1.msra.mxu0 0.0
      %4289 = vmatprep.subr.mxu0 0.0
      %4290 = vmatpush1.msra.mxu0 0.0
      %4291 = vmatprep.subr.mxu0 0.0
      %4292 = vmatpush1.msra.mxu0 0.0
      %4293 = vmatprep.subr.mxu0 0.0
      %4294 = vmatpush1.msra.mxu0 0.0
      %4295 = vmatprep.subr.mxu0 0.0
      %4296 = vmatpush1.msra.mxu0 0.0
      %4297 = vmatprep.subr.mxu0 0.0
      %4298 = vmatpush1.msra.mxu0 0.0
      %4299 = vmatprep.subr.mxu0 0.0
      %4300 = vmatpush1.msra.mxu0 0.0
      %4301 = vmatprep.subr.mxu0 0.0
      %4302 = vmatpush1.msra.mxu0 0.0
      %4303 = vmatprep.subr.mxu0 0.0
      %4304 = vmatpush1.msra.mxu0 %v4265
      %4305 = vmatprep.subr.mxu0 0.0
      %4306 = vmatpush1.msra.mxu0 %v4264
      %4307 = vmatprep.subr.mxu0 0.0
      %4308 = vmatpush1.msra.mxu0 %v4263
      %4309 = vmatprep.subr.mxu0 0.0
      %4310 = vmatpush1.msra.mxu0 %v4262
      %4311 = vmatprep.subr.mxu0 0.0
      %4312 = vmatpush2.msra.mxu0 0.0
      %4313 = vmatprep.subr.mxu0 0.0
      %4314 = vmatpush2.msra.mxu0 0.0
      %4315 = vmatprep.subr.mxu0 0.0
      %4316 = vmatpush2.msra.mxu0 0.0
      %4317 = vmatprep.subr.mxu0 0.0
      %4318 = vmatpush2.msra.mxu0 0.0
      %4319 = vmatprep.subr.mxu0 0.0
      %4320 = vmatpush2.msra.mxu0 0.0
      %4321 = vmatprep.subr.mxu0 0.0
      %4322 = vmatpush2.msra.mxu0 0.0
      %4323 = vmatprep.subr.mxu0 0.0
      %4324 = vmatpush2.msra.mxu0 0.0
      %4325 = vmatprep.subr.mxu0 0.0
      %4326 = vmatpush2.msra.mxu0 0.0
      %4327 = vmatprep.subr.mxu0 0.0
      %4328 = vmatpush2.msra.mxu0 0.0
      %4329 = vmatprep.subr.mxu0 0.0
      %4330 = vmatpush2.msra.mxu0 0.0
      %4331 = vmatprep.subr.mxu0 0.0
      %4332 = vmatpush2.msra.mxu0 0.0
      %4333 = vmatprep.subr.mxu0 0.0
      %4334 = vmatpush2.msra.mxu0 0.0
      %4335 = vmatprep.subr.mxu0 0.0
      %4336 = vmatpush2.msra.mxu0 0.0
      %4337 = vmatprep.subr.mxu0 0.0
      %4338 = vmatpush2.msra.mxu0 0.0
      %4339 = vmatprep.subr.mxu0 0.0
      %4340 = vmatpush2.msra.mxu0 0.0
      %4341 = vmatprep.subr.mxu0 0.0
      %4342 = vmatpush2.msra.mxu0 0.0
      %4343 = vmatprep.mubr.f32.mxu0 0.0
      %4344 = vmatmul.mubr.f32.gmra.mxu0 %v4274
      %v4345 = vpop.f32.mrf.mxu0
      %v4346 = vadd.f32 %v4271, %v4345
      %v4347 = vpop.f32.mrf.mxu0
      %4348 = vmatprep.mubr.f32.mxu0 0.0
      %4349 = vmatmul.mubr.f32.gmra.mxu0 %v4277
      %v4350 = vpop.f32.mrf.mxu0
      %v4351 = vadd.f32 %v4271, %v4350
      %v4352 = vpop.f32.mrf.mxu0
      %4353 = vdwg.mxu0
      %v4354 = vmul.f32 %v4346, 0.5
      %v4355 = vmul.f32 %v4351, 0.5
      %v4356 = vmul.f32 %v4346, 0.044715
      %v4357 = vmul.f32 %v4351, 0.044715
      %v4358 = vmul.f32 %v4356, %v4346
      %v4359 = vmul.f32 %v4357, %v4351
      %v4360 = vmul.f32 %v4358, %v4346
      %v4361 = vmul.f32 %v4359, %v4351
      %v4362 = vadd.f32 %v4346, %v4360
      %v4363 = vadd.f32 %v4351, %v4361
      %v4364 = vmul.f32 %v4362, 0.7978846
      %v4365 = vmul.f32 %v4363, 0.7978846
      %v4366 = vtanh.pop %v4364
      %v4367 = vtanh.pop %v4365
      %v4368 = vadd.f32 %v4366, 1.0
      %v4369 = vadd.f32 %v4367, 1.0
      %v4370 = vmul.f32 %v4354, %v4368
      %v4371 = vmul.f32 %v4355, %v4369
      %v4372 = vld [vmem:[%s51] sm:$0xff]
      %v4373 = vld [vmem:[%s51 + $0x8] sm:$0xff]
      %v4374 = vld [vmem:[%s51 + $0x10] sm:$0xff]
      %v4375 = vld [vmem:[%s51 + $0x18] sm:$0xff]
      %v4376 = vld [vmem:[%s51 + $0x20] sm:$0xff]
      %v4377 = vld [vmem:[%s51 + $0x28] sm:$0xff]
      %v4378 = vld [vmem:[%s51 + $0x30] sm:$0xff]
      %v4379 = vld [vmem:[%s51 + $0x38] sm:$0xff]
      %v4380 = vld [vmem:[%s51 + $0x40] sm:$0xff]
      %v4381 = vld [vmem:[%s51 + $0x48] sm:$0xff]
      %v4382 = vld [vmem:[%s51 + $0x50] sm:$0xff]
      %v4383 = vld [vmem:[%s51 + $0x58] sm:$0xff]
      %v4384 = vld [vmem:[%s51 + $0x60] sm:$0xff]
      %v4385 = vld [vmem:[%s51 + $0x68] sm:$0xff]
      %v4386 = vld [vmem:[%s51 + $0x70] sm:$0xff]
      %v4387 = vld [vmem:[%s51 + $0x78] sm:$0xff]
      %v4388 = vld [vmem:[%s53] sm:$0x1]
      %v4390 = vlaneseq
      %v4391 = vshrl.u32 %v4390, 7
      %v4392 = vsub.s32 0, %v4391
      %v4393 = vrot.slane %v4388, %v4392
      %4395 = vmatprep.subr.mxu0 0.0
      %4396 = vmatpush1.msra.mxu0 %v4387
      %4397 = vmatprep.subr.mxu0 0.0
      %4398 = vmatpush1.msra.mxu0 %v4386
      %4399 = vmatprep.subr.mxu0 0.0
      %4400 = vmatpush1.msra.mxu0 %v4385
      %4401 = vmatprep.subr.mxu0 0.0
      %4402 = vmatpush1.msra.mxu0 %v4384
      %4403 = vmatprep.subr.mxu0 0.0
      %4404 = vmatpush1.msra.mxu0 %v4383
      %4405 = vmatprep.subr.mxu0 0.0
      %4406 = vmatpush1.msra.mxu0 %v4382
      %4407 = vmatprep.subr.mxu0 0.0
      %4408 = vmatpush1.msra.mxu0 %v4381
      %4409 = vmatprep.subr.mxu0 0.0
      %4410 = vmatpush1.msra.mxu0 %v4380
      %4411 = vmatprep.subr.mxu0 0.0
      %4412 = vmatpush1.msra.mxu0 %v4379
      %4413 = vmatprep.subr.mxu0 0.0
      %4414 = vmatpush1.msra.mxu0 %v4378
      %4415 = vmatprep.subr.mxu0 0.0
      %4416 = vmatpush1.msra.mxu0 %v4377
      %4417 = vmatprep.subr.mxu0 0.0
      %4418 = vmatpush1.msra.mxu0 %v4376
      %4419 = vmatprep.subr.mxu0 0.0
      %4420 = vmatpush1.msra.mxu0 %v4375
      %4421 = vmatprep.subr.mxu0 0.0
      %4422 = vmatpush1.msra.mxu0 %v4374
      %4423 = vmatprep.subr.mxu0 0.0
      %4424 = vmatpush1.msra.mxu0 %v4373
      %4425 = vmatprep.subr.mxu0 0.0
      %4426 = vmatpush1.msra.mxu0 %v4372
      %4427 = vmatprep.subr.mxu0 0.0
      %4428 = vmatpush2.msra.mxu0 0.0
      %4429 = vmatprep.subr.mxu0 0.0
      %4430 = vmatpush2.msra.mxu0 0.0
      %4431 = vmatprep.subr.mxu0 0.0
      %4432 = vmatpush2.msra.mxu0 0.0
      %4433 = vmatprep.subr.mxu0 0.0
      %4434 = vmatpush2.msra.mxu0 0.0
      %4435 = vmatprep.subr.mxu0 0.0
      %4436 = vmatpush2.msra.mxu0 0.0
      %4437 = vmatprep.subr.mxu0 0.0
      %4438 = vmatpush2.msra.mxu0 0.0
      %4439 = vmatprep.subr.mxu0 0.0
      %4440 = vmatpush2.msra.mxu0 0.0
      %4441 = vmatprep.subr.mxu0 0.0
      %4442 = vmatpush2.msra.mxu0 0.0
      %4443 = vmatprep.subr.mxu0 0.0
      %4444 = vmatpush2.msra.mxu0 0.0
      %4445 = vmatprep.subr.mxu0 0.0
      %4446 = vmatpush2.msra.mxu0 0.0
      %4447 = vmatprep.subr.mxu0 0.0
      %4448 = vmatpush2.msra.mxu0 0.0
      %4449 = vmatprep.subr.mxu0 0.0
      %4450 = vmatpush2.msra.mxu0 0.0
      %4451 = vmatprep.subr.mxu0 0.0
      %4452 = vmatpush2.msra.mxu0 0.0
      %4453 = vmatprep.subr.mxu0 0.0
      %4454 = vmatpush2.msra.mxu0 0.0
      %4455 = vmatprep.subr.mxu0 0.0
      %4456 = vmatpush2.msra.mxu0 0.0
      %4457 = vmatprep.subr.mxu0 0.0
      %4458 = vmatpush2.msra.mxu0 0.0
      %4459 = vmatprep.mubr.f32.mxu0 0.0
      %4460 = vmatmul.mubr.f32.gmra.mxu0 %v4370
      %v4461 = vpop.f32.mrf.mxu0
      %v4462 = vadd.f32 %v4393, %v4461
      %v4463 = vpop.f32.mrf.mxu0
      %4464 = vmatprep.mubr.f32.mxu0 0.0
      %4465 = vmatmul.mubr.f32.gmra.mxu0 %v4371
      %v4466 = vpop.f32.mrf.mxu0
      %v4467 = vadd.f32 %v4393, %v4466
      %v4468 = vpop.f32.mrf.mxu0
      %4469 = vdwg.mxu0
      %v4470 = vlaneseq
      %v4471 = vshrl.u32 %v4470, 7
      %v4472 = vsub.s32 0, %v4471
      %v4473 = vrot.slane %v1489, %v4472
      %4476 = vrot.lane.b32.xlu0 %v4462, 32
      %v4477 = vpop.permute.xlu0 %4476
      %4478 = vrot.lane.b32.xlu0 %v4467, 32
      %v4479 = vpop.permute.xlu0 %4478
      %v4482 = vmul.f32 %v4473, %v4477
      %v4483 = vmul.f32 %v4473, %v4479
      %4486 = vrot.lane.b32.xlu0 %v4482, 96
      %v4487 = vpop.permute.xlu0 %4486
      %4488 = vrot.lane.b32.xlu0 %v4483, 96
      %v4489 = vpop.permute.xlu0 %4488
      %v4492 = vadd.f32 %v4221, %v4487
      %v4493 = vadd.f32 %v4222, %v4489
      %s4494 = scalar_lea.vmem %s23, 64
      %v4495 = vld [vmem:[%s4494] sm:$0xff]
      %v4496 = vld [vmem:[%s4494 + $0x8] sm:$0xff]
      %v4497 = vld [vmem:[%s4494 + $0x10] sm:$0xff]
      %v4498 = vld [vmem:[%s4494 + $0x18] sm:$0xff]
      %v4499 = vld [vmem:[%s4494 + $0x20] sm:$0xff]
      %v4500 = vld [vmem:[%s4494 + $0x28] sm:$0xff]
      %v4501 = vld [vmem:[%s4494 + $0x30] sm:$0xff]
      %v4502 = vld [vmem:[%s4494 + $0x38] sm:$0xff]
      %s4503 = scalar_lea.vmem %s25, 2
      %v4504 = vld [vmem:[%s4503] sm:$0x3]
      %v4506 = vlaneseq
      %v4507 = vshrl.u32 %v4506, 7
      %v4508 = vsub.s32 0, %v4507
      %v4509 = vrot.slane %v4504, %v4508
      %v4510 = vlaneseq
      %v4511 = vshrl.u32 %v4510, 7
      %v4512 = vsub.s32 1, %v4511
      %v4513 = vrot.slane %v4504, %v4512
      %4516 = vmatprep.subr.mxu0 0.0
      %4517 = vmatpush1.msra.mxu0 0.0
      %4518 = vmatprep.subr.mxu0 0.0
      %4519 = vmatpush1.msra.mxu0 0.0
      %4520 = vmatprep.subr.mxu0 0.0
      %4521 = vmatpush1.msra.mxu0 0.0
      %4522 = vmatprep.subr.mxu0 0.0
      %4523 = vmatpush1.msra.mxu0 0.0
      %4524 = vmatprep.subr.mxu0 0.0
      %4525 = vmatpush1.msra.mxu0 0.0
      %4526 = vmatprep.subr.mxu0 0.0
      %4527 = vmatpush1.msra.mxu0 0.0
      %4528 = vmatprep.subr.mxu0 0.0
      %4529 = vmatpush1.msra.mxu0 0.0
      %4530 = vmatprep.subr.mxu0 0.0
      %4531 = vmatpush1.msra.mxu0 0.0
      %4532 = vmatprep.subr.mxu0 0.0
      %4533 = vmatpush1.msra.mxu0 0.0
      %4534 = vmatprep.subr.mxu0 0.0
      %4535 = vmatpush1.msra.mxu0 0.0
      %4536 = vmatprep.subr.mxu0 0.0
      %4537 = vmatpush1.msra.mxu0 0.0
      %4538 = vmatprep.subr.mxu0 0.0
      %4539 = vmatpush1.msra.mxu0 0.0
      %4540 = vmatprep.subr.mxu0 %v4502
      %4541 = vmatpush1.msra.mxu0 %v4501
      %4542 = vmatprep.subr.mxu0 %v4500
      %4543 = vmatpush1.msra.mxu0 %v4499
      %4544 = vmatprep.subr.mxu0 %v4498
      %4545 = vmatpush1.msra.mxu0 %v4497
      %4546 = vmatprep.subr.mxu0 %v4496
      %4547 = vmatpush1.msra.mxu0 %v4495
      %4548 = vmatprep.subr.mxu0 0.0
      %4549 = vmatpush2.msra.mxu0 0.0
      %4550 = vmatprep.subr.mxu0 0.0
      %4551 = vmatpush2.msra.mxu0 0.0
      %4552 = vmatprep.subr.mxu0 0.0
      %4553 = vmatpush2.msra.mxu0 0.0
      %4554 = vmatprep.subr.mxu0 0.0
      %4555 = vmatpush2.msra.mxu0 0.0
      %4556 = vmatprep.subr.mxu0 0.0
      %4557 = vmatpush2.msra.mxu0 0.0
      %4558 = vmatprep.subr.mxu0 0.0
      %4559 = vmatpush2.msra.mxu0 0.0
      %4560 = vmatprep.subr.mxu0 0.0
      %4561 = vmatpush2.msra.mxu0 0.0
      %4562 = vmatprep.subr.mxu0 0.0
      %4563 = vmatpush2.msra.mxu0 0.0
      %4564 = vmatprep.subr.mxu0 0.0
      %4565 = vmatpush2.msra.mxu0 0.0
      %4566 = vmatprep.subr.mxu0 0.0
      %4567 = vmatpush2.msra.mxu0 0.0
      %4568 = vmatprep.subr.mxu0 0.0
      %4569 = vmatpush2.msra.mxu0 0.0
      %4570 = vmatprep.subr.mxu0 0.0
      %4571 = vmatpush2.msra.mxu0 0.0
      %4572 = vmatprep.subr.mxu0 0.0
      %4573 = vmatpush2.msra.mxu0 0.0
      %4574 = vmatprep.subr.mxu0 0.0
      %4575 = vmatpush2.msra.mxu0 0.0
      %4576 = vmatprep.subr.mxu0 0.0
      %4577 = vmatpush2.msra.mxu0 0.0
      %4578 = vmatprep.subr.mxu0 0.0
      %4579 = vmatpush2.msra.mxu0 0.0
      %4580 = vmatprep.mubr.f32.mxu0 0.0
      %4581 = vmatmul.mubr.f32.gmra.mxu0 %v1418
      %v4582 = vpop.f32.mrf.mxu0
      %v4583 = vadd.f32 %v4509, %v4582
      %v4584 = vpop.f32.mrf.mxu0
      %v4585 = vadd.f32 %v4513, %v4584
      %4586 = vdwg.mxu0
      %v4587 = vsel %vm1231, %v4492, 0.0
      %4588 = vadd.xlane.f32.xlu0 %v4587
      %v4589 = vpop.xlane.xlu0 %4588
      %v4590 = vsel %vm1231, %v4493, 0.0
      %4591 = vadd.xlane.f32.xlu0 %v4590
      %v4592 = vpop.xlane.xlu0 %4591
      %v4593 = vmul.f32 %v4589, %v1497
      %v4594 = vmul.f32 %v4592, %v1497
      %v4595 = vsub.f32 %v4492, %v4593
      %v4596 = vsub.f32 %v4493, %v4594
      %v4597 = vmul.f32 %v4595, %v4595
      %v4598 = vmul.f32 %v4596, %v4596
      %v4599 = vsel %vm1231, %v4597, 0.0
      %4600 = vadd.xlane.f32.xlu0 %v4599
      %v4601 = vpop.xlane.xlu0 %4600
      %v4602 = vsel %vm1231, %v4598, 0.0
      %4603 = vadd.xlane.f32.xlu0 %v4602
      %v4604 = vpop.xlane.xlu0 %4603
      %v4605 = vmul.f32 %v4601, %v1497
      %v4606 = vmul.f32 %v4604, %v1497
      %v4607 = vadd.f32 %v4605, 1e-06
      %v4608 = vadd.f32 %v4606, 1e-06
      %v4609 = vrsqrt.pop %v4607
      %v4610 = vrsqrt.pop %v4608
      %v4611 = vmul.f32 %v4595, %v4609
      %v4612 = vmul.f32 %v4596, %v4610
      %s4613 = scalar_lea.vmem %s27, 32
      %v4614 = vld [vmem:[%s4613] sm:$0xff]
      %v4615 = vld [vmem:[%s4613 + $0x8] sm:$0xff]
      %v4616 = vld [vmem:[%s4613 + $0x10] sm:$0xff]
      %v4617 = vld [vmem:[%s4613 + $0x18] sm:$0xff]
      %s4618 = scalar_lea.vmem %s29, 1
      %v4619 = vld [vmem:[%s4618] sm:$0x1]
      %v4621 = vlaneseq
      %v4622 = vshrl.u32 %v4621, 7
      %v4623 = vsub.s32 0, %v4622
      %v4624 = vrot.slane %v4619, %v4623
      %v4627 = vsel %vm1231, %v4611, 0
      %v4630 = vsel %vm1231, %v4612, 0
      %4632 = vmatprep.subr.mxu0 0.0
      %4633 = vmatpush1.msra.mxu0 0.0
      %4634 = vmatprep.subr.mxu0 0.0
      %4635 = vmatpush1.msra.mxu0 0.0
      %4636 = vmatprep.subr.mxu0 0.0
      %4637 = vmatpush1.msra.mxu0 0.0
      %4638 = vmatprep.subr.mxu0 0.0
      %4639 = vmatpush1.msra.mxu0 0.0
      %4640 = vmatprep.subr.mxu0 0.0
      %4641 = vmatpush1.msra.mxu0 0.0
      %4642 = vmatprep.subr.mxu0 0.0
      %4643 = vmatpush1.msra.mxu0 0.0
      %4644 = vmatprep.subr.mxu0 0.0
      %4645 = vmatpush1.msra.mxu0 0.0
      %4646 = vmatprep.subr.mxu0 0.0
      %4647 = vmatpush1.msra.mxu0 0.0
      %4648 = vmatprep.subr.mxu0 0.0
      %4649 = vmatpush1.msra.mxu0 0.0
      %4650 = vmatprep.subr.mxu0 0.0
      %4651 = vmatpush1.msra.mxu0 0.0
      %4652 = vmatprep.subr.mxu0 0.0
      %4653 = vmatpush1.msra.mxu0 0.0
      %4654 = vmatprep.subr.mxu0 0.0
      %4655 = vmatpush1.msra.mxu0 0.0
      %4656 = vmatprep.subr.mxu0 0.0
      %4657 = vmatpush1.msra.mxu0 %v4617
      %4658 = vmatprep.subr.mxu0 0.0
      %4659 = vmatpush1.msra.mxu0 %v4616
      %4660 = vmatprep.subr.mxu0 0.0
      %4661 = vmatpush1.msra.mxu0 %v4615
      %4662 = vmatprep.subr.mxu0 0.0
      %4663 = vmatpush1.msra.mxu0 %v4614
      %4664 = vmatprep.subr.mxu0 0.0
      %4665 = vmatpush2.msra.mxu0 0.0
      %4666 = vmatprep.subr.mxu0 0.0
      %4667 = vmatpush2.msra.mxu0 0.0
      %4668 = vmatprep.subr.mxu0 0.0
      %4669 = vmatpush2.msra.mxu0 0.0
      %4670 = vmatprep.subr.mxu0 0.0
      %4671 = vmatpush2.msra.mxu0 0.0
      %4672 = vmatprep.subr.mxu0 0.0
      %4673 = vmatpush2.msra.mxu0 0.0
      %4674 = vmatprep.subr.mxu0 0.0
      %4675 = vmatpush2.msra.mxu0 0.0
      %4676 = vmatprep.subr.mxu0 0.0
      %4677 = vmatpush2.msra.mxu0 0.0
      %4678 = vmatprep.subr.mxu0 0.0
      %4679 = vmatpush2.msra.mxu0 0.0
      %4680 = vmatprep.subr.mxu0 0.0
      %4681 = vmatpush2.msra.mxu0 0.0
      %4682 = vmatprep.subr.mxu0 0.0
      %4683 = vmatpush2.msra.mxu0 0.0
      %4684 = vmatprep.subr.mxu0 0.0
      %4685 = vmatpush2.msra.mxu0 0.0
      %4686 = vmatprep.subr.mxu0 0.0
      %4687 = vmatpush2.msra.mxu0 0.0
      %4688 = vmatprep.subr.mxu0 0.0
      %4689 = vmatpush2.msra.mxu0 0.0
      %4690 = vmatprep.subr.mxu0 0.0
      %4691 = vmatpush2.msra.mxu0 0.0
      %4692 = vmatprep.subr.mxu0 0.0
      %4693 = vmatpush2.msra.mxu0 0.0
      %4694 = vmatprep.subr.mxu0 0.0
      %4695 = vmatpush2.msra.mxu0 0.0
      %4696 = vmatprep.mubr.f32.mxu0 0.0
      %4697 = vmatmul.mubr.f32.gmra.mxu0 %v4627
      %v4698 = vpop.f32.mrf.mxu0
      %v4699 = vadd.f32 %v4624, %v4698
      %v4700 = vpop.f32.mrf.mxu0
      %4701 = vmatprep.mubr.f32.mxu0 0.0
      %4702 = vmatmul.mubr.f32.gmra.mxu0 %v4630
      %v4703 = vpop.f32.mrf.mxu0
      %v4704 = vadd.f32 %v4624, %v4703
      %v4705 = vpop.f32.mrf.mxu0
      %4706 = vdwg.mxu0
      %s4707 = scalar_lea.vmem %s31, 32
      %v4708 = vld [vmem:[%s4707] sm:$0xff]
      %v4709 = vld [vmem:[%s4707 + $0x8] sm:$0xff]
      %v4710 = vld [vmem:[%s4707 + $0x10] sm:$0xff]
      %v4711 = vld [vmem:[%s4707 + $0x18] sm:$0xff]
      %s4712 = scalar_lea.vmem %s33, 1
      %v4713 = vld [vmem:[%s4712] sm:$0x1]
      %v4715 = vlaneseq
      %v4716 = vshrl.u32 %v4715, 7
      %v4717 = vsub.s32 0, %v4716
      %v4718 = vrot.slane %v4713, %v4717
      %4720 = vmatprep.subr.mxu0 0.0
      %4721 = vmatpush1.msra.mxu0 0.0
      %4722 = vmatprep.subr.mxu0 0.0
      %4723 = vmatpush1.msra.mxu0 0.0
      %4724 = vmatprep.subr.mxu0 0.0
      %4725 = vmatpush1.msra.mxu0 0.0
      %4726 = vmatprep.subr.mxu0 0.0
      %4727 = vmatpush1.msra.mxu0 0.0
      %4728 = vmatprep.subr.mxu0 0.0
      %4729 = vmatpush1.msra.mxu0 0.0
      %4730 = vmatprep.subr.mxu0 0.0
      %4731 = vmatpush1.msra.mxu0 0.0
      %4732 = vmatprep.subr.mxu0 0.0
      %4733 = vmatpush1.msra.mxu0 0.0
      %4734 = vmatprep.subr.mxu0 0.0
      %4735 = vmatpush1.msra.mxu0 0.0
      %4736 = vmatprep.subr.mxu0 0.0
      %4737 = vmatpush1.msra.mxu0 0.0
      %4738 = vmatprep.subr.mxu0 0.0
      %4739 = vmatpush1.msra.mxu0 0.0
      %4740 = vmatprep.subr.mxu0 0.0
      %4741 = vmatpush1.msra.mxu0 0.0
      %4742 = vmatprep.subr.mxu0 0.0
      %4743 = vmatpush1.msra.mxu0 0.0
      %4744 = vmatprep.subr.mxu0 0.0
      %4745 = vmatpush1.msra.mxu0 %v4711
      %4746 = vmatprep.subr.mxu0 0.0
      %4747 = vmatpush1.msra.mxu0 %v4710
      %4748 = vmatprep.subr.mxu0 0.0
      %4749 = vmatpush1.msra.mxu0 %v4709
      %4750 = vmatprep.subr.mxu0 0.0
      %4751 = vmatpush1.msra.mxu0 %v4708
      %4752 = vmatprep.subr.mxu0 0.0
      %4753 = vmatpush2.msra.mxu0 0.0
      %4754 = vmatprep.subr.mxu0 0.0
      %4755 = vmatpush2.msra.mxu0 0.0
      %4756 = vmatprep.subr.mxu0 0.0
      %4757 = vmatpush2.msra.mxu0 0.0
      %4758 = vmatprep.subr.mxu0 0.0
      %4759 = vmatpush2.msra.mxu0 0.0
      %4760 = vmatprep.subr.mxu0 0.0
      %4761 = vmatpush2.msra.mxu0 0.0
      %4762 = vmatprep.subr.mxu0 0.0
      %4763 = vmatpush2.msra.mxu0 0.0
      %4764 = vmatprep.subr.mxu0 0.0
      %4765 = vmatpush2.msra.mxu0 0.0
      %4766 = vmatprep.subr.mxu0 0.0
      %4767 = vmatpush2.msra.mxu0 0.0
      %4768 = vmatprep.subr.mxu0 0.0
      %4769 = vmatpush2.msra.mxu0 0.0
      %4770 = vmatprep.subr.mxu0 0.0
      %4771 = vmatpush2.msra.mxu0 0.0
      %4772 = vmatprep.subr.mxu0 0.0
      %4773 = vmatpush2.msra.mxu0 0.0
      %4774 = vmatprep.subr.mxu0 0.0
      %4775 = vmatpush2.msra.mxu0 0.0
      %4776 = vmatprep.subr.mxu0 0.0
      %4777 = vmatpush2.msra.mxu0 0.0
      %4778 = vmatprep.subr.mxu0 0.0
      %4779 = vmatpush2.msra.mxu0 0.0
      %4780 = vmatprep.subr.mxu0 0.0
      %4781 = vmatpush2.msra.mxu0 0.0
      %4782 = vmatprep.subr.mxu0 0.0
      %4783 = vmatpush2.msra.mxu0 0.0
      %4784 = vmatprep.mubr.f32.mxu0 0.0
      %4785 = vmatmul.mubr.f32.gmra.mxu0 %v1622
      %v4786 = vpop.f32.mrf.mxu0
      %v4787 = vadd.f32 %v4718, %v4786
      %v4788 = vpop.f32.mrf.mxu0
      %4789 = vmatprep.mubr.f32.mxu0 0.0
      %4790 = vmatmul.mubr.f32.gmra.mxu0 %v1625
      %v4791 = vpop.f32.mrf.mxu0
      %v4792 = vadd.f32 %v4718, %v4791
      %v4793 = vpop.f32.mrf.mxu0
      %4794 = vmatprep.mubr.f32.mxu0 0.0
      %4795 = vmatmul.mubr.f32.gmra.mxu0 %v1628
      %v4796 = vpop.f32.mrf.mxu0
      %v4797 = vadd.f32 %v4718, %v4796
      %v4798 = vpop.f32.mrf.mxu0
      %4799 = vmatprep.mubr.f32.mxu0 0.0
      %4800 = vmatmul.mubr.f32.gmra.mxu0 %v1631
      %v4801 = vpop.f32.mrf.mxu0
      %v4802 = vadd.f32 %v4718, %v4801
      %v4803 = vpop.f32.mrf.mxu0
      %4804 = vdwg.mxu0
      %s4805 = scalar_lea.vmem %s35, 32
      %v4806 = vld [vmem:[%s4805] sm:$0xff]
      %v4807 = vld [vmem:[%s4805 + $0x8] sm:$0xff]
      %v4808 = vld [vmem:[%s4805 + $0x10] sm:$0xff]
      %v4809 = vld [vmem:[%s4805 + $0x18] sm:$0xff]
      %v4811 = vsel %vm1722, %v4699, 0
      %v4814 = vsel %vm1722, %v4704, 0
      %v4817 = vsel %vm1722, %v4787, 0
      %v4820 = vsel %vm1722, %v4792, 0
      %v4823 = vsel %vm1722, %v4797, 0
      %v4826 = vsel %vm1722, %v4802, 0
      %4828 = vmatprep.subr.mxu0 0.0
      %4829 = vmatpush1.xpose.msra.mxu0 0.0
      %4830 = vmatprep.subr.mxu0 0.0
      %4831 = vmatpush1.xpose.msra.mxu0 0.0
      %4832 = vmatprep.subr.mxu0 0.0
      %4833 = vmatpush1.xpose.msra.mxu0 0.0
      %4834 = vmatprep.subr.mxu0 0.0
      %4835 = vmatpush1.xpose.msra.mxu0 0.0
      %4836 = vmatprep.subr.mxu0 0.0
      %4837 = vmatpush1.xpose.msra.mxu0 0.0
      %4838 = vmatprep.subr.mxu0 0.0
      %4839 = vmatpush1.xpose.msra.mxu0 0.0
      %4840 = vmatprep.subr.mxu0 0.0
      %4841 = vmatpush1.xpose.msra.mxu0 0.0
      %4842 = vmatprep.subr.mxu0 0.0
      %4843 = vmatpush1.xpose.msra.mxu0 0.0
      %4844 = vmatprep.subr.mxu0 0.0
      %4845 = vmatpush1.xpose.msra.mxu0 0.0
      %4846 = vmatprep.subr.mxu0 0.0
      %4847 = vmatpush1.xpose.msra.mxu0 0.0
      %4848 = vmatprep.subr.mxu0 0.0
      %4849 = vmatpush1.xpose.msra.mxu0 0.0
      %4850 = vmatprep.subr.mxu0 0.0
      %4851 = vmatpush1.xpose.msra.mxu0 0.0
      %4852 = vmatprep.subr.mxu0 0.0
      %4853 = vmatpush1.xpose.msra.mxu0 %v4826
      %4854 = vmatprep.subr.mxu0 0.0
      %4855 = vmatpush1.xpose.msra.mxu0 %v4823
      %4856 = vmatprep.subr.mxu0 0.0
      %4857 = vmatpush1.xpose.msra.mxu0 %v4820
      %4858 = vmatprep.subr.mxu0 0.0
      %4859 = vmatpush1.xpose.msra.mxu0 %v4817
      %4860 = vmatprep.subr.mxu0 0.0
      %4861 = vmatpush2.xpose.msra.mxu0 0.0
      %4862 = vmatprep.subr.mxu0 0.0
      %4863 = vmatpush2.xpose.msra.mxu0 0.0
      %4864 = vmatprep.subr.mxu0 0.0
      %4865 = vmatpush2.xpose.msra.mxu0 0.0
      %4866 = vmatprep.subr.mxu0 0.0
      %4867 = vmatpush2.xpose.msra.mxu0 0.0
      %4868 = vmatprep.subr.mxu0 0.0
      %4869 = vmatpush2.xpose.msra.mxu0 0.0
      %4870 = vmatprep.subr.mxu0 0.0
      %4871 = vmatpush2.xpose.msra.mxu0 0.0
      %4872 = vmatprep.subr.mxu0 0.0
      %4873 = vmatpush2.xpose.msra.mxu0 0.0
      %4874 = vmatprep.subr.mxu0 0.0
      %4875 = vmatpush2.xpose.msra.mxu0 0.0
      %4876 = vmatprep.subr.mxu0 0.0
      %4877 = vmatpush2.xpose.msra.mxu0 0.0
      %4878 = vmatprep.subr.mxu0 0.0
      %4879 = vmatpush2.xpose.msra.mxu0 0.0
      %4880 = vmatprep.subr.mxu0 0.0
      %4881 = vmatpush2.xpose.msra.mxu0 0.0
      %4882 = vmatprep.subr.mxu0 0.0
      %4883 = vmatpush2.xpose.msra.mxu0 0.0
      %4884 = vmatprep.subr.mxu0 0.0
      %4885 = vmatpush2.xpose.msra.mxu0 0.0
      %4886 = vmatprep.subr.mxu0 0.0
      %4887 = vmatpush2.xpose.msra.mxu0 0.0
      %4888 = vmatprep.subr.mxu0 0.0
      %4889 = vmatpush2.xpose.msra.mxu0 0.0
      %4890 = vmatprep.subr.mxu0 0.0
      %4891 = vmatpush2.xpose.msra.mxu0 0.0
      %4892 = vmatprep.mubr.f32.mxu0 0.0
      %4893 = vmatmul.mubr.f32.gmra.mxu0 %v4811
      %v4894 = vpop.f32.mrf.mxu0
      %v4895 = vadd.f32 0.0, %v4894
      %v4896 = vpop.f32.mrf.mxu0
      %4897 = vmatprep.mubr.f32.mxu0 0.0
      %4898 = vmatmul.mubr.f32.gmra.mxu0 %v4814
      %v4899 = vpop.f32.mrf.mxu0
      %v4900 = vadd.f32 0.0, %v4899
      %v4901 = vpop.f32.mrf.mxu0
      %4902 = vdwg.mxu0
      %v4903 = vmul.f32 %v4895, 0.35355338
      %v4904 = vmul.f32 %v4900, 0.35355338
      %v4905 = vsel %vm1231, %v4903, -inf
      %4906 = vmax.xlane.f32.xlu0 %v4905
      %v4907 = vpop.xlane.xlu0 %4906
      %v4908 = vsel %vm1231, %v4904, -inf
      %4909 = vmax.xlane.f32.xlu0 %v4908
      %v4910 = vpop.xlane.xlu0 %4909
      %v4911 = vsub.f32 %v4903, %v4907
      %v4912 = vsub.f32 %v4904, %v4910
      %v4913 = vmul.f32 %v4911, 1.442695
      %v4914 = vpow.pop %v4913
      %v4915 = vmul.f32 %v4912, 1.442695
      %v4916 = vpow.pop %v4915
      %v4917 = vsel %vm1231, %v4914, 0.0
      %4918 = vadd.xlane.f32.xlu0 %v4917
      %v4919 = vpop.xlane.xlu0 %4918
      %v4920 = vsel %vm1231, %v4916, 0.0
      %4921 = vadd.xlane.f32.xlu0 %v4920
      %v4922 = vpop.xlane.xlu0 %4921
      %v4923 = vrcp.pop %v4919
      %v4924 = vrcp.pop %v4922
      %v4925 = vmul.f32 %v4914, %v4923
      %v4926 = vmul.f32 %v4916, %v4924
      %4927 = vrot.lane.b32.xlu0 %v4787, 96
      %v4928 = vpop.permute.xlu0 %4927
      %4929 = vrot.lane.b32.xlu0 %v4792, 96
      %v4930 = vpop.permute.xlu0 %4929
      %4931 = vrot.lane.b32.xlu0 %v4797, 96
      %v4932 = vpop.permute.xlu0 %4931
      %4933 = vrot.lane.b32.xlu0 %v4802, 96
      %v4934 = vpop.permute.xlu0 %4933
      %v4940 = vsel %vm1231, %v4925, 0
      %v4943 = vsel %vm1231, %v4926, 0
      %4945 = vmatprep.subr.mxu0 0.0
      %4946 = vmatpush1.msra.mxu0 0.0
      %4947 = vmatprep.subr.mxu0 0.0
      %4948 = vmatpush1.msra.mxu0 0.0
      %4949 = vmatprep.subr.mxu0 0.0
      %4950 = vmatpush1.msra.mxu0 0.0
      %4951 = vmatprep.subr.mxu0 0.0
      %4952 = vmatpush1.msra.mxu0 0.0
      %4953 = vmatprep.subr.mxu0 0.0
      %4954 = vmatpush1.msra.mxu0 0.0
      %4955 = vmatprep.subr.mxu0 0.0
      %4956 = vmatpush1.msra.mxu0 0.0
      %4957 = vmatprep.subr.mxu0 0.0
      %4958 = vmatpush1.msra.mxu0 0.0
      %4959 = vmatprep.subr.mxu0 0.0
      %4960 = vmatpush1.msra.mxu0 0.0
      %4961 = vmatprep.subr.mxu0 0.0
      %4962 = vmatpush1.msra.mxu0 0.0
      %4963 = vmatprep.subr.mxu0 0.0
      %4964 = vmatpush1.msra.mxu0 0.0
      %4965 = vmatprep.subr.mxu0 0.0
      %4966 = vmatpush1.msra.mxu0 0.0
      %4967 = vmatprep.subr.mxu0 0.0
      %4968 = vmatpush1.msra.mxu0 0.0
      %4969 = vmatprep.subr.mxu0 0.0
      %4970 = vmatpush1.msra.mxu0 %v4934
      %4971 = vmatprep.subr.mxu0 0.0
      %4972 = vmatpush1.msra.mxu0 %v4932
      %4973 = vmatprep.subr.mxu0 0.0
      %4974 = vmatpush1.msra.mxu0 %v4930
      %4975 = vmatprep.subr.mxu0 0.0
      %4976 = vmatpush1.msra.mxu0 %v4928
      %4977 = vmatprep.subr.mxu0 0.0
      %4978 = vmatpush2.msra.mxu0 0.0
      %4979 = vmatprep.subr.mxu0 0.0
      %4980 = vmatpush2.msra.mxu0 0.0
      %4981 = vmatprep.subr.mxu0 0.0
      %4982 = vmatpush2.msra.mxu0 0.0
      %4983 = vmatprep.subr.mxu0 0.0
      %4984 = vmatpush2.msra.mxu0 0.0
      %4985 = vmatprep.subr.mxu0 0.0
      %4986 = vmatpush2.msra.mxu0 0.0
      %4987 = vmatprep.subr.mxu0 0.0
      %4988 = vmatpush2.msra.mxu0 0.0
      %4989 = vmatprep.subr.mxu0 0.0
      %4990 = vmatpush2.msra.mxu0 0.0
      %4991 = vmatprep.subr.mxu0 0.0
      %4992 = vmatpush2.msra.mxu0 0.0
      %4993 = vmatprep.subr.mxu0 0.0
      %4994 = vmatpush2.msra.mxu0 0.0
      %4995 = vmatprep.subr.mxu0 0.0
      %4996 = vmatpush2.msra.mxu0 0.0
      %4997 = vmatprep.subr.mxu0 0.0
      %4998 = vmatpush2.msra.mxu0 0.0
      %4999 = vmatprep.subr.mxu0 0.0
      %5000 = vmatpush2.msra.mxu0 0.0
      %5001 = vmatprep.subr.mxu0 0.0
      %5002 = vmatpush2.msra.mxu0 0.0
      %5003 = vmatprep.subr.mxu0 0.0
      %5004 = vmatpush2.msra.mxu0 0.0
      %5005 = vmatprep.subr.mxu0 0.0
      %5006 = vmatpush2.msra.mxu0 0.0
      %5007 = vmatprep.subr.mxu0 0.0
      %5008 = vmatpush2.msra.mxu0 0.0
      %5009 = vmatprep.mubr.f32.mxu0 0.0
      %5010 = vmatmul.mubr.f32.gmra.mxu0 %v4940
      %v5011 = vpop.f32.mrf.mxu0
      %v5012 = vadd.f32 0.0, %v5011
      %v5013 = vpop.f32.mrf.mxu0
      %5014 = vmatprep.mubr.f32.mxu0 0.0
      %5015 = vmatmul.mubr.f32.gmra.mxu0 %v4943
      %v5016 = vpop.f32.mrf.mxu0
      %v5017 = vadd.f32 0.0, %v5016
      %v5018 = vpop.f32.mrf.mxu0
      %5019 = vdwg.mxu0
      %5020 = vrot.lane.b32.xlu0 %v4699, 120
      %v5021 = vpop.permute.xlu0 %5020
      %5022 = vrot.lane.b32.xlu0 %v4704, 120
      %v5023 = vpop.permute.xlu0 %5022
      %5024 = vrot.lane.b32.xlu0 %v4787, 120
      %v5025 = vpop.permute.xlu0 %5024
      %5026 = vrot.lane.b32.xlu0 %v4792, 120
      %v5027 = vpop.permute.xlu0 %5026
      %5028 = vrot.lane.b32.xlu0 %v4797, 120
      %v5029 = vpop.permute.xlu0 %5028
      %5030 = vrot.lane.b32.xlu0 %v4802, 120
      %v5031 = vpop.permute.xlu0 %5030
      %v5032 = vsel %vm1722, %v5021, 0
      %v5034 = vsel %vm1722, %v5023, 0
      %v5036 = vsel %vm1722, %v5025, 0
      %v5038 = vsel %vm1722, %v5027, 0
      %v5040 = vsel %vm1722, %v5029, 0
      %v5042 = vsel %vm1722, %v5031, 0
      %5044 = vmatprep.subr.mxu0 0.0
      %5045 = vmatpush1.xpose.msra.mxu0 0.0
      %5046 = vmatprep.subr.mxu0 0.0
      %5047 = vmatpush1.xpose.msra.mxu0 0.0
      %5048 = vmatprep.subr.mxu0 0.0
      %5049 = vmatpush1.xpose.msra.mxu0 0.0
      %5050 = vmatprep.subr.mxu0 0.0
      %5051 = vmatpush1.xpose.msra.mxu0 0.0
      %5052 = vmatprep.subr.mxu0 0.0
      %5053 = vmatpush1.xpose.msra.mxu0 0.0
      %5054 = vmatprep.subr.mxu0 0.0
      %5055 = vmatpush1.xpose.msra.mxu0 0.0
      %5056 = vmatprep.subr.mxu0 0.0
      %5057 = vmatpush1.xpose.msra.mxu0 0.0
      %5058 = vmatprep.subr.mxu0 0.0
      %5059 = vmatpush1.xpose.msra.mxu0 0.0
      %5060 = vmatprep.subr.mxu0 0.0
      %5061 = vmatpush1.xpose.msra.mxu0 0.0
      %5062 = vmatprep.subr.mxu0 0.0
      %5063 = vmatpush1.xpose.msra.mxu0 0.0
      %5064 = vmatprep.subr.mxu0 0.0
      %5065 = vmatpush1.xpose.msra.mxu0 0.0
      %5066 = vmatprep.subr.mxu0 0.0
      %5067 = vmatpush1.xpose.msra.mxu0 0.0
      %5068 = vmatprep.subr.mxu0 0.0
      %5069 = vmatpush1.xpose.msra.mxu0 %v5042
      %5070 = vmatprep.subr.mxu0 0.0
      %5071 = vmatpush1.xpose.msra.mxu0 %v5040
      %5072 = vmatprep.subr.mxu0 0.0
      %5073 = vmatpush1.xpose.msra.mxu0 %v5038
      %5074 = vmatprep.subr.mxu0 0.0
      %5075 = vmatpush1.xpose.msra.mxu0 %v5036
      %5076 = vmatprep.subr.mxu0 0.0
      %5077 = vmatpush2.xpose.msra.mxu0 0.0
      %5078 = vmatprep.subr.mxu0 0.0
      %5079 = vmatpush2.xpose.msra.mxu0 0.0
      %5080 = vmatprep.subr.mxu0 0.0
      %5081 = vmatpush2.xpose.msra.mxu0 0.0
      %5082 = vmatprep.subr.mxu0 0.0
      %5083 = vmatpush2.xpose.msra.mxu0 0.0
      %5084 = vmatprep.subr.mxu0 0.0
      %5085 = vmatpush2.xpose.msra.mxu0 0.0
      %5086 = vmatprep.subr.mxu0 0.0
      %5087 = vmatpush2.xpose.msra.mxu0 0.0
      %5088 = vmatprep.subr.mxu0 0.0
      %5089 = vmatpush2.xpose.msra.mxu0 0.0
      %5090 = vmatprep.subr.mxu0 0.0
      %5091 = vmatpush2.xpose.msra.mxu0 0.0
      %5092 = vmatprep.subr.mxu0 0.0
      %5093 = vmatpush2.xpose.msra.mxu0 0.0
      %5094 = vmatprep.subr.mxu0 0.0
      %5095 = vmatpush2.xpose.msra.mxu0 0.0
      %5096 = vmatprep.subr.mxu0 0.0
      %5097 = vmatpush2.xpose.msra.mxu0 0.0
      %5098 = vmatprep.subr.mxu0 0.0
      %5099 = vmatpush2.xpose.msra.mxu0 0.0
      %5100 = vmatprep.subr.mxu0 0.0
      %5101 = vmatpush2.xpose.msra.mxu0 0.0
      %5102 = vmatprep.subr.mxu0 0.0
      %5103 = vmatpush2.xpose.msra.mxu0 0.0
      %5104 = vmatprep.subr.mxu0 0.0
      %5105 = vmatpush2.xpose.msra.mxu0 0.0
      %5106 = vmatprep.subr.mxu0 0.0
      %5107 = vmatpush2.xpose.msra.mxu0 0.0
      %5108 = vmatprep.mubr.f32.mxu0 0.0
      %5109 = vmatmul.mubr.f32.gmra.mxu0 %v5032
      %v5110 = vpop.f32.mrf.mxu0
      %v5111 = vadd.f32 0.0, %v5110
      %v5112 = vpop.f32.mrf.mxu0
      %5113 = vmatprep.mubr.f32.mxu0 0.0
      %5114 = vmatmul.mubr.f32.gmra.mxu0 %v5034
      %v5115 = vpop.f32.mrf.mxu0
      %v5116 = vadd.f32 0.0, %v5115
      %v5117 = vpop.f32.mrf.mxu0
      %5118 = vdwg.mxu0
      %v5119 = vmul.f32 %v5111, 0.35355338
      %v5120 = vmul.f32 %v5116, 0.35355338
      %v5121 = vsel %vm1231, %v5119, -inf
      %5122 = vmax.xlane.f32.xlu0 %v5121
      %v5123 = vpop.xlane.xlu0 %5122
      %v5124 = vsel %vm1231, %v5120, -inf
      %5125 = vmax.xlane.f32.xlu0 %v5124
      %v5126 = vpop.xlane.xlu0 %5125
      %v5127 = vsub.f32 %v5119, %v5123
      %v5128 = vsub.f32 %v5120, %v5126
      %v5129 = vmul.f32 %v5127, 1.442695
      %v5130 = vpow.pop %v5129
      %v5131 = vmul.f32 %v5128, 1.442695
      %v5132 = vpow.pop %v5131
      %v5133 = vsel %vm1231, %v5130, 0.0
      %5134 = vadd.xlane.f32.xlu0 %v5133
      %v5135 = vpop.xlane.xlu0 %5134
      %v5136 = vsel %vm1231, %v5132, 0.0
      %5137 = vadd.xlane.f32.xlu0 %v5136
      %v5138 = vpop.xlane.xlu0 %5137
      %v5139 = vrcp.pop %v5135
      %v5140 = vrcp.pop %v5138
      %v5141 = vmul.f32 %v5130, %v5139
      %v5142 = vmul.f32 %v5132, %v5140
      %5143 = vrot.lane.b32.xlu0 %v4787, 88
      %v5144 = vpop.permute.xlu0 %5143
      %5145 = vrot.lane.b32.xlu0 %v4792, 88
      %v5146 = vpop.permute.xlu0 %5145
      %5147 = vrot.lane.b32.xlu0 %v4797, 88
      %v5148 = vpop.permute.xlu0 %5147
      %5149 = vrot.lane.b32.xlu0 %v4802, 88
      %v5150 = vpop.permute.xlu0 %5149
      %v5156 = vsel %vm1231, %v5141, 0
      %v5159 = vsel %vm1231, %v5142, 0
      %5161 = vmatprep.subr.mxu0 0.0
      %5162 = vmatpush1.msra.mxu0 0.0
      %5163 = vmatprep.subr.mxu0 0.0
      %5164 = vmatpush1.msra.mxu0 0.0
      %5165 = vmatprep.subr.mxu0 0.0
      %5166 = vmatpush1.msra.mxu0 0.0
      %5167 = vmatprep.subr.mxu0 0.0
      %5168 = vmatpush1.msra.mxu0 0.0
      %5169 = vmatprep.subr.mxu0 0.0
      %5170 = vmatpush1.msra.mxu0 0.0
      %5171 = vmatprep.subr.mxu0 0.0
      %5172 = vmatpush1.msra.mxu0 0.0
      %5173 = vmatprep.subr.mxu0 0.0
      %5174 = vmatpush1.msra.mxu0 0.0
      %5175 = vmatprep.subr.mxu0 0.0
      %5176 = vmatpush1.msra.mxu0 0.0
      %5177 = vmatprep.subr.mxu0 0.0
      %5178 = vmatpush1.msra.mxu0 0.0
      %5179 = vmatprep.subr.mxu0 0.0
      %5180 = vmatpush1.msra.mxu0 0.0
      %5181 = vmatprep.subr.mxu0 0.0
      %5182 = vmatpush1.msra.mxu0 0.0
      %5183 = vmatprep.subr.mxu0 0.0
      %5184 = vmatpush1.msra.mxu0 0.0
      %5185 = vmatprep.subr.mxu0 0.0
      %5186 = vmatpush1.msra.mxu0 %v5150
      %5187 = vmatprep.subr.mxu0 0.0
      %5188 = vmatpush1.msra.mxu0 %v5148
      %5189 = vmatprep.subr.mxu0 0.0
      %5190 = vmatpush1.msra.mxu0 %v5146
      %5191 = vmatprep.subr.mxu0 0.0
      %5192 = vmatpush1.msra.mxu0 %v5144
      %5193 = vmatprep.subr.mxu0 0.0
      %5194 = vmatpush2.msra.mxu0 0.0
      %5195 = vmatprep.subr.mxu0 0.0
      %5196 = vmatpush2.msra.mxu0 0.0
      %5197 = vmatprep.subr.mxu0 0.0
      %5198 = vmatpush2.msra.mxu0 0.0
      %5199 = vmatprep.subr.mxu0 0.0
      %5200 = vmatpush2.msra.mxu0 0.0
      %5201 = vmatprep.subr.mxu0 0.0
      %5202 = vmatpush2.msra.mxu0 0.0
      %5203 = vmatprep.subr.mxu0 0.0
      %5204 = vmatpush2.msra.mxu0 0.0
      %5205 = vmatprep.subr.mxu0 0.0
      %5206 = vmatpush2.msra.mxu0 0.0
      %5207 = vmatprep.subr.mxu0 0.0
      %5208 = vmatpush2.msra.mxu0 0.0
      %5209 = vmatprep.subr.mxu0 0.0
      %5210 = vmatpush2.msra.mxu0 0.0
      %5211 = vmatprep.subr.mxu0 0.0
      %5212 = vmatpush2.msra.mxu0 0.0
      %5213 = vmatprep.subr.mxu0 0.0
      %5214 = vmatpush2.msra.mxu0 0.0
      %5215 = vmatprep.subr.mxu0 0.0
      %5216 = vmatpush2.msra.mxu0 0.0
      %5217 = vmatprep.subr.mxu0 0.0
      %5218 = vmatpush2.msra.mxu0 0.0
      %5219 = vmatprep.subr.mxu0 0.0
      %5220 = vmatpush2.msra.mxu0 0.0
      %5221 = vmatprep.subr.mxu0 0.0
      %5222 = vmatpush2.msra.mxu0 0.0
      %5223 = vmatprep.subr.mxu0 0.0
      %5224 = vmatpush2.msra.mxu0 0.0
      %5225 = vmatprep.mubr.f32.mxu0 0.0
      %5226 = vmatmul.mubr.f32.gmra.mxu0 %v5156
      %v5227 = vpop.f32.mrf.mxu0
      %v5228 = vadd.f32 0.0, %v5227
      %v5229 = vpop.f32.mrf.mxu0
      %5230 = vmatprep.mubr.f32.mxu0 0.0
      %5231 = vmatmul.mubr.f32.gmra.mxu0 %v5159
      %v5232 = vpop.f32.mrf.mxu0
      %v5233 = vadd.f32 0.0, %v5232
      %v5234 = vpop.f32.mrf.mxu0
      %5235 = vdwg.mxu0
      %v5237 = vsel %vm1722, %v5228, 0
      %v5240 = vsel %vm1722, %v5233, 0
      %5242 = vmatprep.subr.mxu0 0.0
      %5243 = vmatpush1.msra.mxu0 0.0
      %5244 = vmatprep.subr.mxu0 0.0
      %5245 = vmatpush1.msra.mxu0 0.0
      %5246 = vmatprep.subr.mxu0 0.0
      %5247 = vmatpush1.msra.mxu0 0.0
      %5248 = vmatprep.subr.mxu0 0.0
      %5249 = vmatpush1.msra.mxu0 0.0
      %5250 = vmatprep.subr.mxu0 0.0
      %5251 = vmatpush1.msra.mxu0 0.0
      %5252 = vmatprep.subr.mxu0 0.0
      %5253 = vmatpush1.msra.mxu0 0.0
      %5254 = vmatprep.subr.mxu0 0.0
      %5255 = vmatpush1.msra.mxu0 0.0
      %5256 = vmatprep.subr.mxu0 0.0
      %5257 = vmatpush1.msra.mxu0 0.0
      %5258 = vmatprep.subr.mxu0 0.0
      %5259 = vmatpush1.msra.mxu0 0.0
      %5260 = vmatprep.subr.mxu0 0.0
      %5261 = vmatpush1.msra.mxu0 0.0
      %5262 = vmatprep.subr.mxu0 0.0
      %5263 = vmatpush1.msra.mxu0 0.0
      %5264 = vmatprep.subr.mxu0 0.0
      %5265 = vmatpush1.msra.mxu0 0.0
      %5266 = vmatprep.subr.mxu0 0.0
      %5267 = vmatpush1.msra.mxu0 0.0
      %5268 = vmatprep.subr.mxu0 0.0
      %5269 = vmatpush1.msra.mxu0 0.0
      %5270 = vmatprep.subr.mxu0 0.0
      %5271 = vmatpush1.msra.mxu0 0.0
      %5272 = vmatprep.subr.mxu0 0.0
      %5273 = vmatpush1.msra.mxu0 %v4807
      %5274 = vmatprep.subr.mxu0 0.0
      %5275 = vmatpush2.msra.mxu0 0.0
      %5276 = vmatprep.subr.mxu0 0.0
      %5277 = vmatpush2.msra.mxu0 0.0
      %5278 = vmatprep.subr.mxu0 0.0
      %5279 = vmatpush2.msra.mxu0 0.0
      %5280 = vmatprep.subr.mxu0 0.0
      %5281 = vmatpush2.msra.mxu0 0.0
      %5282 = vmatprep.subr.mxu0 0.0
      %5283 = vmatpush2.msra.mxu0 0.0
      %5284 = vmatprep.subr.mxu0 0.0
      %5285 = vmatpush2.msra.mxu0 0.0
      %5286 = vmatprep.subr.mxu0 0.0
      %5287 = vmatpush2.msra.mxu0 0.0
      %5288 = vmatprep.subr.mxu0 0.0
      %5289 = vmatpush2.msra.mxu0 0.0
      %5290 = vmatprep.subr.mxu0 0.0
      %5291 = vmatpush2.msra.mxu0 0.0
      %5292 = vmatprep.subr.mxu0 0.0
      %5293 = vmatpush2.msra.mxu0 0.0
      %5294 = vmatprep.subr.mxu0 0.0
      %5295 = vmatpush2.msra.mxu0 0.0
      %5296 = vmatprep.subr.mxu0 0.0
      %5297 = vmatpush2.msra.mxu0 0.0
      %5298 = vmatprep.subr.mxu0 0.0
      %5299 = vmatpush2.msra.mxu0 0.0
      %5300 = vmatprep.subr.mxu0 0.0
      %5301 = vmatpush2.msra.mxu0 0.0
      %5302 = vmatprep.subr.mxu0 0.0
      %5303 = vmatpush2.msra.mxu0 0.0
      %5304 = vmatprep.subr.mxu0 0.0
      %5305 = vmatpush2.msra.mxu0 0.0
      %5306 = vmatprep.mubr.f32.mxu0 0.0
      %5307 = vmatmul.mubr.f32.gmra.mxu0 %v5237
      %v5308 = vpop.f32.mrf.mxu0
      %v5309 = vadd.f32 0.0, %v5308
      %v5310 = vpop.f32.mrf.mxu0
      %5311 = vmatprep.mubr.f32.mxu0 0.0
      %5312 = vmatmul.mubr.f32.gmra.mxu0 %v5240
      %v5313 = vpop.f32.mrf.mxu0
      %v5314 = vadd.f32 0.0, %v5313
      %v5315 = vpop.f32.mrf.mxu0
      %5316 = vdwg.mxu0
      %v5318 = vsel %vm1722, %v5012, 0
      %v5321 = vsel %vm1722, %v5017, 0
      %5323 = vmatprep.subr.mxu0 0.0
      %5324 = vmatpush1.msra.mxu0 0.0
      %5325 = vmatprep.subr.mxu0 0.0
      %5326 = vmatpush1.msra.mxu0 0.0
      %5327 = vmatprep.subr.mxu0 0.0
      %5328 = vmatpush1.msra.mxu0 0.0
      %5329 = vmatprep.subr.mxu0 0.0
      %5330 = vmatpush1.msra.mxu0 0.0
      %5331 = vmatprep.subr.mxu0 0.0
      %5332 = vmatpush1.msra.mxu0 0.0
      %5333 = vmatprep.subr.mxu0 0.0
      %5334 = vmatpush1.msra.mxu0 0.0
      %5335 = vmatprep.subr.mxu0 0.0
      %5336 = vmatpush1.msra.mxu0 0.0
      %5337 = vmatprep.subr.mxu0 0.0
      %5338 = vmatpush1.msra.mxu0 0.0
      %5339 = vmatprep.subr.mxu0 0.0
      %5340 = vmatpush1.msra.mxu0 0.0
      %5341 = vmatprep.subr.mxu0 0.0
      %5342 = vmatpush1.msra.mxu0 0.0
      %5343 = vmatprep.subr.mxu0 0.0
      %5344 = vmatpush1.msra.mxu0 0.0
      %5345 = vmatprep.subr.mxu0 0.0
      %5346 = vmatpush1.msra.mxu0 0.0
      %5347 = vmatprep.subr.mxu0 0.0
      %5348 = vmatpush1.msra.mxu0 0.0
      %5349 = vmatprep.subr.mxu0 0.0
      %5350 = vmatpush1.msra.mxu0 0.0
      %5351 = vmatprep.subr.mxu0 0.0
      %5352 = vmatpush1.msra.mxu0 0.0
      %5353 = vmatprep.subr.mxu0 0.0
      %5354 = vmatpush1.msra.mxu0 %v4806
      %5355 = vmatprep.subr.mxu0 0.0
      %5356 = vmatpush2.msra.mxu0 0.0
      %5357 = vmatprep.subr.mxu0 0.0
      %5358 = vmatpush2.msra.mxu0 0.0
      %5359 = vmatprep.subr.mxu0 0.0
      %5360 = vmatpush2.msra.mxu0 0.0
      %5361 = vmatprep.subr.mxu0 0.0
      %5362 = vmatpush2.msra.mxu0 0.0
      %5363 = vmatprep.subr.mxu0 0.0
      %5364 = vmatpush2.msra.mxu0 0.0
      %5365 = vmatprep.subr.mxu0 0.0
      %5366 = vmatpush2.msra.mxu0 0.0
      %5367 = vmatprep.subr.mxu0 0.0
      %5368 = vmatpush2.msra.mxu0 0.0
      %5369 = vmatprep.subr.mxu0 0.0
      %5370 = vmatpush2.msra.mxu0 0.0
      %5371 = vmatprep.subr.mxu0 0.0
      %5372 = vmatpush2.msra.mxu0 0.0
      %5373 = vmatprep.subr.mxu0 0.0
      %5374 = vmatpush2.msra.mxu0 0.0
      %5375 = vmatprep.subr.mxu0 0.0
      %5376 = vmatpush2.msra.mxu0 0.0
      %5377 = vmatprep.subr.mxu0 0.0
      %5378 = vmatpush2.msra.mxu0 0.0
      %5379 = vmatprep.subr.mxu0 0.0
      %5380 = vmatpush2.msra.mxu0 0.0
      %5381 = vmatprep.subr.mxu0 0.0
      %5382 = vmatpush2.msra.mxu0 0.0
      %5383 = vmatprep.subr.mxu0 0.0
      %5384 = vmatpush2.msra.mxu0 0.0
      %5385 = vmatprep.subr.mxu0 0.0
      %5386 = vmatpush2.msra.mxu0 0.0
      %5387 = vmatprep.mubr.f32.mxu0 0.0
      %5388 = vmatmul.mubr.f32.gmra.mxu0 %v5318
      %v5389 = vpop.f32.mrf.mxu0
      %v5390 = vadd.f32 %v5309, %v5389
      %v5391 = vpop.f32.mrf.mxu0
      %5392 = vmatprep.mubr.f32.mxu0 0.0
      %5393 = vmatmul.mubr.f32.gmra.mxu0 %v5321
      %v5394 = vpop.f32.mrf.mxu0
      %v5395 = vadd.f32 %v5314, %v5394
      %v5396 = vpop.f32.mrf.mxu0
      %5397 = vdwg.mxu0
      %5398 = vrot.lane.b32.xlu0 %v4699, 112
      %v5399 = vpop.permute.xlu0 %5398
      %5400 = vrot.lane.b32.xlu0 %v4704, 112
      %v5401 = vpop.permute.xlu0 %5400
      %5402 = vrot.lane.b32.xlu0 %v4787, 112
      %v5403 = vpop.permute.xlu0 %5402
      %5404 = vrot.lane.b32.xlu0 %v4792, 112
      %v5405 = vpop.permute.xlu0 %5404
      %5406 = vrot.lane.b32.xlu0 %v4797, 112
      %v5407 = vpop.permute.xlu0 %5406
      %5408 = vrot.lane.b32.xlu0 %v4802, 112
      %v5409 = vpop.permute.xlu0 %5408
      %v5410 = vsel %vm1722, %v5399, 0
      %v5412 = vsel %vm1722, %v5401, 0
      %v5414 = vsel %vm1722, %v5403, 0
      %v5416 = vsel %vm1722, %v5405, 0
      %v5418 = vsel %vm1722, %v5407, 0
      %v5420 = vsel %vm1722, %v5409, 0
      %5422 = vmatprep.subr.mxu0 0.0
      %5423 = vmatpush1.xpose.msra.mxu0 0.0
      %5424 = vmatprep.subr.mxu0 0.0
      %5425 = vmatpush1.xpose.msra.mxu0 0.0
      %5426 = vmatprep.subr.mxu0 0.0
      %5427 = vmatpush1.xpose.msra.mxu0 0.0
      %5428 = vmatprep.subr.mxu0 0.0
      %5429 = vmatpush1.xpose.msra.mxu0 0.0
      %5430 = vmatprep.subr.mxu0 0.0
      %5431 = vmatpush1.xpose.msra.mxu0 0.0
      %5432 = vmatprep.subr.mxu0 0.0
      %5433 = vmatpush1.xpose.msra.mxu0 0.0
      %5434 = vmatprep.subr.mxu0 0.0
      %5435 = vmatpush1.xpose.msra.mxu0 0.0
      %5436 = vmatprep.subr.mxu0 0.0
      %5437 = vmatpush1.xpose.msra.mxu0 0.0
      %5438 = vmatprep.subr.mxu0 0.0
      %5439 = vmatpush1.xpose.msra.mxu0 0.0
      %5440 = vmatprep.subr.mxu0 0.0
      %5441 = vmatpush1.xpose.msra.mxu0 0.0
      %5442 = vmatprep.subr.mxu0 0.0
      %5443 = vmatpush1.xpose.msra.mxu0 0.0
      %5444 = vmatprep.subr.mxu0 0.0
      %5445 = vmatpush1.xpose.msra.mxu0 0.0
      %5446 = vmatprep.subr.mxu0 0.0
      %5447 = vmatpush1.xpose.msra.mxu0 %v5420
      %5448 = vmatprep.subr.mxu0 0.0
      %5449 = vmatpush1.xpose.msra.mxu0 %v5418
      %5450 = vmatprep.subr.mxu0 0.0
      %5451 = vmatpush1.xpose.msra.mxu0 %v5416
      %5452 = vmatprep.subr.mxu0 0.0
      %5453 = vmatpush1.xpose.msra.mxu0 %v5414
      %5454 = vmatprep.subr.mxu0 0.0
      %5455 = vmatpush2.xpose.msra.mxu0 0.0
      %5456 = vmatprep.subr.mxu0 0.0
      %5457 = vmatpush2.xpose.msra.mxu0 0.0
      %5458 = vmatprep.subr.mxu0 0.0
      %5459 = vmatpush2.xpose.msra.mxu0 0.0
      %5460 = vmatprep.subr.mxu0 0.0
      %5461 = vmatpush2.xpose.msra.mxu0 0.0
      %5462 = vmatprep.subr.mxu0 0.0
      %5463 = vmatpush2.xpose.msra.mxu0 0.0
      %5464 = vmatprep.subr.mxu0 0.0
      %5465 = vmatpush2.xpose.msra.mxu0 0.0
      %5466 = vmatprep.subr.mxu0 0.0
      %5467 = vmatpush2.xpose.msra.mxu0 0.0
      %5468 = vmatprep.subr.mxu0 0.0
      %5469 = vmatpush2.xpose.msra.mxu0 0.0
      %5470 = vmatprep.subr.mxu0 0.0
      %5471 = vmatpush2.xpose.msra.mxu0 0.0
      %5472 = vmatprep.subr.mxu0 0.0
      %5473 = vmatpush2.xpose.msra.mxu0 0.0
      %5474 = vmatprep.subr.mxu0 0.0
      %5475 = vmatpush2.xpose.msra.mxu0 0.0
      %5476 = vmatprep.subr.mxu0 0.0
      %5477 = vmatpush2.xpose.msra.mxu0 0.0
      %5478 = vmatprep.subr.mxu0 0.0
      %5479 = vmatpush2.xpose.msra.mxu0 0.0
      %5480 = vmatprep.subr.mxu0 0.0
      %5481 = vmatpush2.xpose.msra.mxu0 0.0
      %5482 = vmatprep.subr.mxu0 0.0
      %5483 = vmatpush2.xpose.msra.mxu0 0.0
      %5484 = vmatprep.subr.mxu0 0.0
      %5485 = vmatpush2.xpose.msra.mxu0 0.0
      %5486 = vmatprep.mubr.f32.mxu0 0.0
      %5487 = vmatmul.mubr.f32.gmra.mxu0 %v5410
      %v5488 = vpop.f32.mrf.mxu0
      %v5489 = vadd.f32 0.0, %v5488
      %v5490 = vpop.f32.mrf.mxu0
      %5491 = vmatprep.mubr.f32.mxu0 0.0
      %5492 = vmatmul.mubr.f32.gmra.mxu0 %v5412
      %v5493 = vpop.f32.mrf.mxu0
      %v5494 = vadd.f32 0.0, %v5493
      %v5495 = vpop.f32.mrf.mxu0
      %5496 = vdwg.mxu0
      %v5497 = vmul.f32 %v5489, 0.35355338
      %v5498 = vmul.f32 %v5494, 0.35355338
      %v5499 = vsel %vm1231, %v5497, -inf
      %5500 = vmax.xlane.f32.xlu0 %v5499
      %v5501 = vpop.xlane.xlu0 %5500
      %v5502 = vsel %vm1231, %v5498, -inf
      %5503 = vmax.xlane.f32.xlu0 %v5502
      %v5504 = vpop.xlane.xlu0 %5503
      %v5505 = vsub.f32 %v5497, %v5501
      %v5506 = vsub.f32 %v5498, %v5504
      %v5507 = vmul.f32 %v5505, 1.442695
      %v5508 = vpow.pop %v5507
      %v5509 = vmul.f32 %v5506, 1.442695
      %v5510 = vpow.pop %v5509
      %v5511 = vsel %vm1231, %v5508, 0.0
      %5512 = vadd.xlane.f32.xlu0 %v5511
      %v5513 = vpop.xlane.xlu0 %5512
      %v5514 = vsel %vm1231, %v5510, 0.0
      %5515 = vadd.xlane.f32.xlu0 %v5514
      %v5516 = vpop.xlane.xlu0 %5515
      %v5517 = vrcp.pop %v5513
      %v5518 = vrcp.pop %v5516
      %v5519 = vmul.f32 %v5508, %v5517
      %v5520 = vmul.f32 %v5510, %v5518
      %5521 = vrot.lane.b32.xlu0 %v4787, 80
      %v5522 = vpop.permute.xlu0 %5521
      %5523 = vrot.lane.b32.xlu0 %v4792, 80
      %v5524 = vpop.permute.xlu0 %5523
      %5525 = vrot.lane.b32.xlu0 %v4797, 80
      %v5526 = vpop.permute.xlu0 %5525
      %5527 = vrot.lane.b32.xlu0 %v4802, 80
      %v5528 = vpop.permute.xlu0 %5527
      %v5534 = vsel %vm1231, %v5519, 0
      %v5537 = vsel %vm1231, %v5520, 0
      %5539 = vmatprep.subr.mxu0 0.0
      %5540 = vmatpush1.msra.mxu0 0.0
      %5541 = vmatprep.subr.mxu0 0.0
      %5542 = vmatpush1.msra.mxu0 0.0
      %5543 = vmatprep.subr.mxu0 0.0
      %5544 = vmatpush1.msra.mxu0 0.0
      %5545 = vmatprep.subr.mxu0 0.0
      %5546 = vmatpush1.msra.mxu0 0.0
      %5547 = vmatprep.subr.mxu0 0.0
      %5548 = vmatpush1.msra.mxu0 0.0
      %5549 = vmatprep.subr.mxu0 0.0
      %5550 = vmatpush1.msra.mxu0 0.0
      %5551 = vmatprep.subr.mxu0 0.0
      %5552 = vmatpush1.msra.mxu0 0.0
      %5553 = vmatprep.subr.mxu0 0.0
      %5554 = vmatpush1.msra.mxu0 0.0
      %5555 = vmatprep.subr.mxu0 0.0
      %5556 = vmatpush1.msra.mxu0 0.0
      %5557 = vmatprep.subr.mxu0 0.0
      %5558 = vmatpush1.msra.mxu0 0.0
      %5559 = vmatprep.subr.mxu0 0.0
      %5560 = vmatpush1.msra.mxu0 0.0
      %5561 = vmatprep.subr.mxu0 0.0
      %5562 = vmatpush1.msra.mxu0 0.0
      %5563 = vmatprep.subr.mxu0 0.0
      %5564 = vmatpush1.msra.mxu0 %v5528
      %5565 = vmatprep.subr.mxu0 0.0
      %5566 = vmatpush1.msra.mxu0 %v5526
      %5567 = vmatprep.subr.mxu0 0.0
      %5568 = vmatpush1.msra.mxu0 %v5524
      %5569 = vmatprep.subr.mxu0 0.0
      %5570 = vmatpush1.msra.mxu0 %v5522
      %5571 = vmatprep.subr.mxu0 0.0
      %5572 = vmatpush2.msra.mxu0 0.0
      %5573 = vmatprep.subr.mxu0 0.0
      %5574 = vmatpush2.msra.mxu0 0.0
      %5575 = vmatprep.subr.mxu0 0.0
      %5576 = vmatpush2.msra.mxu0 0.0
      %5577 = vmatprep.subr.mxu0 0.0
      %5578 = vmatpush2.msra.mxu0 0.0
      %5579 = vmatprep.subr.mxu0 0.0
      %5580 = vmatpush2.msra.mxu0 0.0
      %5581 = vmatprep.subr.mxu0 0.0
      %5582 = vmatpush2.msra.mxu0 0.0
      %5583 = vmatprep.subr.mxu0 0.0
      %5584 = vmatpush2.msra.mxu0 0.0
      %5585 = vmatprep.subr.mxu0 0.0
      %5586 = vmatpush2.msra.mxu0 0.0
      %5587 = vmatprep.subr.mxu0 0.0
      %5588 = vmatpush2.msra.mxu0 0.0
      %5589 = vmatprep.subr.mxu0 0.0
      %5590 = vmatpush2.msra.mxu0 0.0
      %5591 = vmatprep.subr.mxu0 0.0
      %5592 = vmatpush2.msra.mxu0 0.0
      %5593 = vmatprep.subr.mxu0 0.0
      %5594 = vmatpush2.msra.mxu0 0.0
      %5595 = vmatprep.subr.mxu0 0.0
      %5596 = vmatpush2.msra.mxu0 0.0
      %5597 = vmatprep.subr.mxu0 0.0
      %5598 = vmatpush2.msra.mxu0 0.0
      %5599 = vmatprep.subr.mxu0 0.0
      %5600 = vmatpush2.msra.mxu0 0.0
      %5601 = vmatprep.subr.mxu0 0.0
      %5602 = vmatpush2.msra.mxu0 0.0
      %5603 = vmatprep.mubr.f32.mxu0 0.0
      %5604 = vmatmul.mubr.f32.gmra.mxu0 %v5534
      %v5605 = vpop.f32.mrf.mxu0
      %v5606 = vadd.f32 0.0, %v5605
      %v5607 = vpop.f32.mrf.mxu0
      %5608 = vmatprep.mubr.f32.mxu0 0.0
      %5609 = vmatmul.mubr.f32.gmra.mxu0 %v5537
      %v5610 = vpop.f32.mrf.mxu0
      %v5611 = vadd.f32 0.0, %v5610
      %v5612 = vpop.f32.mrf.mxu0
      %5613 = vdwg.mxu0
      %v5615 = vsel %vm1722, %v5606, 0
      %v5618 = vsel %vm1722, %v5611, 0
      %5620 = vmatprep.subr.mxu0 0.0
      %5621 = vmatpush1.msra.mxu0 0.0
      %5622 = vmatprep.subr.mxu0 0.0
      %5623 = vmatpush1.msra.mxu0 0.0
      %5624 = vmatprep.subr.mxu0 0.0
      %5625 = vmatpush1.msra.mxu0 0.0
      %5626 = vmatprep.subr.mxu0 0.0
      %5627 = vmatpush1.msra.mxu0 0.0
      %5628 = vmatprep.subr.mxu0 0.0
      %5629 = vmatpush1.msra.mxu0 0.0
      %5630 = vmatprep.subr.mxu0 0.0
      %5631 = vmatpush1.msra.mxu0 0.0
      %5632 = vmatprep.subr.mxu0 0.0
      %5633 = vmatpush1.msra.mxu0 0.0
      %5634 = vmatprep.subr.mxu0 0.0
      %5635 = vmatpush1.msra.mxu0 0.0
      %5636 = vmatprep.subr.mxu0 0.0
      %5637 = vmatpush1.msra.mxu0 0.0
      %5638 = vmatprep.subr.mxu0 0.0
      %5639 = vmatpush1.msra.mxu0 0.0
      %5640 = vmatprep.subr.mxu0 0.0
      %5641 = vmatpush1.msra.mxu0 0.0
      %5642 = vmatprep.subr.mxu0 0.0
      %5643 = vmatpush1.msra.mxu0 0.0
      %5644 = vmatprep.subr.mxu0 0.0
      %5645 = vmatpush1.msra.mxu0 0.0
      %5646 = vmatprep.subr.mxu0 0.0
      %5647 = vmatpush1.msra.mxu0 0.0
      %5648 = vmatprep.subr.mxu0 0.0
      %5649 = vmatpush1.msra.mxu0 0.0
      %5650 = vmatprep.subr.mxu0 0.0
      %5651 = vmatpush1.msra.mxu0 %v4808
      %5652 = vmatprep.subr.mxu0 0.0
      %5653 = vmatpush2.msra.mxu0 0.0
      %5654 = vmatprep.subr.mxu0 0.0
      %5655 = vmatpush2.msra.mxu0 0.0
      %5656 = vmatprep.subr.mxu0 0.0
      %5657 = vmatpush2.msra.mxu0 0.0
      %5658 = vmatprep.subr.mxu0 0.0
      %5659 = vmatpush2.msra.mxu0 0.0
      %5660 = vmatprep.subr.mxu0 0.0
      %5661 = vmatpush2.msra.mxu0 0.0
      %5662 = vmatprep.subr.mxu0 0.0
      %5663 = vmatpush2.msra.mxu0 0.0
      %5664 = vmatprep.subr.mxu0 0.0
      %5665 = vmatpush2.msra.mxu0 0.0
      %5666 = vmatprep.subr.mxu0 0.0
      %5667 = vmatpush2.msra.mxu0 0.0
      %5668 = vmatprep.subr.mxu0 0.0
      %5669 = vmatpush2.msra.mxu0 0.0
      %5670 = vmatprep.subr.mxu0 0.0
      %5671 = vmatpush2.msra.mxu0 0.0
      %5672 = vmatprep.subr.mxu0 0.0
      %5673 = vmatpush2.msra.mxu0 0.0
      %5674 = vmatprep.subr.mxu0 0.0
      %5675 = vmatpush2.msra.mxu0 0.0
      %5676 = vmatprep.subr.mxu0 0.0
      %5677 = vmatpush2.msra.mxu0 0.0
      %5678 = vmatprep.subr.mxu0 0.0
      %5679 = vmatpush2.msra.mxu0 0.0
      %5680 = vmatprep.subr.mxu0 0.0
      %5681 = vmatpush2.msra.mxu0 0.0
      %5682 = vmatprep.subr.mxu0 0.0
      %5683 = vmatpush2.msra.mxu0 0.0
      %5684 = vmatprep.mubr.f32.mxu0 0.0
      %5685 = vmatmul.mubr.f32.gmra.mxu0 %v5615
      %v5686 = vpop.f32.mrf.mxu0
      %v5687 = vadd.f32 0.0, %v5686
      %v5688 = vpop.f32.mrf.mxu0
      %5689 = vmatprep.mubr.f32.mxu0 0.0
      %5690 = vmatmul.mubr.f32.gmra.mxu0 %v5618
      %v5691 = vpop.f32.mrf.mxu0
      %v5692 = vadd.f32 0.0, %v5691
      %v5693 = vpop.f32.mrf.mxu0
      %5694 = vdwg.mxu0
      %v5695 = vadd.f32 %v5390, %v5687
      %v5696 = vadd.f32 %v5395, %v5692
      %5697 = vrot.lane.b32.xlu0 %v4699, 104
      %v5698 = vpop.permute.xlu0 %5697
      %5699 = vrot.lane.b32.xlu0 %v4704, 104
      %v5700 = vpop.permute.xlu0 %5699
      %5701 = vrot.lane.b32.xlu0 %v4787, 104
      %v5702 = vpop.permute.xlu0 %5701
      %5703 = vrot.lane.b32.xlu0 %v4792, 104
      %v5704 = vpop.permute.xlu0 %5703
      %5705 = vrot.lane.b32.xlu0 %v4797, 104
      %v5706 = vpop.permute.xlu0 %5705
      %5707 = vrot.lane.b32.xlu0 %v4802, 104
      %v5708 = vpop.permute.xlu0 %5707
      %v5709 = vsel %vm1722, %v5698, 0
      %v5711 = vsel %vm1722, %v5700, 0
      %v5713 = vsel %vm1722, %v5702, 0
      %v5715 = vsel %vm1722, %v5704, 0
      %v5717 = vsel %vm1722, %v5706, 0
      %v5719 = vsel %vm1722, %v5708, 0
      %5721 = vmatprep.subr.mxu0 0.0
      %5722 = vmatpush1.xpose.msra.mxu0 0.0
      %5723 = vmatprep.subr.mxu0 0.0
      %5724 = vmatpush1.xpose.msra.mxu0 0.0
      %5725 = vmatprep.subr.mxu0 0.0
      %5726 = vmatpush1.xpose.msra.mxu0 0.0
      %5727 = vmatprep.subr.mxu0 0.0
      %5728 = vmatpush1.xpose.msra.mxu0 0.0
      %5729 = vmatprep.subr.mxu0 0.0
      %5730 = vmatpush1.xpose.msra.mxu0 0.0
      %5731 = vmatprep.subr.mxu0 0.0
      %5732 = vmatpush1.xpose.msra.mxu0 0.0
      %5733 = vmatprep.subr.mxu0 0.0
      %5734 = vmatpush1.xpose.msra.mxu0 0.0
      %5735 = vmatprep.subr.mxu0 0.0
      %5736 = vmatpush1.xpose.msra.mxu0 0.0
      %5737 = vmatprep.subr.mxu0 0.0
      %5738 = vmatpush1.xpose.msra.mxu0 0.0
      %5739 = vmatprep.subr.mxu0 0.0
      %5740 = vmatpush1.xpose.msra.mxu0 0.0
      %5741 = vmatprep.subr.mxu0 0.0
      %5742 = vmatpush1.xpose.msra.mxu0 0.0
      %5743 = vmatprep.subr.mxu0 0.0
      %5744 = vmatpush1.xpose.msra.mxu0 0.0
      %5745 = vmatprep.subr.mxu0 0.0
      %5746 = vmatpush1.xpose.msra.mxu0 %v5719
      %5747 = vmatprep.subr.mxu0 0.0
      %5748 = vmatpush1.xpose.msra.mxu0 %v5717
      %5749 = vmatprep.subr.mxu0 0.0
      %5750 = vmatpush1.xpose.msra.mxu0 %v5715
      %5751 = vmatprep.subr.mxu0 0.0
      %5752 = vmatpush1.xpose.msra.mxu0 %v5713
      %5753 = vmatprep.subr.mxu0 0.0
      %5754 = vmatpush2.xpose.msra.mxu0 0.0
      %5755 = vmatprep.subr.mxu0 0.0
      %5756 = vmatpush2.xpose.msra.mxu0 0.0
      %5757 = vmatprep.subr.mxu0 0.0
      %5758 = vmatpush2.xpose.msra.mxu0 0.0
      %5759 = vmatprep.subr.mxu0 0.0
      %5760 = vmatpush2.xpose.msra.mxu0 0.0
      %5761 = vmatprep.subr.mxu0 0.0
      %5762 = vmatpush2.xpose.msra.mxu0 0.0
      %5763 = vmatprep.subr.mxu0 0.0
      %5764 = vmatpush2.xpose.msra.mxu0 0.0
      %5765 = vmatprep.subr.mxu0 0.0
      %5766 = vmatpush2.xpose.msra.mxu0 0.0
      %5767 = vmatprep.subr.mxu0 0.0
      %5768 = vmatpush2.xpose.msra.mxu0 0.0
      %5769 = vmatprep.subr.mxu0 0.0
      %5770 = vmatpush2.xpose.msra.mxu0 0.0
      %5771 = vmatprep.subr.mxu0 0.0
      %5772 = vmatpush2.xpose.msra.mxu0 0.0
      %5773 = vmatprep.subr.mxu0 0.0
      %5774 = vmatpush2.xpose.msra.mxu0 0.0
      %5775 = vmatprep.subr.mxu0 0.0
      %5776 = vmatpush2.xpose.msra.mxu0 0.0
      %5777 = vmatprep.subr.mxu0 0.0
      %5778 = vmatpush2.xpose.msra.mxu0 0.0
      %5779 = vmatprep.subr.mxu0 0.0
      %5780 = vmatpush2.xpose.msra.mxu0 0.0
      %5781 = vmatprep.subr.mxu0 0.0
      %5782 = vmatpush2.xpose.msra.mxu0 0.0
      %5783 = vmatprep.subr.mxu0 0.0
      %5784 = vmatpush2.xpose.msra.mxu0 0.0
      %5785 = vmatprep.mubr.f32.mxu0 0.0
      %5786 = vmatmul.mubr.f32.gmra.mxu0 %v5709
      %v5787 = vpop.f32.mrf.mxu0
      %v5788 = vadd.f32 0.0, %v5787
      %v5789 = vpop.f32.mrf.mxu0
      %5790 = vmatprep.mubr.f32.mxu0 0.0
      %5791 = vmatmul.mubr.f32.gmra.mxu0 %v5711
      %v5792 = vpop.f32.mrf.mxu0
      %v5793 = vadd.f32 0.0, %v5792
      %v5794 = vpop.f32.mrf.mxu0
      %5795 = vdwg.mxu0
      %v5796 = vmul.f32 %v5788, 0.35355338
      %v5797 = vmul.f32 %v5793, 0.35355338
      %v5798 = vsel %vm1231, %v5796, -inf
      %5799 = vmax.xlane.f32.xlu0 %v5798
      %v5800 = vpop.xlane.xlu0 %5799
      %v5801 = vsel %vm1231, %v5797, -inf
      %5802 = vmax.xlane.f32.xlu0 %v5801
      %v5803 = vpop.xlane.xlu0 %5802
      %v5804 = vsub.f32 %v5796, %v5800
      %v5805 = vsub.f32 %v5797, %v5803
      %v5806 = vmul.f32 %v5804, 1.442695
      %v5807 = vpow.pop %v5806
      %v5808 = vmul.f32 %v5805, 1.442695
      %v5809 = vpow.pop %v5808
      %v5810 = vsel %vm1231, %v5807, 0.0
      %5811 = vadd.xlane.f32.xlu0 %v5810
      %v5812 = vpop.xlane.xlu0 %5811
      %v5813 = vsel %vm1231, %v5809, 0.0
      %5814 = vadd.xlane.f32.xlu0 %v5813
      %v5815 = vpop.xlane.xlu0 %5814
      %v5816 = vrcp.pop %v5812
      %v5817 = vrcp.pop %v5815
      %v5818 = vmul.f32 %v5807, %v5816
      %v5819 = vmul.f32 %v5809, %v5817
      %5820 = vrot.lane.b32.xlu0 %v4787, 72
      %v5821 = vpop.permute.xlu0 %5820
      %5822 = vrot.lane.b32.xlu0 %v4792, 72
      %v5823 = vpop.permute.xlu0 %5822
      %5824 = vrot.lane.b32.xlu0 %v4797, 72
      %v5825 = vpop.permute.xlu0 %5824
      %5826 = vrot.lane.b32.xlu0 %v4802, 72
      %v5827 = vpop.permute.xlu0 %5826
      %v5833 = vsel %vm1231, %v5818, 0
      %v5836 = vsel %vm1231, %v5819, 0
      %5838 = vmatprep.subr.mxu0 0.0
      %5839 = vmatpush1.msra.mxu0 0.0
      %5840 = vmatprep.subr.mxu0 0.0
      %5841 = vmatpush1.msra.mxu0 0.0
      %5842 = vmatprep.subr.mxu0 0.0
      %5843 = vmatpush1.msra.mxu0 0.0
      %5844 = vmatprep.subr.mxu0 0.0
      %5845 = vmatpush1.msra.mxu0 0.0
      %5846 = vmatprep.subr.mxu0 0.0
      %5847 = vmatpush1.msra.mxu0 0.0
      %5848 = vmatprep.subr.mxu0 0.0
      %5849 = vmatpush1.msra.mxu0 0.0
      %5850 = vmatprep.subr.mxu0 0.0
      %5851 = vmatpush1.msra.mxu0 0.0
      %5852 = vmatprep.subr.mxu0 0.0
      %5853 = vmatpush1.msra.mxu0 0.0
      %5854 = vmatprep.subr.mxu0 0.0
      %5855 = vmatpush1.msra.mxu0 0.0
      %5856 = vmatprep.subr.mxu0 0.0
      %5857 = vmatpush1.msra.mxu0 0.0
      %5858 = vmatprep.subr.mxu0 0.0
      %5859 = vmatpush1.msra.mxu0 0.0
      %5860 = vmatprep.subr.mxu0 0.0
      %5861 = vmatpush1.msra.mxu0 0.0
      %5862 = vmatprep.subr.mxu0 0.0
      %5863 = vmatpush1.msra.mxu0 %v5827
      %5864 = vmatprep.subr.mxu0 0.0
      %5865 = vmatpush1.msra.mxu0 %v5825
      %5866 = vmatprep.subr.mxu0 0.0
      %5867 = vmatpush1.msra.mxu0 %v5823
      %5868 = vmatprep.subr.mxu0 0.0
      %5869 = vmatpush1.msra.mxu0 %v5821
      %5870 = vmatprep.subr.mxu0 0.0
      %5871 = vmatpush2.msra.mxu0 0.0
      %5872 = vmatprep.subr.mxu0 0.0
      %5873 = vmatpush2.msra.mxu0 0.0
      %5874 = vmatprep.subr.mxu0 0.0
      %5875 = vmatpush2.msra.mxu0 0.0
      %5876 = vmatprep.subr.mxu0 0.0
      %5877 = vmatpush2.msra.mxu0 0.0
      %5878 = vmatprep.subr.mxu0 0.0
      %5879 = vmatpush2.msra.mxu0 0.0
      %5880 = vmatprep.subr.mxu0 0.0
      %5881 = vmatpush2.msra.mxu0 0.0
      %5882 = vmatprep.subr.mxu0 0.0
      %5883 = vmatpush2.msra.mxu0 0.0
      %5884 = vmatprep.subr.mxu0 0.0
      %5885 = vmatpush2.msra.mxu0 0.0
      %5886 = vmatprep.subr.mxu0 0.0
      %5887 = vmatpush2.msra.mxu0 0.0
      %5888 = vmatprep.subr.mxu0 0.0
      %5889 = vmatpush2.msra.mxu0 0.0
      %5890 = vmatprep.subr.mxu0 0.0
      %5891 = vmatpush2.msra.mxu0 0.0
      %5892 = vmatprep.subr.mxu0 0.0
      %5893 = vmatpush2.msra.mxu0 0.0
      %5894 = vmatprep.subr.mxu0 0.0
      %5895 = vmatpush2.msra.mxu0 0.0
      %5896 = vmatprep.subr.mxu0 0.0
      %5897 = vmatpush2.msra.mxu0 0.0
      %5898 = vmatprep.subr.mxu0 0.0
      %5899 = vmatpush2.msra.mxu0 0.0
      %5900 = vmatprep.subr.mxu0 0.0
      %5901 = vmatpush2.msra.mxu0 0.0
      %5902 = vmatprep.mubr.f32.mxu0 0.0
      %5903 = vmatmul.mubr.f32.gmra.mxu0 %v5833
      %v5904 = vpop.f32.mrf.mxu0
      %v5905 = vadd.f32 0.0, %v5904
      %v5906 = vpop.f32.mrf.mxu0
      %5907 = vmatprep.mubr.f32.mxu0 0.0
      %5908 = vmatmul.mubr.f32.gmra.mxu0 %v5836
      %v5909 = vpop.f32.mrf.mxu0
      %v5910 = vadd.f32 0.0, %v5909
      %v5911 = vpop.f32.mrf.mxu0
      %5912 = vdwg.mxu0
      %v5914 = vsel %vm1722, %v5905, 0
      %v5917 = vsel %vm1722, %v5910, 0
      %5919 = vmatprep.subr.mxu0 0.0
      %5920 = vmatpush1.msra.mxu0 0.0
      %5921 = vmatprep.subr.mxu0 0.0
      %5922 = vmatpush1.msra.mxu0 0.0
      %5923 = vmatprep.subr.mxu0 0.0
      %5924 = vmatpush1.msra.mxu0 0.0
      %5925 = vmatprep.subr.mxu0 0.0
      %5926 = vmatpush1.msra.mxu0 0.0
      %5927 = vmatprep.subr.mxu0 0.0
      %5928 = vmatpush1.msra.mxu0 0.0
      %5929 = vmatprep.subr.mxu0 0.0
      %5930 = vmatpush1.msra.mxu0 0.0
      %5931 = vmatprep.subr.mxu0 0.0
      %5932 = vmatpush1.msra.mxu0 0.0
      %5933 = vmatprep.subr.mxu0 0.0
      %5934 = vmatpush1.msra.mxu0 0.0
      %5935 = vmatprep.subr.mxu0 0.0
      %5936 = vmatpush1.msra.mxu0 0.0
      %5937 = vmatprep.subr.mxu0 0.0
      %5938 = vmatpush1.msra.mxu0 0.0
      %5939 = vmatprep.subr.mxu0 0.0
      %5940 = vmatpush1.msra.mxu0 0.0
      %5941 = vmatprep.subr.mxu0 0.0
      %5942 = vmatpush1.msra.mxu0 0.0
      %5943 = vmatprep.subr.mxu0 0.0
      %5944 = vmatpush1.msra.mxu0 0.0
      %5945 = vmatprep.subr.mxu0 0.0
      %5946 = vmatpush1.msra.mxu0 0.0
      %5947 = vmatprep.subr.mxu0 0.0
      %5948 = vmatpush1.msra.mxu0 0.0
      %5949 = vmatprep.subr.mxu0 0.0
      %5950 = vmatpush1.msra.mxu0 %v4809
      %5951 = vmatprep.subr.mxu0 0.0
      %5952 = vmatpush2.msra.mxu0 0.0
      %5953 = vmatprep.subr.mxu0 0.0
      %5954 = vmatpush2.msra.mxu0 0.0
      %5955 = vmatprep.subr.mxu0 0.0
      %5956 = vmatpush2.msra.mxu0 0.0
      %5957 = vmatprep.subr.mxu0 0.0
      %5958 = vmatpush2.msra.mxu0 0.0
      %5959 = vmatprep.subr.mxu0 0.0
      %5960 = vmatpush2.msra.mxu0 0.0
      %5961 = vmatprep.subr.mxu0 0.0
      %5962 = vmatpush2.msra.mxu0 0.0
      %5963 = vmatprep.subr.mxu0 0.0
      %5964 = vmatpush2.msra.mxu0 0.0
      %5965 = vmatprep.subr.mxu0 0.0
      %5966 = vmatpush2.msra.mxu0 0.0
      %5967 = vmatprep.subr.mxu0 0.0
      %5968 = vmatpush2.msra.mxu0 0.0
      %5969 = vmatprep.subr.mxu0 0.0
      %5970 = vmatpush2.msra.mxu0 0.0
      %5971 = vmatprep.subr.mxu0 0.0
      %5972 = vmatpush2.msra.mxu0 0.0
      %5973 = vmatprep.subr.mxu0 0.0
      %5974 = vmatpush2.msra.mxu0 0.0
      %5975 = vmatprep.subr.mxu0 0.0
      %5976 = vmatpush2.msra.mxu0 0.0
      %5977 = vmatprep.subr.mxu0 0.0
      %5978 = vmatpush2.msra.mxu0 0.0
      %5979 = vmatprep.subr.mxu0 0.0
      %5980 = vmatpush2.msra.mxu0 0.0
      %5981 = vmatprep.subr.mxu0 0.0
      %5982 = vmatpush2.msra.mxu0 0.0
      %5983 = vmatprep.mubr.f32.mxu0 0.0
      %5984 = vmatmul.mubr.f32.gmra.mxu0 %v5914
      %v5985 = vpop.f32.mrf.mxu0
      %v5986 = vadd.f32 0.0, %v5985
      %v5987 = vpop.f32.mrf.mxu0
      %5988 = vmatprep.mubr.f32.mxu0 0.0
      %5989 = vmatmul.mubr.f32.gmra.mxu0 %v5917
      %v5990 = vpop.f32.mrf.mxu0
      %v5991 = vadd.f32 0.0, %v5990
      %v5992 = vpop.f32.mrf.mxu0
      %5993 = vdwg.mxu0
      %v5994 = vadd.f32 %v5695, %v5986
      %v5995 = vadd.f32 %v5696, %v5991
      %v5996 = vadd.f32 %v4492, %v5994
      %v5997 = vadd.f32 %v4493, %v5995
      %s5998 = scalar_lea.vmem %s37, 1
      %v5999 = vld [vmem:[%s5998] sm:$0x1]
      %v6001 = vlaneseq
      %v6002 = vshrl.u32 %v6001, 7
      %v6003 = vsub.s32 0, %v6002
      %v6004 = vrot.slane %v5999, %v6003
      %v6006 = vadd.f32 %v5996, %v6004
      %v6007 = vadd.f32 %v5997, %v6004
      %v6008 = vsel %vm1231, %v6006, 0.0
      %6009 = vadd.xlane.f32.xlu0 %v6008
      %v6010 = vpop.xlane.xlu0 %6009
      %v6011 = vsel %vm1231, %v6007, 0.0
      %6012 = vadd.xlane.f32.xlu0 %v6011
      %v6013 = vpop.xlane.xlu0 %6012
      %v6014 = vmul.f32 %v6010, %v1497
      %v6015 = vmul.f32 %v6013, %v1497
      %v6016 = vsub.f32 %v6006, %v6014
      %v6017 = vsub.f32 %v6007, %v6015
      %v6018 = vmul.f32 %v6016, %v6016
      %v6019 = vmul.f32 %v6017, %v6017
      %v6020 = vsel %vm1231, %v6018, 0.0
      %6021 = vadd.xlane.f32.xlu0 %v6020
      %v6022 = vpop.xlane.xlu0 %6021
      %v6023 = vsel %vm1231, %v6019, 0.0
      %6024 = vadd.xlane.f32.xlu0 %v6023
      %v6025 = vpop.xlane.xlu0 %6024
      %v6026 = vmul.f32 %v6022, %v1497
      %v6027 = vmul.f32 %v6025, %v1497
      %v6028 = vadd.f32 %v6026, 1e-06
      %v6029 = vadd.f32 %v6027, 1e-06
      %v6030 = vrsqrt.pop %v6028
      %v6031 = vrsqrt.pop %v6029
      %v6032 = vmul.f32 %v6016, %v6030
      %v6033 = vmul.f32 %v6017, %v6031
      %v6034 = vadd.f32 %v4583, 1.0
      %v6035 = vlaneseq
      %v6036 = vshrl.u32 %v6035, 7
      %v6037 = vsub.s32 0, %v6036
      %v6038 = vrot.slane %v6034, %v6037
      %6040 = vrot.lane.b32.xlu0 %v6038, 96
      %v6041 = vpop.permute.xlu0 %6040
      %v6043 = vmul.f32 %v6032, %v6041
      %v6044 = vmul.f32 %v6033, %v6041
      %v6045 = vlaneseq
      %v6046 = vshrl.u32 %v6045, 7
      %v6047 = vsub.s32 0, %v6046
      %v6048 = vrot.slane %v4583, %v6047
      %v6049 = vadd.f32 %v6043, %v6048
      %v6050 = vadd.f32 %v6044, %v6048
      %s6051 = scalar_lea.vmem %s39, 32
      %v6052 = vld [vmem:[%s6051] sm:$0xff]
      %v6053 = vld [vmem:[%s6051 + $0x8] sm:$0xff]
      %v6054 = vld [vmem:[%s6051 + $0x10] sm:$0xff]
      %v6055 = vld [vmem:[%s6051 + $0x18] sm:$0xff]
      %s6056 = scalar_lea.vmem %s41, 1
      %v6057 = vld [vmem:[%s6056] sm:$0x1]
      %v6059 = vlaneseq
      %v6060 = vshrl.u32 %v6059, 7
      %v6061 = vsub.s32 0, %v6060
      %v6062 = vrot.slane %v6057, %v6061
      %v6065 = vsel %vm1231, %v6049, 0
      %v6068 = vsel %vm1231, %v6050, 0
      %6070 = vmatprep.subr.mxu0 0.0
      %6071 = vmatpush1.msra.mxu0 0.0
      %6072 = vmatprep.subr.mxu0 0.0
      %6073 = vmatpush1.msra.mxu0 0.0
      %6074 = vmatprep.subr.mxu0 0.0
      %6075 = vmatpush1.msra.mxu0 0.0
      %6076 = vmatprep.subr.mxu0 0.0
      %6077 = vmatpush1.msra.mxu0 0.0
      %6078 = vmatprep.subr.mxu0 0.0
      %6079 = vmatpush1.msra.mxu0 0.0
      %6080 = vmatprep.subr.mxu0 0.0
      %6081 = vmatpush1.msra.mxu0 0.0
      %6082 = vmatprep.subr.mxu0 0.0
      %6083 = vmatpush1.msra.mxu0 0.0
      %6084 = vmatprep.subr.mxu0 0.0
      %6085 = vmatpush1.msra.mxu0 0.0
      %6086 = vmatprep.subr.mxu0 0.0
      %6087 = vmatpush1.msra.mxu0 0.0
      %6088 = vmatprep.subr.mxu0 0.0
      %6089 = vmatpush1.msra.mxu0 0.0
      %6090 = vmatprep.subr.mxu0 0.0
      %6091 = vmatpush1.msra.mxu0 0.0
      %6092 = vmatprep.subr.mxu0 0.0
      %6093 = vmatpush1.msra.mxu0 0.0
      %6094 = vmatprep.subr.mxu0 0.0
      %6095 = vmatpush1.msra.mxu0 %v6055
      %6096 = vmatprep.subr.mxu0 0.0
      %6097 = vmatpush1.msra.mxu0 %v6054
      %6098 = vmatprep.subr.mxu0 0.0
      %6099 = vmatpush1.msra.mxu0 %v6053
      %6100 = vmatprep.subr.mxu0 0.0
      %6101 = vmatpush1.msra.mxu0 %v6052
      %6102 = vmatprep.subr.mxu0 0.0
      %6103 = vmatpush2.msra.mxu0 0.0
      %6104 = vmatprep.subr.mxu0 0.0
      %6105 = vmatpush2.msra.mxu0 0.0
      %6106 = vmatprep.subr.mxu0 0.0
      %6107 = vmatpush2.msra.mxu0 0.0
      %6108 = vmatprep.subr.mxu0 0.0
      %6109 = vmatpush2.msra.mxu0 0.0
      %6110 = vmatprep.subr.mxu0 0.0
      %6111 = vmatpush2.msra.mxu0 0.0
      %6112 = vmatprep.subr.mxu0 0.0
      %6113 = vmatpush2.msra.mxu0 0.0
      %6114 = vmatprep.subr.mxu0 0.0
      %6115 = vmatpush2.msra.mxu0 0.0
      %6116 = vmatprep.subr.mxu0 0.0
      %6117 = vmatpush2.msra.mxu0 0.0
      %6118 = vmatprep.subr.mxu0 0.0
      %6119 = vmatpush2.msra.mxu0 0.0
      %6120 = vmatprep.subr.mxu0 0.0
      %6121 = vmatpush2.msra.mxu0 0.0
      %6122 = vmatprep.subr.mxu0 0.0
      %6123 = vmatpush2.msra.mxu0 0.0
      %6124 = vmatprep.subr.mxu0 0.0
      %6125 = vmatpush2.msra.mxu0 0.0
      %6126 = vmatprep.subr.mxu0 0.0
      %6127 = vmatpush2.msra.mxu0 0.0
      %6128 = vmatprep.subr.mxu0 0.0
      %6129 = vmatpush2.msra.mxu0 0.0
      %6130 = vmatprep.subr.mxu0 0.0
      %6131 = vmatpush2.msra.mxu0 0.0
      %6132 = vmatprep.subr.mxu0 0.0
      %6133 = vmatpush2.msra.mxu0 0.0
      %6134 = vmatprep.mubr.f32.mxu0 0.0
      %6135 = vmatmul.mubr.f32.gmra.mxu0 %v6065
      %v6136 = vpop.f32.mrf.mxu0
      %v6137 = vadd.f32 %v6062, %v6136
      %v6138 = vpop.f32.mrf.mxu0
      %6139 = vmatprep.mubr.f32.mxu0 0.0
      %6140 = vmatmul.mubr.f32.gmra.mxu0 %v6068
      %v6141 = vpop.f32.mrf.mxu0
      %v6142 = vadd.f32 %v6062, %v6141
      %v6143 = vpop.f32.mrf.mxu0
      %6144 = vdwg.mxu0
      %s6145 = scalar_lea.vmem %s43, 32
      %v6146 = vld [vmem:[%s6145] sm:$0xff]
      %v6147 = vld [vmem:[%s6145 + $0x8] sm:$0xff]
      %v6148 = vld [vmem:[%s6145 + $0x10] sm:$0xff]
      %v6149 = vld [vmem:[%s6145 + $0x18] sm:$0xff]
      %6152 = vrot.lane.b32.xlu0 %v6137, 96
      %v6153 = vpop.permute.xlu0 %6152
      %6154 = vrot.lane.b32.xlu0 %v6142, 96
      %v6155 = vpop.permute.xlu0 %6154
      %v6156 = vsel %vm1722, %v6137, 0
      %v6158 = vsel %vm1722, %v6142, 0
      %v6160 = vsel %vm1722, %v6153, 0
      %v6162 = vsel %vm1722, %v6155, 0
      %6164 = vmatprep.subr.mxu0 0.0
      %6165 = vmatpush1.xpose.msra.mxu0 0.0
      %6166 = vmatprep.subr.mxu0 0.0
      %6167 = vmatpush1.xpose.msra.mxu0 0.0
      %6168 = vmatprep.subr.mxu0 0.0
      %6169 = vmatpush1.xpose.msra.mxu0 0.0
      %6170 = vmatprep.subr.mxu0 0.0
      %6171 = vmatpush1.xpose.msra.mxu0 0.0
      %6172 = vmatprep.subr.mxu0 0.0
      %6173 = vmatpush1.xpose.msra.mxu0 0.0
      %6174 = vmatprep.subr.mxu0 0.0
      %6175 = vmatpush1.xpose.msra.mxu0 0.0
      %6176 = vmatprep.subr.mxu0 0.0
      %6177 = vmatpush1.xpose.msra.mxu0 0.0
      %6178 = vmatprep.subr.mxu0 0.0
      %6179 = vmatpush1.xpose.msra.mxu0 0.0
      %6180 = vmatprep.subr.mxu0 0.0
      %6181 = vmatpush1.xpose.msra.mxu0 0.0
      %6182 = vmatprep.subr.mxu0 0.0
      %6183 = vmatpush1.xpose.msra.mxu0 0.0
      %6184 = vmatprep.subr.mxu0 0.0
      %6185 = vmatpush1.xpose.msra.mxu0 0.0
      %6186 = vmatprep.subr.mxu0 0.0
      %6187 = vmatpush1.xpose.msra.mxu0 0.0
      %6188 = vmatprep.subr.mxu0 0.0
      %6189 = vmatpush1.xpose.msra.mxu0 0.0
      %6190 = vmatprep.subr.mxu0 0.0
      %6191 = vmatpush1.xpose.msra.mxu0 0.0
      %6192 = vmatprep.subr.mxu0 0.0
      %6193 = vmatpush1.xpose.msra.mxu0 %v6162
      %6194 = vmatprep.subr.mxu0 0.0
      %6195 = vmatpush1.xpose.msra.mxu0 %v6160
      %6196 = vmatprep.subr.mxu0 0.0
      %6197 = vmatpush2.xpose.msra.mxu0 0.0
      %6198 = vmatprep.subr.mxu0 0.0
      %6199 = vmatpush2.xpose.msra.mxu0 0.0
      %6200 = vmatprep.subr.mxu0 0.0
      %6201 = vmatpush2.xpose.msra.mxu0 0.0
      %6202 = vmatprep.subr.mxu0 0.0
      %6203 = vmatpush2.xpose.msra.mxu0 0.0
      %6204 = vmatprep.subr.mxu0 0.0
      %6205 = vmatpush2.xpose.msra.mxu0 0.0
      %6206 = vmatprep.subr.mxu0 0.0
      %6207 = vmatpush2.xpose.msra.mxu0 0.0
      %6208 = vmatprep.subr.mxu0 0.0
      %6209 = vmatpush2.xpose.msra.mxu0 0.0
      %6210 = vmatprep.subr.mxu0 0.0
      %6211 = vmatpush2.xpose.msra.mxu0 0.0
      %6212 = vmatprep.subr.mxu0 0.0
      %6213 = vmatpush2.xpose.msra.mxu0 0.0
      %6214 = vmatprep.subr.mxu0 0.0
      %6215 = vmatpush2.xpose.msra.mxu0 0.0
      %6216 = vmatprep.subr.mxu0 0.0
      %6217 = vmatpush2.xpose.msra.mxu0 0.0
      %6218 = vmatprep.subr.mxu0 0.0
      %6219 = vmatpush2.xpose.msra.mxu0 0.0
      %6220 = vmatprep.subr.mxu0 0.0
      %6221 = vmatpush2.xpose.msra.mxu0 0.0
      %6222 = vmatprep.subr.mxu0 0.0
      %6223 = vmatpush2.xpose.msra.mxu0 0.0
      %6224 = vmatprep.subr.mxu0 0.0
      %6225 = vmatpush2.xpose.msra.mxu0 0.0
      %6226 = vmatprep.subr.mxu0 0.0
      %6227 = vmatpush2.xpose.msra.mxu0 0.0
      %6228 = vmatprep.mubr.f32.mxu0 0.0
      %6229 = vmatmul.mubr.f32.gmra.mxu0 %v6156
      %v6230 = vpop.f32.mrf.mxu0
      %v6231 = vadd.f32 0.0, %v6230
      %v6232 = vpop.f32.mrf.mxu0
      %6233 = vmatprep.mubr.f32.mxu0 0.0
      %6234 = vmatmul.mubr.f32.gmra.mxu0 %v6158
      %v6235 = vpop.f32.mrf.mxu0
      %v6236 = vadd.f32 0.0, %v6235
      %v6237 = vpop.f32.mrf.mxu0
      %6238 = vdwg.mxu0
      %v6239 = vmul.f32 %v6231, 0.35355338
      %v6240 = vmul.f32 %v6236, 0.35355338
      %v6241 = vsel %vm3150, %v6239, -inf
      %6242 = vmax.xlane.f32.xlu0 %v6241
      %v6243 = vpop.xlane.xlu0 %6242
      %v6244 = vsel %vm3150, %v6240, -inf
      %6245 = vmax.xlane.f32.xlu0 %v6244
      %v6246 = vpop.xlane.xlu0 %6245
      %v6247 = vsub.f32 %v6239, %v6243
      %v6248 = vsub.f32 %v6240, %v6246
      %v6249 = vmul.f32 %v6247, 1.442695
      %v6250 = vpow.pop %v6249
      %v6251 = vmul.f32 %v6248, 1.442695
      %v6252 = vpow.pop %v6251
      %v6253 = vsel %vm3150, %v6250, 0.0
      %6254 = vadd.xlane.f32.xlu0 %v6253
      %v6255 = vpop.xlane.xlu0 %6254
      %v6256 = vsel %vm3150, %v6252, 0.0
      %6257 = vadd.xlane.f32.xlu0 %v6256
      %v6258 = vpop.xlane.xlu0 %6257
      %v6259 = vrcp.pop %v6255
      %v6260 = vrcp.pop %v6258
      %v6261 = vmul.f32 %v6250, %v6259
      %v6262 = vmul.f32 %v6252, %v6260
      %6263 = vrot.lane.b32.xlu0 %v6137, 64
      %v6264 = vpop.permute.xlu0 %6263
      %6265 = vrot.lane.b32.xlu0 %v6142, 64
      %v6266 = vpop.permute.xlu0 %6265
      %v6270 = vsel %vm3150, %v6261, 0
      %v6273 = vsel %vm3150, %v6262, 0
      %6275 = vmatprep.subr.mxu0 0.0
      %6276 = vmatpush1.msra.mxu0 0.0
      %6277 = vmatprep.subr.mxu0 0.0
      %6278 = vmatpush1.msra.mxu0 0.0
      %6279 = vmatprep.subr.mxu0 0.0
      %6280 = vmatpush1.msra.mxu0 0.0
      %6281 = vmatprep.subr.mxu0 0.0
      %6282 = vmatpush1.msra.mxu0 0.0
      %6283 = vmatprep.subr.mxu0 0.0
      %6284 = vmatpush1.msra.mxu0 0.0
      %6285 = vmatprep.subr.mxu0 0.0
      %6286 = vmatpush1.msra.mxu0 0.0
      %6287 = vmatprep.subr.mxu0 0.0
      %6288 = vmatpush1.msra.mxu0 0.0
      %6289 = vmatprep.subr.mxu0 0.0
      %6290 = vmatpush1.msra.mxu0 0.0
      %6291 = vmatprep.subr.mxu0 0.0
      %6292 = vmatpush1.msra.mxu0 0.0
      %6293 = vmatprep.subr.mxu0 0.0
      %6294 = vmatpush1.msra.mxu0 0.0
      %6295 = vmatprep.subr.mxu0 0.0
      %6296 = vmatpush1.msra.mxu0 0.0
      %6297 = vmatprep.subr.mxu0 0.0
      %6298 = vmatpush1.msra.mxu0 0.0
      %6299 = vmatprep.subr.mxu0 0.0
      %6300 = vmatpush1.msra.mxu0 0.0
      %6301 = vmatprep.subr.mxu0 0.0
      %6302 = vmatpush1.msra.mxu0 0.0
      %6303 = vmatprep.subr.mxu0 0.0
      %6304 = vmatpush1.msra.mxu0 %v6266
      %6305 = vmatprep.subr.mxu0 0.0
      %6306 = vmatpush1.msra.mxu0 %v6264
      %6307 = vmatprep.subr.mxu0 0.0
      %6308 = vmatpush2.msra.mxu0 0.0
      %6309 = vmatprep.subr.mxu0 0.0
      %6310 = vmatpush2.msra.mxu0 0.0
      %6311 = vmatprep.subr.mxu0 0.0
      %6312 = vmatpush2.msra.mxu0 0.0
      %6313 = vmatprep.subr.mxu0 0.0
      %6314 = vmatpush2.msra.mxu0 0.0
      %6315 = vmatprep.subr.mxu0 0.0
      %6316 = vmatpush2.msra.mxu0 0.0
      %6317 = vmatprep.subr.mxu0 0.0
      %6318 = vmatpush2.msra.mxu0 0.0
      %6319 = vmatprep.subr.mxu0 0.0
      %6320 = vmatpush2.msra.mxu0 0.0
      %6321 = vmatprep.subr.mxu0 0.0
      %6322 = vmatpush2.msra.mxu0 0.0
      %6323 = vmatprep.subr.mxu0 0.0
      %6324 = vmatpush2.msra.mxu0 0.0
      %6325 = vmatprep.subr.mxu0 0.0
      %6326 = vmatpush2.msra.mxu0 0.0
      %6327 = vmatprep.subr.mxu0 0.0
      %6328 = vmatpush2.msra.mxu0 0.0
      %6329 = vmatprep.subr.mxu0 0.0
      %6330 = vmatpush2.msra.mxu0 0.0
      %6331 = vmatprep.subr.mxu0 0.0
      %6332 = vmatpush2.msra.mxu0 0.0
      %6333 = vmatprep.subr.mxu0 0.0
      %6334 = vmatpush2.msra.mxu0 0.0
      %6335 = vmatprep.subr.mxu0 0.0
      %6336 = vmatpush2.msra.mxu0 0.0
      %6337 = vmatprep.subr.mxu0 0.0
      %6338 = vmatpush2.msra.mxu0 0.0
      %6339 = vmatprep.mubr.f32.mxu0 0.0
      %6340 = vmatmul.mubr.f32.gmra.mxu0 %v6270
      %v6341 = vpop.f32.mrf.mxu0
      %v6342 = vadd.f32 0.0, %v6341
      %v6343 = vpop.f32.mrf.mxu0
      %6344 = vmatprep.mubr.f32.mxu0 0.0
      %6345 = vmatmul.mubr.f32.gmra.mxu0 %v6273
      %v6346 = vpop.f32.mrf.mxu0
      %v6347 = vadd.f32 0.0, %v6346
      %v6348 = vpop.f32.mrf.mxu0
      %6349 = vdwg.mxu0
      %6350 = vrot.lane.b32.xlu0 %v6137, 120
      %v6351 = vpop.permute.xlu0 %6350
      %6352 = vrot.lane.b32.xlu0 %v6142, 120
      %v6353 = vpop.permute.xlu0 %6352
      %6354 = vrot.lane.b32.xlu0 %v6137, 88
      %v6355 = vpop.permute.xlu0 %6354
      %6356 = vrot.lane.b32.xlu0 %v6142, 88
      %v6357 = vpop.permute.xlu0 %6356
      %v6358 = vsel %vm1722, %v6351, 0
      %v6360 = vsel %vm1722, %v6353, 0
      %v6362 = vsel %vm1722, %v6355, 0
      %v6364 = vsel %vm1722, %v6357, 0
      %6366 = vmatprep.subr.mxu0 0.0
      %6367 = vmatpush1.xpose.msra.mxu0 0.0
      %6368 = vmatprep.subr.mxu0 0.0
      %6369 = vmatpush1.xpose.msra.mxu0 0.0
      %6370 = vmatprep.subr.mxu0 0.0
      %6371 = vmatpush1.xpose.msra.mxu0 0.0
      %6372 = vmatprep.subr.mxu0 0.0
      %6373 = vmatpush1.xpose.msra.mxu0 0.0
      %6374 = vmatprep.subr.mxu0 0.0
      %6375 = vmatpush1.xpose.msra.mxu0 0.0
      %6376 = vmatprep.subr.mxu0 0.0
      %6377 = vmatpush1.xpose.msra.mxu0 0.0
      %6378 = vmatprep.subr.mxu0 0.0
      %6379 = vmatpush1.xpose.msra.mxu0 0.0
      %6380 = vmatprep.subr.mxu0 0.0
      %6381 = vmatpush1.xpose.msra.mxu0 0.0
      %6382 = vmatprep.subr.mxu0 0.0
      %6383 = vmatpush1.xpose.msra.mxu0 0.0
      %6384 = vmatprep.subr.mxu0 0.0
      %6385 = vmatpush1.xpose.msra.mxu0 0.0
      %6386 = vmatprep.subr.mxu0 0.0
      %6387 = vmatpush1.xpose.msra.mxu0 0.0
      %6388 = vmatprep.subr.mxu0 0.0
      %6389 = vmatpush1.xpose.msra.mxu0 0.0
      %6390 = vmatprep.subr.mxu0 0.0
      %6391 = vmatpush1.xpose.msra.mxu0 0.0
      %6392 = vmatprep.subr.mxu0 0.0
      %6393 = vmatpush1.xpose.msra.mxu0 0.0
      %6394 = vmatprep.subr.mxu0 0.0
      %6395 = vmatpush1.xpose.msra.mxu0 %v6364
      %6396 = vmatprep.subr.mxu0 0.0
      %6397 = vmatpush1.xpose.msra.mxu0 %v6362
      %6398 = vmatprep.subr.mxu0 0.0
      %6399 = vmatpush2.xpose.msra.mxu0 0.0
      %6400 = vmatprep.subr.mxu0 0.0
      %6401 = vmatpush2.xpose.msra.mxu0 0.0
      %6402 = vmatprep.subr.mxu0 0.0
      %6403 = vmatpush2.xpose.msra.mxu0 0.0
      %6404 = vmatprep.subr.mxu0 0.0
      %6405 = vmatpush2.xpose.msra.mxu0 0.0
      %6406 = vmatprep.subr.mxu0 0.0
      %6407 = vmatpush2.xpose.msra.mxu0 0.0
      %6408 = vmatprep.subr.mxu0 0.0
      %6409 = vmatpush2.xpose.msra.mxu0 0.0
      %6410 = vmatprep.subr.mxu0 0.0
      %6411 = vmatpush2.xpose.msra.mxu0 0.0
      %6412 = vmatprep.subr.mxu0 0.0
      %6413 = vmatpush2.xpose.msra.mxu0 0.0
      %6414 = vmatprep.subr.mxu0 0.0
      %6415 = vmatpush2.xpose.msra.mxu0 0.0
      %6416 = vmatprep.subr.mxu0 0.0
      %6417 = vmatpush2.xpose.msra.mxu0 0.0
      %6418 = vmatprep.subr.mxu0 0.0
      %6419 = vmatpush2.xpose.msra.mxu0 0.0
      %6420 = vmatprep.subr.mxu0 0.0
      %6421 = vmatpush2.xpose.msra.mxu0 0.0
      %6422 = vmatprep.subr.mxu0 0.0
      %6423 = vmatpush2.xpose.msra.mxu0 0.0
      %6424 = vmatprep.subr.mxu0 0.0
      %6425 = vmatpush2.xpose.msra.mxu0 0.0
      %6426 = vmatprep.subr.mxu0 0.0
      %6427 = vmatpush2.xpose.msra.mxu0 0.0
      %6428 = vmatprep.subr.mxu0 0.0
      %6429 = vmatpush2.xpose.msra.mxu0 0.0
      %6430 = vmatprep.mubr.f32.mxu0 0.0
      %6431 = vmatmul.mubr.f32.gmra.mxu0 %v6358
      %v6432 = vpop.f32.mrf.mxu0
      %v6433 = vadd.f32 0.0, %v6432
      %v6434 = vpop.f32.mrf.mxu0
      %6435 = vmatprep.mubr.f32.mxu0 0.0
      %6436 = vmatmul.mubr.f32.gmra.mxu0 %v6360
      %v6437 = vpop.f32.mrf.mxu0
      %v6438 = vadd.f32 0.0, %v6437
      %v6439 = vpop.f32.mrf.mxu0
      %6440 = vdwg.mxu0
      %v6441 = vmul.f32 %v6433, 0.35355338
      %v6442 = vmul.f32 %v6438, 0.35355338
      %v6443 = vsel %vm3150, %v6441, -inf
      %6444 = vmax.xlane.f32.xlu0 %v6443
      %v6445 = vpop.xlane.xlu0 %6444
      %v6446 = vsel %vm3150, %v6442, -inf
      %6447 = vmax.xlane.f32.xlu0 %v6446
      %v6448 = vpop.xlane.xlu0 %6447
      %v6449 = vsub.f32 %v6441, %v6445
      %v6450 = vsub.f32 %v6442, %v6448
      %v6451 = vmul.f32 %v6449, 1.442695
      %v6452 = vpow.pop %v6451
      %v6453 = vmul.f32 %v6450, 1.442695
      %v6454 = vpow.pop %v6453
      %v6455 = vsel %vm3150, %v6452, 0.0
      %6456 = vadd.xlane.f32.xlu0 %v6455
      %v6457 = vpop.xlane.xlu0 %6456
      %v6458 = vsel %vm3150, %v6454, 0.0
      %6459 = vadd.xlane.f32.xlu0 %v6458
      %v6460 = vpop.xlane.xlu0 %6459
      %v6461 = vrcp.pop %v6457
      %v6462 = vrcp.pop %v6460
      %v6463 = vmul.f32 %v6452, %v6461
      %v6464 = vmul.f32 %v6454, %v6462
      %6465 = vrot.lane.b32.xlu0 %v6137, 56
      %v6466 = vpop.permute.xlu0 %6465
      %6467 = vrot.lane.b32.xlu0 %v6142, 56
      %v6468 = vpop.permute.xlu0 %6467
      %v6472 = vsel %vm3150, %v6463, 0
      %v6475 = vsel %vm3150, %v6464, 0
      %6477 = vmatprep.subr.mxu0 0.0
      %6478 = vmatpush1.msra.mxu0 0.0
      %6479 = vmatprep.subr.mxu0 0.0
      %6480 = vmatpush1.msra.mxu0 0.0
      %6481 = vmatprep.subr.mxu0 0.0
      %6482 = vmatpush1.msra.mxu0 0.0
      %6483 = vmatprep.subr.mxu0 0.0
      %6484 = vmatpush1.msra.mxu0 0.0
      %6485 = vmatprep.subr.mxu0 0.0
      %6486 = vmatpush1.msra.mxu0 0.0
      %6487 = vmatprep.subr.mxu0 0.0
      %6488 = vmatpush1.msra.mxu0 0.0
      %6489 = vmatprep.subr.mxu0 0.0
      %6490 = vmatpush1.msra.mxu0 0.0
      %6491 = vmatprep.subr.mxu0 0.0
      %6492 = vmatpush1.msra.mxu0 0.0
      %6493 = vmatprep.subr.mxu0 0.0
      %6494 = vmatpush1.msra.mxu0 0.0
      %6495 = vmatprep.subr.mxu0 0.0
      %6496 = vmatpush1.msra.mxu0 0.0
      %6497 = vmatprep.subr.mxu0 0.0
      %6498 = vmatpush1.msra.mxu0 0.0
      %6499 = vmatprep.subr.mxu0 0.0
      %6500 = vmatpush1.msra.mxu0 0.0
      %6501 = vmatprep.subr.mxu0 0.0
      %6502 = vmatpush1.msra.mxu0 0.0
      %6503 = vmatprep.subr.mxu0 0.0
      %6504 = vmatpush1.msra.mxu0 0.0
      %6505 = vmatprep.subr.mxu0 0.0
      %6506 = vmatpush1.msra.mxu0 %v6468
      %6507 = vmatprep.subr.mxu0 0.0
      %6508 = vmatpush1.msra.mxu0 %v6466
      %6509 = vmatprep.subr.mxu0 0.0
      %6510 = vmatpush2.msra.mxu0 0.0
      %6511 = vmatprep.subr.mxu0 0.0
      %6512 = vmatpush2.msra.mxu0 0.0
      %6513 = vmatprep.subr.mxu0 0.0
      %6514 = vmatpush2.msra.mxu0 0.0
      %6515 = vmatprep.subr.mxu0 0.0
      %6516 = vmatpush2.msra.mxu0 0.0
      %6517 = vmatprep.subr.mxu0 0.0
      %6518 = vmatpush2.msra.mxu0 0.0
      %6519 = vmatprep.subr.mxu0 0.0
      %6520 = vmatpush2.msra.mxu0 0.0
      %6521 = vmatprep.subr.mxu0 0.0
      %6522 = vmatpush2.msra.mxu0 0.0
      %6523 = vmatprep.subr.mxu0 0.0
      %6524 = vmatpush2.msra.mxu0 0.0
      %6525 = vmatprep.subr.mxu0 0.0
      %6526 = vmatpush2.msra.mxu0 0.0
      %6527 = vmatprep.subr.mxu0 0.0
      %6528 = vmatpush2.msra.mxu0 0.0
      %6529 = vmatprep.subr.mxu0 0.0
      %6530 = vmatpush2.msra.mxu0 0.0
      %6531 = vmatprep.subr.mxu0 0.0
      %6532 = vmatpush2.msra.mxu0 0.0
      %6533 = vmatprep.subr.mxu0 0.0
      %6534 = vmatpush2.msra.mxu0 0.0
      %6535 = vmatprep.subr.mxu0 0.0
      %6536 = vmatpush2.msra.mxu0 0.0
      %6537 = vmatprep.subr.mxu0 0.0
      %6538 = vmatpush2.msra.mxu0 0.0
      %6539 = vmatprep.subr.mxu0 0.0
      %6540 = vmatpush2.msra.mxu0 0.0
      %6541 = vmatprep.mubr.f32.mxu0 0.0
      %6542 = vmatmul.mubr.f32.gmra.mxu0 %v6472
      %v6543 = vpop.f32.mrf.mxu0
      %v6544 = vadd.f32 0.0, %v6543
      %v6545 = vpop.f32.mrf.mxu0
      %6546 = vmatprep.mubr.f32.mxu0 0.0
      %6547 = vmatmul.mubr.f32.gmra.mxu0 %v6475
      %v6548 = vpop.f32.mrf.mxu0
      %v6549 = vadd.f32 0.0, %v6548
      %v6550 = vpop.f32.mrf.mxu0
      %6551 = vdwg.mxu0
      %v6553 = vsel %vm1722, %v6544, 0
      %v6556 = vsel %vm1722, %v6549, 0
      %6558 = vmatprep.subr.mxu0 0.0
      %6559 = vmatpush1.msra.mxu0 0.0
      %6560 = vmatprep.subr.mxu0 0.0
      %6561 = vmatpush1.msra.mxu0 0.0
      %6562 = vmatprep.subr.mxu0 0.0
      %6563 = vmatpush1.msra.mxu0 0.0
      %6564 = vmatprep.subr.mxu0 0.0
      %6565 = vmatpush1.msra.mxu0 0.0
      %6566 = vmatprep.subr.mxu0 0.0
      %6567 = vmatpush1.msra.mxu0 0.0
      %6568 = vmatprep.subr.mxu0 0.0
      %6569 = vmatpush1.msra.mxu0 0.0
      %6570 = vmatprep.subr.mxu0 0.0
      %6571 = vmatpush1.msra.mxu0 0.0
      %6572 = vmatprep.subr.mxu0 0.0
      %6573 = vmatpush1.msra.mxu0 0.0
      %6574 = vmatprep.subr.mxu0 0.0
      %6575 = vmatpush1.msra.mxu0 0.0
      %6576 = vmatprep.subr.mxu0 0.0
      %6577 = vmatpush1.msra.mxu0 0.0
      %6578 = vmatprep.subr.mxu0 0.0
      %6579 = vmatpush1.msra.mxu0 0.0
      %6580 = vmatprep.subr.mxu0 0.0
      %6581 = vmatpush1.msra.mxu0 0.0
      %6582 = vmatprep.subr.mxu0 0.0
      %6583 = vmatpush1.msra.mxu0 0.0
      %6584 = vmatprep.subr.mxu0 0.0
      %6585 = vmatpush1.msra.mxu0 0.0
      %6586 = vmatprep.subr.mxu0 0.0
      %6587 = vmatpush1.msra.mxu0 0.0
      %6588 = vmatprep.subr.mxu0 0.0
      %6589 = vmatpush1.msra.mxu0 %v6147
      %6590 = vmatprep.subr.mxu0 0.0
      %6591 = vmatpush2.msra.mxu0 0.0
      %6592 = vmatprep.subr.mxu0 0.0
      %6593 = vmatpush2.msra.mxu0 0.0
      %6594 = vmatprep.subr.mxu0 0.0
      %6595 = vmatpush2.msra.mxu0 0.0
      %6596 = vmatprep.subr.mxu0 0.0
      %6597 = vmatpush2.msra.mxu0 0.0
      %6598 = vmatprep.subr.mxu0 0.0
      %6599 = vmatpush2.msra.mxu0 0.0
      %6600 = vmatprep.subr.mxu0 0.0
      %6601 = vmatpush2.msra.mxu0 0.0
      %6602 = vmatprep.subr.mxu0 0.0
      %6603 = vmatpush2.msra.mxu0 0.0
      %6604 = vmatprep.subr.mxu0 0.0
      %6605 = vmatpush2.msra.mxu0 0.0
      %6606 = vmatprep.subr.mxu0 0.0
      %6607 = vmatpush2.msra.mxu0 0.0
      %6608 = vmatprep.subr.mxu0 0.0
      %6609 = vmatpush2.msra.mxu0 0.0
      %6610 = vmatprep.subr.mxu0 0.0
      %6611 = vmatpush2.msra.mxu0 0.0
      %6612 = vmatprep.subr.mxu0 0.0
      %6613 = vmatpush2.msra.mxu0 0.0
      %6614 = vmatprep.subr.mxu0 0.0
      %6615 = vmatpush2.msra.mxu0 0.0
      %6616 = vmatprep.subr.mxu0 0.0
      %6617 = vmatpush2.msra.mxu0 0.0
      %6618 = vmatprep.subr.mxu0 0.0
      %6619 = vmatpush2.msra.mxu0 0.0
      %6620 = vmatprep.subr.mxu0 0.0
      %6621 = vmatpush2.msra.mxu0 0.0
      %6622 = vmatprep.mubr.f32.mxu0 0.0
      %6623 = vmatmul.mubr.f32.gmra.mxu0 %v6553
      %v6624 = vpop.f32.mrf.mxu0
      %v6625 = vadd.f32 0.0, %v6624
      %v6626 = vpop.f32.mrf.mxu0
      %6627 = vmatprep.mubr.f32.mxu0 0.0
      %6628 = vmatmul.mubr.f32.gmra.mxu0 %v6556
      %v6629 = vpop.f32.mrf.mxu0
      %v6630 = vadd.f32 0.0, %v6629
      %v6631 = vpop.f32.mrf.mxu0
      %6632 = vdwg.mxu0
      %v6634 = vsel %vm1722, %v6342, 0
      %v6637 = vsel %vm1722, %v6347, 0
      %6639 = vmatprep.subr.mxu0 0.0
      %6640 = vmatpush1.msra.mxu0 0.0
      %6641 = vmatprep.subr.mxu0 0.0
      %6642 = vmatpush1.msra.mxu0 0.0
      %6643 = vmatprep.subr.mxu0 0.0
      %6644 = vmatpush1.msra.mxu0 0.0
      %6645 = vmatprep.subr.mxu0 0.0
      %6646 = vmatpush1.msra.mxu0 0.0
      %6647 = vmatprep.subr.mxu0 0.0
      %6648 = vmatpush1.msra.mxu0 0.0
      %6649 = vmatprep.subr.mxu0 0.0
      %6650 = vmatpush1.msra.mxu0 0.0
      %6651 = vmatprep.subr.mxu0 0.0
      %6652 = vmatpush1.msra.mxu0 0.0
      %6653 = vmatprep.subr.mxu0 0.0
      %6654 = vmatpush1.msra.mxu0 0.0
      %6655 = vmatprep.subr.mxu0 0.0
      %6656 = vmatpush1.msra.mxu0 0.0
      %6657 = vmatprep.subr.mxu0 0.0
      %6658 = vmatpush1.msra.mxu0 0.0
      %6659 = vmatprep.subr.mxu0 0.0
      %6660 = vmatpush1.msra.mxu0 0.0
      %6661 = vmatprep.subr.mxu0 0.0
      %6662 = vmatpush1.msra.mxu0 0.0
      %6663 = vmatprep.subr.mxu0 0.0
      %6664 = vmatpush1.msra.mxu0 0.0
      %6665 = vmatprep.subr.mxu0 0.0
      %6666 = vmatpush1.msra.mxu0 0.0
      %6667 = vmatprep.subr.mxu0 0.0
      %6668 = vmatpush1.msra.mxu0 0.0
      %6669 = vmatprep.subr.mxu0 0.0
      %6670 = vmatpush1.msra.mxu0 %v6146
      %6671 = vmatprep.subr.mxu0 0.0
      %6672 = vmatpush2.msra.mxu0 0.0
      %6673 = vmatprep.subr.mxu0 0.0
      %6674 = vmatpush2.msra.mxu0 0.0
      %6675 = vmatprep.subr.mxu0 0.0
      %6676 = vmatpush2.msra.mxu0 0.0
      %6677 = vmatprep.subr.mxu0 0.0
      %6678 = vmatpush2.msra.mxu0 0.0
      %6679 = vmatprep.subr.mxu0 0.0
      %6680 = vmatpush2.msra.mxu0 0.0
      %6681 = vmatprep.subr.mxu0 0.0
      %6682 = vmatpush2.msra.mxu0 0.0
      %6683 = vmatprep.subr.mxu0 0.0
      %6684 = vmatpush2.msra.mxu0 0.0
      %6685 = vmatprep.subr.mxu0 0.0
      %6686 = vmatpush2.msra.mxu0 0.0
      %6687 = vmatprep.subr.mxu0 0.0
      %6688 = vmatpush2.msra.mxu0 0.0
      %6689 = vmatprep.subr.mxu0 0.0
      %6690 = vmatpush2.msra.mxu0 0.0
      %6691 = vmatprep.subr.mxu0 0.0
      %6692 = vmatpush2.msra.mxu0 0.0
      %6693 = vmatprep.subr.mxu0 0.0
      %6694 = vmatpush2.msra.mxu0 0.0
      %6695 = vmatprep.subr.mxu0 0.0
      %6696 = vmatpush2.msra.mxu0 0.0
      %6697 = vmatprep.subr.mxu0 0.0
      %6698 = vmatpush2.msra.mxu0 0.0
      %6699 = vmatprep.subr.mxu0 0.0
      %6700 = vmatpush2.msra.mxu0 0.0
      %6701 = vmatprep.subr.mxu0 0.0
      %6702 = vmatpush2.msra.mxu0 0.0
      %6703 = vmatprep.mubr.f32.mxu0 0.0
      %6704 = vmatmul.mubr.f32.gmra.mxu0 %v6634
      %v6705 = vpop.f32.mrf.mxu0
      %v6706 = vadd.f32 %v6625, %v6705
      %v6707 = vpop.f32.mrf.mxu0
      %6708 = vmatprep.mubr.f32.mxu0 0.0
      %6709 = vmatmul.mubr.f32.gmra.mxu0 %v6637
      %v6710 = vpop.f32.mrf.mxu0
      %v6711 = vadd.f32 %v6630, %v6710
      %v6712 = vpop.f32.mrf.mxu0
      %6713 = vdwg.mxu0
      %6714 = vrot.lane.b32.xlu0 %v6137, 112
      %v6715 = vpop.permute.xlu0 %6714
      %6716 = vrot.lane.b32.xlu0 %v6142, 112
      %v6717 = vpop.permute.xlu0 %6716
      %6718 = vrot.lane.b32.xlu0 %v6137, 80
      %v6719 = vpop.permute.xlu0 %6718
      %6720 = vrot.lane.b32.xlu0 %v6142, 80
      %v6721 = vpop.permute.xlu0 %6720
      %v6722 = vsel %vm1722, %v6715, 0
      %v6724 = vsel %vm1722, %v6717, 0
      %v6726 = vsel %vm1722, %v6719, 0
      %v6728 = vsel %vm1722, %v6721, 0
      %6730 = vmatprep.subr.mxu0 0.0
      %6731 = vmatpush1.xpose.msra.mxu0 0.0
      %6732 = vmatprep.subr.mxu0 0.0
      %6733 = vmatpush1.xpose.msra.mxu0 0.0
      %6734 = vmatprep.subr.mxu0 0.0
      %6735 = vmatpush1.xpose.msra.mxu0 0.0
      %6736 = vmatprep.subr.mxu0 0.0
      %6737 = vmatpush1.xpose.msra.mxu0 0.0
      %6738 = vmatprep.subr.mxu0 0.0
      %6739 = vmatpush1.xpose.msra.mxu0 0.0
      %6740 = vmatprep.subr.mxu0 0.0
      %6741 = vmatpush1.xpose.msra.mxu0 0.0
      %6742 = vmatprep.subr.mxu0 0.0
      %6743 = vmatpush1.xpose.msra.mxu0 0.0
      %6744 = vmatprep.subr.mxu0 0.0
      %6745 = vmatpush1.xpose.msra.mxu0 0.0
      %6746 = vmatprep.subr.mxu0 0.0
      %6747 = vmatpush1.xpose.msra.mxu0 0.0
      %6748 = vmatprep.subr.mxu0 0.0
      %6749 = vmatpush1.xpose.msra.mxu0 0.0
      %6750 = vmatprep.subr.mxu0 0.0
      %6751 = vmatpush1.xpose.msra.mxu0 0.0
      %6752 = vmatprep.subr.mxu0 0.0
      %6753 = vmatpush1.xpose.msra.mxu0 0.0
      %6754 = vmatprep.subr.mxu0 0.0
      %6755 = vmatpush1.xpose.msra.mxu0 0.0
      %6756 = vmatprep.subr.mxu0 0.0
      %6757 = vmatpush1.xpose.msra.mxu0 0.0
      %6758 = vmatprep.subr.mxu0 0.0
      %6759 = vmatpush1.xpose.msra.mxu0 %v6728
      %6760 = vmatprep.subr.mxu0 0.0
      %6761 = vmatpush1.xpose.msra.mxu0 %v6726
      %6762 = vmatprep.subr.mxu0 0.0
      %6763 = vmatpush2.xpose.msra.mxu0 0.0
      %6764 = vmatprep.subr.mxu0 0.0
      %6765 = vmatpush2.xpose.msra.mxu0 0.0
      %6766 = vmatprep.subr.mxu0 0.0
      %6767 = vmatpush2.xpose.msra.mxu0 0.0
      %6768 = vmatprep.subr.mxu0 0.0
      %6769 = vmatpush2.xpose.msra.mxu0 0.0
      %6770 = vmatprep.subr.mxu0 0.0
      %6771 = vmatpush2.xpose.msra.mxu0 0.0
      %6772 = vmatprep.subr.mxu0 0.0
      %6773 = vmatpush2.xpose.msra.mxu0 0.0
      %6774 = vmatprep.subr.mxu0 0.0
      %6775 = vmatpush2.xpose.msra.mxu0 0.0
      %6776 = vmatprep.subr.mxu0 0.0
      %6777 = vmatpush2.xpose.msra.mxu0 0.0
      %6778 = vmatprep.subr.mxu0 0.0
      %6779 = vmatpush2.xpose.msra.mxu0 0.0
      %6780 = vmatprep.subr.mxu0 0.0
      %6781 = vmatpush2.xpose.msra.mxu0 0.0
      %6782 = vmatprep.subr.mxu0 0.0
      %6783 = vmatpush2.xpose.msra.mxu0 0.0
      %6784 = vmatprep.subr.mxu0 0.0
      %6785 = vmatpush2.xpose.msra.mxu0 0.0
      %6786 = vmatprep.subr.mxu0 0.0
      %6787 = vmatpush2.xpose.msra.mxu0 0.0
      %6788 = vmatprep.subr.mxu0 0.0
      %6789 = vmatpush2.xpose.msra.mxu0 0.0
      %6790 = vmatprep.subr.mxu0 0.0
      %6791 = vmatpush2.xpose.msra.mxu0 0.0
      %6792 = vmatprep.subr.mxu0 0.0
      %6793 = vmatpush2.xpose.msra.mxu0 0.0
      %6794 = vmatprep.mubr.f32.mxu0 0.0
      %6795 = vmatmul.mubr.f32.gmra.mxu0 %v6722
      %v6796 = vpop.f32.mrf.mxu0
      %v6797 = vadd.f32 0.0, %v6796
      %v6798 = vpop.f32.mrf.mxu0
      %6799 = vmatprep.mubr.f32.mxu0 0.0
      %6800 = vmatmul.mubr.f32.gmra.mxu0 %v6724
      %v6801 = vpop.f32.mrf.mxu0
      %v6802 = vadd.f32 0.0, %v6801
      %v6803 = vpop.f32.mrf.mxu0
      %6804 = vdwg.mxu0
      %v6805 = vmul.f32 %v6797, 0.35355338
      %v6806 = vmul.f32 %v6802, 0.35355338
      %v6807 = vsel %vm3150, %v6805, -inf
      %6808 = vmax.xlane.f32.xlu0 %v6807
      %v6809 = vpop.xlane.xlu0 %6808
      %v6810 = vsel %vm3150, %v6806, -inf
      %6811 = vmax.xlane.f32.xlu0 %v6810
      %v6812 = vpop.xlane.xlu0 %6811
      %v6813 = vsub.f32 %v6805, %v6809
      %v6814 = vsub.f32 %v6806, %v6812
      %v6815 = vmul.f32 %v6813, 1.442695
      %v6816 = vpow.pop %v6815
      %v6817 = vmul.f32 %v6814, 1.442695
      %v6818 = vpow.pop %v6817
      %v6819 = vsel %vm3150, %v6816, 0.0
      %6820 = vadd.xlane.f32.xlu0 %v6819
      %v6821 = vpop.xlane.xlu0 %6820
      %v6822 = vsel %vm3150, %v6818, 0.0
      %6823 = vadd.xlane.f32.xlu0 %v6822
      %v6824 = vpop.xlane.xlu0 %6823
      %v6825 = vrcp.pop %v6821
      %v6826 = vrcp.pop %v6824
      %v6827 = vmul.f32 %v6816, %v6825
      %v6828 = vmul.f32 %v6818, %v6826
      %6829 = vrot.lane.b32.xlu0 %v6137, 48
      %v6830 = vpop.permute.xlu0 %6829
      %6831 = vrot.lane.b32.xlu0 %v6142, 48
      %v6832 = vpop.permute.xlu0 %6831
      %v6836 = vsel %vm3150, %v6827, 0
      %v6839 = vsel %vm3150, %v6828, 0
      %6841 = vmatprep.subr.mxu0 0.0
      %6842 = vmatpush1.msra.mxu0 0.0
      %6843 = vmatprep.subr.mxu0 0.0
      %6844 = vmatpush1.msra.mxu0 0.0
      %6845 = vmatprep.subr.mxu0 0.0
      %6846 = vmatpush1.msra.mxu0 0.0
      %6847 = vmatprep.subr.mxu0 0.0
      %6848 = vmatpush1.msra.mxu0 0.0
      %6849 = vmatprep.subr.mxu0 0.0
      %6850 = vmatpush1.msra.mxu0 0.0
      %6851 = vmatprep.subr.mxu0 0.0
      %6852 = vmatpush1.msra.mxu0 0.0
      %6853 = vmatprep.subr.mxu0 0.0
      %6854 = vmatpush1.msra.mxu0 0.0
      %6855 = vmatprep.subr.mxu0 0.0
      %6856 = vmatpush1.msra.mxu0 0.0
      %6857 = vmatprep.subr.mxu0 0.0
      %6858 = vmatpush1.msra.mxu0 0.0
      %6859 = vmatprep.subr.mxu0 0.0
      %6860 = vmatpush1.msra.mxu0 0.0
      %6861 = vmatprep.subr.mxu0 0.0
      %6862 = vmatpush1.msra.mxu0 0.0
      %6863 = vmatprep.subr.mxu0 0.0
      %6864 = vmatpush1.msra.mxu0 0.0
      %6865 = vmatprep.subr.mxu0 0.0
      %6866 = vmatpush1.msra.mxu0 0.0
      %6867 = vmatprep.subr.mxu0 0.0
      %6868 = vmatpush1.msra.mxu0 0.0
      %6869 = vmatprep.subr.mxu0 0.0
      %6870 = vmatpush1.msra.mxu0 %v6832
      %6871 = vmatprep.subr.mxu0 0.0
      %6872 = vmatpush1.msra.mxu0 %v6830
      %6873 = vmatprep.subr.mxu0 0.0
      %6874 = vmatpush2.msra.mxu0 0.0
      %6875 = vmatprep.subr.mxu0 0.0
      %6876 = vmatpush2.msra.mxu0 0.0
      %6877 = vmatprep.subr.mxu0 0.0
      %6878 = vmatpush2.msra.mxu0 0.0
      %6879 = vmatprep.subr.mxu0 0.0
      %6880 = vmatpush2.msra.mxu0 0.0
      %6881 = vmatprep.subr.mxu0 0.0
      %6882 = vmatpush2.msra.mxu0 0.0
      %6883 = vmatprep.subr.mxu0 0.0
      %6884 = vmatpush2.msra.mxu0 0.0
      %6885 = vmatprep.subr.mxu0 0.0
      %6886 = vmatpush2.msra.mxu0 0.0
      %6887 = vmatprep.subr.mxu0 0.0
      %6888 = vmatpush2.msra.mxu0 0.0
      %6889 = vmatprep.subr.mxu0 0.0
      %6890 = vmatpush2.msra.mxu0 0.0
      %6891 = vmatprep.subr.mxu0 0.0
      %6892 = vmatpush2.msra.mxu0 0.0
      %6893 = vmatprep.subr.mxu0 0.0
      %6894 = vmatpush2.msra.mxu0 0.0
      %6895 = vmatprep.subr.mxu0 0.0
      %6896 = vmatpush2.msra.mxu0 0.0
      %6897 = vmatprep.subr.mxu0 0.0
      %6898 = vmatpush2.msra.mxu0 0.0
      %6899 = vmatprep.subr.mxu0 0.0
      %6900 = vmatpush2.msra.mxu0 0.0
      %6901 = vmatprep.subr.mxu0 0.0
      %6902 = vmatpush2.msra.mxu0 0.0
      %6903 = vmatprep.subr.mxu0 0.0
      %6904 = vmatpush2.msra.mxu0 0.0
      %6905 = vmatprep.mubr.f32.mxu0 0.0
      %6906 = vmatmul.mubr.f32.gmra.mxu0 %v6836
      %v6907 = vpop.f32.mrf.mxu0
      %v6908 = vadd.f32 0.0, %v6907
      %v6909 = vpop.f32.mrf.mxu0
      %6910 = vmatprep.mubr.f32.mxu0 0.0
      %6911 = vmatmul.mubr.f32.gmra.mxu0 %v6839
      %v6912 = vpop.f32.mrf.mxu0
      %v6913 = vadd.f32 0.0, %v6912
      %v6914 = vpop.f32.mrf.mxu0
      %6915 = vdwg.mxu0
      %v6917 = vsel %vm1722, %v6908, 0
      %v6920 = vsel %vm1722, %v6913, 0
      %6922 = vmatprep.subr.mxu0 0.0
      %6923 = vmatpush1.msra.mxu0 0.0
      %6924 = vmatprep.subr.mxu0 0.0
      %6925 = vmatpush1.msra.mxu0 0.0
      %6926 = vmatprep.subr.mxu0 0.0
      %6927 = vmatpush1.msra.mxu0 0.0
      %6928 = vmatprep.subr.mxu0 0.0
      %6929 = vmatpush1.msra.mxu0 0.0
      %6930 = vmatprep.subr.mxu0 0.0
      %6931 = vmatpush1.msra.mxu0 0.0
      %6932 = vmatprep.subr.mxu0 0.0
      %6933 = vmatpush1.msra.mxu0 0.0
      %6934 = vmatprep.subr.mxu0 0.0
      %6935 = vmatpush1.msra.mxu0 0.0
      %6936 = vmatprep.subr.mxu0 0.0
      %6937 = vmatpush1.msra.mxu0 0.0
      %6938 = vmatprep.subr.mxu0 0.0
      %6939 = vmatpush1.msra.mxu0 0.0
      %6940 = vmatprep.subr.mxu0 0.0
      %6941 = vmatpush1.msra.mxu0 0.0
      %6942 = vmatprep.subr.mxu0 0.0
      %6943 = vmatpush1.msra.mxu0 0.0
      %6944 = vmatprep.subr.mxu0 0.0
      %6945 = vmatpush1.msra.mxu0 0.0
      %6946 = vmatprep.subr.mxu0 0.0
      %6947 = vmatpush1.msra.mxu0 0.0
      %6948 = vmatprep.subr.mxu0 0.0
      %6949 = vmatpush1.msra.mxu0 0.0
      %6950 = vmatprep.subr.mxu0 0.0
      %6951 = vmatpush1.msra.mxu0 0.0
      %6952 = vmatprep.subr.mxu0 0.0
      %6953 = vmatpush1.msra.mxu0 %v6148
      %6954 = vmatprep.subr.mxu0 0.0
      %6955 = vmatpush2.msra.mxu0 0.0
      %6956 = vmatprep.subr.mxu0 0.0
      %6957 = vmatpush2.msra.mxu0 0.0
      %6958 = vmatprep.subr.mxu0 0.0
      %6959 = vmatpush2.msra.mxu0 0.0
      %6960 = vmatprep.subr.mxu0 0.0
      %6961 = vmatpush2.msra.mxu0 0.0
      %6962 = vmatprep.subr.mxu0 0.0
      %6963 = vmatpush2.msra.mxu0 0.0
      %6964 = vmatprep.subr.mxu0 0.0
      %6965 = vmatpush2.msra.mxu0 0.0
      %6966 = vmatprep.subr.mxu0 0.0
      %6967 = vmatpush2.msra.mxu0 0.0
      %6968 = vmatprep.subr.mxu0 0.0
      %6969 = vmatpush2.msra.mxu0 0.0
      %6970 = vmatprep.subr.mxu0 0.0
      %6971 = vmatpush2.msra.mxu0 0.0
      %6972 = vmatprep.subr.mxu0 0.0
      %6973 = vmatpush2.msra.mxu0 0.0
      %6974 = vmatprep.subr.mxu0 0.0
      %6975 = vmatpush2.msra.mxu0 0.0
      %6976 = vmatprep.subr.mxu0 0.0
      %6977 = vmatpush2.msra.mxu0 0.0
      %6978 = vmatprep.subr.mxu0 0.0
      %6979 = vmatpush2.msra.mxu0 0.0
      %6980 = vmatprep.subr.mxu0 0.0
      %6981 = vmatpush2.msra.mxu0 0.0
      %6982 = vmatprep.subr.mxu0 0.0
      %6983 = vmatpush2.msra.mxu0 0.0
      %6984 = vmatprep.subr.mxu0 0.0
      %6985 = vmatpush2.msra.mxu0 0.0
      %6986 = vmatprep.mubr.f32.mxu0 0.0
      %6987 = vmatmul.mubr.f32.gmra.mxu0 %v6917
      %v6988 = vpop.f32.mrf.mxu0
      %v6989 = vadd.f32 0.0, %v6988
      %v6990 = vpop.f32.mrf.mxu0
      %6991 = vmatprep.mubr.f32.mxu0 0.0
      %6992 = vmatmul.mubr.f32.gmra.mxu0 %v6920
      %v6993 = vpop.f32.mrf.mxu0
      %v6994 = vadd.f32 0.0, %v6993
      %v6995 = vpop.f32.mrf.mxu0
      %6996 = vdwg.mxu0
      %v6997 = vadd.f32 %v6706, %v6989
      %v6998 = vadd.f32 %v6711, %v6994
      %6999 = vrot.lane.b32.xlu0 %v6137, 104
      %v7000 = vpop.permute.xlu0 %6999
      %7001 = vrot.lane.b32.xlu0 %v6142, 104
      %v7002 = vpop.permute.xlu0 %7001
      %7003 = vrot.lane.b32.xlu0 %v6137, 72
      %v7004 = vpop.permute.xlu0 %7003
      %7005 = vrot.lane.b32.xlu0 %v6142, 72
      %v7006 = vpop.permute.xlu0 %7005
      %v7007 = vsel %vm1722, %v7000, 0
      %v7009 = vsel %vm1722, %v7002, 0
      %v7011 = vsel %vm1722, %v7004, 0
      %v7013 = vsel %vm1722, %v7006, 0
      %7015 = vmatprep.subr.mxu0 0.0
      %7016 = vmatpush1.xpose.msra.mxu0 0.0
      %7017 = vmatprep.subr.mxu0 0.0
      %7018 = vmatpush1.xpose.msra.mxu0 0.0
      %7019 = vmatprep.subr.mxu0 0.0
      %7020 = vmatpush1.xpose.msra.mxu0 0.0
      %7021 = vmatprep.subr.mxu0 0.0
      %7022 = vmatpush1.xpose.msra.mxu0 0.0
      %7023 = vmatprep.subr.mxu0 0.0
      %7024 = vmatpush1.xpose.msra.mxu0 0.0
      %7025 = vmatprep.subr.mxu0 0.0
      %7026 = vmatpush1.xpose.msra.mxu0 0.0
      %7027 = vmatprep.subr.mxu0 0.0
      %7028 = vmatpush1.xpose.msra.mxu0 0.0
      %7029 = vmatprep.subr.mxu0 0.0
      %7030 = vmatpush1.xpose.msra.mxu0 0.0
      %7031 = vmatprep.subr.mxu0 0.0
      %7032 = vmatpush1.xpose.msra.mxu0 0.0
      %7033 = vmatprep.subr.mxu0 0.0
      %7034 = vmatpush1.xpose.msra.mxu0 0.0
      %7035 = vmatprep.subr.mxu0 0.0
      %7036 = vmatpush1.xpose.msra.mxu0 0.0
      %7037 = vmatprep.subr.mxu0 0.0
      %7038 = vmatpush1.xpose.msra.mxu0 0.0
      %7039 = vmatprep.subr.mxu0 0.0
      %7040 = vmatpush1.xpose.msra.mxu0 0.0
      %7041 = vmatprep.subr.mxu0 0.0
      %7042 = vmatpush1.xpose.msra.mxu0 0.0
      %7043 = vmatprep.subr.mxu0 0.0
      %7044 = vmatpush1.xpose.msra.mxu0 %v7013
      %7045 = vmatprep.subr.mxu0 0.0
      %7046 = vmatpush1.xpose.msra.mxu0 %v7011
      %7047 = vmatprep.subr.mxu0 0.0
      %7048 = vmatpush2.xpose.msra.mxu0 0.0
      %7049 = vmatprep.subr.mxu0 0.0
      %7050 = vmatpush2.xpose.msra.mxu0 0.0
      %7051 = vmatprep.subr.mxu0 0.0
      %7052 = vmatpush2.xpose.msra.mxu0 0.0
      %7053 = vmatprep.subr.mxu0 0.0
      %7054 = vmatpush2.xpose.msra.mxu0 0.0
      %7055 = vmatprep.subr.mxu0 0.0
      %7056 = vmatpush2.xpose.msra.mxu0 0.0
      %7057 = vmatprep.subr.mxu0 0.0
      %7058 = vmatpush2.xpose.msra.mxu0 0.0
      %7059 = vmatprep.subr.mxu0 0.0
      %7060 = vmatpush2.xpose.msra.mxu0 0.0
      %7061 = vmatprep.subr.mxu0 0.0
      %7062 = vmatpush2.xpose.msra.mxu0 0.0
      %7063 = vmatprep.subr.mxu0 0.0
      %7064 = vmatpush2.xpose.msra.mxu0 0.0
      %7065 = vmatprep.subr.mxu0 0.0
      %7066 = vmatpush2.xpose.msra.mxu0 0.0
      %7067 = vmatprep.subr.mxu0 0.0
      %7068 = vmatpush2.xpose.msra.mxu0 0.0
      %7069 = vmatprep.subr.mxu0 0.0
      %7070 = vmatpush2.xpose.msra.mxu0 0.0
      %7071 = vmatprep.subr.mxu0 0.0
      %7072 = vmatpush2.xpose.msra.mxu0 0.0
      %7073 = vmatprep.subr.mxu0 0.0
      %7074 = vmatpush2.xpose.msra.mxu0 0.0
      %7075 = vmatprep.subr.mxu0 0.0
      %7076 = vmatpush2.xpose.msra.mxu0 0.0
      %7077 = vmatprep.subr.mxu0 0.0
      %7078 = vmatpush2.xpose.msra.mxu0 0.0
      %7079 = vmatprep.mubr.f32.mxu0 0.0
      %7080 = vmatmul.mubr.f32.gmra.mxu0 %v7007
      %v7081 = vpop.f32.mrf.mxu0
      %v7082 = vadd.f32 0.0, %v7081
      %v7083 = vpop.f32.mrf.mxu0
      %7084 = vmatprep.mubr.f32.mxu0 0.0
      %7085 = vmatmul.mubr.f32.gmra.mxu0 %v7009
      %v7086 = vpop.f32.mrf.mxu0
      %v7087 = vadd.f32 0.0, %v7086
      %v7088 = vpop.f32.mrf.mxu0
      %7089 = vdwg.mxu0
      %v7090 = vmul.f32 %v7082, 0.35355338
      %v7091 = vmul.f32 %v7087, 0.35355338
      %v7092 = vsel %vm3150, %v7090, -inf
      %7093 = vmax.xlane.f32.xlu0 %v7092
      %v7094 = vpop.xlane.xlu0 %7093
      %v7095 = vsel %vm3150, %v7091, -inf
      %7096 = vmax.xlane.f32.xlu0 %v7095
      %v7097 = vpop.xlane.xlu0 %7096
      %v7098 = vsub.f32 %v7090, %v7094
      %v7099 = vsub.f32 %v7091, %v7097
      %v7100 = vmul.f32 %v7098, 1.442695
      %v7101 = vpow.pop %v7100
      %v7102 = vmul.f32 %v7099, 1.442695
      %v7103 = vpow.pop %v7102
      %v7104 = vsel %vm3150, %v7101, 0.0
      %7105 = vadd.xlane.f32.xlu0 %v7104
      %v7106 = vpop.xlane.xlu0 %7105
      %v7107 = vsel %vm3150, %v7103, 0.0
      %7108 = vadd.xlane.f32.xlu0 %v7107
      %v7109 = vpop.xlane.xlu0 %7108
      %v7110 = vrcp.pop %v7106
      %v7111 = vrcp.pop %v7109
      %v7112 = vmul.f32 %v7101, %v7110
      %v7113 = vmul.f32 %v7103, %v7111
      %7114 = vrot.lane.b32.xlu0 %v6137, 40
      %v7115 = vpop.permute.xlu0 %7114
      %7116 = vrot.lane.b32.xlu0 %v6142, 40
      %v7117 = vpop.permute.xlu0 %7116
      %v7121 = vsel %vm3150, %v7112, 0
      %v7124 = vsel %vm3150, %v7113, 0
      %7126 = vmatprep.subr.mxu0 0.0
      %7127 = vmatpush1.msra.mxu0 0.0
      %7128 = vmatprep.subr.mxu0 0.0
      %7129 = vmatpush1.msra.mxu0 0.0
      %7130 = vmatprep.subr.mxu0 0.0
      %7131 = vmatpush1.msra.mxu0 0.0
      %7132 = vmatprep.subr.mxu0 0.0
      %7133 = vmatpush1.msra.mxu0 0.0
      %7134 = vmatprep.subr.mxu0 0.0
      %7135 = vmatpush1.msra.mxu0 0.0
      %7136 = vmatprep.subr.mxu0 0.0
      %7137 = vmatpush1.msra.mxu0 0.0
      %7138 = vmatprep.subr.mxu0 0.0
      %7139 = vmatpush1.msra.mxu0 0.0
      %7140 = vmatprep.subr.mxu0 0.0
      %7141 = vmatpush1.msra.mxu0 0.0
      %7142 = vmatprep.subr.mxu0 0.0
      %7143 = vmatpush1.msra.mxu0 0.0
      %7144 = vmatprep.subr.mxu0 0.0
      %7145 = vmatpush1.msra.mxu0 0.0
      %7146 = vmatprep.subr.mxu0 0.0
      %7147 = vmatpush1.msra.mxu0 0.0
      %7148 = vmatprep.subr.mxu0 0.0
      %7149 = vmatpush1.msra.mxu0 0.0
      %7150 = vmatprep.subr.mxu0 0.0
      %7151 = vmatpush1.msra.mxu0 0.0
      %7152 = vmatprep.subr.mxu0 0.0
      %7153 = vmatpush1.msra.mxu0 0.0
      %7154 = vmatprep.subr.mxu0 0.0
      %7155 = vmatpush1.msra.mxu0 %v7117
      %7156 = vmatprep.subr.mxu0 0.0
      %7157 = vmatpush1.msra.mxu0 %v7115
      %7158 = vmatprep.subr.mxu0 0.0
      %7159 = vmatpush2.msra.mxu0 0.0
      %7160 = vmatprep.subr.mxu0 0.0
      %7161 = vmatpush2.msra.mxu0 0.0
      %7162 = vmatprep.subr.mxu0 0.0
      %7163 = vmatpush2.msra.mxu0 0.0
      %7164 = vmatprep.subr.mxu0 0.0
      %7165 = vmatpush2.msra.mxu0 0.0
      %7166 = vmatprep.subr.mxu0 0.0
      %7167 = vmatpush2.msra.mxu0 0.0
      %7168 = vmatprep.subr.mxu0 0.0
      %7169 = vmatpush2.msra.mxu0 0.0
      %7170 = vmatprep.subr.mxu0 0.0
      %7171 = vmatpush2.msra.mxu0 0.0
      %7172 = vmatprep.subr.mxu0 0.0
      %7173 = vmatpush2.msra.mxu0 0.0
      %7174 = vmatprep.subr.mxu0 0.0
      %7175 = vmatpush2.msra.mxu0 0.0
      %7176 = vmatprep.subr.mxu0 0.0
      %7177 = vmatpush2.msra.mxu0 0.0
      %7178 = vmatprep.subr.mxu0 0.0
      %7179 = vmatpush2.msra.mxu0 0.0
      %7180 = vmatprep.subr.mxu0 0.0
      %7181 = vmatpush2.msra.mxu0 0.0
      %7182 = vmatprep.subr.mxu0 0.0
      %7183 = vmatpush2.msra.mxu0 0.0
      %7184 = vmatprep.subr.mxu0 0.0
      %7185 = vmatpush2.msra.mxu0 0.0
      %7186 = vmatprep.subr.mxu0 0.0
      %7187 = vmatpush2.msra.mxu0 0.0
      %7188 = vmatprep.subr.mxu0 0.0
      %7189 = vmatpush2.msra.mxu0 0.0
      %7190 = vmatprep.mubr.f32.mxu0 0.0
      %7191 = vmatmul.mubr.f32.gmra.mxu0 %v7121
      %v7192 = vpop.f32.mrf.mxu0
      %v7193 = vadd.f32 0.0, %v7192
      %v7194 = vpop.f32.mrf.mxu0
      %7195 = vmatprep.mubr.f32.mxu0 0.0
      %7196 = vmatmul.mubr.f32.gmra.mxu0 %v7124
      %v7197 = vpop.f32.mrf.mxu0
      %v7198 = vadd.f32 0.0, %v7197
      %v7199 = vpop.f32.mrf.mxu0
      %7200 = vdwg.mxu0
      %v7202 = vsel %vm1722, %v7193, 0
      %v7205 = vsel %vm1722, %v7198, 0
      %7207 = vmatprep.subr.mxu0 0.0
      %7208 = vmatpush1.msra.mxu0 0.0
      %7209 = vmatprep.subr.mxu0 0.0
      %7210 = vmatpush1.msra.mxu0 0.0
      %7211 = vmatprep.subr.mxu0 0.0
      %7212 = vmatpush1.msra.mxu0 0.0
      %7213 = vmatprep.subr.mxu0 0.0
      %7214 = vmatpush1.msra.mxu0 0.0
      %7215 = vmatprep.subr.mxu0 0.0
      %7216 = vmatpush1.msra.mxu0 0.0
      %7217 = vmatprep.subr.mxu0 0.0
      %7218 = vmatpush1.msra.mxu0 0.0
      %7219 = vmatprep.subr.mxu0 0.0
      %7220 = vmatpush1.msra.mxu0 0.0
      %7221 = vmatprep.subr.mxu0 0.0
      %7222 = vmatpush1.msra.mxu0 0.0
      %7223 = vmatprep.subr.mxu0 0.0
      %7224 = vmatpush1.msra.mxu0 0.0
      %7225 = vmatprep.subr.mxu0 0.0
      %7226 = vmatpush1.msra.mxu0 0.0
      %7227 = vmatprep.subr.mxu0 0.0
      %7228 = vmatpush1.msra.mxu0 0.0
      %7229 = vmatprep.subr.mxu0 0.0
      %7230 = vmatpush1.msra.mxu0 0.0
      %7231 = vmatprep.subr.mxu0 0.0
      %7232 = vmatpush1.msra.mxu0 0.0
      %7233 = vmatprep.subr.mxu0 0.0
      %7234 = vmatpush1.msra.mxu0 0.0
      %7235 = vmatprep.subr.mxu0 0.0
      %7236 = vmatpush1.msra.mxu0 0.0
      %7237 = vmatprep.subr.mxu0 0.0
      %7238 = vmatpush1.msra.mxu0 %v6149
      %7239 = vmatprep.subr.mxu0 0.0
      %7240 = vmatpush2.msra.mxu0 0.0
      %7241 = vmatprep.subr.mxu0 0.0
      %7242 = vmatpush2.msra.mxu0 0.0
      %7243 = vmatprep.subr.mxu0 0.0
      %7244 = vmatpush2.msra.mxu0 0.0
      %7245 = vmatprep.subr.mxu0 0.0
      %7246 = vmatpush2.msra.mxu0 0.0
      %7247 = vmatprep.subr.mxu0 0.0
      %7248 = vmatpush2.msra.mxu0 0.0
      %7249 = vmatprep.subr.mxu0 0.0
      %7250 = vmatpush2.msra.mxu0 0.0
      %7251 = vmatprep.subr.mxu0 0.0
      %7252 = vmatpush2.msra.mxu0 0.0
      %7253 = vmatprep.subr.mxu0 0.0
      %7254 = vmatpush2.msra.mxu0 0.0
      %7255 = vmatprep.subr.mxu0 0.0
      %7256 = vmatpush2.msra.mxu0 0.0
      %7257 = vmatprep.subr.mxu0 0.0
      %7258 = vmatpush2.msra.mxu0 0.0
      %7259 = vmatprep.subr.mxu0 0.0
      %7260 = vmatpush2.msra.mxu0 0.0
      %7261 = vmatprep.subr.mxu0 0.0
      %7262 = vmatpush2.msra.mxu0 0.0
      %7263 = vmatprep.subr.mxu0 0.0
      %7264 = vmatpush2.msra.mxu0 0.0
      %7265 = vmatprep.subr.mxu0 0.0
      %7266 = vmatpush2.msra.mxu0 0.0
      %7267 = vmatprep.subr.mxu0 0.0
      %7268 = vmatpush2.msra.mxu0 0.0
      %7269 = vmatprep.subr.mxu0 0.0
      %7270 = vmatpush2.msra.mxu0 0.0
      %7271 = vmatprep.mubr.f32.mxu0 0.0
      %7272 = vmatmul.mubr.f32.gmra.mxu0 %v7202
      %v7273 = vpop.f32.mrf.mxu0
      %v7274 = vadd.f32 0.0, %v7273
      %v7275 = vpop.f32.mrf.mxu0
      %7276 = vmatprep.mubr.f32.mxu0 0.0
      %7277 = vmatmul.mubr.f32.gmra.mxu0 %v7205
      %v7278 = vpop.f32.mrf.mxu0
      %v7279 = vadd.f32 0.0, %v7278
      %v7280 = vpop.f32.mrf.mxu0
      %7281 = vdwg.mxu0
      %v7282 = vadd.f32 %v6997, %v7274
      %v7283 = vadd.f32 %v6998, %v7279
      %s7284 = scalar_lea.vmem %s45, 1
      %v7285 = vld [vmem:[%s7284] sm:$0x1]
      %v7287 = vlaneseq
      %v7288 = vshrl.u32 %v7287, 7
      %v7289 = vsub.s32 0, %v7288
      %v7290 = vrot.slane %v7285, %v7289
      %v7292 = vadd.f32 %v7282, %v7290
      %v7293 = vadd.f32 %v7283, %v7290
      %7296 = vrot.lane.b32.xlu0 %v7292, 64
      %v7297 = vpop.permute.xlu0 %7296
      %7298 = vrot.lane.b32.xlu0 %v7293, 64
      %v7299 = vpop.permute.xlu0 %7298
      %v7302 = vmul.f32 %v6048, %v7297
      %v7303 = vmul.f32 %v6048, %v7299
      %7306 = vrot.lane.b32.xlu0 %v7302, 64
      %v7307 = vpop.permute.xlu0 %7306
      %7308 = vrot.lane.b32.xlu0 %v7303, 64
      %v7309 = vpop.permute.xlu0 %7308
      %v7312 = vadd.f32 %v6006, %v7307
      %v7313 = vadd.f32 %v6007, %v7309
      %v7314 = vsel %vm1231, %v7312, 0.0
      %7315 = vadd.xlane.f32.xlu0 %v7314
      %v7316 = vpop.xlane.xlu0 %7315
      %v7317 = vsel %vm1231, %v7313, 0.0
      %7318 = vadd.xlane.f32.xlu0 %v7317
      %v7319 = vpop.xlane.xlu0 %7318
      %v7320 = vmul.f32 %v7316, %v1497
      %v7321 = vmul.f32 %v7319, %v1497
      %v7322 = vsub.f32 %v7312, %v7320
      %v7323 = vsub.f32 %v7313, %v7321
      %v7324 = vmul.f32 %v7322, %v7322
      %v7325 = vmul.f32 %v7323, %v7323
      %v7326 = vsel %vm1231, %v7324, 0.0
      %7327 = vadd.xlane.f32.xlu0 %v7326
      %v7328 = vpop.xlane.xlu0 %7327
      %v7329 = vsel %vm1231, %v7325, 0.0
      %7330 = vadd.xlane.f32.xlu0 %v7329
      %v7331 = vpop.xlane.xlu0 %7330
      %v7332 = vmul.f32 %v7328, %v1497
      %v7333 = vmul.f32 %v7331, %v1497
      %v7334 = vadd.f32 %v7332, 1e-06
      %v7335 = vadd.f32 %v7333, 1e-06
      %v7336 = vrsqrt.pop %v7334
      %v7337 = vrsqrt.pop %v7335
      %v7338 = vmul.f32 %v7322, %v7336
      %v7339 = vmul.f32 %v7323, %v7337
      %v7340 = vadd.f32 %v4585, 1.0
      %v7341 = vlaneseq
      %v7342 = vshrl.u32 %v7341, 7
      %v7343 = vsub.s32 0, %v7342
      %v7344 = vrot.slane %v7340, %v7343
      %v7345 = vmul.f32 %v7338, %v7344
      %v7346 = vmul.f32 %v7339, %v7344
      %7348 = vrot.lane.b32.xlu0 %v6048, 32
      %v7349 = vpop.permute.xlu0 %7348
      %v7351 = vadd.f32 %v7345, %v7349
      %v7352 = vadd.f32 %v7346, %v7349
      %s7353 = scalar_lea.vmem %s47, 32
      %v7354 = vld [vmem:[%s7353] sm:$0xff]
      %v7355 = vld [vmem:[%s7353 + $0x8] sm:$0xff]
      %v7356 = vld [vmem:[%s7353 + $0x10] sm:$0xff]
      %v7357 = vld [vmem:[%s7353 + $0x18] sm:$0xff]
      %s7358 = scalar_lea.vmem %s49, 1
      %v7359 = vld [vmem:[%s7358] sm:$0x1]
      %v7361 = vlaneseq
      %v7362 = vshrl.u32 %v7361, 7
      %v7363 = vsub.s32 0, %v7362
      %v7364 = vrot.slane %v7359, %v7363
      %v7367 = vsel %vm1231, %v7351, 0
      %v7370 = vsel %vm1231, %v7352, 0
      %7372 = vmatprep.subr.mxu0 0.0
      %7373 = vmatpush1.msra.mxu0 0.0
      %7374 = vmatprep.subr.mxu0 0.0
      %7375 = vmatpush1.msra.mxu0 0.0
      %7376 = vmatprep.subr.mxu0 0.0
      %7377 = vmatpush1.msra.mxu0 0.0
      %7378 = vmatprep.subr.mxu0 0.0
      %7379 = vmatpush1.msra.mxu0 0.0
      %7380 = vmatprep.subr.mxu0 0.0
      %7381 = vmatpush1.msra.mxu0 0.0
      %7382 = vmatprep.subr.mxu0 0.0
      %7383 = vmatpush1.msra.mxu0 0.0
      %7384 = vmatprep.subr.mxu0 0.0
      %7385 = vmatpush1.msra.mxu0 0.0
      %7386 = vmatprep.subr.mxu0 0.0
      %7387 = vmatpush1.msra.mxu0 0.0
      %7388 = vmatprep.subr.mxu0 0.0
      %7389 = vmatpush1.msra.mxu0 0.0
      %7390 = vmatprep.subr.mxu0 0.0
      %7391 = vmatpush1.msra.mxu0 0.0
      %7392 = vmatprep.subr.mxu0 0.0
      %7393 = vmatpush1.msra.mxu0 0.0
      %7394 = vmatprep.subr.mxu0 0.0
      %7395 = vmatpush1.msra.mxu0 0.0
      %7396 = vmatprep.subr.mxu0 0.0
      %7397 = vmatpush1.msra.mxu0 %v7357
      %7398 = vmatprep.subr.mxu0 0.0
      %7399 = vmatpush1.msra.mxu0 %v7356
      %7400 = vmatprep.subr.mxu0 0.0
      %7401 = vmatpush1.msra.mxu0 %v7355
      %7402 = vmatprep.subr.mxu0 0.0
      %7403 = vmatpush1.msra.mxu0 %v7354
      %7404 = vmatprep.subr.mxu0 0.0
      %7405 = vmatpush2.msra.mxu0 0.0
      %7406 = vmatprep.subr.mxu0 0.0
      %7407 = vmatpush2.msra.mxu0 0.0
      %7408 = vmatprep.subr.mxu0 0.0
      %7409 = vmatpush2.msra.mxu0 0.0
      %7410 = vmatprep.subr.mxu0 0.0
      %7411 = vmatpush2.msra.mxu0 0.0
      %7412 = vmatprep.subr.mxu0 0.0
      %7413 = vmatpush2.msra.mxu0 0.0
      %7414 = vmatprep.subr.mxu0 0.0
      %7415 = vmatpush2.msra.mxu0 0.0
      %7416 = vmatprep.subr.mxu0 0.0
      %7417 = vmatpush2.msra.mxu0 0.0
      %7418 = vmatprep.subr.mxu0 0.0
      %7419 = vmatpush2.msra.mxu0 0.0
      %7420 = vmatprep.subr.mxu0 0.0
      %7421 = vmatpush2.msra.mxu0 0.0
      %7422 = vmatprep.subr.mxu0 0.0
      %7423 = vmatpush2.msra.mxu0 0.0
      %7424 = vmatprep.subr.mxu0 0.0
      %7425 = vmatpush2.msra.mxu0 0.0
      %7426 = vmatprep.subr.mxu0 0.0
      %7427 = vmatpush2.msra.mxu0 0.0
      %7428 = vmatprep.subr.mxu0 0.0
      %7429 = vmatpush2.msra.mxu0 0.0
      %7430 = vmatprep.subr.mxu0 0.0
      %7431 = vmatpush2.msra.mxu0 0.0
      %7432 = vmatprep.subr.mxu0 0.0
      %7433 = vmatpush2.msra.mxu0 0.0
      %7434 = vmatprep.subr.mxu0 0.0
      %7435 = vmatpush2.msra.mxu0 0.0
      %7436 = vmatprep.mubr.f32.mxu0 0.0
      %7437 = vmatmul.mubr.f32.gmra.mxu0 %v7367
      %v7438 = vpop.f32.mrf.mxu0
      %v7439 = vadd.f32 %v7364, %v7438
      %v7440 = vpop.f32.mrf.mxu0
      %7441 = vmatprep.mubr.f32.mxu0 0.0
      %7442 = vmatmul.mubr.f32.gmra.mxu0 %v7370
      %v7443 = vpop.f32.mrf.mxu0
      %v7444 = vadd.f32 %v7364, %v7443
      %v7445 = vpop.f32.mrf.mxu0
      %7446 = vdwg.mxu0
      %v7447 = vmul.f32 %v7439, 0.5
      %v7448 = vmul.f32 %v7444, 0.5
      %v7449 = vmul.f32 %v7439, 0.044715
      %v7450 = vmul.f32 %v7444, 0.044715
      %v7451 = vmul.f32 %v7449, %v7439
      %v7452 = vmul.f32 %v7450, %v7444
      %v7453 = vmul.f32 %v7451, %v7439
      %v7454 = vmul.f32 %v7452, %v7444
      %v7455 = vadd.f32 %v7439, %v7453
      %v7456 = vadd.f32 %v7444, %v7454
      %v7457 = vmul.f32 %v7455, 0.7978846
      %v7458 = vmul.f32 %v7456, 0.7978846
      %v7459 = vtanh.pop %v7457
      %v7460 = vtanh.pop %v7458
      %v7461 = vadd.f32 %v7459, 1.0
      %v7462 = vadd.f32 %v7460, 1.0
      %v7463 = vmul.f32 %v7447, %v7461
      %v7464 = vmul.f32 %v7448, %v7462
      %s7465 = scalar_lea.vmem %s51, 128
      %v7466 = vld [vmem:[%s7465] sm:$0xff]
      %v7467 = vld [vmem:[%s7465 + $0x8] sm:$0xff]
      %v7468 = vld [vmem:[%s7465 + $0x10] sm:$0xff]
      %v7469 = vld [vmem:[%s7465 + $0x18] sm:$0xff]
      %v7470 = vld [vmem:[%s7465 + $0x20] sm:$0xff]
      %v7471 = vld [vmem:[%s7465 + $0x28] sm:$0xff]
      %v7472 = vld [vmem:[%s7465 + $0x30] sm:$0xff]
      %v7473 = vld [vmem:[%s7465 + $0x38] sm:$0xff]
      %v7474 = vld [vmem:[%s7465 + $0x40] sm:$0xff]
      %v7475 = vld [vmem:[%s7465 + $0x48] sm:$0xff]
      %v7476 = vld [vmem:[%s7465 + $0x50] sm:$0xff]
      %v7477 = vld [vmem:[%s7465 + $0x58] sm:$0xff]
      %v7478 = vld [vmem:[%s7465 + $0x60] sm:$0xff]
      %v7479 = vld [vmem:[%s7465 + $0x68] sm:$0xff]
      %v7480 = vld [vmem:[%s7465 + $0x70] sm:$0xff]
      %v7481 = vld [vmem:[%s7465 + $0x78] sm:$0xff]
      %s7482 = scalar_lea.vmem %s53, 1
      %v7483 = vld [vmem:[%s7482] sm:$0x1]
      %v7485 = vlaneseq
      %v7486 = vshrl.u32 %v7485, 7
      %v7487 = vsub.s32 0, %v7486
      %v7488 = vrot.slane %v7483, %v7487
      %7490 = vmatprep.subr.mxu0 0.0
      %7491 = vmatpush1.msra.mxu0 %v7481
      %7492 = vmatprep.subr.mxu0 0.0
      %7493 = vmatpush1.msra.mxu0 %v7480
      %7494 = vmatprep.subr.mxu0 0.0
      %7495 = vmatpush1.msra.mxu0 %v7479
      %7496 = vmatprep.subr.mxu0 0.0
      %7497 = vmatpush1.msra.mxu0 %v7478
      %7498 = vmatprep.subr.mxu0 0.0
      %7499 = vmatpush1.msra.mxu0 %v7477
      %7500 = vmatprep.subr.mxu0 0.0
      %7501 = vmatpush1.msra.mxu0 %v7476
      %7502 = vmatprep.subr.mxu0 0.0
      %7503 = vmatpush1.msra.mxu0 %v7475
      %7504 = vmatprep.subr.mxu0 0.0
      %7505 = vmatpush1.msra.mxu0 %v7474
      %7506 = vmatprep.subr.mxu0 0.0
      %7507 = vmatpush1.msra.mxu0 %v7473
      %7508 = vmatprep.subr.mxu0 0.0
      %7509 = vmatpush1.msra.mxu0 %v7472
      %7510 = vmatprep.subr.mxu0 0.0
      %7511 = vmatpush1.msra.mxu0 %v7471
      %7512 = vmatprep.subr.mxu0 0.0
      %7513 = vmatpush1.msra.mxu0 %v7470
      %7514 = vmatprep.subr.mxu0 0.0
      %7515 = vmatpush1.msra.mxu0 %v7469
      %7516 = vmatprep.subr.mxu0 0.0
      %7517 = vmatpush1.msra.mxu0 %v7468
      %7518 = vmatprep.subr.mxu0 0.0
      %7519 = vmatpush1.msra.mxu0 %v7467
      %7520 = vmatprep.subr.mxu0 0.0
      %7521 = vmatpush1.msra.mxu0 %v7466
      %7522 = vmatprep.subr.mxu0 0.0
      %7523 = vmatpush2.msra.mxu0 0.0
      %7524 = vmatprep.subr.mxu0 0.0
      %7525 = vmatpush2.msra.mxu0 0.0
      %7526 = vmatprep.subr.mxu0 0.0
      %7527 = vmatpush2.msra.mxu0 0.0
      %7528 = vmatprep.subr.mxu0 0.0
      %7529 = vmatpush2.msra.mxu0 0.0
      %7530 = vmatprep.subr.mxu0 0.0
      %7531 = vmatpush2.msra.mxu0 0.0
      %7532 = vmatprep.subr.mxu0 0.0
      %7533 = vmatpush2.msra.mxu0 0.0
      %7534 = vmatprep.subr.mxu0 0.0
      %7535 = vmatpush2.msra.mxu0 0.0
      %7536 = vmatprep.subr.mxu0 0.0
      %7537 = vmatpush2.msra.mxu0 0.0
      %7538 = vmatprep.subr.mxu0 0.0
      %7539 = vmatpush2.msra.mxu0 0.0
      %7540 = vmatprep.subr.mxu0 0.0
      %7541 = vmatpush2.msra.mxu0 0.0
      %7542 = vmatprep.subr.mxu0 0.0
      %7543 = vmatpush2.msra.mxu0 0.0
      %7544 = vmatprep.subr.mxu0 0.0
      %7545 = vmatpush2.msra.mxu0 0.0
      %7546 = vmatprep.subr.mxu0 0.0
      %7547 = vmatpush2.msra.mxu0 0.0
      %7548 = vmatprep.subr.mxu0 0.0
      %7549 = vmatpush2.msra.mxu0 0.0
      %7550 = vmatprep.subr.mxu0 0.0
      %7551 = vmatpush2.msra.mxu0 0.0
      %7552 = vmatprep.subr.mxu0 0.0
      %7553 = vmatpush2.msra.mxu0 0.0
      %7554 = vmatprep.mubr.f32.mxu0 0.0
      %7555 = vmatmul.mubr.f32.gmra.mxu0 %v7463
      %v7556 = vpop.f32.mrf.mxu0
      %v7557 = vadd.f32 %v7488, %v7556
      %v7558 = vpop.f32.mrf.mxu0
      %7559 = vmatprep.mubr.f32.mxu0 0.0
      %7560 = vmatmul.mubr.f32.gmra.mxu0 %v7464
      %v7561 = vpop.f32.mrf.mxu0
      %v7562 = vadd.f32 %v7488, %v7561
      %v7563 = vpop.f32.mrf.mxu0
      %7564 = vdwg.mxu0
      %v7565 = vlaneseq
      %v7566 = vshrl.u32 %v7565, 7
      %v7567 = vsub.s32 0, %v7566
      %v7568 = vrot.slane %v4585, %v7567
      %7571 = vrot.lane.b32.xlu0 %v7557, 32
      %v7572 = vpop.permute.xlu0 %7571
      %7573 = vrot.lane.b32.xlu0 %v7562, 32
      %v7574 = vpop.permute.xlu0 %7573
      %v7577 = vmul.f32 %v7568, %v7572
      %v7578 = vmul.f32 %v7568, %v7574
      %7581 = vrot.lane.b32.xlu0 %v7577, 96
      %v7582 = vpop.permute.xlu0 %7581
      %7583 = vrot.lane.b32.xlu0 %v7578, 96
      %v7584 = vpop.permute.xlu0 %7583
      %v7587 = vadd.f32 %v7312, %v7582
      %v7588 = vadd.f32 %v7313, %v7584
      %v7589 = vld [vmem:[%s55] sm:$0xff]
      %v7590 = vld [vmem:[%s55 + $0x8] sm:$0xff]
      %v7591 = vld [vmem:[%s55 + $0x10] sm:$0xff]
      %v7592 = vld [vmem:[%s55 + $0x18] sm:$0xff]
      %v7593 = vld [vmem:[%s57] sm:$0x1]
      %7594 = vmatprep.subr.mxu0 0.0
      %7595 = vmatpush1.msra.mxu0 0.0
      %7596 = vmatprep.subr.mxu0 0.0
      %7597 = vmatpush1.msra.mxu0 0.0
      %7598 = vmatprep.subr.mxu0 0.0
      %7599 = vmatpush1.msra.mxu0 0.0
      %7600 = vmatprep.subr.mxu0 0.0
      %7601 = vmatpush1.msra.mxu0 0.0
      %7602 = vmatprep.subr.mxu0 0.0
      %7603 = vmatpush1.msra.mxu0 0.0
      %7604 = vmatprep.subr.mxu0 0.0
      %7605 = vmatpush1.msra.mxu0 0.0
      %7606 = vmatprep.subr.mxu0 0.0
      %7607 = vmatpush1.msra.mxu0 0.0
      %7608 = vmatprep.subr.mxu0 0.0
      %7609 = vmatpush1.msra.mxu0 0.0
      %7610 = vmatprep.subr.mxu0 0.0
      %7611 = vmatpush1.msra.mxu0 0.0
      %7612 = vmatprep.subr.mxu0 0.0
      %7613 = vmatpush1.msra.mxu0 0.0
      %7614 = vmatprep.subr.mxu0 0.0
      %7615 = vmatpush1.msra.mxu0 0.0
      %7616 = vmatprep.subr.mxu0 0.0
      %7617 = vmatpush1.msra.mxu0 0.0
      %7618 = vmatprep.subr.mxu0 0.0
      %7619 = vmatpush1.msra.mxu0 %v7592
      %7620 = vmatprep.subr.mxu0 0.0
      %7621 = vmatpush1.msra.mxu0 %v7591
      %7622 = vmatprep.subr.mxu0 0.0
      %7623 = vmatpush1.msra.mxu0 %v7590
      %7624 = vmatprep.subr.mxu0 0.0
      %7625 = vmatpush1.msra.mxu0 %v7589
      %7626 = vmatprep.subr.mxu0 0.0
      %7627 = vmatpush2.msra.mxu0 0.0
      %7628 = vmatprep.subr.mxu0 0.0
      %7629 = vmatpush2.msra.mxu0 0.0
      %7630 = vmatprep.subr.mxu0 0.0
      %7631 = vmatpush2.msra.mxu0 0.0
      %7632 = vmatprep.subr.mxu0 0.0
      %7633 = vmatpush2.msra.mxu0 0.0
      %7634 = vmatprep.subr.mxu0 0.0
      %7635 = vmatpush2.msra.mxu0 0.0
      %7636 = vmatprep.subr.mxu0 0.0
      %7637 = vmatpush2.msra.mxu0 0.0
      %7638 = vmatprep.subr.mxu0 0.0
      %7639 = vmatpush2.msra.mxu0 0.0
      %7640 = vmatprep.subr.mxu0 0.0
      %7641 = vmatpush2.msra.mxu0 0.0
      %7642 = vmatprep.subr.mxu0 0.0
      %7643 = vmatpush2.msra.mxu0 0.0
      %7644 = vmatprep.subr.mxu0 0.0
      %7645 = vmatpush2.msra.mxu0 0.0
      %7646 = vmatprep.subr.mxu0 0.0
      %7647 = vmatpush2.msra.mxu0 0.0
      %7648 = vmatprep.subr.mxu0 0.0
      %7649 = vmatpush2.msra.mxu0 0.0
      %7650 = vmatprep.subr.mxu0 0.0
      %7651 = vmatpush2.msra.mxu0 0.0
      %7652 = vmatprep.subr.mxu0 0.0
      %7653 = vmatpush2.msra.mxu0 0.0
      %7654 = vmatprep.subr.mxu0 0.0
      %7655 = vmatpush2.msra.mxu0 0.0
      %7656 = vmatprep.subr.mxu0 0.0
      %7657 = vmatpush2.msra.mxu0 0.0
      %7658 = vmatprep.mubr.f32.mxu0 0.0
      %7659 = vmatmul.mubr.f32.gmra.mxu0 %v1418
      %v7660 = vpop.f32.mrf.mxu0
      %v7661 = vadd.f32 %v7593, %v7660
      %v7662 = vpop.f32.mrf.mxu0
      %7663 = vdwg.mxu0
      %v7664 = vsel %vm1231, %v7587, 0.0
      %7665 = vadd.xlane.f32.xlu0 %v7664
      %v7666 = vpop.xlane.xlu0 %7665
      %v7667 = vsel %vm1231, %v7588, 0.0
      %7668 = vadd.xlane.f32.xlu0 %v7667
      %v7669 = vpop.xlane.xlu0 %7668
      %v7670 = vmul.f32 %v7666, %v1497
      %v7671 = vmul.f32 %v7669, %v1497
      %v7672 = vsub.f32 %v7587, %v7670
      %v7673 = vsub.f32 %v7588, %v7671
      %v7674 = vmul.f32 %v7672, %v7672
      %v7675 = vmul.f32 %v7673, %v7673
      %v7676 = vsel %vm1231, %v7674, 0.0
      %7677 = vadd.xlane.f32.xlu0 %v7676
      %v7678 = vpop.xlane.xlu0 %7677
      %v7679 = vsel %vm1231, %v7675, 0.0
      %7680 = vadd.xlane.f32.xlu0 %v7679
      %v7681 = vpop.xlane.xlu0 %7680
      %v7682 = vmul.f32 %v7678, %v1497
      %v7683 = vmul.f32 %v7681, %v1497
      %v7684 = vadd.f32 %v7682, 1e-06
      %v7685 = vadd.f32 %v7683, 1e-06
      %v7686 = vrsqrt.pop %v7684
      %v7687 = vrsqrt.pop %v7685
      %v7688 = vmul.f32 %v7672, %v7686
      %v7689 = vmul.f32 %v7673, %v7687
      %v7690 = vadd.f32 %v7661, 1.0
      %v7691 = vlaneseq
      %v7692 = vshrl.u32 %v7691, 7
      %v7693 = vsub.s32 0, %v7692
      %v7694 = vrot.slane %v7690, %v7693
      %7696 = vrot.lane.b32.xlu0 %v7694, 96
      %v7697 = vpop.permute.xlu0 %7696
      %v7699 = vmul.f32 %v7688, %v7697
      %v7700 = vmul.f32 %v7689, %v7697
      %v7701 = vlaneseq
      %v7702 = vshrl.u32 %v7701, 7
      %v7703 = vsub.s32 0, %v7702
      %v7704 = vrot.slane %v7661, %v7703
      %v7705 = vadd.f32 %v7699, %v7704
      %v7706 = vadd.f32 %v7700, %v7704
      %v7707 = vld [vmem:[%s59] sm:$0xff]
      %v7708 = vld [vmem:[%s59 + $0x8] sm:$0xff]
      %v7709 = vld [vmem:[%s59 + $0x10] sm:$0xff]
      %v7710 = vld [vmem:[%s59 + $0x18] sm:$0xff]
      %v7711 = vld [vmem:[%s61] sm:$0x1]
      %v7713 = vlaneseq
      %v7714 = vshrl.u32 %v7713, 7
      %v7715 = vsub.s32 0, %v7714
      %v7716 = vrot.slane %v7711, %v7715
      %v7719 = vsel %vm1231, %v7705, 0
      %v7722 = vsel %vm1231, %v7706, 0
      %7724 = vmatprep.subr.mxu0 0.0
      %7725 = vmatpush1.msra.mxu0 0.0
      %7726 = vmatprep.subr.mxu0 0.0
      %7727 = vmatpush1.msra.mxu0 0.0
      %7728 = vmatprep.subr.mxu0 0.0
      %7729 = vmatpush1.msra.mxu0 0.0
      %7730 = vmatprep.subr.mxu0 0.0
      %7731 = vmatpush1.msra.mxu0 0.0
      %7732 = vmatprep.subr.mxu0 0.0
      %7733 = vmatpush1.msra.mxu0 0.0
      %7734 = vmatprep.subr.mxu0 0.0
      %7735 = vmatpush1.msra.mxu0 0.0
      %7736 = vmatprep.subr.mxu0 0.0
      %7737 = vmatpush1.msra.mxu0 0.0
      %7738 = vmatprep.subr.mxu0 0.0
      %7739 = vmatpush1.msra.mxu0 0.0
      %7740 = vmatprep.subr.mxu0 0.0
      %7741 = vmatpush1.msra.mxu0 0.0
      %7742 = vmatprep.subr.mxu0 0.0
      %7743 = vmatpush1.msra.mxu0 0.0
      %7744 = vmatprep.subr.mxu0 0.0
      %7745 = vmatpush1.msra.mxu0 0.0
      %7746 = vmatprep.subr.mxu0 0.0
      %7747 = vmatpush1.msra.mxu0 0.0
      %7748 = vmatprep.subr.mxu0 0.0
      %7749 = vmatpush1.msra.mxu0 %v7710
      %7750 = vmatprep.subr.mxu0 0.0
      %7751 = vmatpush1.msra.mxu0 %v7709
      %7752 = vmatprep.subr.mxu0 0.0
      %7753 = vmatpush1.msra.mxu0 %v7708
      %7754 = vmatprep.subr.mxu0 0.0
      %7755 = vmatpush1.msra.mxu0 %v7707
      %7756 = vmatprep.subr.mxu0 0.0
      %7757 = vmatpush2.msra.mxu0 0.0
      %7758 = vmatprep.subr.mxu0 0.0
      %7759 = vmatpush2.msra.mxu0 0.0
      %7760 = vmatprep.subr.mxu0 0.0
      %7761 = vmatpush2.msra.mxu0 0.0
      %7762 = vmatprep.subr.mxu0 0.0
      %7763 = vmatpush2.msra.mxu0 0.0
      %7764 = vmatprep.subr.mxu0 0.0
      %7765 = vmatpush2.msra.mxu0 0.0
      %7766 = vmatprep.subr.mxu0 0.0
      %7767 = vmatpush2.msra.mxu0 0.0
      %7768 = vmatprep.subr.mxu0 0.0
      %7769 = vmatpush2.msra.mxu0 0.0
      %7770 = vmatprep.subr.mxu0 0.0
      %7771 = vmatpush2.msra.mxu0 0.0
      %7772 = vmatprep.subr.mxu0 0.0
      %7773 = vmatpush2.msra.mxu0 0.0
      %7774 = vmatprep.subr.mxu0 0.0
      %7775 = vmatpush2.msra.mxu0 0.0
      %7776 = vmatprep.subr.mxu0 0.0
      %7777 = vmatpush2.msra.mxu0 0.0
      %7778 = vmatprep.subr.mxu0 0.0
      %7779 = vmatpush2.msra.mxu0 0.0
      %7780 = vmatprep.subr.mxu0 0.0
      %7781 = vmatpush2.msra.mxu0 0.0
      %7782 = vmatprep.subr.mxu0 0.0
      %7783 = vmatpush2.msra.mxu0 0.0
      %7784 = vmatprep.subr.mxu0 0.0
      %7785 = vmatpush2.msra.mxu0 0.0
      %7786 = vmatprep.subr.mxu0 0.0
      %7787 = vmatpush2.msra.mxu0 0.0
      %7788 = vmatprep.mubr.f32.mxu0 0.0
      %7789 = vmatmul.mubr.f32.gmra.mxu0 %v7719
      %v7790 = vpop.f32.mrf.mxu0
      %v7791 = vadd.f32 %v7716, %v7790
      %v7792 = vpop.f32.mrf.mxu0
      %7793 = vmatprep.mubr.f32.mxu0 0.0
      %7794 = vmatmul.mubr.f32.gmra.mxu0 %v7722
      %v7795 = vpop.f32.mrf.mxu0
      %v7796 = vadd.f32 %v7716, %v7795
      %v7797 = vpop.f32.mrf.mxu0
      %7798 = vdwg.mxu0
      %7799 = vst [vmem:[%s1012] sm:$0xff] %v7791
      %7800 = vst [vmem:[%s1012 + $0x8] sm:$0xff] %v7796
      %p7801 = scmp.lt.s32.totalorder %s74, 1
      %s7802 = scalar_select %p7801, %s74, 1
      %s7803 = smul.addr %s7802, 2
      %s7804 = smul.addr %s7803, 8
      %s7805 = scalar_lea.vmem %s63, %s7804
      // Predicated region
      $region145: #{dit_forward.1} parent=143 // pred_check
        %p7806 = pneg %p763
      $region146: #{dit_forward.1} parent=143 // pred_check_branch
        %7808 = sbr.rel (%p7806) target = $region148
      $region147: #{dit_forward.1} parent=143 // pred_region
        _
      $region148: #{dit_forward.1} parent=143 // pred_fallthru
        _
    $region144: #{dit_forward.1} parent=5 // pred_fallthru
      _
    %p7809 = scmp.le.s32.totalorder 2, %s69
    // Predicated region
    $region149: #{dit_forward.1} parent=5 // pred_check
      %p7810 = pneg %p7809
    $region150: #{dit_forward.1} parent=5 // pred_check_branch
      %7812 = sbr.rel (%p7810) target = $region152
    $region151: #{dit_forward.1} parent=5 // pred_region
      %s7813 = ssub.s32 %s69, 2
      // Predicated region
      $region153: #{dit_forward.1} parent=151 // pred_check
        %p7814 = pneg %p769
      $region154: #{dit_forward.1} parent=151 // pred_check_branch
        %7816 = sbr.rel (%p7814) target = $region156
      $region155: #{dit_forward.1} parent=151 // pred_region
        %p7817 = scmp.lt.s32.totalorder %s75, 1
        %s7818 = scalar_select %p7817, %s75, 1
        %s7819 = smul.addr %s7818, 2
        %s7820 = smul.addr %s7819, 8
        %s7821 = scalar_lea.vmem %s63, %s7820
      $region156: #{dit_forward.1} parent=151 // pred_fallthru
        _
    $region152: #{dit_forward.1} parent=5 // pred_fallthru
      _
  $region6: #{dit_forward.1} parent=0 // loop_footer
    %s73 = sadd.s32 1, %s69
  $region7: #{dit_forward.1} parent=0 // loop_footer_branch
    %68 = sbr.rel target = $region3
  $region8: #{dit_forward.1} parent=0 // loop_exit
    _

</llo_original>
